<compile_context>
chip_gen: v7x
topology: tpu7x:2x2x1
jax: 0.10.0
libtpu: 0.0.40
codegen_flags: <defaults>
</compile_context>

<pallas_src>
import jax
import jax.numpy as jnp
from jax import lax
from jax.experimental import pallas as pl
from jax.experimental.pallas import tpu as pltpu


# ----------------------------------------------------------------------------
# Pallas kernels: fused (patches @ weight) [+ bias] + ReLU on the MXU.
#   a_ref: (M, K) bf16   w_ref: (K, N) bf16   b_ref: (1, N) f32
# Accumulation, bias add and ReLU are f32; only the final store casts to
# o_ref.dtype (bf16 for intermediate layers, f32 for the last one).
# ----------------------------------------------------------------------------
def _mm_bias_relu_kernel(a_ref, w_ref, b_ref, o_ref):
    acc = jnp.dot(a_ref[...], w_ref[...], preferred_element_type=jnp.float32)
    o_ref[...] = jnp.maximum(acc + b_ref[...], 0.0).astype(o_ref.dtype)


def _mm_relu_kernel(a_ref, w_ref, o_ref):
    acc = jnp.dot(a_ref[...], w_ref[...], preferred_element_type=jnp.float32)
    o_ref[...] = jnp.maximum(acc, 0.0).astype(o_ref.dtype)


def fused_matmul_bias_relu(a, w, b, out_dtype=jnp.bfloat16):
    """relu(a @ w [+ b]).  a: (M, K) bf16, w: (K, N) bf16, b: (1, N) f32 or None.

    Whole-layer single-block kernel: every operand fits VMEM, so the grid is a
    single step (no pipelining needed, no partial blocks, minimal overhead).
    """
    M, K = a.shape
    _, N = w.shape
    if b is None:
        kernel, args = _mm_relu_kernel, (a, w)
        in_specs = [pl.BlockSpec((M, K), lambda i: (0, 0)),
                    pl.BlockSpec((K, N), lambda i: (0, 0))]
    else:
        kernel, args = _mm_bias_relu_kernel, (a, w, b)
        in_specs = [pl.BlockSpec((M, K), lambda i: (0, 0)),
                    pl.BlockSpec((K, N), lambda i: (0, 0)),
                    pl.BlockSpec((1, N), lambda i: (0, 0))]
    return pl.pallas_call(
        kernel,
        out_shape=jax.ShapeDtypeStruct((M, N), out_dtype),
        grid=(1,),
        in_specs=in_specs,
        out_specs=pl.BlockSpec((M, N), lambda i: (0, 0)),
        compiler_params=pltpu.CompilerParams(
            dimension_semantics=("arbitrary",)),
    )(*args)


# ----------------------------------------------------------------------------
# One conv layer in NHWC: XLA does only the tiny stride-2 window slicing
# (im2col, no transposes, no padding); the Pallas kernel does all the math.
# Patch column order is (kh, kw, Cin), matching the weight transform below.
# ----------------------------------------------------------------------------
def conv2d_relu_nhwc(x, w_mat, b_row, *, k=4, s=2, out_dtype=jnp.bfloat16):
    """x: (N, H, W, Cin), w_mat: (k*k*Cin, Cout) bf16, b_row: (1, Cout) f32|None."""
    N, H, W, C = x.shape
    Ho = (H - k) // s + 1
    Wo = (W - k) // s + 1
    xb = x.astype(jnp.bfloat16)
    cols = [xb[:, i:i + s * Ho:s, j:j + s * Wo:s, :]
            for i in range(k) for j in range(k)]
    patches = jnp.stack(cols, axis=3).reshape(N * Ho * Wo, k * k * C)
    out = fused_matmul_bias_relu(patches, w_mat, b_row, out_dtype=out_dtype)
    return out.reshape(N, Ho, Wo, -1)


# ----------------------------------------------------------------------------
# Full module forward (matches the nn.Sequential in the PyTorch Conv module).
# ----------------------------------------------------------------------------
def conv_module_forward(x_nchw, mm_params):
    (w1, b1), (w2, b2), (w3, b3), (w4, b4) = mm_params
    h = jnp.transpose(x_nchw, (0, 2, 3, 1))                 # NCHW -> NHWC, once
    h = conv2d_relu_nhwc(h, w1, b1, out_dtype=jnp.bfloat16)
    h = conv2d_relu_nhwc(h, w2, b2, out_dtype=jnp.bfloat16)
    h = conv2d_relu_nhwc(h, w3, b3, out_dtype=jnp.bfloat16)
    h = conv2d_relu_nhwc(h, w4, b4, out_dtype=jnp.float32)
    # Single final (tiny) permutation so the flatten matches torch.nn.Flatten
    # applied to an NCHW tensor.
    n = h.shape[0]
    return jnp.transpose(h, (0, 3, 1, 2)).reshape(n, -1)    # (N, 1024) for 64x64


# ----------------------------------------------------------------------------
# Parameters: PyTorch OIHW layout (the module's parameterization) + a one-time
# transform into the matmul layout the kernels consume.
# ----------------------------------------------------------------------------
def init_params(key):
    def conv_w(k, cout, cin, ks):
        fan_in = cin * ks * ks
        return jax.random.normal(k, (cout, cin, ks, ks), jnp.float32) / jnp.sqrt(fan_in)

    ks = jax.random.split(key, 7)
    w1 = conv_w(ks[0], 32, 1, 4)
    w2 = conv_w(ks[1], 64, 32, 4)
    b2 = 0.01 * jax.random.normal(ks[2], (64,), jnp.float32)
    w3 = conv_w(ks[3], 128, 64, 4)
    b3 = 0.01 * jax.random.normal(ks[4], (128,), jnp.float32)
    w4 = conv_w(ks[5], 256, 128, 4)
    b4 = 0.01 * jax.random.normal(ks[6], (256,), jnp.float32)
    return ((w1,), (w2, b2), (w3, b3), (w4, b4))


def prepare_mm_params(params):
    """OIHW -> (k*k*Cin, Cout) bf16 weights in (kh, kw, Cin) row order, plus
    (1, Cout) f32 biases (None for the bias-free first conv). Done once."""
    (w1,), (w2, b2), (w3, b3), (w4, b4) = params

    def w_mat(w):
        co, ci, kh, kw = w.shape
        return jnp.transpose(w, (2, 3, 1, 0)).reshape(kh * kw * ci, co).astype(jnp.bfloat16)

    def b_row(b):
        return b.reshape(1, -1).astype(jnp.float32)

    return ((w_mat(w1), None),
            (w_mat(w2), b_row(b2)),
            (w_mat(w3), b_row(b3)),
            (w_mat(w4), b_row(b4)))


# Pure-JAX reference (lax conv) mirroring the kernel's bf16-operand math.
def _reference_forward(x_nchw, params):
    (w1,), (w2, b2), (w3, b3), (w4, b4) = params
    dn = lax.conv_dimension_numbers(x_nchw.shape, w1.shape, ("NCHW", "OIHW", "NCHW"))

    def conv(h, w, b):
        y = lax.conv_general_dilated(
            h.astype(jnp.bfloat16), w.astype(jnp.bfloat16), (2, 2), "VALID",
            dimension_numbers=dn, preferred_element_type=jnp.float32)
        if b is not None:
            y = y + b.reshape(1, -1, 1, 1)
        return jnp.maximum(y, 0.0)

    h = conv(x_nchw, w1, None)
    h = conv(h, w2, b2)
    h = conv(h, w3, b3)
    h = conv(h, w4, b4)
    return h.reshape(h.shape[0], -1)


if __name__ == "__main__":
    key = jax.random.PRNGKey(0)
    kp, kx = jax.random.split(key)
    params = init_params(kp)               # PyTorch OIHW layout
    mm_params = prepare_mm_params(params)  # matmul layout, bf16 weights

    # 1-channel 64x64 input: the geometry the module documents (h_dim = 1024).
    x = jax.random.normal(kx, (2, 1, 64, 64), jnp.float32)

    fwd = jax.jit(conv_module_forward)
    out = jax.block_until_ready(fwd(x, mm_params))
    assert out.shape == (2, 1024), out.shape

    ref = jax.block_until_ready(_reference_forward(x, params))
    max_err = float(jnp.max(jnp.abs(out - ref)))
    assert jnp.allclose(out, ref, rtol=1e-2, atol=1e-2), max_err

    print("KERNEL_OK")
</pallas_src>

<mosaic_0001>
module attributes {stable_mosaic.version = 11 : i64} {
  func.func @_mm_relu_kernel(%arg0: i32, %arg1: memref<1922x16xbf16, #tpu.memory_space<vmem>>, %arg2: memref<16x32xbf16, #tpu.memory_space<vmem>>, %arg3: memref<1922x32xbf16, #tpu.memory_space<vmem>>) attributes {dimension_semantics = [#tpu.dimension_semantics<arbitrary>], iteration_bounds = array<i64: 1>, scalar_prefetch = 0 : i64, scratch_operands = 0 : i64, tpu.core_type = #tpu.core_type<tc>, window_params = [{pipeline_mode = #tpu.pipeline_mode<synchronous>, transform_indices = @transform_0, window_bounds = array<i64: 1922, 16>}, {pipeline_mode = #tpu.pipeline_mode<synchronous>, transform_indices = @transform_1, window_bounds = array<i64: 16, 32>}, {pipeline_mode = #tpu.pipeline_mode<synchronous>, transform_indices = @transform_2, window_bounds = array<i64: 1922, 32>}]} {
    %c0 = arith.constant 0 : index
    %c0_0 = arith.constant 0 : index
    %0 = vector.load %arg1[%c0, %c0_0] : memref<1922x16xbf16, #tpu.memory_space<vmem>>, vector<1922x16xbf16>
    %c0_1 = arith.constant 0 : index
    %c0_2 = arith.constant 0 : index
    %1 = vector.load %arg2[%c0_1, %c0_2] : memref<16x32xbf16, #tpu.memory_space<vmem>>, vector<16x32xbf16>
    %cst = arith.constant dense<0.000000e+00> : vector<1922x32xf32>
    %2 = tpu.matmul %0, %1, %cst {dimension_numbers = #tpu.dot_dimension_numbers<[1], [0], [0], [1], [0, 0, 1, 1], [], []>} : vector<1922x16xbf16>, vector<16x32xbf16>, vector<1922x32xf32> -> vector<1922x32xf32>
    %cst_3 = arith.constant 0.000000e+00 : f32
    %3 = vector.broadcast %cst_3 : f32 to vector<1922x32xf32>
    %4 = arith.maximumf %2, %3 : vector<1922x32xf32>
    %5 = arith.truncf %4 : vector<1922x32xf32> to vector<1922x32xbf16>
    %c0_4 = arith.constant 0 : index
    %c0_5 = arith.constant 0 : index
    %6 = vector.load %arg3[%c0_4, %c0_5] : memref<1922x32xbf16, #tpu.memory_space<vmem>>, vector<1922x32xbf16>
    tpu.vector_store %arg3[%c0_4, %c0_5], %5 {strides = array<i32>} : memref<1922x32xbf16, #tpu.memory_space<vmem>>, vector<1922x32xbf16>,
    return
  }
  func.func @transform_0(%arg0: i32) -> (i32, i32) {
    %c0_i32 = arith.constant 0 : i32
    %c0_i32_0 = arith.constant 0 : i32
    %c0_i32_1 = arith.constant 0 : i32
    return %c0_i32, %c0_i32_0 : i32, i32
  }
  func.func @transform_1(%arg0: i32) -> (i32, i32) {
    %c0_i32 = arith.constant 0 : i32
    %c0_i32_0 = arith.constant 0 : i32
    %c0_i32_1 = arith.constant 0 : i32
    return %c0_i32, %c0_i32_0 : i32, i32
  }
  func.func @transform_2(%arg0: i32) -> (i32, i32) {
    %c0_i32 = arith.constant 0 : i32
    %c0_i32_0 = arith.constant 0 : i32
    %c0_i32_1 = arith.constant 0 : i32
    return %c0_i32, %c0_i32_0 : i32, i32
  }
}

module attributes {stable_mosaic.version = 11 : i64} {
  func.func @_mm_bias_relu_kernel(%arg0: i32, %arg1: memref<392x512xbf16, #tpu.memory_space<vmem>>, %arg2: memref<512x64xbf16, #tpu.memory_space<vmem>>, %arg3: memref<1x64xf32, #tpu.memory_space<vmem>>, %arg4: memref<392x64xbf16, #tpu.memory_space<vmem>>) attributes {dimension_semantics = [#tpu.dimension_semantics<arbitrary>], iteration_bounds = array<i64: 1>, scalar_prefetch = 0 : i64, scratch_operands = 0 : i64, tpu.core_type = #tpu.core_type<tc>, window_params = [{pipeline_mode = #tpu.pipeline_mode<synchronous>, transform_indices = @transform_0, window_bounds = array<i64: 392, 512>}, {pipeline_mode = #tpu.pipeline_mode<synchronous>, transform_indices = @transform_1, window_bounds = array<i64: 512, 64>}, {pipeline_mode = #tpu.pipeline_mode<synchronous>, transform_indices = @transform_2, window_bounds = array<i64: 1, 64>}, {pipeline_mode = #tpu.pipeline_mode<synchronous>, transform_indices = @transform_3, window_bounds = array<i64: 392, 64>}]} {
    %c0 = arith.constant 0 : index
    %c0_0 = arith.constant 0 : index
    %0 = vector.load %arg1[%c0, %c0_0] : memref<392x512xbf16, #tpu.memory_space<vmem>>, vector<392x512xbf16>
    %c0_1 = arith.constant 0 : index
    %c0_2 = arith.constant 0 : index
    %1 = vector.load %arg2[%c0_1, %c0_2] : memref<512x64xbf16, #tpu.memory_space<vmem>>, vector<512x64xbf16>
    %cst = arith.constant dense<0.000000e+00> : vector<392x64xf32>
    %2 = tpu.matmul %0, %1, %cst {dimension_numbers = #tpu.dot_dimension_numbers<[1], [0], [0], [1], [0, 0, 1, 1], [], []>} : vector<392x512xbf16>, vector<512x64xbf16>, vector<392x64xf32> -> vector<392x64xf32>
    %c0_3 = arith.constant 0 : index
    %c0_4 = arith.constant 0 : index
    %3 = vector.load %arg3[%c0_3, %c0_4] : memref<1x64xf32, #tpu.memory_space<vmem>>, vector<1x64xf32>
    %4 = vector.broadcast %3 : vector<1x64xf32> to vector<392x64xf32>
    %5 = arith.addf %2, %4 : vector<392x64xf32>
    %cst_5 = arith.constant 0.000000e+00 : f32
    %6 = vector.broadcast %cst_5 : f32 to vector<392x64xf32>
    %7 = arith.maximumf %5, %6 : vector<392x64xf32>
    %8 = arith.truncf %7 : vector<392x64xf32> to vector<392x64xbf16>
    %c0_6 = arith.constant 0 : index
    %c0_7 = arith.constant 0 : index
    %9 = vector.load %arg4[%c0_6, %c0_7] : memref<392x64xbf16, #tpu.memory_space<vmem>>, vector<392x64xbf16>
    tpu.vector_store %arg4[%c0_6, %c0_7], %8 {strides = array<i32>} : memref<392x64xbf16, #tpu.memory_space<vmem>>, vector<392x64xbf16>,
    return
  }
  func.func @transform_0(%arg0: i32) -> (i32, i32) {
    %c0_i32 = arith.constant 0 : i32
    %c0_i32_0 = arith.constant 0 : i32
    %c0_i32_1 = arith.constant 0 : i32
    return %c0_i32, %c0_i32_0 : i32, i32
  }
  func.func @transform_1(%arg0: i32) -> (i32, i32) {
    %c0_i32 = arith.constant 0 : i32
    %c0_i32_0 = arith.constant 0 : i32
    %c0_i32_1 = arith.constant 0 : i32
    return %c0_i32, %c0_i32_0 : i32, i32
  }
  func.func @transform_2(%arg0: i32) -> (i32, i32) {
    %c0_i32 = arith.constant 0 : i32
    %c0_i32_0 = arith.constant 0 : i32
    %c0_i32_1 = arith.constant 0 : i32
    return %c0_i32, %c0_i32_0 : i32, i32
  }
  func.func @transform_3(%arg0: i32) -> (i32, i32) {
    %c0_i32 = arith.constant 0 : i32
    %c0_i32_0 = arith.constant 0 : i32
    %c0_i32_1 = arith.constant 0 : i32
    return %c0_i32, %c0_i32_0 : i32, i32
  }
}

module attributes {stable_mosaic.version = 11 : i64} {
  func.func @_mm_bias_relu_kernel(%arg0: i32, %arg1: memref<72x1024xbf16, #tpu.memory_space<vmem>>, %arg2: memref<1024x128xbf16, #tpu.memory_space<vmem>>, %arg3: memref<1x128xf32, #tpu.memory_space<vmem>>, %arg4: memref<72x128xbf16, #tpu.memory_space<vmem>>) attributes {dimension_semantics = [#tpu.dimension_semantics<arbitrary>], iteration_bounds = array<i64: 1>, scalar_prefetch = 0 : i64, scratch_operands = 0 : i64, tpu.core_type = #tpu.core_type<tc>, window_params = [{pipeline_mode = #tpu.pipeline_mode<synchronous>, transform_indices = @transform_0, window_bounds = array<i64: 72, 1024>}, {pipeline_mode = #tpu.pipeline_mode<synchronous>, transform_indices = @transform_1, window_bounds = array<i64: 1024, 128>}, {pipeline_mode = #tpu.pipeline_mode<synchronous>, transform_indices = @transform_2, window_bounds = array<i64: 1, 128>}, {pipeline_mode = #tpu.pipeline_mode<synchronous>, transform_indices = @transform_3, window_bounds = array<i64: 72, 128>}]} {
    %c0 = arith.constant 0 : index
    %c0_0 = arith.constant 0 : index
    %0 = vector.load %arg1[%c0, %c0_0] : memref<72x1024xbf16, #tpu.memory_space<vmem>>, vector<72x1024xbf16>
    %c0_1 = arith.constant 0 : index
    %c0_2 = arith.constant 0 : index
    %1 = vector.load %arg2[%c0_1, %c0_2] : memref<1024x128xbf16, #tpu.memory_space<vmem>>, vector<1024x128xbf16>
    %cst = arith.constant dense<0.000000e+00> : vector<72x128xf32>
    %2 = tpu.matmul %0, %1, %cst {dimension_numbers = #tpu.dot_dimension_numbers<[1], [0], [0], [1], [0, 0, 1, 1], [], []>} : vector<72x1024xbf16>, vector<1024x128xbf16>, vector<72x128xf32> -> vector<72x128xf32>
    %c0_3 = arith.constant 0 : index
    %c0_4 = arith.constant 0 : index
    %3 = vector.load %arg3[%c0_3, %c0_4] : memref<1x128xf32, #tpu.memory_space<vmem>>, vector<1x128xf32>
    %4 = vector.broadcast %3 : vector<1x128xf32> to vector<72x128xf32>
    %5 = arith.addf %2, %4 : vector<72x128xf32>
    %cst_5 = arith.constant 0.000000e+00 : f32
    %6 = vector.broadcast %cst_5 : f32 to vector<72x128xf32>
    %7 = arith.maximumf %5, %6 : vector<72x128xf32>
    %8 = arith.truncf %7 : vector<72x128xf32> to vector<72x128xbf16>
    %c0_6 = arith.constant 0 : index
    %c0_7 = arith.constant 0 : index
    %9 = vector.load %arg4[%c0_6, %c0_7] : memref<72x128xbf16, #tpu.memory_space<vmem>>, vector<72x128xbf16>
    tpu.vector_store %arg4[%c0_6, %c0_7], %8 {strides = array<i32>} : memref<72x128xbf16, #tpu.memory_space<vmem>>, vector<72x128xbf16>,
    return
  }
  func.func @transform_0(%arg0: i32) -> (i32, i32) {
    %c0_i32 = arith.constant 0 : i32
    %c0_i32_0 = arith.constant 0 : i32
    %c0_i32_1 = arith.constant 0 : i32
    return %c0_i32, %c0_i32_0 : i32, i32
  }
  func.func @transform_1(%arg0: i32) -> (i32, i32) {
    %c0_i32 = arith.constant 0 : i32
    %c0_i32_0 = arith.constant 0 : i32
    %c0_i32_1 = arith.constant 0 : i32
    return %c0_i32, %c0_i32_0 : i32, i32
  }
  func.func @transform_2(%arg0: i32) -> (i32, i32) {
    %c0_i32 = arith.constant 0 : i32
    %c0_i32_0 = arith.constant 0 : i32
    %c0_i32_1 = arith.constant 0 : i32
    return %c0_i32, %c0_i32_0 : i32, i32
  }
  func.func @transform_3(%arg0: i32) -> (i32, i32) {
    %c0_i32 = arith.constant 0 : i32
    %c0_i32_0 = arith.constant 0 : i32
    %c0_i32_1 = arith.constant 0 : i32
    return %c0_i32, %c0_i32_0 : i32, i32
  }
}

module attributes {stable_mosaic.version = 11 : i64} {
  func.func @_mm_bias_relu_kernel(%arg0: i32, %arg1: memref<8x2048xbf16, #tpu.memory_space<vmem>>, %arg2: memref<2048x256xbf16, #tpu.memory_space<vmem>>, %arg3: memref<1x256xf32, #tpu.memory_space<vmem>>, %arg4: memref<8x256xf32, #tpu.memory_space<vmem>>) attributes {dimension_semantics = [#tpu.dimension_semantics<arbitrary>], iteration_bounds = array<i64: 1>, scalar_prefetch = 0 : i64, scratch_operands = 0 : i64, tpu.core_type = #tpu.core_type<tc>, window_params = [{pipeline_mode = #tpu.pipeline_mode<synchronous>, transform_indices = @transform_0, window_bounds = array<i64: 8, 2048>}, {pipeline_mode = #tpu.pipeline_mode<synchronous>, transform_indices = @transform_1, window_bounds = array<i64: 2048, 256>}, {pipeline_mode = #tpu.pipeline_mode<synchronous>, transform_indices = @transform_2, window_bounds = array<i64: 1, 256>}, {pipeline_mode = #tpu.pipeline_mode<synchronous>, transform_indices = @transform_3, window_bounds = array<i64: 8, 256>}]} {
    %c0 = arith.constant 0 : index
    %c0_0 = arith.constant 0 : index
    %0 = vector.load %arg1[%c0, %c0_0] : memref<8x2048xbf16, #tpu.memory_space<vmem>>, vector<8x2048xbf16>
    %c0_1 = arith.constant 0 : index
    %c0_2 = arith.constant 0 : index
    %1 = vector.load %arg2[%c0_1, %c0_2] : memref<2048x256xbf16, #tpu.memory_space<vmem>>, vector<2048x256xbf16>
    %cst = arith.constant dense<0.000000e+00> : vector<8x256xf32>
    %2 = tpu.matmul %0, %1, %cst {dimension_numbers = #tpu.dot_dimension_numbers<[1], [0], [0], [1], [0, 0, 1, 1], [], []>} : vector<8x2048xbf16>, vector<2048x256xbf16>, vector<8x256xf32> -> vector<8x256xf32>
    %c0_3 = arith.constant 0 : index
    %c0_4 = arith.constant 0 : index
    %3 = vector.load %arg3[%c0_3, %c0_4] : memref<1x256xf32, #tpu.memory_space<vmem>>, vector<1x256xf32>
    %4 = vector.broadcast %3 : vector<1x256xf32> to vector<8x256xf32>
    %5 = arith.addf %2, %4 : vector<8x256xf32>
    %cst_5 = arith.constant 0.000000e+00 : f32
    %6 = vector.broadcast %cst_5 : f32 to vector<8x256xf32>
    %7 = arith.maximumf %5, %6 : vector<8x256xf32>
    %c0_6 = arith.constant 0 : index
    %c0_7 = arith.constant 0 : index
    %8 = vector.load %arg4[%c0_6, %c0_7] : memref<8x256xf32, #tpu.memory_space<vmem>>, vector<8x256xf32>
    tpu.vector_store %arg4[%c0_6, %c0_7], %7 {strides = array<i32>} : memref<8x256xf32, #tpu.memory_space<vmem>>, vector<8x256xf32>,
    return
  }
  func.func @transform_0(%arg0: i32) -> (i32, i32) {
    %c0_i32 = arith.constant 0 : i32
    %c0_i32_0 = arith.constant 0 : i32
    %c0_i32_1 = arith.constant 0 : i32
    return %c0_i32, %c0_i32_0 : i32, i32
  }
  func.func @transform_1(%arg0: i32) -> (i32, i32) {
    %c0_i32 = arith.constant 0 : i32
    %c0_i32_0 = arith.constant 0 : i32
    %c0_i32_1 = arith.constant 0 : i32
    return %c0_i32, %c0_i32_0 : i32, i32
  }
  func.func @transform_2(%arg0: i32) -> (i32, i32) {
    %c0_i32 = arith.constant 0 : i32
    %c0_i32_0 = arith.constant 0 : i32
    %c0_i32_1 = arith.constant 0 : i32
    return %c0_i32, %c0_i32_0 : i32, i32
  }
  func.func @transform_3(%arg0: i32) -> (i32, i32) {
    %c0_i32 = arith.constant 0 : i32
    %c0_i32_0 = arith.constant 0 : i32
    %c0_i32_1 = arith.constant 0 : i32
    return %c0_i32, %c0_i32_0 : i32, i32
  }
}

</mosaic_0001>

<llo_original>
// kernel: conv_module_forward.4
$region0: #{conv_module_forward.4}
  #allocation0 [shape = 'u32[]', space=smem, size = 0x4, offset = 0x4, fixed_abs, tag = 'smem constant byte address 0x4 - core index']
  #allocation1 [shape = 'u32[144,128]{1,0:T(1,128)}', space=vmem, size = 0x12000, scoped, tag = 'internal scratch']
  %s0 = inlined_call_operand.vmem [shape: bf16[1922,16], index: 0, kind: input, shape index: {}]
  %s1 = inlined_call_operand.vmem [shape: bf16[16,32], index: 1, kind: input, shape index: {}]
  %s2 = inlined_call_operand.vmem [shape: bf16[1922,32], index: 2, kind: output, shape index: {}]
  %s3 = sld [smem:[#allocation0]]
  $region18: #{conv_module_forward.4} parent=0
    _
  %s5 = ssub.s32 1, %s3
  %s6 = scalar_select 0, %s5, %s3
  // Predicated region
  $region2: #{conv_module_forward.4} parent=0 // pred_check
    _
  $region3: #{conv_module_forward.4} parent=0 // pred_check_branch
    %8 = sbr.rel (0) target = $region5
  $region4: #{conv_module_forward.4} parent=0 // pred_region
    _
  $region5: #{conv_module_forward.4} parent=0 // pred_fallthru
    _
  // Predicated region
  $region6: #{conv_module_forward.4} parent=0 // pred_check
    _
  $region7: #{conv_module_forward.4} parent=0 // pred_check_branch
    %10 = sbr.rel (0) target = $region9
  $region8: #{conv_module_forward.4} parent=0 // pred_region
    _
  $region9: #{conv_module_forward.4} parent=0 // pred_fallthru
    _
  %v12 = vld [vmem:[%s0] sm:$0xf]
  %v13 = vld [vmem:[%s0 + $0x4] sm:$0xf]
  %v14 = vld [vmem:[%s0 + $0x8] sm:$0xf]
  %v15 = vld [vmem:[%s0 + $0xc] sm:$0xf]
  %v16 = vld [vmem:[%s0 + $0x10] sm:$0xf]
  %v17 = vld [vmem:[%s0 + $0x14] sm:$0xf]
  %v18 = vld [vmem:[%s0 + $0x18] sm:$0xf]
  %v19 = vld [vmem:[%s0 + $0x1c] sm:$0xf]
  %v20 = vld [vmem:[%s0 + $0x20] sm:$0xf]
  %v21 = vld [vmem:[%s0 + $0x24] sm:$0xf]
  %v22 = vld [vmem:[%s0 + $0x28] sm:$0xf]
  %v23 = vld [vmem:[%s0 + $0x2c] sm:$0xf]
  %v24 = vld [vmem:[%s0 + $0x30] sm:$0xf]
  %v25 = vld [vmem:[%s0 + $0x34] sm:$0xf]
  %v26 = vld [vmem:[%s0 + $0x38] sm:$0xf]
  %v27 = vld [vmem:[%s0 + $0x3c] sm:$0xf]
  %v28 = vld [vmem:[%s0 + $0x40] sm:$0xf]
  %v29 = vld [vmem:[%s0 + $0x44] sm:$0xf]
  %v30 = vld [vmem:[%s0 + $0x48] sm:$0xf]
  %v31 = vld [vmem:[%s0 + $0x4c] sm:$0xf]
  %v32 = vld [vmem:[%s0 + $0x50] sm:$0xf]
  %v33 = vld [vmem:[%s0 + $0x54] sm:$0xf]
  %v34 = vld [vmem:[%s0 + $0x58] sm:$0xf]
  %v35 = vld [vmem:[%s0 + $0x5c] sm:$0xf]
  %v36 = vld [vmem:[%s0 + $0x60] sm:$0xf]
  %v37 = vld [vmem:[%s0 + $0x64] sm:$0xf]
  %v38 = vld [vmem:[%s0 + $0x68] sm:$0xf]
  %v39 = vld [vmem:[%s0 + $0x6c] sm:$0xf]
  %v40 = vld [vmem:[%s0 + $0x70] sm:$0xf]
  %v41 = vld [vmem:[%s0 + $0x74] sm:$0xf]
  %v42 = vld [vmem:[%s0 + $0x78] sm:$0xf]
  %v43 = vld [vmem:[%s0 + $0x7c] sm:$0xf]
  %v44 = vld [vmem:[%s0 + $0x80] sm:$0xf]
  %v45 = vld [vmem:[%s0 + $0x84] sm:$0xf]
  %v46 = vld [vmem:[%s0 + $0x88] sm:$0xf]
  %v47 = vld [vmem:[%s0 + $0x8c] sm:$0xf]
  %v48 = vld [vmem:[%s0 + $0x90] sm:$0xf]
  %v49 = vld [vmem:[%s0 + $0x94] sm:$0xf]
  %v50 = vld [vmem:[%s0 + $0x98] sm:$0xf]
  %v51 = vld [vmem:[%s0 + $0x9c] sm:$0xf]
  %v52 = vld [vmem:[%s0 + $0xa0] sm:$0xf]
  %v53 = vld [vmem:[%s0 + $0xa4] sm:$0xf]
  %v54 = vld [vmem:[%s0 + $0xa8] sm:$0xf]
  %v55 = vld [vmem:[%s0 + $0xac] sm:$0xf]
  %v56 = vld [vmem:[%s0 + $0xb0] sm:$0xf]
  %v57 = vld [vmem:[%s0 + $0xb4] sm:$0xf]
  %v58 = vld [vmem:[%s0 + $0xb8] sm:$0xf]
  %v59 = vld [vmem:[%s0 + $0xbc] sm:$0xf]
  %v60 = vld [vmem:[%s0 + $0xc0] sm:$0xf]
  %v61 = vld [vmem:[%s0 + $0xc4] sm:$0xf]
  %v62 = vld [vmem:[%s0 + $0xc8] sm:$0xf]
  %v63 = vld [vmem:[%s0 + $0xcc] sm:$0xf]
  %v64 = vld [vmem:[%s0 + $0xd0] sm:$0xf]
  %v65 = vld [vmem:[%s0 + $0xd4] sm:$0xf]
  %v66 = vld [vmem:[%s0 + $0xd8] sm:$0xf]
  %v67 = vld [vmem:[%s0 + $0xdc] sm:$0xf]
  %v68 = vld [vmem:[%s0 + $0xe0] sm:$0xf]
  %v69 = vld [vmem:[%s0 + $0xe4] sm:$0xf]
  %v70 = vld [vmem:[%s0 + $0xe8] sm:$0xf]
  %v71 = vld [vmem:[%s0 + $0xec] sm:$0xf]
  %v72 = vld [vmem:[%s0 + $0xf0] sm:$0xf]
  %v73 = vld [vmem:[%s0 + $0xf4] sm:$0xf]
  %v74 = vld [vmem:[%s0 + $0xf8] sm:$0xf]
  %v75 = vld [vmem:[%s0 + $0xfc] sm:$0xf]
  %v76 = vld [vmem:[%s0 + $0x100] sm:$0xf]
  %v77 = vld [vmem:[%s0 + $0x104] sm:$0xf]
  %v78 = vld [vmem:[%s0 + $0x108] sm:$0xf]
  %v79 = vld [vmem:[%s0 + $0x10c] sm:$0xf]
  %v80 = vld [vmem:[%s0 + $0x110] sm:$0xf]
  %v81 = vld [vmem:[%s0 + $0x114] sm:$0xf]
  %v82 = vld [vmem:[%s0 + $0x118] sm:$0xf]
  %v83 = vld [vmem:[%s0 + $0x11c] sm:$0xf]
  %v84 = vld [vmem:[%s0 + $0x120] sm:$0xf]
  %v85 = vld [vmem:[%s0 + $0x124] sm:$0xf]
  %v86 = vld [vmem:[%s0 + $0x128] sm:$0xf]
  %v87 = vld [vmem:[%s0 + $0x12c] sm:$0xf]
  %v88 = vld [vmem:[%s0 + $0x130] sm:$0xf]
  %v89 = vld [vmem:[%s0 + $0x134] sm:$0xf]
  %v90 = vld [vmem:[%s0 + $0x138] sm:$0xf]
  %v91 = vld [vmem:[%s0 + $0x13c] sm:$0xf]
  %v92 = vld [vmem:[%s0 + $0x140] sm:$0xf]
  %v93 = vld [vmem:[%s0 + $0x144] sm:$0xf]
  %v94 = vld [vmem:[%s0 + $0x148] sm:$0xf]
  %v95 = vld [vmem:[%s0 + $0x14c] sm:$0xf]
  %v96 = vld [vmem:[%s0 + $0x150] sm:$0xf]
  %v97 = vld [vmem:[%s0 + $0x154] sm:$0xf]
  %v98 = vld [vmem:[%s0 + $0x158] sm:$0xf]
  %v99 = vld [vmem:[%s0 + $0x15c] sm:$0xf]
  %v100 = vld [vmem:[%s0 + $0x160] sm:$0xf]
  %v101 = vld [vmem:[%s0 + $0x164] sm:$0xf]
  %v102 = vld [vmem:[%s0 + $0x168] sm:$0xf]
  %v103 = vld [vmem:[%s0 + $0x16c] sm:$0xf]
  %v104 = vld [vmem:[%s0 + $0x170] sm:$0xf]
  %v105 = vld [vmem:[%s0 + $0x174] sm:$0xf]
  %v106 = vld [vmem:[%s0 + $0x178] sm:$0xf]
  %v107 = vld [vmem:[%s0 + $0x17c] sm:$0xf]
  %v108 = vld [vmem:[%s0 + $0x180] sm:$0xf]
  %v109 = vld [vmem:[%s0 + $0x184] sm:$0xf]
  %v110 = vld [vmem:[%s0 + $0x188] sm:$0xf]
  %v111 = vld [vmem:[%s0 + $0x18c] sm:$0xf]
  %v112 = vld [vmem:[%s0 + $0x190] sm:$0xf]
  %v113 = vld [vmem:[%s0 + $0x194] sm:$0xf]
  %v114 = vld [vmem:[%s0 + $0x198] sm:$0xf]
  %v115 = vld [vmem:[%s0 + $0x19c] sm:$0xf]
  %v116 = vld [vmem:[%s0 + $0x1a0] sm:$0xf]
  %v117 = vld [vmem:[%s0 + $0x1a4] sm:$0xf]
  %v118 = vld [vmem:[%s0 + $0x1a8] sm:$0xf]
  %v119 = vld [vmem:[%s0 + $0x1ac] sm:$0xf]
  %v120 = vld [vmem:[%s0 + $0x1b0] sm:$0xf]
  %v121 = vld [vmem:[%s0 + $0x1b4] sm:$0xf]
  %v122 = vld [vmem:[%s0 + $0x1b8] sm:$0xf]
  %v123 = vld [vmem:[%s0 + $0x1bc] sm:$0xf]
  %v124 = vld [vmem:[%s0 + $0x1c0] sm:$0xf]
  %v125 = vld [vmem:[%s0 + $0x1c4] sm:$0xf]
  %v126 = vld [vmem:[%s0 + $0x1c8] sm:$0xf]
  %v127 = vld [vmem:[%s0 + $0x1cc] sm:$0xf]
  %v128 = vld [vmem:[%s0 + $0x1d0] sm:$0xf]
  %v129 = vld [vmem:[%s0 + $0x1d4] sm:$0xf]
  %v130 = vld [vmem:[%s0 + $0x1d8] sm:$0xf]
  %v131 = vld [vmem:[%s0 + $0x1dc] sm:$0xf]
  %v132 = vld [vmem:[%s0 + $0x1e0] sm:$0xf]
  %v133 = vld [vmem:[%s0 + $0x1e4] sm:$0xf]
  %v134 = vld [vmem:[%s0 + $0x1e8] sm:$0xf]
  %v135 = vld [vmem:[%s0 + $0x1ec] sm:$0xf]
  %v136 = vld [vmem:[%s0 + $0x1f0] sm:$0xf]
  %v137 = vld [vmem:[%s0 + $0x1f4] sm:$0xf]
  %v138 = vld [vmem:[%s0 + $0x1f8] sm:$0xf]
  %v139 = vld [vmem:[%s0 + $0x1fc] sm:$0xf]
  %v140 = vld [vmem:[%s0 + $0x200] sm:$0xf]
  %v141 = vld [vmem:[%s0 + $0x204] sm:$0xf]
  %v142 = vld [vmem:[%s0 + $0x208] sm:$0xf]
  %v143 = vld [vmem:[%s0 + $0x20c] sm:$0xf]
  %v144 = vld [vmem:[%s0 + $0x210] sm:$0xf]
  %v145 = vld [vmem:[%s0 + $0x214] sm:$0xf]
  %v146 = vld [vmem:[%s0 + $0x218] sm:$0xf]
  %v147 = vld [vmem:[%s0 + $0x21c] sm:$0xf]
  %v148 = vld [vmem:[%s0 + $0x220] sm:$0xf]
  %v149 = vld [vmem:[%s0 + $0x224] sm:$0xf]
  %v150 = vld [vmem:[%s0 + $0x228] sm:$0xf]
  %v151 = vld [vmem:[%s0 + $0x22c] sm:$0xf]
  %v152 = vld [vmem:[%s0 + $0x230] sm:$0xf]
  %v153 = vld [vmem:[%s0 + $0x234] sm:$0xf]
  %v154 = vld [vmem:[%s0 + $0x238] sm:$0xf]
  %v155 = vld [vmem:[%s0 + $0x23c] sm:$0xf]
  %v156 = vld [vmem:[%s0 + $0x240] sm:$0xf]
  %v157 = vld [vmem:[%s0 + $0x244] sm:$0xf]
  %v158 = vld [vmem:[%s0 + $0x248] sm:$0xf]
  %v159 = vld [vmem:[%s0 + $0x24c] sm:$0xf]
  %v160 = vld [vmem:[%s0 + $0x250] sm:$0xf]
  %v161 = vld [vmem:[%s0 + $0x254] sm:$0xf]
  %v162 = vld [vmem:[%s0 + $0x258] sm:$0xf]
  %v163 = vld [vmem:[%s0 + $0x25c] sm:$0xf]
  %v164 = vld [vmem:[%s0 + $0x260] sm:$0xf]
  %v165 = vld [vmem:[%s0 + $0x264] sm:$0xf]
  %v166 = vld [vmem:[%s0 + $0x268] sm:$0xf]
  %v167 = vld [vmem:[%s0 + $0x26c] sm:$0xf]
  %v168 = vld [vmem:[%s0 + $0x270] sm:$0xf]
  %v169 = vld [vmem:[%s0 + $0x274] sm:$0xf]
  %v170 = vld [vmem:[%s0 + $0x278] sm:$0xf]
  %v171 = vld [vmem:[%s0 + $0x27c] sm:$0xf]
  %v172 = vld [vmem:[%s0 + $0x280] sm:$0xf]
  %v173 = vld [vmem:[%s0 + $0x284] sm:$0xf]
  %v174 = vld [vmem:[%s0 + $0x288] sm:$0xf]
  %v175 = vld [vmem:[%s0 + $0x28c] sm:$0xf]
  %v176 = vld [vmem:[%s0 + $0x290] sm:$0xf]
  %v177 = vld [vmem:[%s0 + $0x294] sm:$0xf]
  %v178 = vld [vmem:[%s0 + $0x298] sm:$0xf]
  %v179 = vld [vmem:[%s0 + $0x29c] sm:$0xf]
  %v180 = vld [vmem:[%s0 + $0x2a0] sm:$0xf]
  %v181 = vld [vmem:[%s0 + $0x2a4] sm:$0xf]
  %v182 = vld [vmem:[%s0 + $0x2a8] sm:$0xf]
  %v183 = vld [vmem:[%s0 + $0x2ac] sm:$0xf]
  %v184 = vld [vmem:[%s0 + $0x2b0] sm:$0xf]
  %v185 = vld [vmem:[%s0 + $0x2b4] sm:$0xf]
  %v186 = vld [vmem:[%s0 + $0x2b8] sm:$0xf]
  %v187 = vld [vmem:[%s0 + $0x2bc] sm:$0xf]
  %v188 = vld [vmem:[%s0 + $0x2c0] sm:$0xf]
  %v189 = vld [vmem:[%s0 + $0x2c4] sm:$0xf]
  %v190 = vld [vmem:[%s0 + $0x2c8] sm:$0xf]
  %v191 = vld [vmem:[%s0 + $0x2cc] sm:$0xf]
  %v192 = vld [vmem:[%s0 + $0x2d0] sm:$0xf]
  %v193 = vld [vmem:[%s0 + $0x2d4] sm:$0xf]
  %v194 = vld [vmem:[%s0 + $0x2d8] sm:$0xf]
  %v195 = vld [vmem:[%s0 + $0x2dc] sm:$0xf]
  %v196 = vld [vmem:[%s0 + $0x2e0] sm:$0xf]
  %v197 = vld [vmem:[%s0 + $0x2e4] sm:$0xf]
  %v198 = vld [vmem:[%s0 + $0x2e8] sm:$0xf]
  %v199 = vld [vmem:[%s0 + $0x2ec] sm:$0xf]
  %v200 = vld [vmem:[%s0 + $0x2f0] sm:$0xf]
  %v201 = vld [vmem:[%s0 + $0x2f4] sm:$0xf]
  %v202 = vld [vmem:[%s0 + $0x2f8] sm:$0xf]
  %v203 = vld [vmem:[%s0 + $0x2fc] sm:$0xf]
  %v204 = vld [vmem:[%s0 + $0x300] sm:$0xf]
  %v205 = vld [vmem:[%s0 + $0x304] sm:$0xf]
  %v206 = vld [vmem:[%s0 + $0x308] sm:$0xf]
  %v207 = vld [vmem:[%s0 + $0x30c] sm:$0xf]
  %v208 = vld [vmem:[%s0 + $0x310] sm:$0xf]
  %v209 = vld [vmem:[%s0 + $0x314] sm:$0xf]
  %v210 = vld [vmem:[%s0 + $0x318] sm:$0xf]
  %v211 = vld [vmem:[%s0 + $0x31c] sm:$0xf]
  %v212 = vld [vmem:[%s0 + $0x320] sm:$0xf]
  %v213 = vld [vmem:[%s0 + $0x324] sm:$0xf]
  %v214 = vld [vmem:[%s0 + $0x328] sm:$0xf]
  %v215 = vld [vmem:[%s0 + $0x32c] sm:$0xf]
  %v216 = vld [vmem:[%s0 + $0x330] sm:$0xf]
  %v217 = vld [vmem:[%s0 + $0x334] sm:$0xf]
  %v218 = vld [vmem:[%s0 + $0x338] sm:$0xf]
  %v219 = vld [vmem:[%s0 + $0x33c] sm:$0xf]
  %v220 = vld [vmem:[%s0 + $0x340] sm:$0xf]
  %v221 = vld [vmem:[%s0 + $0x344] sm:$0xf]
  %v222 = vld [vmem:[%s0 + $0x348] sm:$0xf]
  %v223 = vld [vmem:[%s0 + $0x34c] sm:$0xf]
  %v224 = vld [vmem:[%s0 + $0x350] sm:$0xf]
  %v225 = vld [vmem:[%s0 + $0x354] sm:$0xf]
  %v226 = vld [vmem:[%s0 + $0x358] sm:$0xf]
  %v227 = vld [vmem:[%s0 + $0x35c] sm:$0xf]
  %v228 = vld [vmem:[%s0 + $0x360] sm:$0xf]
  %v229 = vld [vmem:[%s0 + $0x364] sm:$0xf]
  %v230 = vld [vmem:[%s0 + $0x368] sm:$0xf]
  %v231 = vld [vmem:[%s0 + $0x36c] sm:$0xf]
  %v232 = vld [vmem:[%s0 + $0x370] sm:$0xf]
  %v233 = vld [vmem:[%s0 + $0x374] sm:$0xf]
  %v234 = vld [vmem:[%s0 + $0x378] sm:$0xf]
  %v235 = vld [vmem:[%s0 + $0x37c] sm:$0xf]
  %v236 = vld [vmem:[%s0 + $0x380] sm:$0xf]
  %v237 = vld [vmem:[%s0 + $0x384] sm:$0xf]
  %v238 = vld [vmem:[%s0 + $0x388] sm:$0xf]
  %v239 = vld [vmem:[%s0 + $0x38c] sm:$0xf]
  %v240 = vld [vmem:[%s0 + $0x390] sm:$0xf]
  %v241 = vld [vmem:[%s0 + $0x394] sm:$0xf]
  %v242 = vld [vmem:[%s0 + $0x398] sm:$0xf]
  %v243 = vld [vmem:[%s0 + $0x39c] sm:$0xf]
  %v244 = vld [vmem:[%s0 + $0x3a0] sm:$0xf]
  %v245 = vld [vmem:[%s0 + $0x3a4] sm:$0xf]
  %v246 = vld [vmem:[%s0 + $0x3a8] sm:$0xf]
  %v247 = vld [vmem:[%s0 + $0x3ac] sm:$0xf]
  %v248 = vld [vmem:[%s0 + $0x3b0] sm:$0xf]
  %v249 = vld [vmem:[%s0 + $0x3b4] sm:$0xf]
  %v250 = vld [vmem:[%s0 + $0x3b8] sm:$0xf]
  %v251 = vld [vmem:[%s0 + $0x3bc] sm:$0xf]
  %v252 = vld [vmem:[%s0 + $0x3c0] sm:$0x1]
  %v253 = vld [vmem:[%s1] sm:$0xf]
  %v254 = vld [vmem:[%s1 + $0x4] sm:$0xf]
  %v496 = vunpack.c.l.b16 %v12
  %v497 = vunpack.c.l.b16 %v13
  %v498 = vunpack.c.l.b16 %v14
  %v499 = vunpack.c.l.b16 %v15
  %v500 = vunpack.c.l.b16 %v16
  %v501 = vunpack.c.l.b16 %v17
  %v502 = vunpack.c.l.b16 %v18
  %v503 = vunpack.c.l.b16 %v19
  %v504 = vunpack.c.l.b16 %v20
  %v505 = vunpack.c.l.b16 %v21
  %v506 = vunpack.c.l.b16 %v22
  %v507 = vunpack.c.l.b16 %v23
  %v508 = vunpack.c.l.b16 %v24
  %v509 = vunpack.c.l.b16 %v25
  %v510 = vunpack.c.l.b16 %v26
  %v511 = vunpack.c.l.b16 %v27
  %v512 = vunpack.c.l.b16 %v28
  %v513 = vunpack.c.l.b16 %v29
  %v514 = vunpack.c.l.b16 %v30
  %v515 = vunpack.c.l.b16 %v31
  %v516 = vunpack.c.l.b16 %v32
  %v517 = vunpack.c.l.b16 %v33
  %v518 = vunpack.c.l.b16 %v34
  %v519 = vunpack.c.l.b16 %v35
  %v520 = vunpack.c.l.b16 %v36
  %v521 = vunpack.c.l.b16 %v37
  %v522 = vunpack.c.l.b16 %v38
  %v523 = vunpack.c.l.b16 %v39
  %v524 = vunpack.c.l.b16 %v40
  %v525 = vunpack.c.l.b16 %v41
  %v526 = vunpack.c.l.b16 %v42
  %v527 = vunpack.c.l.b16 %v43
  %v528 = vunpack.c.l.b16 %v44
  %v529 = vunpack.c.l.b16 %v45
  %v530 = vunpack.c.l.b16 %v46
  %v531 = vunpack.c.l.b16 %v47
  %v532 = vunpack.c.l.b16 %v48
  %v533 = vunpack.c.l.b16 %v49
  %v534 = vunpack.c.l.b16 %v50
  %v535 = vunpack.c.l.b16 %v51
  %v536 = vunpack.c.l.b16 %v52
  %v537 = vunpack.c.l.b16 %v53
  %v538 = vunpack.c.l.b16 %v54
  %v539 = vunpack.c.l.b16 %v55
  %v540 = vunpack.c.l.b16 %v56
  %v541 = vunpack.c.l.b16 %v57
  %v542 = vunpack.c.l.b16 %v58
  %v543 = vunpack.c.l.b16 %v59
  %v544 = vunpack.c.l.b16 %v60
  %v545 = vunpack.c.l.b16 %v61
  %v546 = vunpack.c.l.b16 %v62
  %v547 = vunpack.c.l.b16 %v63
  %v548 = vunpack.c.l.b16 %v64
  %v549 = vunpack.c.l.b16 %v65
  %v550 = vunpack.c.l.b16 %v66
  %v551 = vunpack.c.l.b16 %v67
  %v552 = vunpack.c.l.b16 %v68
  %v553 = vunpack.c.l.b16 %v69
  %v554 = vunpack.c.l.b16 %v70
  %v555 = vunpack.c.l.b16 %v71
  %v556 = vunpack.c.l.b16 %v72
  %v557 = vunpack.c.l.b16 %v73
  %v558 = vunpack.c.l.b16 %v74
  %v559 = vunpack.c.l.b16 %v75
  %v560 = vunpack.c.l.b16 %v76
  %v561 = vunpack.c.l.b16 %v77
  %v562 = vunpack.c.l.b16 %v78
  %v563 = vunpack.c.l.b16 %v79
  %v564 = vunpack.c.l.b16 %v80
  %v565 = vunpack.c.l.b16 %v81
  %v566 = vunpack.c.l.b16 %v82
  %v567 = vunpack.c.l.b16 %v83
  %v568 = vunpack.c.l.b16 %v84
  %v569 = vunpack.c.l.b16 %v85
  %v570 = vunpack.c.l.b16 %v86
  %v571 = vunpack.c.l.b16 %v87
  %v572 = vunpack.c.l.b16 %v88
  %v573 = vunpack.c.l.b16 %v89
  %v574 = vunpack.c.l.b16 %v90
  %v575 = vunpack.c.l.b16 %v91
  %v576 = vunpack.c.l.b16 %v92
  %v577 = vunpack.c.l.b16 %v93
  %v578 = vunpack.c.l.b16 %v94
  %v579 = vunpack.c.l.b16 %v95
  %v580 = vunpack.c.l.b16 %v96
  %v581 = vunpack.c.l.b16 %v97
  %v582 = vunpack.c.l.b16 %v98
  %v583 = vunpack.c.l.b16 %v99
  %v584 = vunpack.c.l.b16 %v100
  %v585 = vunpack.c.l.b16 %v101
  %v586 = vunpack.c.l.b16 %v102
  %v587 = vunpack.c.l.b16 %v103
  %v588 = vunpack.c.l.b16 %v104
  %v589 = vunpack.c.l.b16 %v105
  %v590 = vunpack.c.l.b16 %v106
  %v591 = vunpack.c.l.b16 %v107
  %v592 = vunpack.c.l.b16 %v108
  %v593 = vunpack.c.l.b16 %v109
  %v594 = vunpack.c.l.b16 %v110
  %v595 = vunpack.c.l.b16 %v111
  %v596 = vunpack.c.l.b16 %v112
  %v597 = vunpack.c.l.b16 %v113
  %v598 = vunpack.c.l.b16 %v114
  %v599 = vunpack.c.l.b16 %v115
  %v600 = vunpack.c.l.b16 %v116
  %v601 = vunpack.c.l.b16 %v117
  %v602 = vunpack.c.l.b16 %v118
  %v603 = vunpack.c.l.b16 %v119
  %v604 = vunpack.c.l.b16 %v120
  %v605 = vunpack.c.l.b16 %v121
  %v606 = vunpack.c.l.b16 %v122
  %v607 = vunpack.c.l.b16 %v123
  %v608 = vunpack.c.l.b16 %v124
  %v609 = vunpack.c.l.b16 %v125
  %v610 = vunpack.c.l.b16 %v126
  %v611 = vunpack.c.l.b16 %v127
  %v612 = vunpack.c.l.b16 %v128
  %v613 = vunpack.c.l.b16 %v129
  %v614 = vunpack.c.l.b16 %v130
  %v615 = vunpack.c.l.b16 %v131
  %v616 = vunpack.c.l.b16 %v132
  %v617 = vunpack.c.l.b16 %v133
  %v618 = vunpack.c.l.b16 %v134
  %v619 = vunpack.c.l.b16 %v135
  %v620 = vunpack.c.l.b16 %v136
  %v621 = vunpack.c.l.b16 %v137
  %v622 = vunpack.c.l.b16 %v138
  %v623 = vunpack.c.l.b16 %v139
  %v624 = vunpack.c.l.b16 %v140
  %v625 = vunpack.c.l.b16 %v141
  %v626 = vunpack.c.l.b16 %v142
  %v627 = vunpack.c.l.b16 %v143
  %v628 = vunpack.c.l.b16 %v144
  %v629 = vunpack.c.l.b16 %v145
  %v630 = vunpack.c.l.b16 %v146
  %v631 = vunpack.c.l.b16 %v147
  %v632 = vunpack.c.l.b16 %v148
  %v633 = vunpack.c.l.b16 %v149
  %v634 = vunpack.c.l.b16 %v150
  %v635 = vunpack.c.l.b16 %v151
  %v636 = vunpack.c.l.b16 %v152
  %v637 = vunpack.c.l.b16 %v153
  %v638 = vunpack.c.l.b16 %v154
  %v639 = vunpack.c.l.b16 %v155
  %v640 = vunpack.c.l.b16 %v156
  %v641 = vunpack.c.l.b16 %v157
  %v642 = vunpack.c.l.b16 %v158
  %v643 = vunpack.c.l.b16 %v159
  %v644 = vunpack.c.l.b16 %v160
  %v645 = vunpack.c.l.b16 %v161
  %v646 = vunpack.c.l.b16 %v162
  %v647 = vunpack.c.l.b16 %v163
  %v648 = vunpack.c.l.b16 %v164
  %v649 = vunpack.c.l.b16 %v165
  %v650 = vunpack.c.l.b16 %v166
  %v651 = vunpack.c.l.b16 %v167
  %v652 = vunpack.c.l.b16 %v168
  %v653 = vunpack.c.l.b16 %v169
  %v654 = vunpack.c.l.b16 %v170
  %v655 = vunpack.c.l.b16 %v171
  %v656 = vunpack.c.l.b16 %v172
  %v657 = vunpack.c.l.b16 %v173
  %v658 = vunpack.c.l.b16 %v174
  %v659 = vunpack.c.l.b16 %v175
  %v660 = vunpack.c.l.b16 %v176
  %v661 = vunpack.c.l.b16 %v177
  %v662 = vunpack.c.l.b16 %v178
  %v663 = vunpack.c.l.b16 %v179
  %v664 = vunpack.c.l.b16 %v180
  %v665 = vunpack.c.l.b16 %v181
  %v666 = vunpack.c.l.b16 %v182
  %v667 = vunpack.c.l.b16 %v183
  %v668 = vunpack.c.l.b16 %v184
  %v669 = vunpack.c.l.b16 %v185
  %v670 = vunpack.c.l.b16 %v186
  %v671 = vunpack.c.l.b16 %v187
  %v672 = vunpack.c.l.b16 %v188
  %v673 = vunpack.c.l.b16 %v189
  %v674 = vunpack.c.l.b16 %v190
  %v675 = vunpack.c.l.b16 %v191
  %v676 = vunpack.c.l.b16 %v192
  %v677 = vunpack.c.l.b16 %v193
  %v678 = vunpack.c.l.b16 %v194
  %v679 = vunpack.c.l.b16 %v195
  %v680 = vunpack.c.l.b16 %v196
  %v681 = vunpack.c.l.b16 %v197
  %v682 = vunpack.c.l.b16 %v198
  %v683 = vunpack.c.l.b16 %v199
  %v684 = vunpack.c.l.b16 %v200
  %v685 = vunpack.c.l.b16 %v201
  %v686 = vunpack.c.l.b16 %v202
  %v687 = vunpack.c.l.b16 %v203
  %v688 = vunpack.c.l.b16 %v204
  %v689 = vunpack.c.l.b16 %v205
  %v690 = vunpack.c.l.b16 %v206
  %v691 = vunpack.c.l.b16 %v207
  %v692 = vunpack.c.l.b16 %v208
  %v693 = vunpack.c.l.b16 %v209
  %v694 = vunpack.c.l.b16 %v210
  %v695 = vunpack.c.l.b16 %v211
  %v696 = vunpack.c.l.b16 %v212
  %v697 = vunpack.c.l.b16 %v213
  %v698 = vunpack.c.l.b16 %v214
  %v699 = vunpack.c.l.b16 %v215
  %v700 = vunpack.c.l.b16 %v216
  %v701 = vunpack.c.l.b16 %v217
  %v702 = vunpack.c.l.b16 %v218
  %v703 = vunpack.c.l.b16 %v219
  %v704 = vunpack.c.l.b16 %v220
  %v705 = vunpack.c.l.b16 %v221
  %v706 = vunpack.c.l.b16 %v222
  %v707 = vunpack.c.l.b16 %v223
  %v708 = vunpack.c.l.b16 %v224
  %v709 = vunpack.c.l.b16 %v225
  %v710 = vunpack.c.l.b16 %v226
  %v711 = vunpack.c.l.b16 %v227
  %v712 = vunpack.c.l.b16 %v228
  %v713 = vunpack.c.l.b16 %v229
  %v714 = vunpack.c.l.b16 %v230
  %v715 = vunpack.c.l.b16 %v231
  %v716 = vunpack.c.l.b16 %v232
  %v717 = vunpack.c.l.b16 %v233
  %v718 = vunpack.c.l.b16 %v234
  %v719 = vunpack.c.l.b16 %v235
  %v720 = vunpack.c.l.b16 %v236
  %v721 = vunpack.c.l.b16 %v237
  %v722 = vunpack.c.l.b16 %v238
  %v723 = vunpack.c.l.b16 %v239
  %v724 = vunpack.c.l.b16 %v240
  %v725 = vunpack.c.l.b16 %v241
  %v726 = vunpack.c.l.b16 %v242
  %v727 = vunpack.c.l.b16 %v243
  %v728 = vunpack.c.l.b16 %v244
  %v729 = vunpack.c.l.b16 %v245
  %v730 = vunpack.c.l.b16 %v246
  %v731 = vunpack.c.l.b16 %v247
  %v732 = vunpack.c.l.b16 %v248
  %v733 = vunpack.c.l.b16 %v249
  %v734 = vunpack.c.l.b16 %v250
  %v735 = vunpack.c.l.b16 %v251
  %v736 = vunpack.c.l.b16 %v252
  %v737 = vpack.c.b16 %v497, %v496
  %v738 = vpack.c.b16 %v499, %v498
  %v739 = vpack.c.b16 %v501, %v500
  %v740 = vpack.c.b16 %v503, %v502
  %v741 = vpack.c.b16 %v505, %v504
  %v742 = vpack.c.b16 %v507, %v506
  %v743 = vpack.c.b16 %v509, %v508
  %v744 = vpack.c.b16 %v511, %v510
  %v745 = vpack.c.b16 %v513, %v512
  %v746 = vpack.c.b16 %v515, %v514
  %v747 = vpack.c.b16 %v517, %v516
  %v748 = vpack.c.b16 %v519, %v518
  %v749 = vpack.c.b16 %v521, %v520
  %v750 = vpack.c.b16 %v523, %v522
  %v751 = vpack.c.b16 %v525, %v524
  %v752 = vpack.c.b16 %v527, %v526
  %v753 = vpack.c.b16 %v529, %v528
  %v754 = vpack.c.b16 %v531, %v530
  %v755 = vpack.c.b16 %v533, %v532
  %v756 = vpack.c.b16 %v535, %v534
  %v757 = vpack.c.b16 %v537, %v536
  %v758 = vpack.c.b16 %v539, %v538
  %v759 = vpack.c.b16 %v541, %v540
  %v760 = vpack.c.b16 %v543, %v542
  %v761 = vpack.c.b16 %v545, %v544
  %v762 = vpack.c.b16 %v547, %v546
  %v763 = vpack.c.b16 %v549, %v548
  %v764 = vpack.c.b16 %v551, %v550
  %v765 = vpack.c.b16 %v553, %v552
  %v766 = vpack.c.b16 %v555, %v554
  %v767 = vpack.c.b16 %v557, %v556
  %v768 = vpack.c.b16 %v559, %v558
  %v769 = vpack.c.b16 %v561, %v560
  %v770 = vpack.c.b16 %v563, %v562
  %v771 = vpack.c.b16 %v565, %v564
  %v772 = vpack.c.b16 %v567, %v566
  %v773 = vpack.c.b16 %v569, %v568
  %v774 = vpack.c.b16 %v571, %v570
  %v775 = vpack.c.b16 %v573, %v572
  %v776 = vpack.c.b16 %v575, %v574
  %v777 = vpack.c.b16 %v577, %v576
  %v778 = vpack.c.b16 %v579, %v578
  %v779 = vpack.c.b16 %v581, %v580
  %v780 = vpack.c.b16 %v583, %v582
  %v781 = vpack.c.b16 %v585, %v584
  %v782 = vpack.c.b16 %v587, %v586
  %v783 = vpack.c.b16 %v589, %v588
  %v784 = vpack.c.b16 %v591, %v590
  %v785 = vpack.c.b16 %v593, %v592
  %v786 = vpack.c.b16 %v595, %v594
  %v787 = vpack.c.b16 %v597, %v596
  %v788 = vpack.c.b16 %v599, %v598
  %v789 = vpack.c.b16 %v601, %v600
  %v790 = vpack.c.b16 %v603, %v602
  %v791 = vpack.c.b16 %v605, %v604
  %v792 = vpack.c.b16 %v607, %v606
  %v793 = vpack.c.b16 %v609, %v608
  %v794 = vpack.c.b16 %v611, %v610
  %v795 = vpack.c.b16 %v613, %v612
  %v796 = vpack.c.b16 %v615, %v614
  %v797 = vpack.c.b16 %v617, %v616
  %v798 = vpack.c.b16 %v619, %v618
  %v799 = vpack.c.b16 %v621, %v620
  %v800 = vpack.c.b16 %v623, %v622
  %v801 = vpack.c.b16 %v625, %v624
  %v802 = vpack.c.b16 %v627, %v626
  %v803 = vpack.c.b16 %v629, %v628
  %v804 = vpack.c.b16 %v631, %v630
  %v805 = vpack.c.b16 %v633, %v632
  %v806 = vpack.c.b16 %v635, %v634
  %v807 = vpack.c.b16 %v637, %v636
  %v808 = vpack.c.b16 %v639, %v638
  %v809 = vpack.c.b16 %v641, %v640
  %v810 = vpack.c.b16 %v643, %v642
  %v811 = vpack.c.b16 %v645, %v644
  %v812 = vpack.c.b16 %v647, %v646
  %v813 = vpack.c.b16 %v649, %v648
  %v814 = vpack.c.b16 %v651, %v650
  %v815 = vpack.c.b16 %v653, %v652
  %v816 = vpack.c.b16 %v655, %v654
  %v817 = vpack.c.b16 %v657, %v656
  %v818 = vpack.c.b16 %v659, %v658
  %v819 = vpack.c.b16 %v661, %v660
  %v820 = vpack.c.b16 %v663, %v662
  %v821 = vpack.c.b16 %v665, %v664
  %v822 = vpack.c.b16 %v667, %v666
  %v823 = vpack.c.b16 %v669, %v668
  %v824 = vpack.c.b16 %v671, %v670
  %v825 = vpack.c.b16 %v673, %v672
  %v826 = vpack.c.b16 %v675, %v674
  %v827 = vpack.c.b16 %v677, %v676
  %v828 = vpack.c.b16 %v679, %v678
  %v829 = vpack.c.b16 %v681, %v680
  %v830 = vpack.c.b16 %v683, %v682
  %v831 = vpack.c.b16 %v685, %v684
  %v832 = vpack.c.b16 %v687, %v686
  %v833 = vpack.c.b16 %v689, %v688
  %v834 = vpack.c.b16 %v691, %v690
  %v835 = vpack.c.b16 %v693, %v692
  %v836 = vpack.c.b16 %v695, %v694
  %v837 = vpack.c.b16 %v697, %v696
  %v838 = vpack.c.b16 %v699, %v698
  %v839 = vpack.c.b16 %v701, %v700
  %v840 = vpack.c.b16 %v703, %v702
  %v841 = vpack.c.b16 %v705, %v704
  %v842 = vpack.c.b16 %v707, %v706
  %v843 = vpack.c.b16 %v709, %v708
  %v844 = vpack.c.b16 %v711, %v710
  %v845 = vpack.c.b16 %v713, %v712
  %v846 = vpack.c.b16 %v715, %v714
  %v847 = vpack.c.b16 %v717, %v716
  %v848 = vpack.c.b16 %v719, %v718
  %v849 = vpack.c.b16 %v721, %v720
  %v850 = vpack.c.b16 %v723, %v722
  %v851 = vpack.c.b16 %v725, %v724
  %v852 = vpack.c.b16 %v727, %v726
  %v853 = vpack.c.b16 %v729, %v728
  %v854 = vpack.c.b16 %v731, %v730
  %v855 = vpack.c.b16 %v733, %v732
  %v856 = vpack.c.b16 %v735, %v734
  %v857 = vpack.c.b16 %v736, %v736
  %v860 = vunpack.c.l.b16 %v253
  %v861 = vunpack.c.l.b16 %v254
  %v862 = vpack.c.b16 %v861, %v860
  %vm864 = vcmask 130048
  %v866 = vsel %vm864, %v737, 0
  %v869 = vsel %vm864, %v738, 0
  %v872 = vsel %vm864, %v739, 0
  %v875 = vsel %vm864, %v740, 0
  %v878 = vsel %vm864, %v741, 0
  %v881 = vsel %vm864, %v742, 0
  %v884 = vsel %vm864, %v743, 0
  %v887 = vsel %vm864, %v744, 0
  %v890 = vsel %vm864, %v745, 0
  %v893 = vsel %vm864, %v746, 0
  %v896 = vsel %vm864, %v747, 0
  %v899 = vsel %vm864, %v748, 0
  %v902 = vsel %vm864, %v749, 0
  %v905 = vsel %vm864, %v750, 0
  %v908 = vsel %vm864, %v751, 0
  %v911 = vsel %vm864, %v752, 0
  %v914 = vsel %vm864, %v753, 0
  %v917 = vsel %vm864, %v754, 0
  %v920 = vsel %vm864, %v755, 0
  %v923 = vsel %vm864, %v756, 0
  %v926 = vsel %vm864, %v757, 0
  %v929 = vsel %vm864, %v758, 0
  %v932 = vsel %vm864, %v759, 0
  %v935 = vsel %vm864, %v760, 0
  %v938 = vsel %vm864, %v761, 0
  %v941 = vsel %vm864, %v762, 0
  %v944 = vsel %vm864, %v763, 0
  %v947 = vsel %vm864, %v764, 0
  %v950 = vsel %vm864, %v765, 0
  %v953 = vsel %vm864, %v766, 0
  %v956 = vsel %vm864, %v767, 0
  %v959 = vsel %vm864, %v768, 0
  %v962 = vsel %vm864, %v769, 0
  %v965 = vsel %vm864, %v770, 0
  %v968 = vsel %vm864, %v771, 0
  %v971 = vsel %vm864, %v772, 0
  %v974 = vsel %vm864, %v773, 0
  %v977 = vsel %vm864, %v774, 0
  %v980 = vsel %vm864, %v775, 0
  %v983 = vsel %vm864, %v776, 0
  %v986 = vsel %vm864, %v777, 0
  %v989 = vsel %vm864, %v778, 0
  %v992 = vsel %vm864, %v779, 0
  %v995 = vsel %vm864, %v780, 0
  %v998 = vsel %vm864, %v781, 0
  %v1001 = vsel %vm864, %v782, 0
  %v1004 = vsel %vm864, %v783, 0
  %v1007 = vsel %vm864, %v784, 0
  %v1010 = vsel %vm864, %v785, 0
  %v1013 = vsel %vm864, %v786, 0
  %v1016 = vsel %vm864, %v787, 0
  %v1019 = vsel %vm864, %v788, 0
  %v1022 = vsel %vm864, %v789, 0
  %v1025 = vsel %vm864, %v790, 0
  %v1028 = vsel %vm864, %v791, 0
  %v1031 = vsel %vm864, %v792, 0
  %v1034 = vsel %vm864, %v793, 0
  %v1037 = vsel %vm864, %v794, 0
  %v1040 = vsel %vm864, %v795, 0
  %v1043 = vsel %vm864, %v796, 0
  %v1046 = vsel %vm864, %v797, 0
  %v1049 = vsel %vm864, %v798, 0
  %v1052 = vsel %vm864, %v799, 0
  %v1055 = vsel %vm864, %v800, 0
  %v1058 = vsel %vm864, %v801, 0
  %v1061 = vsel %vm864, %v802, 0
  %v1064 = vsel %vm864, %v803, 0
  %v1067 = vsel %vm864, %v804, 0
  %v1070 = vsel %vm864, %v805, 0
  %v1073 = vsel %vm864, %v806, 0
  %v1076 = vsel %vm864, %v807, 0
  %v1079 = vsel %vm864, %v808, 0
  %v1082 = vsel %vm864, %v809, 0
  %v1085 = vsel %vm864, %v810, 0
  %v1088 = vsel %vm864, %v811, 0
  %v1091 = vsel %vm864, %v812, 0
  %v1094 = vsel %vm864, %v813, 0
  %v1097 = vsel %vm864, %v814, 0
  %v1100 = vsel %vm864, %v815, 0
  %v1103 = vsel %vm864, %v816, 0
  %v1106 = vsel %vm864, %v817, 0
  %v1109 = vsel %vm864, %v818, 0
  %v1112 = vsel %vm864, %v819, 0
  %v1115 = vsel %vm864, %v820, 0
  %v1118 = vsel %vm864, %v821, 0
  %v1121 = vsel %vm864, %v822, 0
  %v1124 = vsel %vm864, %v823, 0
  %v1127 = vsel %vm864, %v824, 0
  %v1130 = vsel %vm864, %v825, 0
  %v1133 = vsel %vm864, %v826, 0
  %v1136 = vsel %vm864, %v827, 0
  %v1139 = vsel %vm864, %v828, 0
  %v1142 = vsel %vm864, %v829, 0
  %v1145 = vsel %vm864, %v830, 0
  %v1148 = vsel %vm864, %v831, 0
  %v1151 = vsel %vm864, %v832, 0
  %v1154 = vsel %vm864, %v833, 0
  %v1157 = vsel %vm864, %v834, 0
  %v1160 = vsel %vm864, %v835, 0
  %v1163 = vsel %vm864, %v836, 0
  %v1166 = vsel %vm864, %v837, 0
  %v1169 = vsel %vm864, %v838, 0
  %v1172 = vsel %vm864, %v839, 0
  %v1175 = vsel %vm864, %v840, 0
  %v1178 = vsel %vm864, %v841, 0
  %v1181 = vsel %vm864, %v842, 0
  %v1184 = vsel %vm864, %v843, 0
  %v1187 = vsel %vm864, %v844, 0
  %v1190 = vsel %vm864, %v845, 0
  %v1193 = vsel %vm864, %v846, 0
  %v1196 = vsel %vm864, %v847, 0
  %v1199 = vsel %vm864, %v848, 0
  %v1202 = vsel %vm864, %v849, 0
  %v1205 = vsel %vm864, %v850, 0
  %v1208 = vsel %vm864, %v851, 0
  %v1211 = vsel %vm864, %v852, 0
  %v1214 = vsel %vm864, %v853, 0
  %v1217 = vsel %vm864, %v854, 0
  %v1220 = vsel %vm864, %v855, 0
  %v1223 = vsel %vm864, %v856, 0
  %v1226 = vsel %vm864, %v857, 0
  %1228 = vmatprep.subr.bf16.mxu0 0
  %1229 = vmatpush1.bf16.msra.mxu0 %v862
  %1230 = vmatprep.subr.bf16.mxu0 0
  %1231 = vmatpush1.bf16.msra.mxu0 0
  %1232 = vmatprep.subr.bf16.mxu0 0
  %1233 = vmatpush1.bf16.msra.mxu0 0
  %1234 = vmatprep.subr.bf16.mxu0 0
  %1235 = vmatpush1.bf16.msra.mxu0 0
  %1236 = vmatprep.subr.bf16.mxu0 0
  %1237 = vmatpush1.bf16.msra.mxu0 0
  %1238 = vmatprep.subr.bf16.mxu0 0
  %1239 = vmatpush1.bf16.msra.mxu0 0
  %1240 = vmatprep.subr.bf16.mxu0 0
  %1241 = vmatpush1.bf16.msra.mxu0 0
  %1242 = vmatprep.subr.bf16.mxu0 0
  %1243 = vmatpush1.bf16.msra.mxu0 0
  %1244 = vmatprep.subr.bf16.mxu0 0
  %1245 = vmatpush1.bf16.msra.mxu0 0
  %1246 = vmatprep.subr.bf16.mxu0 0
  %1247 = vmatpush1.bf16.msra.mxu0 0
  %1248 = vmatprep.subr.bf16.mxu0 0
  %1249 = vmatpush1.bf16.msra.mxu0 0
  %1250 = vmatprep.subr.bf16.mxu0 0
  %1251 = vmatpush1.bf16.msra.mxu0 0
  %1252 = vmatprep.subr.bf16.mxu0 0
  %1253 = vmatpush1.bf16.msra.mxu0 0
  %1254 = vmatprep.subr.bf16.mxu0 0
  %1255 = vmatpush1.bf16.msra.mxu0 0
  %1256 = vmatprep.subr.bf16.mxu0 0
  %1257 = vmatpush1.bf16.msra.mxu0 0
  %1258 = vmatprep.subr.bf16.mxu0 0
  %1259 = vmatpush1.bf16.msra.mxu0 0
  %1260 = vmatprep.mubr.bf16.mxu0 0
  %1261 = vmatmul.mubr.bf16.gmra.mrb[0].mxu0 %v866
  %v1262 = vpop.f32.mrb[0].mxu0
  %v1263 = vadd.f32 0.0, %v1262
  %v1264 = vpop.f32.mrb[0].mxu0
  %v1265 = vpop.f32.mrb[0].mxu0
  %v1266 = vadd.f32 0.0, %v1265
  %v1267 = vpop.f32.mrb[0].mxu0
  %1268 = vmatprep.mubr.bf16.mxu0 0
  %1269 = vmatmul.mubr.bf16.gmra.mrb[0].mxu0 %v869
  %v1270 = vpop.f32.mrb[0].mxu0
  %v1271 = vadd.f32 0.0, %v1270
  %v1272 = vpop.f32.mrb[0].mxu0
  %v1273 = vpop.f32.mrb[0].mxu0
  %v1274 = vadd.f32 0.0, %v1273
  %v1275 = vpop.f32.mrb[0].mxu0
  %1276 = vmatprep.mubr.bf16.mxu0 0
  %1277 = vmatmul.mubr.bf16.gmra.mrb[0].mxu0 %v872
  %v1278 = vpop.f32.mrb[0].mxu0
  %v1279 = vadd.f32 0.0, %v1278
  %v1280 = vpop.f32.mrb[0].mxu0
  %v1281 = vpop.f32.mrb[0].mxu0
  %v1282 = vadd.f32 0.0, %v1281
  %v1283 = vpop.f32.mrb[0].mxu0
  %1284 = vmatprep.mubr.bf16.mxu0 0
  %1285 = vmatmul.mubr.bf16.gmra.mrb[0].mxu0 %v875
  %v1286 = vpop.f32.mrb[0].mxu0
  %v1287 = vadd.f32 0.0, %v1286
  %v1288 = vpop.f32.mrb[0].mxu0
  %v1289 = vpop.f32.mrb[0].mxu0
  %v1290 = vadd.f32 0.0, %v1289
  %v1291 = vpop.f32.mrb[0].mxu0
  %1292 = vmatprep.mubr.bf16.mxu0 0
  %1293 = vmatmul.mubr.bf16.gmra.mrb[0].mxu0 %v878
  %v1294 = vpop.f32.mrb[0].mxu0
  %v1295 = vadd.f32 0.0, %v1294
  %v1296 = vpop.f32.mrb[0].mxu0
  %v1297 = vpop.f32.mrb[0].mxu0
  %v1298 = vadd.f32 0.0, %v1297
  %v1299 = vpop.f32.mrb[0].mxu0
  %1300 = vmatprep.mubr.bf16.mxu0 0
  %1301 = vmatmul.mubr.bf16.gmra.mrb[0].mxu0 %v881
  %v1302 = vpop.f32.mrb[0].mxu0
  %v1303 = vadd.f32 0.0, %v1302
  %v1304 = vpop.f32.mrb[0].mxu0
  %v1305 = vpop.f32.mrb[0].mxu0
  %v1306 = vadd.f32 0.0, %v1305
  %v1307 = vpop.f32.mrb[0].mxu0
  %1308 = vmatprep.mubr.bf16.mxu0 0
  %1309 = vmatmul.mubr.bf16.gmra.mrb[0].mxu0 %v884
  %v1310 = vpop.f32.mrb[0].mxu0
  %v1311 = vadd.f32 0.0, %v1310
  %v1312 = vpop.f32.mrb[0].mxu0
  %v1313 = vpop.f32.mrb[0].mxu0
  %v1314 = vadd.f32 0.0, %v1313
  %v1315 = vpop.f32.mrb[0].mxu0
  %1316 = vmatprep.mubr.bf16.mxu0 0
  %1317 = vmatmul.mubr.bf16.gmra.mrb[0].mxu0 %v887
  %v1318 = vpop.f32.mrb[0].mxu0
  %v1319 = vadd.f32 0.0, %v1318
  %v1320 = vpop.f32.mrb[0].mxu0
  %v1321 = vpop.f32.mrb[0].mxu0
  %v1322 = vadd.f32 0.0, %v1321
  %v1323 = vpop.f32.mrb[0].mxu0
  %1324 = vmatprep.mubr.bf16.mxu0 0
  %1325 = vmatmul.mubr.bf16.gmra.mrb[0].mxu0 %v890
  %v1326 = vpop.f32.mrb[0].mxu0
  %v1327 = vadd.f32 0.0, %v1326
  %v1328 = vpop.f32.mrb[0].mxu0
  %v1329 = vpop.f32.mrb[0].mxu0
  %v1330 = vadd.f32 0.0, %v1329
  %v1331 = vpop.f32.mrb[0].mxu0
  %1332 = vmatprep.mubr.bf16.mxu0 0
  %1333 = vmatmul.mubr.bf16.gmra.mrb[0].mxu0 %v893
  %v1334 = vpop.f32.mrb[0].mxu0
  %v1335 = vadd.f32 0.0, %v1334
  %v1336 = vpop.f32.mrb[0].mxu0
  %v1337 = vpop.f32.mrb[0].mxu0
  %v1338 = vadd.f32 0.0, %v1337
  %v1339 = vpop.f32.mrb[0].mxu0
  %1340 = vmatprep.mubr.bf16.mxu0 0
  %1341 = vmatmul.mubr.bf16.gmra.mrb[0].mxu0 %v896
  %v1342 = vpop.f32.mrb[0].mxu0
  %v1343 = vadd.f32 0.0, %v1342
  %v1344 = vpop.f32.mrb[0].mxu0
  %v1345 = vpop.f32.mrb[0].mxu0
  %v1346 = vadd.f32 0.0, %v1345
  %v1347 = vpop.f32.mrb[0].mxu0
  %1348 = vmatprep.mubr.bf16.mxu0 0
  %1349 = vmatmul.mubr.bf16.gmra.mrb[0].mxu0 %v899
  %v1350 = vpop.f32.mrb[0].mxu0
  %v1351 = vadd.f32 0.0, %v1350
  %v1352 = vpop.f32.mrb[0].mxu0
  %v1353 = vpop.f32.mrb[0].mxu0
  %v1354 = vadd.f32 0.0, %v1353
  %v1355 = vpop.f32.mrb[0].mxu0
  %1356 = vmatprep.mubr.bf16.mxu0 0
  %1357 = vmatmul.mubr.bf16.gmra.mrb[0].mxu0 %v902
  %v1358 = vpop.f32.mrb[0].mxu0
  %v1359 = vadd.f32 0.0, %v1358
  %v1360 = vpop.f32.mrb[0].mxu0
  %v1361 = vpop.f32.mrb[0].mxu0
  %v1362 = vadd.f32 0.0, %v1361
  %v1363 = vpop.f32.mrb[0].mxu0
  %1364 = vmatprep.mubr.bf16.mxu0 0
  %1365 = vmatmul.mubr.bf16.gmra.mrb[0].mxu0 %v905
  %v1366 = vpop.f32.mrb[0].mxu0
  %v1367 = vadd.f32 0.0, %v1366
  %v1368 = vpop.f32.mrb[0].mxu0
  %v1369 = vpop.f32.mrb[0].mxu0
  %v1370 = vadd.f32 0.0, %v1369
  %v1371 = vpop.f32.mrb[0].mxu0
  %1372 = vmatprep.mubr.bf16.mxu0 0
  %1373 = vmatmul.mubr.bf16.gmra.mrb[0].mxu0 %v908
  %v1374 = vpop.f32.mrb[0].mxu0
  %v1375 = vadd.f32 0.0, %v1374
  %v1376 = vpop.f32.mrb[0].mxu0
  %v1377 = vpop.f32.mrb[0].mxu0
  %v1378 = vadd.f32 0.0, %v1377
  %v1379 = vpop.f32.mrb[0].mxu0
  %1380 = vmatprep.mubr.bf16.mxu0 0
  %1381 = vmatmul.mubr.bf16.gmra.mrb[0].mxu0 %v911
  %v1382 = vpop.f32.mrb[0].mxu0
  %v1383 = vadd.f32 0.0, %v1382
  %v1384 = vpop.f32.mrb[0].mxu0
  %v1385 = vpop.f32.mrb[0].mxu0
  %v1386 = vadd.f32 0.0, %v1385
  %v1387 = vpop.f32.mrb[0].mxu0
  %1388 = vmatprep.mubr.bf16.mxu0 0
  %1389 = vmatmul.mubr.bf16.gmra.mrb[0].mxu0 %v914
  %v1390 = vpop.f32.mrb[0].mxu0
  %v1391 = vadd.f32 0.0, %v1390
  %v1392 = vpop.f32.mrb[0].mxu0
  %v1393 = vpop.f32.mrb[0].mxu0
  %v1394 = vadd.f32 0.0, %v1393
  %v1395 = vpop.f32.mrb[0].mxu0
  %1396 = vmatprep.mubr.bf16.mxu0 0
  %1397 = vmatmul.mubr.bf16.gmra.mrb[0].mxu0 %v917
  %v1398 = vpop.f32.mrb[0].mxu0
  %v1399 = vadd.f32 0.0, %v1398
  %v1400 = vpop.f32.mrb[0].mxu0
  %v1401 = vpop.f32.mrb[0].mxu0
  %v1402 = vadd.f32 0.0, %v1401
  %v1403 = vpop.f32.mrb[0].mxu0
  %1404 = vmatprep.mubr.bf16.mxu0 0
  %1405 = vmatmul.mubr.bf16.gmra.mrb[0].mxu0 %v920
  %v1406 = vpop.f32.mrb[0].mxu0
  %v1407 = vadd.f32 0.0, %v1406
  %v1408 = vpop.f32.mrb[0].mxu0
  %v1409 = vpop.f32.mrb[0].mxu0
  %v1410 = vadd.f32 0.0, %v1409
  %v1411 = vpop.f32.mrb[0].mxu0
  %1412 = vmatprep.mubr.bf16.mxu0 0
  %1413 = vmatmul.mubr.bf16.gmra.mrb[0].mxu0 %v923
  %v1414 = vpop.f32.mrb[0].mxu0
  %v1415 = vadd.f32 0.0, %v1414
  %v1416 = vpop.f32.mrb[0].mxu0
  %v1417 = vpop.f32.mrb[0].mxu0
  %v1418 = vadd.f32 0.0, %v1417
  %v1419 = vpop.f32.mrb[0].mxu0
  %1420 = vmatprep.mubr.bf16.mxu0 0
  %1421 = vmatmul.mubr.bf16.gmra.mrb[0].mxu0 %v926
  %v1422 = vpop.f32.mrb[0].mxu0
  %v1423 = vadd.f32 0.0, %v1422
  %v1424 = vpop.f32.mrb[0].mxu0
  %v1425 = vpop.f32.mrb[0].mxu0
  %v1426 = vadd.f32 0.0, %v1425
  %v1427 = vpop.f32.mrb[0].mxu0
  %1428 = vmatprep.mubr.bf16.mxu0 0
  %1429 = vmatmul.mubr.bf16.gmra.mrb[0].mxu0 %v929
  %v1430 = vpop.f32.mrb[0].mxu0
  %v1431 = vadd.f32 0.0, %v1430
  %v1432 = vpop.f32.mrb[0].mxu0
  %v1433 = vpop.f32.mrb[0].mxu0
  %v1434 = vadd.f32 0.0, %v1433
  %v1435 = vpop.f32.mrb[0].mxu0
  %1436 = vmatprep.mubr.bf16.mxu0 0
  %1437 = vmatmul.mubr.bf16.gmra.mrb[0].mxu0 %v932
  %v1438 = vpop.f32.mrb[0].mxu0
  %v1439 = vadd.f32 0.0, %v1438
  %v1440 = vpop.f32.mrb[0].mxu0
  %v1441 = vpop.f32.mrb[0].mxu0
  %v1442 = vadd.f32 0.0, %v1441
  %v1443 = vpop.f32.mrb[0].mxu0
  %1444 = vmatprep.mubr.bf16.mxu0 0
  %1445 = vmatmul.mubr.bf16.gmra.mrb[0].mxu0 %v935
  %v1446 = vpop.f32.mrb[0].mxu0
  %v1447 = vadd.f32 0.0, %v1446
  %v1448 = vpop.f32.mrb[0].mxu0
  %v1449 = vpop.f32.mrb[0].mxu0
  %v1450 = vadd.f32 0.0, %v1449
  %v1451 = vpop.f32.mrb[0].mxu0
  %1452 = vmatprep.mubr.bf16.mxu0 0
  %1453 = vmatmul.mubr.bf16.gmra.mrb[0].mxu0 %v938
  %v1454 = vpop.f32.mrb[0].mxu0
  %v1455 = vadd.f32 0.0, %v1454
  %v1456 = vpop.f32.mrb[0].mxu0
  %v1457 = vpop.f32.mrb[0].mxu0
  %v1458 = vadd.f32 0.0, %v1457
  %v1459 = vpop.f32.mrb[0].mxu0
  %1460 = vmatprep.mubr.bf16.mxu0 0
  %1461 = vmatmul.mubr.bf16.gmra.mrb[0].mxu0 %v941
  %v1462 = vpop.f32.mrb[0].mxu0
  %v1463 = vadd.f32 0.0, %v1462
  %v1464 = vpop.f32.mrb[0].mxu0
  %v1465 = vpop.f32.mrb[0].mxu0
  %v1466 = vadd.f32 0.0, %v1465
  %v1467 = vpop.f32.mrb[0].mxu0
  %1468 = vmatprep.mubr.bf16.mxu0 0
  %1469 = vmatmul.mubr.bf16.gmra.mrb[0].mxu0 %v944
  %v1470 = vpop.f32.mrb[0].mxu0
  %v1471 = vadd.f32 0.0, %v1470
  %v1472 = vpop.f32.mrb[0].mxu0
  %v1473 = vpop.f32.mrb[0].mxu0
  %v1474 = vadd.f32 0.0, %v1473
  %v1475 = vpop.f32.mrb[0].mxu0
  %1476 = vmatprep.mubr.bf16.mxu0 0
  %1477 = vmatmul.mubr.bf16.gmra.mrb[0].mxu0 %v947
  %v1478 = vpop.f32.mrb[0].mxu0
  %v1479 = vadd.f32 0.0, %v1478
  %v1480 = vpop.f32.mrb[0].mxu0
  %v1481 = vpop.f32.mrb[0].mxu0
  %v1482 = vadd.f32 0.0, %v1481
  %v1483 = vpop.f32.mrb[0].mxu0
  %1484 = vmatprep.mubr.bf16.mxu0 0
  %1485 = vmatmul.mubr.bf16.gmra.mrb[0].mxu0 %v950
  %v1486 = vpop.f32.mrb[0].mxu0
  %v1487 = vadd.f32 0.0, %v1486
  %v1488 = vpop.f32.mrb[0].mxu0
  %v1489 = vpop.f32.mrb[0].mxu0
  %v1490 = vadd.f32 0.0, %v1489
  %v1491 = vpop.f32.mrb[0].mxu0
  %1492 = vmatprep.mubr.bf16.mxu0 0
  %1493 = vmatmul.mubr.bf16.gmra.mrb[0].mxu0 %v953
  %v1494 = vpop.f32.mrb[0].mxu0
  %v1495 = vadd.f32 0.0, %v1494
  %v1496 = vpop.f32.mrb[0].mxu0
  %v1497 = vpop.f32.mrb[0].mxu0
  %v1498 = vadd.f32 0.0, %v1497
  %v1499 = vpop.f32.mrb[0].mxu0
  %1500 = vmatprep.mubr.bf16.mxu0 0
  %1501 = vmatmul.mubr.bf16.gmra.mrb[0].mxu0 %v956
  %v1502 = vpop.f32.mrb[0].mxu0
  %v1503 = vadd.f32 0.0, %v1502
  %v1504 = vpop.f32.mrb[0].mxu0
  %v1505 = vpop.f32.mrb[0].mxu0
  %v1506 = vadd.f32 0.0, %v1505
  %v1507 = vpop.f32.mrb[0].mxu0
  %1508 = vmatprep.mubr.bf16.mxu0 0
  %1509 = vmatmul.mubr.bf16.gmra.mrb[0].mxu0 %v959
  %v1510 = vpop.f32.mrb[0].mxu0
  %v1511 = vadd.f32 0.0, %v1510
  %v1512 = vpop.f32.mrb[0].mxu0
  %v1513 = vpop.f32.mrb[0].mxu0
  %v1514 = vadd.f32 0.0, %v1513
  %v1515 = vpop.f32.mrb[0].mxu0
  %1516 = vmatprep.mubr.bf16.mxu0 0
  %1517 = vmatmul.mubr.bf16.gmra.mrb[0].mxu0 %v962
  %v1518 = vpop.f32.mrb[0].mxu0
  %v1519 = vadd.f32 0.0, %v1518
  %v1520 = vpop.f32.mrb[0].mxu0
  %v1521 = vpop.f32.mrb[0].mxu0
  %v1522 = vadd.f32 0.0, %v1521
  %v1523 = vpop.f32.mrb[0].mxu0
  %1524 = vmatprep.mubr.bf16.mxu0 0
  %1525 = vmatmul.mubr.bf16.gmra.mrb[0].mxu0 %v965
  %v1526 = vpop.f32.mrb[0].mxu0
  %v1527 = vadd.f32 0.0, %v1526
  %v1528 = vpop.f32.mrb[0].mxu0
  %v1529 = vpop.f32.mrb[0].mxu0
  %v1530 = vadd.f32 0.0, %v1529
  %v1531 = vpop.f32.mrb[0].mxu0
  %1532 = vmatprep.mubr.bf16.mxu0 0
  %1533 = vmatmul.mubr.bf16.gmra.mrb[0].mxu0 %v968
  %v1534 = vpop.f32.mrb[0].mxu0
  %v1535 = vadd.f32 0.0, %v1534
  %v1536 = vpop.f32.mrb[0].mxu0
  %v1537 = vpop.f32.mrb[0].mxu0
  %v1538 = vadd.f32 0.0, %v1537
  %v1539 = vpop.f32.mrb[0].mxu0
  %1540 = vmatprep.mubr.bf16.mxu0 0
  %1541 = vmatmul.mubr.bf16.gmra.mrb[0].mxu0 %v971
  %v1542 = vpop.f32.mrb[0].mxu0
  %v1543 = vadd.f32 0.0, %v1542
  %v1544 = vpop.f32.mrb[0].mxu0
  %v1545 = vpop.f32.mrb[0].mxu0
  %v1546 = vadd.f32 0.0, %v1545
  %v1547 = vpop.f32.mrb[0].mxu0
  %1548 = vmatprep.mubr.bf16.mxu0 0
  %1549 = vmatmul.mubr.bf16.gmra.mrb[0].mxu0 %v974
  %v1550 = vpop.f32.mrb[0].mxu0
  %v1551 = vadd.f32 0.0, %v1550
  %v1552 = vpop.f32.mrb[0].mxu0
  %v1553 = vpop.f32.mrb[0].mxu0
  %v1554 = vadd.f32 0.0, %v1553
  %v1555 = vpop.f32.mrb[0].mxu0
  %1556 = vmatprep.mubr.bf16.mxu0 0
  %1557 = vmatmul.mubr.bf16.gmra.mrb[0].mxu0 %v977
  %v1558 = vpop.f32.mrb[0].mxu0
  %v1559 = vadd.f32 0.0, %v1558
  %v1560 = vpop.f32.mrb[0].mxu0
  %v1561 = vpop.f32.mrb[0].mxu0
  %v1562 = vadd.f32 0.0, %v1561
  %v1563 = vpop.f32.mrb[0].mxu0
  %1564 = vmatprep.mubr.bf16.mxu0 0
  %1565 = vmatmul.mubr.bf16.gmra.mrb[0].mxu0 %v980
  %v1566 = vpop.f32.mrb[0].mxu0
  %v1567 = vadd.f32 0.0, %v1566
  %v1568 = vpop.f32.mrb[0].mxu0
  %v1569 = vpop.f32.mrb[0].mxu0
  %v1570 = vadd.f32 0.0, %v1569
  %v1571 = vpop.f32.mrb[0].mxu0
  %1572 = vmatprep.mubr.bf16.mxu0 0
  %1573 = vmatmul.mubr.bf16.gmra.mrb[0].mxu0 %v983
  %v1574 = vpop.f32.mrb[0].mxu0
  %v1575 = vadd.f32 0.0, %v1574
  %v1576 = vpop.f32.mrb[0].mxu0
  %v1577 = vpop.f32.mrb[0].mxu0
  %v1578 = vadd.f32 0.0, %v1577
  %v1579 = vpop.f32.mrb[0].mxu0
  %1580 = vmatprep.mubr.bf16.mxu0 0
  %1581 = vmatmul.mubr.bf16.gmra.mrb[0].mxu0 %v986
  %v1582 = vpop.f32.mrb[0].mxu0
  %v1583 = vadd.f32 0.0, %v1582
  %v1584 = vpop.f32.mrb[0].mxu0
  %v1585 = vpop.f32.mrb[0].mxu0
  %v1586 = vadd.f32 0.0, %v1585
  %v1587 = vpop.f32.mrb[0].mxu0
  %1588 = vmatprep.mubr.bf16.mxu0 0
  %1589 = vmatmul.mubr.bf16.gmra.mrb[0].mxu0 %v989
  %v1590 = vpop.f32.mrb[0].mxu0
  %v1591 = vadd.f32 0.0, %v1590
  %v1592 = vpop.f32.mrb[0].mxu0
  %v1593 = vpop.f32.mrb[0].mxu0
  %v1594 = vadd.f32 0.0, %v1593
  %v1595 = vpop.f32.mrb[0].mxu0
  %1596 = vmatprep.mubr.bf16.mxu0 0
  %1597 = vmatmul.mubr.bf16.gmra.mrb[0].mxu0 %v992
  %v1598 = vpop.f32.mrb[0].mxu0
  %v1599 = vadd.f32 0.0, %v1598
  %v1600 = vpop.f32.mrb[0].mxu0
  %v1601 = vpop.f32.mrb[0].mxu0
  %v1602 = vadd.f32 0.0, %v1601
  %v1603 = vpop.f32.mrb[0].mxu0
  %1604 = vmatprep.mubr.bf16.mxu0 0
  %1605 = vmatmul.mubr.bf16.gmra.mrb[0].mxu0 %v995
  %v1606 = vpop.f32.mrb[0].mxu0
  %v1607 = vadd.f32 0.0, %v1606
  %v1608 = vpop.f32.mrb[0].mxu0
  %v1609 = vpop.f32.mrb[0].mxu0
  %v1610 = vadd.f32 0.0, %v1609
  %v1611 = vpop.f32.mrb[0].mxu0
  %1612 = vmatprep.mubr.bf16.mxu0 0
  %1613 = vmatmul.mubr.bf16.gmra.mrb[0].mxu0 %v998
  %v1614 = vpop.f32.mrb[0].mxu0
  %v1615 = vadd.f32 0.0, %v1614
  %v1616 = vpop.f32.mrb[0].mxu0
  %v1617 = vpop.f32.mrb[0].mxu0
  %v1618 = vadd.f32 0.0, %v1617
  %v1619 = vpop.f32.mrb[0].mxu0
  %1620 = vmatprep.mubr.bf16.mxu0 0
  %1621 = vmatmul.mubr.bf16.gmra.mrb[0].mxu0 %v1001
  %v1622 = vpop.f32.mrb[0].mxu0
  %v1623 = vadd.f32 0.0, %v1622
  %v1624 = vpop.f32.mrb[0].mxu0
  %v1625 = vpop.f32.mrb[0].mxu0
  %v1626 = vadd.f32 0.0, %v1625
  %v1627 = vpop.f32.mrb[0].mxu0
  %1628 = vmatprep.mubr.bf16.mxu0 0
  %1629 = vmatmul.mubr.bf16.gmra.mrb[0].mxu0 %v1004
  %v1630 = vpop.f32.mrb[0].mxu0
  %v1631 = vadd.f32 0.0, %v1630
  %v1632 = vpop.f32.mrb[0].mxu0
  %v1633 = vpop.f32.mrb[0].mxu0
  %v1634 = vadd.f32 0.0, %v1633
  %v1635 = vpop.f32.mrb[0].mxu0
  %1636 = vmatprep.mubr.bf16.mxu0 0
  %1637 = vmatmul.mubr.bf16.gmra.mrb[0].mxu0 %v1007
  %v1638 = vpop.f32.mrb[0].mxu0
  %v1639 = vadd.f32 0.0, %v1638
  %v1640 = vpop.f32.mrb[0].mxu0
  %v1641 = vpop.f32.mrb[0].mxu0
  %v1642 = vadd.f32 0.0, %v1641
  %v1643 = vpop.f32.mrb[0].mxu0
  %1644 = vmatprep.mubr.bf16.mxu0 0
  %1645 = vmatmul.mubr.bf16.gmra.mrb[0].mxu0 %v1010
  %v1646 = vpop.f32.mrb[0].mxu0
  %v1647 = vadd.f32 0.0, %v1646
  %v1648 = vpop.f32.mrb[0].mxu0
  %v1649 = vpop.f32.mrb[0].mxu0
  %v1650 = vadd.f32 0.0, %v1649
  %v1651 = vpop.f32.mrb[0].mxu0
  %1652 = vmatprep.mubr.bf16.mxu0 0
  %1653 = vmatmul.mubr.bf16.gmra.mrb[0].mxu0 %v1013
  %v1654 = vpop.f32.mrb[0].mxu0
  %v1655 = vadd.f32 0.0, %v1654
  %v1656 = vpop.f32.mrb[0].mxu0
  %v1657 = vpop.f32.mrb[0].mxu0
  %v1658 = vadd.f32 0.0, %v1657
  %v1659 = vpop.f32.mrb[0].mxu0
  %1660 = vmatprep.mubr.bf16.mxu0 0
  %1661 = vmatmul.mubr.bf16.gmra.mrb[0].mxu0 %v1016
  %v1662 = vpop.f32.mrb[0].mxu0
  %v1663 = vadd.f32 0.0, %v1662
  %v1664 = vpop.f32.mrb[0].mxu0
  %v1665 = vpop.f32.mrb[0].mxu0
  %v1666 = vadd.f32 0.0, %v1665
  %v1667 = vpop.f32.mrb[0].mxu0
  %1668 = vmatprep.mubr.bf16.mxu0 0
  %1669 = vmatmul.mubr.bf16.gmra.mrb[0].mxu0 %v1019
  %v1670 = vpop.f32.mrb[0].mxu0
  %v1671 = vadd.f32 0.0, %v1670
  %v1672 = vpop.f32.mrb[0].mxu0
  %v1673 = vpop.f32.mrb[0].mxu0
  %v1674 = vadd.f32 0.0, %v1673
  %v1675 = vpop.f32.mrb[0].mxu0
  %1676 = vmatprep.mubr.bf16.mxu0 0
  %1677 = vmatmul.mubr.bf16.gmra.mrb[0].mxu0 %v1022
  %v1678 = vpop.f32.mrb[0].mxu0
  %v1679 = vadd.f32 0.0, %v1678
  %v1680 = vpop.f32.mrb[0].mxu0
  %v1681 = vpop.f32.mrb[0].mxu0
  %v1682 = vadd.f32 0.0, %v1681
  %v1683 = vpop.f32.mrb[0].mxu0
  %1684 = vmatprep.mubr.bf16.mxu0 0
  %1685 = vmatmul.mubr.bf16.gmra.mrb[0].mxu0 %v1025
  %v1686 = vpop.f32.mrb[0].mxu0
  %v1687 = vadd.f32 0.0, %v1686
  %v1688 = vpop.f32.mrb[0].mxu0
  %v1689 = vpop.f32.mrb[0].mxu0
  %v1690 = vadd.f32 0.0, %v1689
  %v1691 = vpop.f32.mrb[0].mxu0
  %1692 = vmatprep.mubr.bf16.mxu0 0
  %1693 = vmatmul.mubr.bf16.gmra.mrb[0].mxu0 %v1028
  %v1694 = vpop.f32.mrb[0].mxu0
  %v1695 = vadd.f32 0.0, %v1694
  %v1696 = vpop.f32.mrb[0].mxu0
  %v1697 = vpop.f32.mrb[0].mxu0
  %v1698 = vadd.f32 0.0, %v1697
  %v1699 = vpop.f32.mrb[0].mxu0
  %1700 = vmatprep.mubr.bf16.mxu0 0
  %1701 = vmatmul.mubr.bf16.gmra.mrb[0].mxu0 %v1031
  %v1702 = vpop.f32.mrb[0].mxu0
  %v1703 = vadd.f32 0.0, %v1702
  %v1704 = vpop.f32.mrb[0].mxu0
  %v1705 = vpop.f32.mrb[0].mxu0
  %v1706 = vadd.f32 0.0, %v1705
  %v1707 = vpop.f32.mrb[0].mxu0
  %1708 = vmatprep.mubr.bf16.mxu0 0
  %1709 = vmatmul.mubr.bf16.gmra.mrb[0].mxu0 %v1034
  %v1710 = vpop.f32.mrb[0].mxu0
  %v1711 = vadd.f32 0.0, %v1710
  %v1712 = vpop.f32.mrb[0].mxu0
  %v1713 = vpop.f32.mrb[0].mxu0
  %v1714 = vadd.f32 0.0, %v1713
  %v1715 = vpop.f32.mrb[0].mxu0
  %1716 = vmatprep.mubr.bf16.mxu0 0
  %1717 = vmatmul.mubr.bf16.gmra.mrb[0].mxu0 %v1037
  %v1718 = vpop.f32.mrb[0].mxu0
  %v1719 = vadd.f32 0.0, %v1718
  %v1720 = vpop.f32.mrb[0].mxu0
  %v1721 = vpop.f32.mrb[0].mxu0
  %v1722 = vadd.f32 0.0, %v1721
  %v1723 = vpop.f32.mrb[0].mxu0
  %1724 = vmatprep.mubr.bf16.mxu0 0
  %1725 = vmatmul.mubr.bf16.gmra.mrb[0].mxu0 %v1040
  %v1726 = vpop.f32.mrb[0].mxu0
  %v1727 = vadd.f32 0.0, %v1726
  %v1728 = vpop.f32.mrb[0].mxu0
  %v1729 = vpop.f32.mrb[0].mxu0
  %v1730 = vadd.f32 0.0, %v1729
  %v1731 = vpop.f32.mrb[0].mxu0
  %1732 = vmatprep.mubr.bf16.mxu0 0
  %1733 = vmatmul.mubr.bf16.gmra.mrb[0].mxu0 %v1043
  %v1734 = vpop.f32.mrb[0].mxu0
  %v1735 = vadd.f32 0.0, %v1734
  %v1736 = vpop.f32.mrb[0].mxu0
  %v1737 = vpop.f32.mrb[0].mxu0
  %v1738 = vadd.f32 0.0, %v1737
  %v1739 = vpop.f32.mrb[0].mxu0
  %1740 = vmatprep.mubr.bf16.mxu0 0
  %1741 = vmatmul.mubr.bf16.gmra.mrb[0].mxu0 %v1046
  %v1742 = vpop.f32.mrb[0].mxu0
  %v1743 = vadd.f32 0.0, %v1742
  %v1744 = vpop.f32.mrb[0].mxu0
  %v1745 = vpop.f32.mrb[0].mxu0
  %v1746 = vadd.f32 0.0, %v1745
  %v1747 = vpop.f32.mrb[0].mxu0
  %1748 = vmatprep.mubr.bf16.mxu0 0
  %1749 = vmatmul.mubr.bf16.gmra.mrb[0].mxu0 %v1049
  %v1750 = vpop.f32.mrb[0].mxu0
  %v1751 = vadd.f32 0.0, %v1750
  %v1752 = vpop.f32.mrb[0].mxu0
  %v1753 = vpop.f32.mrb[0].mxu0
  %v1754 = vadd.f32 0.0, %v1753
  %v1755 = vpop.f32.mrb[0].mxu0
  %1756 = vmatprep.mubr.bf16.mxu0 0
  %1757 = vmatmul.mubr.bf16.gmra.mrb[0].mxu0 %v1052
  %v1758 = vpop.f32.mrb[0].mxu0
  %v1759 = vadd.f32 0.0, %v1758
  %v1760 = vpop.f32.mrb[0].mxu0
  %v1761 = vpop.f32.mrb[0].mxu0
  %v1762 = vadd.f32 0.0, %v1761
  %v1763 = vpop.f32.mrb[0].mxu0
  %1764 = vmatprep.mubr.bf16.mxu0 0
  %1765 = vmatmul.mubr.bf16.gmra.mrb[0].mxu0 %v1055
  %v1766 = vpop.f32.mrb[0].mxu0
  %v1767 = vadd.f32 0.0, %v1766
  %v1768 = vpop.f32.mrb[0].mxu0
  %v1769 = vpop.f32.mrb[0].mxu0
  %v1770 = vadd.f32 0.0, %v1769
  %v1771 = vpop.f32.mrb[0].mxu0
  %1772 = vmatprep.mubr.bf16.mxu0 0
  %1773 = vmatmul.mubr.bf16.gmra.mrb[0].mxu0 %v1058
  %v1774 = vpop.f32.mrb[0].mxu0
  %v1775 = vadd.f32 0.0, %v1774
  %v1776 = vpop.f32.mrb[0].mxu0
  %v1777 = vpop.f32.mrb[0].mxu0
  %v1778 = vadd.f32 0.0, %v1777
  %v1779 = vpop.f32.mrb[0].mxu0
  %1780 = vmatprep.mubr.bf16.mxu0 0
  %1781 = vmatmul.mubr.bf16.gmra.mrb[0].mxu0 %v1061
  %v1782 = vpop.f32.mrb[0].mxu0
  %v1783 = vadd.f32 0.0, %v1782
  %v1784 = vpop.f32.mrb[0].mxu0
  %v1785 = vpop.f32.mrb[0].mxu0
  %v1786 = vadd.f32 0.0, %v1785
  %v1787 = vpop.f32.mrb[0].mxu0
  %1788 = vmatprep.mubr.bf16.mxu0 0
  %1789 = vmatmul.mubr.bf16.gmra.mrb[0].mxu0 %v1064
  %v1790 = vpop.f32.mrb[0].mxu0
  %v1791 = vadd.f32 0.0, %v1790
  %v1792 = vpop.f32.mrb[0].mxu0
  %v1793 = vpop.f32.mrb[0].mxu0
  %v1794 = vadd.f32 0.0, %v1793
  %v1795 = vpop.f32.mrb[0].mxu0
  %1796 = vmatprep.mubr.bf16.mxu0 0
  %1797 = vmatmul.mubr.bf16.gmra.mrb[0].mxu0 %v1067
  %v1798 = vpop.f32.mrb[0].mxu0
  %v1799 = vadd.f32 0.0, %v1798
  %v1800 = vpop.f32.mrb[0].mxu0
  %v1801 = vpop.f32.mrb[0].mxu0
  %v1802 = vadd.f32 0.0, %v1801
  %v1803 = vpop.f32.mrb[0].mxu0
  %1804 = vmatprep.mubr.bf16.mxu0 0
  %1805 = vmatmul.mubr.bf16.gmra.mrb[0].mxu0 %v1070
  %v1806 = vpop.f32.mrb[0].mxu0
  %v1807 = vadd.f32 0.0, %v1806
  %v1808 = vpop.f32.mrb[0].mxu0
  %v1809 = vpop.f32.mrb[0].mxu0
  %v1810 = vadd.f32 0.0, %v1809
  %v1811 = vpop.f32.mrb[0].mxu0
  %1812 = vmatprep.mubr.bf16.mxu0 0
  %1813 = vmatmul.mubr.bf16.gmra.mrb[0].mxu0 %v1073
  %v1814 = vpop.f32.mrb[0].mxu0
  %v1815 = vadd.f32 0.0, %v1814
  %v1816 = vpop.f32.mrb[0].mxu0
  %v1817 = vpop.f32.mrb[0].mxu0
  %v1818 = vadd.f32 0.0, %v1817
  %v1819 = vpop.f32.mrb[0].mxu0
  %1820 = vmatprep.mubr.bf16.mxu0 0
  %1821 = vmatmul.mubr.bf16.gmra.mrb[0].mxu0 %v1076
  %v1822 = vpop.f32.mrb[0].mxu0
  %v1823 = vadd.f32 0.0, %v1822
  %v1824 = vpop.f32.mrb[0].mxu0
  %v1825 = vpop.f32.mrb[0].mxu0
  %v1826 = vadd.f32 0.0, %v1825
  %v1827 = vpop.f32.mrb[0].mxu0
  %1828 = vmatprep.mubr.bf16.mxu0 0
  %1829 = vmatmul.mubr.bf16.gmra.mrb[0].mxu0 %v1079
  %v1830 = vpop.f32.mrb[0].mxu0
  %v1831 = vadd.f32 0.0, %v1830
  %v1832 = vpop.f32.mrb[0].mxu0
  %v1833 = vpop.f32.mrb[0].mxu0
  %v1834 = vadd.f32 0.0, %v1833
  %v1835 = vpop.f32.mrb[0].mxu0
  %1836 = vmatprep.mubr.bf16.mxu0 0
  %1837 = vmatmul.mubr.bf16.gmra.mrb[0].mxu0 %v1082
  %v1838 = vpop.f32.mrb[0].mxu0
  %v1839 = vadd.f32 0.0, %v1838
  %v1840 = vpop.f32.mrb[0].mxu0
  %v1841 = vpop.f32.mrb[0].mxu0
  %v1842 = vadd.f32 0.0, %v1841
  %v1843 = vpop.f32.mrb[0].mxu0
  %1844 = vmatprep.mubr.bf16.mxu0 0
  %1845 = vmatmul.mubr.bf16.gmra.mrb[0].mxu0 %v1085
  %v1846 = vpop.f32.mrb[0].mxu0
  %v1847 = vadd.f32 0.0, %v1846
  %v1848 = vpop.f32.mrb[0].mxu0
  %v1849 = vpop.f32.mrb[0].mxu0
  %v1850 = vadd.f32 0.0, %v1849
  %v1851 = vpop.f32.mrb[0].mxu0
  %1852 = vmatprep.mubr.bf16.mxu0 0
  %1853 = vmatmul.mubr.bf16.gmra.mrb[0].mxu0 %v1088
  %v1854 = vpop.f32.mrb[0].mxu0
  %v1855 = vadd.f32 0.0, %v1854
  %v1856 = vpop.f32.mrb[0].mxu0
  %v1857 = vpop.f32.mrb[0].mxu0
  %v1858 = vadd.f32 0.0, %v1857
  %v1859 = vpop.f32.mrb[0].mxu0
  %1860 = vmatprep.mubr.bf16.mxu0 0
  %1861 = vmatmul.mubr.bf16.gmra.mrb[0].mxu0 %v1091
  %v1862 = vpop.f32.mrb[0].mxu0
  %v1863 = vadd.f32 0.0, %v1862
  %v1864 = vpop.f32.mrb[0].mxu0
  %v1865 = vpop.f32.mrb[0].mxu0
  %v1866 = vadd.f32 0.0, %v1865
  %v1867 = vpop.f32.mrb[0].mxu0
  %1868 = vmatprep.mubr.bf16.mxu0 0
  %1869 = vmatmul.mubr.bf16.gmra.mrb[0].mxu0 %v1094
  %v1870 = vpop.f32.mrb[0].mxu0
  %v1871 = vadd.f32 0.0, %v1870
  %v1872 = vpop.f32.mrb[0].mxu0
  %v1873 = vpop.f32.mrb[0].mxu0
  %v1874 = vadd.f32 0.0, %v1873
  %v1875 = vpop.f32.mrb[0].mxu0
  %1876 = vmatprep.mubr.bf16.mxu0 0
  %1877 = vmatmul.mubr.bf16.gmra.mrb[0].mxu0 %v1097
  %v1878 = vpop.f32.mrb[0].mxu0
  %v1879 = vadd.f32 0.0, %v1878
  %v1880 = vpop.f32.mrb[0].mxu0
  %v1881 = vpop.f32.mrb[0].mxu0
  %v1882 = vadd.f32 0.0, %v1881
  %v1883 = vpop.f32.mrb[0].mxu0
  %1884 = vmatprep.mubr.bf16.mxu0 0
  %1885 = vmatmul.mubr.bf16.gmra.mrb[0].mxu0 %v1100
  %v1886 = vpop.f32.mrb[0].mxu0
  %v1887 = vadd.f32 0.0, %v1886
  %v1888 = vpop.f32.mrb[0].mxu0
  %v1889 = vpop.f32.mrb[0].mxu0
  %v1890 = vadd.f32 0.0, %v1889
  %v1891 = vpop.f32.mrb[0].mxu0
  %1892 = vmatprep.mubr.bf16.mxu0 0
  %1893 = vmatmul.mubr.bf16.gmra.mrb[0].mxu0 %v1103
  %v1894 = vpop.f32.mrb[0].mxu0
  %v1895 = vadd.f32 0.0, %v1894
  %v1896 = vpop.f32.mrb[0].mxu0
  %v1897 = vpop.f32.mrb[0].mxu0
  %v1898 = vadd.f32 0.0, %v1897
  %v1899 = vpop.f32.mrb[0].mxu0
  %1900 = vmatprep.mubr.bf16.mxu0 0
  %1901 = vmatmul.mubr.bf16.gmra.mrb[0].mxu0 %v1106
  %v1902 = vpop.f32.mrb[0].mxu0
  %v1903 = vadd.f32 0.0, %v1902
  %v1904 = vpop.f32.mrb[0].mxu0
  %v1905 = vpop.f32.mrb[0].mxu0
  %v1906 = vadd.f32 0.0, %v1905
  %v1907 = vpop.f32.mrb[0].mxu0
  %1908 = vmatprep.mubr.bf16.mxu0 0
  %1909 = vmatmul.mubr.bf16.gmra.mrb[0].mxu0 %v1109
  %v1910 = vpop.f32.mrb[0].mxu0
  %v1911 = vadd.f32 0.0, %v1910
  %v1912 = vpop.f32.mrb[0].mxu0
  %v1913 = vpop.f32.mrb[0].mxu0
  %v1914 = vadd.f32 0.0, %v1913
  %v1915 = vpop.f32.mrb[0].mxu0
  %1916 = vmatprep.mubr.bf16.mxu0 0
  %1917 = vmatmul.mubr.bf16.gmra.mrb[0].mxu0 %v1112
  %v1918 = vpop.f32.mrb[0].mxu0
  %v1919 = vadd.f32 0.0, %v1918
  %v1920 = vpop.f32.mrb[0].mxu0
  %v1921 = vpop.f32.mrb[0].mxu0
  %v1922 = vadd.f32 0.0, %v1921
  %v1923 = vpop.f32.mrb[0].mxu0
  %1924 = vmatprep.mubr.bf16.mxu0 0
  %1925 = vmatmul.mubr.bf16.gmra.mrb[0].mxu0 %v1115
  %v1926 = vpop.f32.mrb[0].mxu0
  %v1927 = vadd.f32 0.0, %v1926
  %v1928 = vpop.f32.mrb[0].mxu0
  %v1929 = vpop.f32.mrb[0].mxu0
  %v1930 = vadd.f32 0.0, %v1929
  %v1931 = vpop.f32.mrb[0].mxu0
  %1932 = vmatprep.mubr.bf16.mxu0 0
  %1933 = vmatmul.mubr.bf16.gmra.mrb[0].mxu0 %v1118
  %v1934 = vpop.f32.mrb[0].mxu0
  %v1935 = vadd.f32 0.0, %v1934
  %v1936 = vpop.f32.mrb[0].mxu0
  %v1937 = vpop.f32.mrb[0].mxu0
  %v1938 = vadd.f32 0.0, %v1937
  %v1939 = vpop.f32.mrb[0].mxu0
  %1940 = vmatprep.mubr.bf16.mxu0 0
  %1941 = vmatmul.mubr.bf16.gmra.mrb[0].mxu0 %v1121
  %v1942 = vpop.f32.mrb[0].mxu0
  %v1943 = vadd.f32 0.0, %v1942
  %v1944 = vpop.f32.mrb[0].mxu0
  %v1945 = vpop.f32.mrb[0].mxu0
  %v1946 = vadd.f32 0.0, %v1945
  %v1947 = vpop.f32.mrb[0].mxu0
  %1948 = vmatprep.mubr.bf16.mxu0 0
  %1949 = vmatmul.mubr.bf16.gmra.mrb[0].mxu0 %v1124
  %v1950 = vpop.f32.mrb[0].mxu0
  %v1951 = vadd.f32 0.0, %v1950
  %v1952 = vpop.f32.mrb[0].mxu0
  %v1953 = vpop.f32.mrb[0].mxu0
  %v1954 = vadd.f32 0.0, %v1953
  %v1955 = vpop.f32.mrb[0].mxu0
  %1956 = vmatprep.mubr.bf16.mxu0 0
  %1957 = vmatmul.mubr.bf16.gmra.mrb[0].mxu0 %v1127
  %v1958 = vpop.f32.mrb[0].mxu0
  %v1959 = vadd.f32 0.0, %v1958
  %v1960 = vpop.f32.mrb[0].mxu0
  %v1961 = vpop.f32.mrb[0].mxu0
  %v1962 = vadd.f32 0.0, %v1961
  %v1963 = vpop.f32.mrb[0].mxu0
  %1964 = vmatprep.mubr.bf16.mxu0 0
  %1965 = vmatmul.mubr.bf16.gmra.mrb[0].mxu0 %v1130
  %v1966 = vpop.f32.mrb[0].mxu0
  %v1967 = vadd.f32 0.0, %v1966
  %v1968 = vpop.f32.mrb[0].mxu0
  %v1969 = vpop.f32.mrb[0].mxu0
  %v1970 = vadd.f32 0.0, %v1969
  %v1971 = vpop.f32.mrb[0].mxu0
  %1972 = vmatprep.mubr.bf16.mxu0 0
  %1973 = vmatmul.mubr.bf16.gmra.mrb[0].mxu0 %v1133
  %v1974 = vpop.f32.mrb[0].mxu0
  %v1975 = vadd.f32 0.0, %v1974
  %v1976 = vpop.f32.mrb[0].mxu0
  %v1977 = vpop.f32.mrb[0].mxu0
  %v1978 = vadd.f32 0.0, %v1977
  %v1979 = vpop.f32.mrb[0].mxu0
  %1980 = vmatprep.mubr.bf16.mxu0 0
  %1981 = vmatmul.mubr.bf16.gmra.mrb[0].mxu0 %v1136
  %v1982 = vpop.f32.mrb[0].mxu0
  %v1983 = vadd.f32 0.0, %v1982
  %v1984 = vpop.f32.mrb[0].mxu0
  %v1985 = vpop.f32.mrb[0].mxu0
  %v1986 = vadd.f32 0.0, %v1985
  %v1987 = vpop.f32.mrb[0].mxu0
  %1988 = vmatprep.mubr.bf16.mxu0 0
  %1989 = vmatmul.mubr.bf16.gmra.mrb[0].mxu0 %v1139
  %v1990 = vpop.f32.mrb[0].mxu0
  %v1991 = vadd.f32 0.0, %v1990
  %v1992 = vpop.f32.mrb[0].mxu0
  %v1993 = vpop.f32.mrb[0].mxu0
  %v1994 = vadd.f32 0.0, %v1993
  %v1995 = vpop.f32.mrb[0].mxu0
  %1996 = vmatprep.mubr.bf16.mxu0 0
  %1997 = vmatmul.mubr.bf16.gmra.mrb[0].mxu0 %v1142
  %v1998 = vpop.f32.mrb[0].mxu0
  %v1999 = vadd.f32 0.0, %v1998
  %v2000 = vpop.f32.mrb[0].mxu0
  %v2001 = vpop.f32.mrb[0].mxu0
  %v2002 = vadd.f32 0.0, %v2001
  %v2003 = vpop.f32.mrb[0].mxu0
  %2004 = vmatprep.mubr.bf16.mxu0 0
  %2005 = vmatmul.mubr.bf16.gmra.mrb[0].mxu0 %v1145
  %v2006 = vpop.f32.mrb[0].mxu0
  %v2007 = vadd.f32 0.0, %v2006
  %v2008 = vpop.f32.mrb[0].mxu0
  %v2009 = vpop.f32.mrb[0].mxu0
  %v2010 = vadd.f32 0.0, %v2009
  %v2011 = vpop.f32.mrb[0].mxu0
  %2012 = vmatprep.mubr.bf16.mxu0 0
  %2013 = vmatmul.mubr.bf16.gmra.mrb[0].mxu0 %v1148
  %v2014 = vpop.f32.mrb[0].mxu0
  %v2015 = vadd.f32 0.0, %v2014
  %v2016 = vpop.f32.mrb[0].mxu0
  %v2017 = vpop.f32.mrb[0].mxu0
  %v2018 = vadd.f32 0.0, %v2017
  %v2019 = vpop.f32.mrb[0].mxu0
  %2020 = vmatprep.mubr.bf16.mxu0 0
  %2021 = vmatmul.mubr.bf16.gmra.mrb[0].mxu0 %v1151
  %v2022 = vpop.f32.mrb[0].mxu0
  %v2023 = vadd.f32 0.0, %v2022
  %v2024 = vpop.f32.mrb[0].mxu0
  %v2025 = vpop.f32.mrb[0].mxu0
  %v2026 = vadd.f32 0.0, %v2025
  %v2027 = vpop.f32.mrb[0].mxu0
  %2028 = vmatprep.mubr.bf16.mxu0 0
  %2029 = vmatmul.mubr.bf16.gmra.mrb[0].mxu0 %v1154
  %v2030 = vpop.f32.mrb[0].mxu0
  %v2031 = vadd.f32 0.0, %v2030
  %v2032 = vpop.f32.mrb[0].mxu0
  %v2033 = vpop.f32.mrb[0].mxu0
  %v2034 = vadd.f32 0.0, %v2033
  %v2035 = vpop.f32.mrb[0].mxu0
  %2036 = vmatprep.mubr.bf16.mxu0 0
  %2037 = vmatmul.mubr.bf16.gmra.mrb[0].mxu0 %v1157
  %v2038 = vpop.f32.mrb[0].mxu0
  %v2039 = vadd.f32 0.0, %v2038
  %v2040 = vpop.f32.mrb[0].mxu0
  %v2041 = vpop.f32.mrb[0].mxu0
  %v2042 = vadd.f32 0.0, %v2041
  %v2043 = vpop.f32.mrb[0].mxu0
  %2044 = vmatprep.mubr.bf16.mxu0 0
  %2045 = vmatmul.mubr.bf16.gmra.mrb[0].mxu0 %v1160
  %v2046 = vpop.f32.mrb[0].mxu0
  %v2047 = vadd.f32 0.0, %v2046
  %v2048 = vpop.f32.mrb[0].mxu0
  %v2049 = vpop.f32.mrb[0].mxu0
  %v2050 = vadd.f32 0.0, %v2049
  %v2051 = vpop.f32.mrb[0].mxu0
  %2052 = vmatprep.mubr.bf16.mxu0 0
  %2053 = vmatmul.mubr.bf16.gmra.mrb[0].mxu0 %v1163
  %v2054 = vpop.f32.mrb[0].mxu0
  %v2055 = vadd.f32 0.0, %v2054
  %v2056 = vpop.f32.mrb[0].mxu0
  %v2057 = vpop.f32.mrb[0].mxu0
  %v2058 = vadd.f32 0.0, %v2057
  %v2059 = vpop.f32.mrb[0].mxu0
  %2060 = vmatprep.mubr.bf16.mxu0 0
  %2061 = vmatmul.mubr.bf16.gmra.mrb[0].mxu0 %v1166
  %v2062 = vpop.f32.mrb[0].mxu0
  %v2063 = vadd.f32 0.0, %v2062
  %v2064 = vpop.f32.mrb[0].mxu0
  %v2065 = vpop.f32.mrb[0].mxu0
  %v2066 = vadd.f32 0.0, %v2065
  %v2067 = vpop.f32.mrb[0].mxu0
  %2068 = vmatprep.mubr.bf16.mxu0 0
  %2069 = vmatmul.mubr.bf16.gmra.mrb[0].mxu0 %v1169
  %v2070 = vpop.f32.mrb[0].mxu0
  %v2071 = vadd.f32 0.0, %v2070
  %v2072 = vpop.f32.mrb[0].mxu0
  %v2073 = vpop.f32.mrb[0].mxu0
  %v2074 = vadd.f32 0.0, %v2073
  %v2075 = vpop.f32.mrb[0].mxu0
  %2076 = vmatprep.mubr.bf16.mxu0 0
  %2077 = vmatmul.mubr.bf16.gmra.mrb[0].mxu0 %v1172
  %v2078 = vpop.f32.mrb[0].mxu0
  %v2079 = vadd.f32 0.0, %v2078
  %v2080 = vpop.f32.mrb[0].mxu0
  %v2081 = vpop.f32.mrb[0].mxu0
  %v2082 = vadd.f32 0.0, %v2081
  %v2083 = vpop.f32.mrb[0].mxu0
  %2084 = vmatprep.mubr.bf16.mxu0 0
  %2085 = vmatmul.mubr.bf16.gmra.mrb[0].mxu0 %v1175
  %v2086 = vpop.f32.mrb[0].mxu0
  %v2087 = vadd.f32 0.0, %v2086
  %v2088 = vpop.f32.mrb[0].mxu0
  %v2089 = vpop.f32.mrb[0].mxu0
  %v2090 = vadd.f32 0.0, %v2089
  %v2091 = vpop.f32.mrb[0].mxu0
  %2092 = vmatprep.mubr.bf16.mxu0 0
  %2093 = vmatmul.mubr.bf16.gmra.mrb[0].mxu0 %v1178
  %v2094 = vpop.f32.mrb[0].mxu0
  %v2095 = vadd.f32 0.0, %v2094
  %v2096 = vpop.f32.mrb[0].mxu0
  %v2097 = vpop.f32.mrb[0].mxu0
  %v2098 = vadd.f32 0.0, %v2097
  %v2099 = vpop.f32.mrb[0].mxu0
  %2100 = vmatprep.mubr.bf16.mxu0 0
  %2101 = vmatmul.mubr.bf16.gmra.mrb[0].mxu0 %v1181
  %v2102 = vpop.f32.mrb[0].mxu0
  %v2103 = vadd.f32 0.0, %v2102
  %v2104 = vpop.f32.mrb[0].mxu0
  %v2105 = vpop.f32.mrb[0].mxu0
  %v2106 = vadd.f32 0.0, %v2105
  %v2107 = vpop.f32.mrb[0].mxu0
  %2108 = vmatprep.mubr.bf16.mxu0 0
  %2109 = vmatmul.mubr.bf16.gmra.mrb[0].mxu0 %v1184
  %v2110 = vpop.f32.mrb[0].mxu0
  %v2111 = vadd.f32 0.0, %v2110
  %v2112 = vpop.f32.mrb[0].mxu0
  %v2113 = vpop.f32.mrb[0].mxu0
  %v2114 = vadd.f32 0.0, %v2113
  %v2115 = vpop.f32.mrb[0].mxu0
  %2116 = vmatprep.mubr.bf16.mxu0 0
  %2117 = vmatmul.mubr.bf16.gmra.mrb[0].mxu0 %v1187
  %v2118 = vpop.f32.mrb[0].mxu0
  %v2119 = vadd.f32 0.0, %v2118
  %v2120 = vpop.f32.mrb[0].mxu0
  %v2121 = vpop.f32.mrb[0].mxu0
  %v2122 = vadd.f32 0.0, %v2121
  %v2123 = vpop.f32.mrb[0].mxu0
  %2124 = vmatprep.mubr.bf16.mxu0 0
  %2125 = vmatmul.mubr.bf16.gmra.mrb[0].mxu0 %v1190
  %v2126 = vpop.f32.mrb[0].mxu0
  %v2127 = vadd.f32 0.0, %v2126
  %v2128 = vpop.f32.mrb[0].mxu0
  %v2129 = vpop.f32.mrb[0].mxu0
  %v2130 = vadd.f32 0.0, %v2129
  %v2131 = vpop.f32.mrb[0].mxu0
  %2132 = vmatprep.mubr.bf16.mxu0 0
  %2133 = vmatmul.mubr.bf16.gmra.mrb[0].mxu0 %v1193
  %v2134 = vpop.f32.mrb[0].mxu0
  %v2135 = vadd.f32 0.0, %v2134
  %v2136 = vpop.f32.mrb[0].mxu0
  %v2137 = vpop.f32.mrb[0].mxu0
  %v2138 = vadd.f32 0.0, %v2137
  %v2139 = vpop.f32.mrb[0].mxu0
  %2140 = vmatprep.mubr.bf16.mxu0 0
  %2141 = vmatmul.mubr.bf16.gmra.mrb[0].mxu0 %v1196
  %v2142 = vpop.f32.mrb[0].mxu0
  %v2143 = vadd.f32 0.0, %v2142
  %v2144 = vpop.f32.mrb[0].mxu0
  %v2145 = vpop.f32.mrb[0].mxu0
  %v2146 = vadd.f32 0.0, %v2145
  %v2147 = vpop.f32.mrb[0].mxu0
  %2148 = vmatprep.mubr.bf16.mxu0 0
  %2149 = vmatmul.mubr.bf16.gmra.mrb[0].mxu0 %v1199
  %v2150 = vpop.f32.mrb[0].mxu0
  %v2151 = vadd.f32 0.0, %v2150
  %v2152 = vpop.f32.mrb[0].mxu0
  %v2153 = vpop.f32.mrb[0].mxu0
  %v2154 = vadd.f32 0.0, %v2153
  %v2155 = vpop.f32.mrb[0].mxu0
  %2156 = vmatprep.mubr.bf16.mxu0 0
  %2157 = vmatmul.mubr.bf16.gmra.mrb[0].mxu0 %v1202
  %v2158 = vpop.f32.mrb[0].mxu0
  %v2159 = vadd.f32 0.0, %v2158
  %v2160 = vpop.f32.mrb[0].mxu0
  %v2161 = vpop.f32.mrb[0].mxu0
  %v2162 = vadd.f32 0.0, %v2161
  %v2163 = vpop.f32.mrb[0].mxu0
  %2164 = vmatprep.mubr.bf16.mxu0 0
  %2165 = vmatmul.mubr.bf16.gmra.mrb[0].mxu0 %v1205
  %v2166 = vpop.f32.mrb[0].mxu0
  %v2167 = vadd.f32 0.0, %v2166
  %v2168 = vpop.f32.mrb[0].mxu0
  %v2169 = vpop.f32.mrb[0].mxu0
  %v2170 = vadd.f32 0.0, %v2169
  %v2171 = vpop.f32.mrb[0].mxu0
  %2172 = vmatprep.mubr.bf16.mxu0 0
  %2173 = vmatmul.mubr.bf16.gmra.mrb[0].mxu0 %v1208
  %v2174 = vpop.f32.mrb[0].mxu0
  %v2175 = vadd.f32 0.0, %v2174
  %v2176 = vpop.f32.mrb[0].mxu0
  %v2177 = vpop.f32.mrb[0].mxu0
  %v2178 = vadd.f32 0.0, %v2177
  %v2179 = vpop.f32.mrb[0].mxu0
  %2180 = vmatprep.mubr.bf16.mxu0 0
  %2181 = vmatmul.mubr.bf16.gmra.mrb[0].mxu0 %v1211
  %v2182 = vpop.f32.mrb[0].mxu0
  %v2183 = vadd.f32 0.0, %v2182
  %v2184 = vpop.f32.mrb[0].mxu0
  %v2185 = vpop.f32.mrb[0].mxu0
  %v2186 = vadd.f32 0.0, %v2185
  %v2187 = vpop.f32.mrb[0].mxu0
  %2188 = vmatprep.mubr.bf16.mxu0 0
  %2189 = vmatmul.mubr.bf16.gmra.mrb[0].mxu0 %v1214
  %v2190 = vpop.f32.mrb[0].mxu0
  %v2191 = vadd.f32 0.0, %v2190
  %v2192 = vpop.f32.mrb[0].mxu0
  %v2193 = vpop.f32.mrb[0].mxu0
  %v2194 = vadd.f32 0.0, %v2193
  %v2195 = vpop.f32.mrb[0].mxu0
  %2196 = vmatprep.mubr.bf16.mxu0 0
  %2197 = vmatmul.mubr.bf16.gmra.mrb[0].mxu0 %v1217
  %v2198 = vpop.f32.mrb[0].mxu0
  %v2199 = vadd.f32 0.0, %v2198
  %v2200 = vpop.f32.mrb[0].mxu0
  %v2201 = vpop.f32.mrb[0].mxu0
  %v2202 = vadd.f32 0.0, %v2201
  %v2203 = vpop.f32.mrb[0].mxu0
  %2204 = vmatprep.mubr.bf16.mxu0 0
  %2205 = vmatmul.mubr.bf16.gmra.mrb[0].mxu0 %v1220
  %v2206 = vpop.f32.mrb[0].mxu0
  %v2207 = vadd.f32 0.0, %v2206
  %v2208 = vpop.f32.mrb[0].mxu0
  %v2209 = vpop.f32.mrb[0].mxu0
  %v2210 = vadd.f32 0.0, %v2209
  %v2211 = vpop.f32.mrb[0].mxu0
  %2212 = vmatprep.mubr.bf16.mxu0 0
  %2213 = vmatmul.mubr.bf16.gmra.mrb[0].mxu0 %v1223
  %v2214 = vpop.f32.mrb[0].mxu0
  %v2215 = vadd.f32 0.0, %v2214
  %v2216 = vpop.f32.mrb[0].mxu0
  %v2217 = vpop.f32.mrb[0].mxu0
  %v2218 = vadd.f32 0.0, %v2217
  %v2219 = vpop.f32.mrb[0].mxu0
  %2220 = vmatprep.mubr.bf16.mxu0 0
  %2221 = vmatmul.mubr.bf16.gmra.mrb[0].mxu0 %v1226
  %v2222 = vpop.f32.mrb[0].mxu0
  %v2223 = vadd.f32 0.0, %v2222
  %v2224 = vpop.f32.mrb[0].mxu0
  %v2225 = vpop.f32.mrb[0].mxu0
  %v2226 = vpop.f32.mrb[0].mxu0
  %2227 = vdwg.mxu0
  %v2228 = vmax.f32 %v1263, 0.0
  %v2229 = vmax.f32 %v1266, 0.0
  %v2230 = vmax.f32 %v1271, 0.0
  %v2231 = vmax.f32 %v1274, 0.0
  %v2232 = vmax.f32 %v1279, 0.0
  %v2233 = vmax.f32 %v1282, 0.0
  %v2234 = vmax.f32 %v1287, 0.0
  %v2235 = vmax.f32 %v1290, 0.0
  %v2236 = vmax.f32 %v1295, 0.0
  %v2237 = vmax.f32 %v1298, 0.0
  %v2238 = vmax.f32 %v1303, 0.0
  %v2239 = vmax.f32 %v1306, 0.0
  %v2240 = vmax.f32 %v1311, 0.0
  %v2241 = vmax.f32 %v1314, 0.0
  %v2242 = vmax.f32 %v1319, 0.0
  %v2243 = vmax.f32 %v1322, 0.0
  %v2244 = vmax.f32 %v1327, 0.0
  %v2245 = vmax.f32 %v1330, 0.0
  %v2246 = vmax.f32 %v1335, 0.0
  %v2247 = vmax.f32 %v1338, 0.0
  %v2248 = vmax.f32 %v1343, 0.0
  %v2249 = vmax.f32 %v1346, 0.0
  %v2250 = vmax.f32 %v1351, 0.0
  %v2251 = vmax.f32 %v1354, 0.0
  %v2252 = vmax.f32 %v1359, 0.0
  %v2253 = vmax.f32 %v1362, 0.0
  %v2254 = vmax.f32 %v1367, 0.0
  %v2255 = vmax.f32 %v1370, 0.0
  %v2256 = vmax.f32 %v1375, 0.0
  %v2257 = vmax.f32 %v1378, 0.0
  %v2258 = vmax.f32 %v1383, 0.0
  %v2259 = vmax.f32 %v1386, 0.0
  %v2260 = vmax.f32 %v1391, 0.0
  %v2261 = vmax.f32 %v1394, 0.0
  %v2262 = vmax.f32 %v1399, 0.0
  %v2263 = vmax.f32 %v1402, 0.0
  %v2264 = vmax.f32 %v1407, 0.0
  %v2265 = vmax.f32 %v1410, 0.0
  %v2266 = vmax.f32 %v1415, 0.0
  %v2267 = vmax.f32 %v1418, 0.0
  %v2268 = vmax.f32 %v1423, 0.0
  %v2269 = vmax.f32 %v1426, 0.0
  %v2270 = vmax.f32 %v1431, 0.0
  %v2271 = vmax.f32 %v1434, 0.0
  %v2272 = vmax.f32 %v1439, 0.0
  %v2273 = vmax.f32 %v1442, 0.0
  %v2274 = vmax.f32 %v1447, 0.0
  %v2275 = vmax.f32 %v1450, 0.0
  %v2276 = vmax.f32 %v1455, 0.0
  %v2277 = vmax.f32 %v1458, 0.0
  %v2278 = vmax.f32 %v1463, 0.0
  %v2279 = vmax.f32 %v1466, 0.0
  %v2280 = vmax.f32 %v1471, 0.0
  %v2281 = vmax.f32 %v1474, 0.0
  %v2282 = vmax.f32 %v1479, 0.0
  %v2283 = vmax.f32 %v1482, 0.0
  %v2284 = vmax.f32 %v1487, 0.0
  %v2285 = vmax.f32 %v1490, 0.0
  %v2286 = vmax.f32 %v1495, 0.0
  %v2287 = vmax.f32 %v1498, 0.0
  %v2288 = vmax.f32 %v1503, 0.0
  %v2289 = vmax.f32 %v1506, 0.0
  %v2290 = vmax.f32 %v1511, 0.0
  %v2291 = vmax.f32 %v1514, 0.0
  %v2292 = vmax.f32 %v1519, 0.0
  %v2293 = vmax.f32 %v1522, 0.0
  %v2294 = vmax.f32 %v1527, 0.0
  %v2295 = vmax.f32 %v1530, 0.0
  %v2296 = vmax.f32 %v1535, 0.0
  %v2297 = vmax.f32 %v1538, 0.0
  %v2298 = vmax.f32 %v1543, 0.0
  %v2299 = vmax.f32 %v1546, 0.0
  %v2300 = vmax.f32 %v1551, 0.0
  %v2301 = vmax.f32 %v1554, 0.0
  %v2302 = vmax.f32 %v1559, 0.0
  %v2303 = vmax.f32 %v1562, 0.0
  %v2304 = vmax.f32 %v1567, 0.0
  %v2305 = vmax.f32 %v1570, 0.0
  %v2306 = vmax.f32 %v1575, 0.0
  %v2307 = vmax.f32 %v1578, 0.0
  %v2308 = vmax.f32 %v1583, 0.0
  %v2309 = vmax.f32 %v1586, 0.0
  %v2310 = vmax.f32 %v1591, 0.0
  %v2311 = vmax.f32 %v1594, 0.0
  %v2312 = vmax.f32 %v1599, 0.0
  %v2313 = vmax.f32 %v1602, 0.0
  %v2314 = vmax.f32 %v1607, 0.0
  %v2315 = vmax.f32 %v1610, 0.0
  %v2316 = vmax.f32 %v1615, 0.0
  %v2317 = vmax.f32 %v1618, 0.0
  %v2318 = vmax.f32 %v1623, 0.0
  %v2319 = vmax.f32 %v1626, 0.0
  %v2320 = vmax.f32 %v1631, 0.0
  %v2321 = vmax.f32 %v1634, 0.0
  %v2322 = vmax.f32 %v1639, 0.0
  %v2323 = vmax.f32 %v1642, 0.0
  %v2324 = vmax.f32 %v1647, 0.0
  %v2325 = vmax.f32 %v1650, 0.0
  %v2326 = vmax.f32 %v1655, 0.0
  %v2327 = vmax.f32 %v1658, 0.0
  %v2328 = vmax.f32 %v1663, 0.0
  %v2329 = vmax.f32 %v1666, 0.0
  %v2330 = vmax.f32 %v1671, 0.0
  %v2331 = vmax.f32 %v1674, 0.0
  %v2332 = vmax.f32 %v1679, 0.0
  %v2333 = vmax.f32 %v1682, 0.0
  %v2334 = vmax.f32 %v1687, 0.0
  %v2335 = vmax.f32 %v1690, 0.0
  %v2336 = vmax.f32 %v1695, 0.0
  %v2337 = vmax.f32 %v1698, 0.0
  %v2338 = vmax.f32 %v1703, 0.0
  %v2339 = vmax.f32 %v1706, 0.0
  %v2340 = vmax.f32 %v1711, 0.0
  %v2341 = vmax.f32 %v1714, 0.0
  %v2342 = vmax.f32 %v1719, 0.0
  %v2343 = vmax.f32 %v1722, 0.0
  %v2344 = vmax.f32 %v1727, 0.0
  %v2345 = vmax.f32 %v1730, 0.0
  %v2346 = vmax.f32 %v1735, 0.0
  %v2347 = vmax.f32 %v1738, 0.0
  %v2348 = vmax.f32 %v1743, 0.0
  %v2349 = vmax.f32 %v1746, 0.0
  %v2350 = vmax.f32 %v1751, 0.0
  %v2351 = vmax.f32 %v1754, 0.0
  %v2352 = vmax.f32 %v1759, 0.0
  %v2353 = vmax.f32 %v1762, 0.0
  %v2354 = vmax.f32 %v1767, 0.0
  %v2355 = vmax.f32 %v1770, 0.0
  %v2356 = vmax.f32 %v1775, 0.0
  %v2357 = vmax.f32 %v1778, 0.0
  %v2358 = vmax.f32 %v1783, 0.0
  %v2359 = vmax.f32 %v1786, 0.0
  %v2360 = vmax.f32 %v1791, 0.0
  %v2361 = vmax.f32 %v1794, 0.0
  %v2362 = vmax.f32 %v1799, 0.0
  %v2363 = vmax.f32 %v1802, 0.0
  %v2364 = vmax.f32 %v1807, 0.0
  %v2365 = vmax.f32 %v1810, 0.0
  %v2366 = vmax.f32 %v1815, 0.0
  %v2367 = vmax.f32 %v1818, 0.0
  %v2368 = vmax.f32 %v1823, 0.0
  %v2369 = vmax.f32 %v1826, 0.0
  %v2370 = vmax.f32 %v1831, 0.0
  %v2371 = vmax.f32 %v1834, 0.0
  %v2372 = vmax.f32 %v1839, 0.0
  %v2373 = vmax.f32 %v1842, 0.0
  %v2374 = vmax.f32 %v1847, 0.0
  %v2375 = vmax.f32 %v1850, 0.0
  %v2376 = vmax.f32 %v1855, 0.0
  %v2377 = vmax.f32 %v1858, 0.0
  %v2378 = vmax.f32 %v1863, 0.0
  %v2379 = vmax.f32 %v1866, 0.0
  %v2380 = vmax.f32 %v1871, 0.0
  %v2381 = vmax.f32 %v1874, 0.0
  %v2382 = vmax.f32 %v1879, 0.0
  %v2383 = vmax.f32 %v1882, 0.0
  %v2384 = vmax.f32 %v1887, 0.0
  %v2385 = vmax.f32 %v1890, 0.0
  %v2386 = vmax.f32 %v1895, 0.0
  %v2387 = vmax.f32 %v1898, 0.0
  %v2388 = vmax.f32 %v1903, 0.0
  %v2389 = vmax.f32 %v1906, 0.0
  %v2390 = vmax.f32 %v1911, 0.0
  %v2391 = vmax.f32 %v1914, 0.0
  %v2392 = vmax.f32 %v1919, 0.0
  %v2393 = vmax.f32 %v1922, 0.0
  %v2394 = vmax.f32 %v1927, 0.0
  %v2395 = vmax.f32 %v1930, 0.0
  %v2396 = vmax.f32 %v1935, 0.0
  %v2397 = vmax.f32 %v1938, 0.0
  %v2398 = vmax.f32 %v1943, 0.0
  %v2399 = vmax.f32 %v1946, 0.0
  %v2400 = vmax.f32 %v1951, 0.0
  %v2401 = vmax.f32 %v1954, 0.0
  %v2402 = vmax.f32 %v1959, 0.0
  %v2403 = vmax.f32 %v1962, 0.0
  %v2404 = vmax.f32 %v1967, 0.0
  %v2405 = vmax.f32 %v1970, 0.0
  %v2406 = vmax.f32 %v1975, 0.0
  %v2407 = vmax.f32 %v1978, 0.0
  %v2408 = vmax.f32 %v1983, 0.0
  %v2409 = vmax.f32 %v1986, 0.0
  %v2410 = vmax.f32 %v1991, 0.0
  %v2411 = vmax.f32 %v1994, 0.0
  %v2412 = vmax.f32 %v1999, 0.0
  %v2413 = vmax.f32 %v2002, 0.0
  %v2414 = vmax.f32 %v2007, 0.0
  %v2415 = vmax.f32 %v2010, 0.0
  %v2416 = vmax.f32 %v2015, 0.0
  %v2417 = vmax.f32 %v2018, 0.0
  %v2418 = vmax.f32 %v2023, 0.0
  %v2419 = vmax.f32 %v2026, 0.0
  %v2420 = vmax.f32 %v2031, 0.0
  %v2421 = vmax.f32 %v2034, 0.0
  %v2422 = vmax.f32 %v2039, 0.0
  %v2423 = vmax.f32 %v2042, 0.0
  %v2424 = vmax.f32 %v2047, 0.0
  %v2425 = vmax.f32 %v2050, 0.0
  %v2426 = vmax.f32 %v2055, 0.0
  %v2427 = vmax.f32 %v2058, 0.0
  %v2428 = vmax.f32 %v2063, 0.0
  %v2429 = vmax.f32 %v2066, 0.0
  %v2430 = vmax.f32 %v2071, 0.0
  %v2431 = vmax.f32 %v2074, 0.0
  %v2432 = vmax.f32 %v2079, 0.0
  %v2433 = vmax.f32 %v2082, 0.0
  %v2434 = vmax.f32 %v2087, 0.0
  %v2435 = vmax.f32 %v2090, 0.0
  %v2436 = vmax.f32 %v2095, 0.0
  %v2437 = vmax.f32 %v2098, 0.0
  %v2438 = vmax.f32 %v2103, 0.0
  %v2439 = vmax.f32 %v2106, 0.0
  %v2440 = vmax.f32 %v2111, 0.0
  %v2441 = vmax.f32 %v2114, 0.0
  %v2442 = vmax.f32 %v2119, 0.0
  %v2443 = vmax.f32 %v2122, 0.0
  %v2444 = vmax.f32 %v2127, 0.0
  %v2445 = vmax.f32 %v2130, 0.0
  %v2446 = vmax.f32 %v2135, 0.0
  %v2447 = vmax.f32 %v2138, 0.0
  %v2448 = vmax.f32 %v2143, 0.0
  %v2449 = vmax.f32 %v2146, 0.0
  %v2450 = vmax.f32 %v2151, 0.0
  %v2451 = vmax.f32 %v2154, 0.0
  %v2452 = vmax.f32 %v2159, 0.0
  %v2453 = vmax.f32 %v2162, 0.0
  %v2454 = vmax.f32 %v2167, 0.0
  %v2455 = vmax.f32 %v2170, 0.0
  %v2456 = vmax.f32 %v2175, 0.0
  %v2457 = vmax.f32 %v2178, 0.0
  %v2458 = vmax.f32 %v2183, 0.0
  %v2459 = vmax.f32 %v2186, 0.0
  %v2460 = vmax.f32 %v2191, 0.0
  %v2461 = vmax.f32 %v2194, 0.0
  %v2462 = vmax.f32 %v2199, 0.0
  %v2463 = vmax.f32 %v2202, 0.0
  %v2464 = vmax.f32 %v2207, 0.0
  %v2465 = vmax.f32 %v2210, 0.0
  %v2466 = vmax.f32 %v2215, 0.0
  %v2467 = vmax.f32 %v2218, 0.0
  %v2468 = vmax.f32 %v2223, 0.0
  %v2469 = vpack.c.bf16 %v2229, %v2228
  %v2470 = vpack.c.bf16 %v2231, %v2230
  %v2471 = vpack.c.bf16 %v2233, %v2232
  %v2472 = vpack.c.bf16 %v2235, %v2234
  %v2473 = vpack.c.bf16 %v2237, %v2236
  %v2474 = vpack.c.bf16 %v2239, %v2238
  %v2475 = vpack.c.bf16 %v2241, %v2240
  %v2476 = vpack.c.bf16 %v2243, %v2242
  %v2477 = vpack.c.bf16 %v2245, %v2244
  %v2478 = vpack.c.bf16 %v2247, %v2246
  %v2479 = vpack.c.bf16 %v2249, %v2248
  %v2480 = vpack.c.bf16 %v2251, %v2250
  %v2481 = vpack.c.bf16 %v2253, %v2252
  %v2482 = vpack.c.bf16 %v2255, %v2254
  %v2483 = vpack.c.bf16 %v2257, %v2256
  %v2484 = vpack.c.bf16 %v2259, %v2258
  %v2485 = vpack.c.bf16 %v2261, %v2260
  %v2486 = vpack.c.bf16 %v2263, %v2262
  %v2487 = vpack.c.bf16 %v2265, %v2264
  %v2488 = vpack.c.bf16 %v2267, %v2266
  %v2489 = vpack.c.bf16 %v2269, %v2268
  %v2490 = vpack.c.bf16 %v2271, %v2270
  %v2491 = vpack.c.bf16 %v2273, %v2272
  %v2492 = vpack.c.bf16 %v2275, %v2274
  %v2493 = vpack.c.bf16 %v2277, %v2276
  %v2494 = vpack.c.bf16 %v2279, %v2278
  %v2495 = vpack.c.bf16 %v2281, %v2280
  %v2496 = vpack.c.bf16 %v2283, %v2282
  %v2497 = vpack.c.bf16 %v2285, %v2284
  %v2498 = vpack.c.bf16 %v2287, %v2286
  %v2499 = vpack.c.bf16 %v2289, %v2288
  %v2500 = vpack.c.bf16 %v2291, %v2290
  %v2501 = vpack.c.bf16 %v2293, %v2292
  %v2502 = vpack.c.bf16 %v2295, %v2294
  %v2503 = vpack.c.bf16 %v2297, %v2296
  %v2504 = vpack.c.bf16 %v2299, %v2298
  %v2505 = vpack.c.bf16 %v2301, %v2300
  %v2506 = vpack.c.bf16 %v2303, %v2302
  %v2507 = vpack.c.bf16 %v2305, %v2304
  %v2508 = vpack.c.bf16 %v2307, %v2306
  %v2509 = vpack.c.bf16 %v2309, %v2308
  %v2510 = vpack.c.bf16 %v2311, %v2310
  %v2511 = vpack.c.bf16 %v2313, %v2312
  %v2512 = vpack.c.bf16 %v2315, %v2314
  %v2513 = vpack.c.bf16 %v2317, %v2316
  %v2514 = vpack.c.bf16 %v2319, %v2318
  %v2515 = vpack.c.bf16 %v2321, %v2320
  %v2516 = vpack.c.bf16 %v2323, %v2322
  %v2517 = vpack.c.bf16 %v2325, %v2324
  %v2518 = vpack.c.bf16 %v2327, %v2326
  %v2519 = vpack.c.bf16 %v2329, %v2328
  %v2520 = vpack.c.bf16 %v2331, %v2330
  %v2521 = vpack.c.bf16 %v2333, %v2332
  %v2522 = vpack.c.bf16 %v2335, %v2334
  %v2523 = vpack.c.bf16 %v2337, %v2336
  %v2524 = vpack.c.bf16 %v2339, %v2338
  %v2525 = vpack.c.bf16 %v2341, %v2340
  %v2526 = vpack.c.bf16 %v2343, %v2342
  %v2527 = vpack.c.bf16 %v2345, %v2344
  %v2528 = vpack.c.bf16 %v2347, %v2346
  %v2529 = vpack.c.bf16 %v2349, %v2348
  %v2530 = vpack.c.bf16 %v2351, %v2350
  %v2531 = vpack.c.bf16 %v2353, %v2352
  %v2532 = vpack.c.bf16 %v2355, %v2354
  %v2533 = vpack.c.bf16 %v2357, %v2356
  %v2534 = vpack.c.bf16 %v2359, %v2358
  %v2535 = vpack.c.bf16 %v2361, %v2360
  %v2536 = vpack.c.bf16 %v2363, %v2362
  %v2537 = vpack.c.bf16 %v2365, %v2364
  %v2538 = vpack.c.bf16 %v2367, %v2366
  %v2539 = vpack.c.bf16 %v2369, %v2368
  %v2540 = vpack.c.bf16 %v2371, %v2370
  %v2541 = vpack.c.bf16 %v2373, %v2372
  %v2542 = vpack.c.bf16 %v2375, %v2374
  %v2543 = vpack.c.bf16 %v2377, %v2376
  %v2544 = vpack.c.bf16 %v2379, %v2378
  %v2545 = vpack.c.bf16 %v2381, %v2380
  %v2546 = vpack.c.bf16 %v2383, %v2382
  %v2547 = vpack.c.bf16 %v2385, %v2384
  %v2548 = vpack.c.bf16 %v2387, %v2386
  %v2549 = vpack.c.bf16 %v2389, %v2388
  %v2550 = vpack.c.bf16 %v2391, %v2390
  %v2551 = vpack.c.bf16 %v2393, %v2392
  %v2552 = vpack.c.bf16 %v2395, %v2394
  %v2553 = vpack.c.bf16 %v2397, %v2396
  %v2554 = vpack.c.bf16 %v2399, %v2398
  %v2555 = vpack.c.bf16 %v2401, %v2400
  %v2556 = vpack.c.bf16 %v2403, %v2402
  %v2557 = vpack.c.bf16 %v2405, %v2404
  %v2558 = vpack.c.bf16 %v2407, %v2406
  %v2559 = vpack.c.bf16 %v2409, %v2408
  %v2560 = vpack.c.bf16 %v2411, %v2410
  %v2561 = vpack.c.bf16 %v2413, %v2412
  %v2562 = vpack.c.bf16 %v2415, %v2414
  %v2563 = vpack.c.bf16 %v2417, %v2416
  %v2564 = vpack.c.bf16 %v2419, %v2418
  %v2565 = vpack.c.bf16 %v2421, %v2420
  %v2566 = vpack.c.bf16 %v2423, %v2422
  %v2567 = vpack.c.bf16 %v2425, %v2424
  %v2568 = vpack.c.bf16 %v2427, %v2426
  %v2569 = vpack.c.bf16 %v2429, %v2428
  %v2570 = vpack.c.bf16 %v2431, %v2430
  %v2571 = vpack.c.bf16 %v2433, %v2432
  %v2572 = vpack.c.bf16 %v2435, %v2434
  %v2573 = vpack.c.bf16 %v2437, %v2436
  %v2574 = vpack.c.bf16 %v2439, %v2438
  %v2575 = vpack.c.bf16 %v2441, %v2440
  %v2576 = vpack.c.bf16 %v2443, %v2442
  %v2577 = vpack.c.bf16 %v2445, %v2444
  %v2578 = vpack.c.bf16 %v2447, %v2446
  %v2579 = vpack.c.bf16 %v2449, %v2448
  %v2580 = vpack.c.bf16 %v2451, %v2450
  %v2581 = vpack.c.bf16 %v2453, %v2452
  %v2582 = vpack.c.bf16 %v2455, %v2454
  %v2583 = vpack.c.bf16 %v2457, %v2456
  %v2584 = vpack.c.bf16 %v2459, %v2458
  %v2585 = vpack.c.bf16 %v2461, %v2460
  %v2586 = vpack.c.bf16 %v2463, %v2462
  %v2587 = vpack.c.bf16 %v2465, %v2464
  %v2588 = vpack.c.bf16 %v2467, %v2466
  %v2589 = vpack.c.bf16 %v2468, %v2468
  %v2711 = vunpack.c.l.b16 %v2469
  %v2712 = vunpack.c.h.b16 %v2469
  %v2713 = vunpack.c.l.b16 %v2470
  %v2714 = vunpack.c.h.b16 %v2470
  %v2715 = vunpack.c.l.b16 %v2471
  %v2716 = vunpack.c.h.b16 %v2471
  %v2717 = vunpack.c.l.b16 %v2472
  %v2718 = vunpack.c.h.b16 %v2472
  %v2719 = vunpack.c.l.b16 %v2473
  %v2720 = vunpack.c.h.b16 %v2473
  %v2721 = vunpack.c.l.b16 %v2474
  %v2722 = vunpack.c.h.b16 %v2474
  %v2723 = vunpack.c.l.b16 %v2475
  %v2724 = vunpack.c.h.b16 %v2475
  %v2725 = vunpack.c.l.b16 %v2476
  %v2726 = vunpack.c.h.b16 %v2476
  %v2727 = vunpack.c.l.b16 %v2477
  %v2728 = vunpack.c.h.b16 %v2477
  %v2729 = vunpack.c.l.b16 %v2478
  %v2730 = vunpack.c.h.b16 %v2478
  %v2731 = vunpack.c.l.b16 %v2479
  %v2732 = vunpack.c.h.b16 %v2479
  %v2733 = vunpack.c.l.b16 %v2480
  %v2734 = vunpack.c.h.b16 %v2480
  %v2735 = vunpack.c.l.b16 %v2481
  %v2736 = vunpack.c.h.b16 %v2481
  %v2737 = vunpack.c.l.b16 %v2482
  %v2738 = vunpack.c.h.b16 %v2482
  %v2739 = vunpack.c.l.b16 %v2483
  %v2740 = vunpack.c.h.b16 %v2483
  %v2741 = vunpack.c.l.b16 %v2484
  %v2742 = vunpack.c.h.b16 %v2484
  %v2743 = vunpack.c.l.b16 %v2485
  %v2744 = vunpack.c.h.b16 %v2485
  %v2745 = vunpack.c.l.b16 %v2486
  %v2746 = vunpack.c.h.b16 %v2486
  %v2747 = vunpack.c.l.b16 %v2487
  %v2748 = vunpack.c.h.b16 %v2487
  %v2749 = vunpack.c.l.b16 %v2488
  %v2750 = vunpack.c.h.b16 %v2488
  %v2751 = vunpack.c.l.b16 %v2489
  %v2752 = vunpack.c.h.b16 %v2489
  %v2753 = vunpack.c.l.b16 %v2490
  %v2754 = vunpack.c.h.b16 %v2490
  %v2755 = vunpack.c.l.b16 %v2491
  %v2756 = vunpack.c.h.b16 %v2491
  %v2757 = vunpack.c.l.b16 %v2492
  %v2758 = vunpack.c.h.b16 %v2492
  %v2759 = vunpack.c.l.b16 %v2493
  %v2760 = vunpack.c.h.b16 %v2493
  %v2761 = vunpack.c.l.b16 %v2494
  %v2762 = vunpack.c.h.b16 %v2494
  %v2763 = vunpack.c.l.b16 %v2495
  %v2764 = vunpack.c.h.b16 %v2495
  %v2765 = vunpack.c.l.b16 %v2496
  %v2766 = vunpack.c.h.b16 %v2496
  %v2767 = vunpack.c.l.b16 %v2497
  %v2768 = vunpack.c.h.b16 %v2497
  %v2769 = vunpack.c.l.b16 %v2498
  %v2770 = vunpack.c.h.b16 %v2498
  %v2771 = vunpack.c.l.b16 %v2499
  %v2772 = vunpack.c.h.b16 %v2499
  %v2773 = vunpack.c.l.b16 %v2500
  %v2774 = vunpack.c.h.b16 %v2500
  %v2775 = vunpack.c.l.b16 %v2501
  %v2776 = vunpack.c.h.b16 %v2501
  %v2777 = vunpack.c.l.b16 %v2502
  %v2778 = vunpack.c.h.b16 %v2502
  %v2779 = vunpack.c.l.b16 %v2503
  %v2780 = vunpack.c.h.b16 %v2503
  %v2781 = vunpack.c.l.b16 %v2504
  %v2782 = vunpack.c.h.b16 %v2504
  %v2783 = vunpack.c.l.b16 %v2505
  %v2784 = vunpack.c.h.b16 %v2505
  %v2785 = vunpack.c.l.b16 %v2506
  %v2786 = vunpack.c.h.b16 %v2506
  %v2787 = vunpack.c.l.b16 %v2507
  %v2788 = vunpack.c.h.b16 %v2507
  %v2789 = vunpack.c.l.b16 %v2508
  %v2790 = vunpack.c.h.b16 %v2508
  %v2791 = vunpack.c.l.b16 %v2509
  %v2792 = vunpack.c.h.b16 %v2509
  %v2793 = vunpack.c.l.b16 %v2510
  %v2794 = vunpack.c.h.b16 %v2510
  %v2795 = vunpack.c.l.b16 %v2511
  %v2796 = vunpack.c.h.b16 %v2511
  %v2797 = vunpack.c.l.b16 %v2512
  %v2798 = vunpack.c.h.b16 %v2512
  %v2799 = vunpack.c.l.b16 %v2513
  %v2800 = vunpack.c.h.b16 %v2513
  %v2801 = vunpack.c.l.b16 %v2514
  %v2802 = vunpack.c.h.b16 %v2514
  %v2803 = vunpack.c.l.b16 %v2515
  %v2804 = vunpack.c.h.b16 %v2515
  %v2805 = vunpack.c.l.b16 %v2516
  %v2806 = vunpack.c.h.b16 %v2516
  %v2807 = vunpack.c.l.b16 %v2517
  %v2808 = vunpack.c.h.b16 %v2517
  %v2809 = vunpack.c.l.b16 %v2518
  %v2810 = vunpack.c.h.b16 %v2518
  %v2811 = vunpack.c.l.b16 %v2519
  %v2812 = vunpack.c.h.b16 %v2519
  %v2813 = vunpack.c.l.b16 %v2520
  %v2814 = vunpack.c.h.b16 %v2520
  %v2815 = vunpack.c.l.b16 %v2521
  %v2816 = vunpack.c.h.b16 %v2521
  %v2817 = vunpack.c.l.b16 %v2522
  %v2818 = vunpack.c.h.b16 %v2522
  %v2819 = vunpack.c.l.b16 %v2523
  %v2820 = vunpack.c.h.b16 %v2523
  %v2821 = vunpack.c.l.b16 %v2524
  %v2822 = vunpack.c.h.b16 %v2524
  %v2823 = vunpack.c.l.b16 %v2525
  %v2824 = vunpack.c.h.b16 %v2525
  %v2825 = vunpack.c.l.b16 %v2526
  %v2826 = vunpack.c.h.b16 %v2526
  %v2827 = vunpack.c.l.b16 %v2527
  %v2828 = vunpack.c.h.b16 %v2527
  %v2829 = vunpack.c.l.b16 %v2528
  %v2830 = vunpack.c.h.b16 %v2528
  %v2831 = vunpack.c.l.b16 %v2529
  %v2832 = vunpack.c.h.b16 %v2529
  %v2833 = vunpack.c.l.b16 %v2530
  %v2834 = vunpack.c.h.b16 %v2530
  %v2835 = vunpack.c.l.b16 %v2531
  %v2836 = vunpack.c.h.b16 %v2531
  %v2837 = vunpack.c.l.b16 %v2532
  %v2838 = vunpack.c.h.b16 %v2532
  %v2839 = vunpack.c.l.b16 %v2533
  %v2840 = vunpack.c.h.b16 %v2533
  %v2841 = vunpack.c.l.b16 %v2534
  %v2842 = vunpack.c.h.b16 %v2534
  %v2843 = vunpack.c.l.b16 %v2535
  %v2844 = vunpack.c.h.b16 %v2535
  %v2845 = vunpack.c.l.b16 %v2536
  %v2846 = vunpack.c.h.b16 %v2536
  %v2847 = vunpack.c.l.b16 %v2537
  %v2848 = vunpack.c.h.b16 %v2537
  %v2849 = vunpack.c.l.b16 %v2538
  %v2850 = vunpack.c.h.b16 %v2538
  %v2851 = vunpack.c.l.b16 %v2539
  %v2852 = vunpack.c.h.b16 %v2539
  %v2853 = vunpack.c.l.b16 %v2540
  %v2854 = vunpack.c.h.b16 %v2540
  %v2855 = vunpack.c.l.b16 %v2541
  %v2856 = vunpack.c.h.b16 %v2541
  %v2857 = vunpack.c.l.b16 %v2542
  %v2858 = vunpack.c.h.b16 %v2542
  %v2859 = vunpack.c.l.b16 %v2543
  %v2860 = vunpack.c.h.b16 %v2543
  %v2861 = vunpack.c.l.b16 %v2544
  %v2862 = vunpack.c.h.b16 %v2544
  %v2863 = vunpack.c.l.b16 %v2545
  %v2864 = vunpack.c.h.b16 %v2545
  %v2865 = vunpack.c.l.b16 %v2546
  %v2866 = vunpack.c.h.b16 %v2546
  %v2867 = vunpack.c.l.b16 %v2547
  %v2868 = vunpack.c.h.b16 %v2547
  %v2869 = vunpack.c.l.b16 %v2548
  %v2870 = vunpack.c.h.b16 %v2548
  %v2871 = vunpack.c.l.b16 %v2549
  %v2872 = vunpack.c.h.b16 %v2549
  %v2873 = vunpack.c.l.b16 %v2550
  %v2874 = vunpack.c.h.b16 %v2550
  %v2875 = vunpack.c.l.b16 %v2551
  %v2876 = vunpack.c.h.b16 %v2551
  %v2877 = vunpack.c.l.b16 %v2552
  %v2878 = vunpack.c.h.b16 %v2552
  %v2879 = vunpack.c.l.b16 %v2553
  %v2880 = vunpack.c.h.b16 %v2553
  %v2881 = vunpack.c.l.b16 %v2554
  %v2882 = vunpack.c.h.b16 %v2554
  %v2883 = vunpack.c.l.b16 %v2555
  %v2884 = vunpack.c.h.b16 %v2555
  %v2885 = vunpack.c.l.b16 %v2556
  %v2886 = vunpack.c.h.b16 %v2556
  %v2887 = vunpack.c.l.b16 %v2557
  %v2888 = vunpack.c.h.b16 %v2557
  %v2889 = vunpack.c.l.b16 %v2558
  %v2890 = vunpack.c.h.b16 %v2558
  %v2891 = vunpack.c.l.b16 %v2559
  %v2892 = vunpack.c.h.b16 %v2559
  %v2893 = vunpack.c.l.b16 %v2560
  %v2894 = vunpack.c.h.b16 %v2560
  %v2895 = vunpack.c.l.b16 %v2561
  %v2896 = vunpack.c.h.b16 %v2561
  %v2897 = vunpack.c.l.b16 %v2562
  %v2898 = vunpack.c.h.b16 %v2562
  %v2899 = vunpack.c.l.b16 %v2563
  %v2900 = vunpack.c.h.b16 %v2563
  %v2901 = vunpack.c.l.b16 %v2564
  %v2902 = vunpack.c.h.b16 %v2564
  %v2903 = vunpack.c.l.b16 %v2565
  %v2904 = vunpack.c.h.b16 %v2565
  %v2905 = vunpack.c.l.b16 %v2566
  %v2906 = vunpack.c.h.b16 %v2566
  %v2907 = vunpack.c.l.b16 %v2567
  %v2908 = vunpack.c.h.b16 %v2567
  %v2909 = vunpack.c.l.b16 %v2568
  %v2910 = vunpack.c.h.b16 %v2568
  %v2911 = vunpack.c.l.b16 %v2569
  %v2912 = vunpack.c.h.b16 %v2569
  %v2913 = vunpack.c.l.b16 %v2570
  %v2914 = vunpack.c.h.b16 %v2570
  %v2915 = vunpack.c.l.b16 %v2571
  %v2916 = vunpack.c.h.b16 %v2571
  %v2917 = vunpack.c.l.b16 %v2572
  %v2918 = vunpack.c.h.b16 %v2572
  %v2919 = vunpack.c.l.b16 %v2573
  %v2920 = vunpack.c.h.b16 %v2573
  %v2921 = vunpack.c.l.b16 %v2574
  %v2922 = vunpack.c.h.b16 %v2574
  %v2923 = vunpack.c.l.b16 %v2575
  %v2924 = vunpack.c.h.b16 %v2575
  %v2925 = vunpack.c.l.b16 %v2576
  %v2926 = vunpack.c.h.b16 %v2576
  %v2927 = vunpack.c.l.b16 %v2577
  %v2928 = vunpack.c.h.b16 %v2577
  %v2929 = vunpack.c.l.b16 %v2578
  %v2930 = vunpack.c.h.b16 %v2578
  %v2931 = vunpack.c.l.b16 %v2579
  %v2932 = vunpack.c.h.b16 %v2579
  %v2933 = vunpack.c.l.b16 %v2580
  %v2934 = vunpack.c.h.b16 %v2580
  %v2935 = vunpack.c.l.b16 %v2581
  %v2936 = vunpack.c.h.b16 %v2581
  %v2937 = vunpack.c.l.b16 %v2582
  %v2938 = vunpack.c.h.b16 %v2582
  %v2939 = vunpack.c.l.b16 %v2583
  %v2940 = vunpack.c.h.b16 %v2583
  %v2941 = vunpack.c.l.b16 %v2584
  %v2942 = vunpack.c.h.b16 %v2584
  %v2943 = vunpack.c.l.b16 %v2585
  %v2944 = vunpack.c.h.b16 %v2585
  %v2945 = vunpack.c.l.b16 %v2586
  %v2946 = vunpack.c.h.b16 %v2586
  %v2947 = vunpack.c.l.b16 %v2587
  %v2948 = vunpack.c.h.b16 %v2587
  %v2949 = vunpack.c.l.b16 %v2588
  %v2950 = vunpack.c.h.b16 %v2588
  %v2951 = vunpack.c.l.b16 %v2589
  %v2952 = vpack.c.b16 %v2711, %v2711
  %v2953 = vpack.c.b16 %v2712, %v2712
  %v2954 = vpack.c.b16 %v2713, %v2713
  %v2955 = vpack.c.b16 %v2714, %v2714
  %v2956 = vpack.c.b16 %v2715, %v2715
  %v2957 = vpack.c.b16 %v2716, %v2716
  %v2958 = vpack.c.b16 %v2717, %v2717
  %v2959 = vpack.c.b16 %v2718, %v2718
  %v2960 = vpack.c.b16 %v2719, %v2719
  %v2961 = vpack.c.b16 %v2720, %v2720
  %v2962 = vpack.c.b16 %v2721, %v2721
  %v2963 = vpack.c.b16 %v2722, %v2722
  %v2964 = vpack.c.b16 %v2723, %v2723
  %v2965 = vpack.c.b16 %v2724, %v2724
  %v2966 = vpack.c.b16 %v2725, %v2725
  %v2967 = vpack.c.b16 %v2726, %v2726
  %v2968 = vpack.c.b16 %v2727, %v2727
  %v2969 = vpack.c.b16 %v2728, %v2728
  %v2970 = vpack.c.b16 %v2729, %v2729
  %v2971 = vpack.c.b16 %v2730, %v2730
  %v2972 = vpack.c.b16 %v2731, %v2731
  %v2973 = vpack.c.b16 %v2732, %v2732
  %v2974 = vpack.c.b16 %v2733, %v2733
  %v2975 = vpack.c.b16 %v2734, %v2734
  %v2976 = vpack.c.b16 %v2735, %v2735
  %v2977 = vpack.c.b16 %v2736, %v2736
  %v2978 = vpack.c.b16 %v2737, %v2737
  %v2979 = vpack.c.b16 %v2738, %v2738
  %v2980 = vpack.c.b16 %v2739, %v2739
  %v2981 = vpack.c.b16 %v2740, %v2740
  %v2982 = vpack.c.b16 %v2741, %v2741
  %v2983 = vpack.c.b16 %v2742, %v2742
  %v2984 = vpack.c.b16 %v2743, %v2743
  %v2985 = vpack.c.b16 %v2744, %v2744
  %v2986 = vpack.c.b16 %v2745, %v2745
  %v2987 = vpack.c.b16 %v2746, %v2746
  %v2988 = vpack.c.b16 %v2747, %v2747
  %v2989 = vpack.c.b16 %v2748, %v2748
  %v2990 = vpack.c.b16 %v2749, %v2749
  %v2991 = vpack.c.b16 %v2750, %v2750
  %v2992 = vpack.c.b16 %v2751, %v2751
  %v2993 = vpack.c.b16 %v2752, %v2752
  %v2994 = vpack.c.b16 %v2753, %v2753
  %v2995 = vpack.c.b16 %v2754, %v2754
  %v2996 = vpack.c.b16 %v2755, %v2755
  %v2997 = vpack.c.b16 %v2756, %v2756
  %v2998 = vpack.c.b16 %v2757, %v2757
  %v2999 = vpack.c.b16 %v2758, %v2758
  %v3000 = vpack.c.b16 %v2759, %v2759
  %v3001 = vpack.c.b16 %v2760, %v2760
  %v3002 = vpack.c.b16 %v2761, %v2761
  %v3003 = vpack.c.b16 %v2762, %v2762
  %v3004 = vpack.c.b16 %v2763, %v2763
  %v3005 = vpack.c.b16 %v2764, %v2764
  %v3006 = vpack.c.b16 %v2765, %v2765
  %v3007 = vpack.c.b16 %v2766, %v2766
  %v3008 = vpack.c.b16 %v2767, %v2767
  %v3009 = vpack.c.b16 %v2768, %v2768
  %v3010 = vpack.c.b16 %v2769, %v2769
  %v3011 = vpack.c.b16 %v2770, %v2770
  %v3012 = vpack.c.b16 %v2771, %v2771
  %v3013 = vpack.c.b16 %v2772, %v2772
  %v3014 = vpack.c.b16 %v2773, %v2773
  %v3015 = vpack.c.b16 %v2774, %v2774
  %v3016 = vpack.c.b16 %v2775, %v2775
  %v3017 = vpack.c.b16 %v2776, %v2776
  %v3018 = vpack.c.b16 %v2777, %v2777
  %v3019 = vpack.c.b16 %v2778, %v2778
  %v3020 = vpack.c.b16 %v2779, %v2779
  %v3021 = vpack.c.b16 %v2780, %v2780
  %v3022 = vpack.c.b16 %v2781, %v2781
  %v3023 = vpack.c.b16 %v2782, %v2782
  %v3024 = vpack.c.b16 %v2783, %v2783
  %v3025 = vpack.c.b16 %v2784, %v2784
  %v3026 = vpack.c.b16 %v2785, %v2785
  %v3027 = vpack.c.b16 %v2786, %v2786
  %v3028 = vpack.c.b16 %v2787, %v2787
  %v3029 = vpack.c.b16 %v2788, %v2788
  %v3030 = vpack.c.b16 %v2789, %v2789
  %v3031 = vpack.c.b16 %v2790, %v2790
  %v3032 = vpack.c.b16 %v2791, %v2791
  %v3033 = vpack.c.b16 %v2792, %v2792
  %v3034 = vpack.c.b16 %v2793, %v2793
  %v3035 = vpack.c.b16 %v2794, %v2794
  %v3036 = vpack.c.b16 %v2795, %v2795
  %v3037 = vpack.c.b16 %v2796, %v2796
  %v3038 = vpack.c.b16 %v2797, %v2797
  %v3039 = vpack.c.b16 %v2798, %v2798
  %v3040 = vpack.c.b16 %v2799, %v2799
  %v3041 = vpack.c.b16 %v2800, %v2800
  %v3042 = vpack.c.b16 %v2801, %v2801
  %v3043 = vpack.c.b16 %v2802, %v2802
  %v3044 = vpack.c.b16 %v2803, %v2803
  %v3045 = vpack.c.b16 %v2804, %v2804
  %v3046 = vpack.c.b16 %v2805, %v2805
  %v3047 = vpack.c.b16 %v2806, %v2806
  %v3048 = vpack.c.b16 %v2807, %v2807
  %v3049 = vpack.c.b16 %v2808, %v2808
  %v3050 = vpack.c.b16 %v2809, %v2809
  %v3051 = vpack.c.b16 %v2810, %v2810
  %v3052 = vpack.c.b16 %v2811, %v2811
  %v3053 = vpack.c.b16 %v2812, %v2812
  %v3054 = vpack.c.b16 %v2813, %v2813
  %v3055 = vpack.c.b16 %v2814, %v2814
  %v3056 = vpack.c.b16 %v2815, %v2815
  %v3057 = vpack.c.b16 %v2816, %v2816
  %v3058 = vpack.c.b16 %v2817, %v2817
  %v3059 = vpack.c.b16 %v2818, %v2818
  %v3060 = vpack.c.b16 %v2819, %v2819
  %v3061 = vpack.c.b16 %v2820, %v2820
  %v3062 = vpack.c.b16 %v2821, %v2821
  %v3063 = vpack.c.b16 %v2822, %v2822
  %v3064 = vpack.c.b16 %v2823, %v2823
  %v3065 = vpack.c.b16 %v2824, %v2824
  %v3066 = vpack.c.b16 %v2825, %v2825
  %v3067 = vpack.c.b16 %v2826, %v2826
  %v3068 = vpack.c.b16 %v2827, %v2827
  %v3069 = vpack.c.b16 %v2828, %v2828
  %v3070 = vpack.c.b16 %v2829, %v2829
  %v3071 = vpack.c.b16 %v2830, %v2830
  %v3072 = vpack.c.b16 %v2831, %v2831
  %v3073 = vpack.c.b16 %v2832, %v2832
  %v3074 = vpack.c.b16 %v2833, %v2833
  %v3075 = vpack.c.b16 %v2834, %v2834
  %v3076 = vpack.c.b16 %v2835, %v2835
  %v3077 = vpack.c.b16 %v2836, %v2836
  %v3078 = vpack.c.b16 %v2837, %v2837
  %v3079 = vpack.c.b16 %v2838, %v2838
  %v3080 = vpack.c.b16 %v2839, %v2839
  %v3081 = vpack.c.b16 %v2840, %v2840
  %v3082 = vpack.c.b16 %v2841, %v2841
  %v3083 = vpack.c.b16 %v2842, %v2842
  %v3084 = vpack.c.b16 %v2843, %v2843
  %v3085 = vpack.c.b16 %v2844, %v2844
  %v3086 = vpack.c.b16 %v2845, %v2845
  %v3087 = vpack.c.b16 %v2846, %v2846
  %v3088 = vpack.c.b16 %v2847, %v2847
  %v3089 = vpack.c.b16 %v2848, %v2848
  %v3090 = vpack.c.b16 %v2849, %v2849
  %v3091 = vpack.c.b16 %v2850, %v2850
  %v3092 = vpack.c.b16 %v2851, %v2851
  %v3093 = vpack.c.b16 %v2852, %v2852
  %v3094 = vpack.c.b16 %v2853, %v2853
  %v3095 = vpack.c.b16 %v2854, %v2854
  %v3096 = vpack.c.b16 %v2855, %v2855
  %v3097 = vpack.c.b16 %v2856, %v2856
  %v3098 = vpack.c.b16 %v2857, %v2857
  %v3099 = vpack.c.b16 %v2858, %v2858
  %v3100 = vpack.c.b16 %v2859, %v2859
  %v3101 = vpack.c.b16 %v2860, %v2860
  %v3102 = vpack.c.b16 %v2861, %v2861
  %v3103 = vpack.c.b16 %v2862, %v2862
  %v3104 = vpack.c.b16 %v2863, %v2863
  %v3105 = vpack.c.b16 %v2864, %v2864
  %v3106 = vpack.c.b16 %v2865, %v2865
  %v3107 = vpack.c.b16 %v2866, %v2866
  %v3108 = vpack.c.b16 %v2867, %v2867
  %v3109 = vpack.c.b16 %v2868, %v2868
  %v3110 = vpack.c.b16 %v2869, %v2869
  %v3111 = vpack.c.b16 %v2870, %v2870
  %v3112 = vpack.c.b16 %v2871, %v2871
  %v3113 = vpack.c.b16 %v2872, %v2872
  %v3114 = vpack.c.b16 %v2873, %v2873
  %v3115 = vpack.c.b16 %v2874, %v2874
  %v3116 = vpack.c.b16 %v2875, %v2875
  %v3117 = vpack.c.b16 %v2876, %v2876
  %v3118 = vpack.c.b16 %v2877, %v2877
  %v3119 = vpack.c.b16 %v2878, %v2878
  %v3120 = vpack.c.b16 %v2879, %v2879
  %v3121 = vpack.c.b16 %v2880, %v2880
  %v3122 = vpack.c.b16 %v2881, %v2881
  %v3123 = vpack.c.b16 %v2882, %v2882
  %v3124 = vpack.c.b16 %v2883, %v2883
  %v3125 = vpack.c.b16 %v2884, %v2884
  %v3126 = vpack.c.b16 %v2885, %v2885
  %v3127 = vpack.c.b16 %v2886, %v2886
  %v3128 = vpack.c.b16 %v2887, %v2887
  %v3129 = vpack.c.b16 %v2888, %v2888
  %v3130 = vpack.c.b16 %v2889, %v2889
  %v3131 = vpack.c.b16 %v2890, %v2890
  %v3132 = vpack.c.b16 %v2891, %v2891
  %v3133 = vpack.c.b16 %v2892, %v2892
  %v3134 = vpack.c.b16 %v2893, %v2893
  %v3135 = vpack.c.b16 %v2894, %v2894
  %v3136 = vpack.c.b16 %v2895, %v2895
  %v3137 = vpack.c.b16 %v2896, %v2896
  %v3138 = vpack.c.b16 %v2897, %v2897
  %v3139 = vpack.c.b16 %v2898, %v2898
  %v3140 = vpack.c.b16 %v2899, %v2899
  %v3141 = vpack.c.b16 %v2900, %v2900
  %v3142 = vpack.c.b16 %v2901, %v2901
  %v3143 = vpack.c.b16 %v2902, %v2902
  %v3144 = vpack.c.b16 %v2903, %v2903
  %v3145 = vpack.c.b16 %v2904, %v2904
  %v3146 = vpack.c.b16 %v2905, %v2905
  %v3147 = vpack.c.b16 %v2906, %v2906
  %v3148 = vpack.c.b16 %v2907, %v2907
  %v3149 = vpack.c.b16 %v2908, %v2908
  %v3150 = vpack.c.b16 %v2909, %v2909
  %v3151 = vpack.c.b16 %v2910, %v2910
  %v3152 = vpack.c.b16 %v2911, %v2911
  %v3153 = vpack.c.b16 %v2912, %v2912
  %v3154 = vpack.c.b16 %v2913, %v2913
  %v3155 = vpack.c.b16 %v2914, %v2914
  %v3156 = vpack.c.b16 %v2915, %v2915
  %v3157 = vpack.c.b16 %v2916, %v2916
  %v3158 = vpack.c.b16 %v2917, %v2917
  %v3159 = vpack.c.b16 %v2918, %v2918
  %v3160 = vpack.c.b16 %v2919, %v2919
  %v3161 = vpack.c.b16 %v2920, %v2920
  %v3162 = vpack.c.b16 %v2921, %v2921
  %v3163 = vpack.c.b16 %v2922, %v2922
  %v3164 = vpack.c.b16 %v2923, %v2923
  %v3165 = vpack.c.b16 %v2924, %v2924
  %v3166 = vpack.c.b16 %v2925, %v2925
  %v3167 = vpack.c.b16 %v2926, %v2926
  %v3168 = vpack.c.b16 %v2927, %v2927
  %v3169 = vpack.c.b16 %v2928, %v2928
  %v3170 = vpack.c.b16 %v2929, %v2929
  %v3171 = vpack.c.b16 %v2930, %v2930
  %v3172 = vpack.c.b16 %v2931, %v2931
  %v3173 = vpack.c.b16 %v2932, %v2932
  %v3174 = vpack.c.b16 %v2933, %v2933
  %v3175 = vpack.c.b16 %v2934, %v2934
  %v3176 = vpack.c.b16 %v2935, %v2935
  %v3177 = vpack.c.b16 %v2936, %v2936
  %v3178 = vpack.c.b16 %v2937, %v2937
  %v3179 = vpack.c.b16 %v2938, %v2938
  %v3180 = vpack.c.b16 %v2939, %v2939
  %v3181 = vpack.c.b16 %v2940, %v2940
  %v3182 = vpack.c.b16 %v2941, %v2941
  %v3183 = vpack.c.b16 %v2942, %v2942
  %v3184 = vpack.c.b16 %v2943, %v2943
  %v3185 = vpack.c.b16 %v2944, %v2944
  %v3186 = vpack.c.b16 %v2945, %v2945
  %v3187 = vpack.c.b16 %v2946, %v2946
  %v3188 = vpack.c.b16 %v2947, %v2947
  %v3189 = vpack.c.b16 %v2948, %v2948
  %v3190 = vpack.c.b16 %v2949, %v2949
  %v3191 = vpack.c.b16 %v2950, %v2950
  %v3192 = vpack.c.b16 %v2951, %v2951
  %vm3434 = vcmask 257024
  %3435 = vst.msk [vmem:[%s2] sm:$0xf] %vm3434, %v2952
  %3436 = vst.msk [vmem:[%s2 + $0x4] sm:$0xf] %vm3434, %v2953
  %3437 = vst.msk [vmem:[%s2 + $0x8] sm:$0xf] %vm3434, %v2954
  %3438 = vst.msk [vmem:[%s2 + $0xc] sm:$0xf] %vm3434, %v2955
  %3439 = vst.msk [vmem:[%s2 + $0x10] sm:$0xf] %vm3434, %v2956
  %3440 = vst.msk [vmem:[%s2 + $0x14] sm:$0xf] %vm3434, %v2957
  %3441 = vst.msk [vmem:[%s2 + $0x18] sm:$0xf] %vm3434, %v2958
  %3442 = vst.msk [vmem:[%s2 + $0x1c] sm:$0xf] %vm3434, %v2959
  %3443 = vst.msk [vmem:[%s2 + $0x20] sm:$0xf] %vm3434, %v2960
  %3444 = vst.msk [vmem:[%s2 + $0x24] sm:$0xf] %vm3434, %v2961
  %3445 = vst.msk [vmem:[%s2 + $0x28] sm:$0xf] %vm3434, %v2962
  %3446 = vst.msk [vmem:[%s2 + $0x2c] sm:$0xf] %vm3434, %v2963
  %3447 = vst.msk [vmem:[%s2 + $0x30] sm:$0xf] %vm3434, %v2964
  %3448 = vst.msk [vmem:[%s2 + $0x34] sm:$0xf] %vm3434, %v2965
  %3449 = vst.msk [vmem:[%s2 + $0x38] sm:$0xf] %vm3434, %v2966
  %3450 = vst.msk [vmem:[%s2 + $0x3c] sm:$0xf] %vm3434, %v2967
  %3451 = vst.msk [vmem:[%s2 + $0x40] sm:$0xf] %vm3434, %v2968
  %3452 = vst.msk [vmem:[%s2 + $0x44] sm:$0xf] %vm3434, %v2969
  %3453 = vst.msk [vmem:[%s2 + $0x48] sm:$0xf] %vm3434, %v2970
  %3454 = vst.msk [vmem:[%s2 + $0x4c] sm:$0xf] %vm3434, %v2971
  %3455 = vst.msk [vmem:[%s2 + $0x50] sm:$0xf] %vm3434, %v2972
  %3456 = vst.msk [vmem:[%s2 + $0x54] sm:$0xf] %vm3434, %v2973
  %3457 = vst.msk [vmem:[%s2 + $0x58] sm:$0xf] %vm3434, %v2974
  %3458 = vst.msk [vmem:[%s2 + $0x5c] sm:$0xf] %vm3434, %v2975
  %3459 = vst.msk [vmem:[%s2 + $0x60] sm:$0xf] %vm3434, %v2976
  %3460 = vst.msk [vmem:[%s2 + $0x64] sm:$0xf] %vm3434, %v2977
  %3461 = vst.msk [vmem:[%s2 + $0x68] sm:$0xf] %vm3434, %v2978
  %3462 = vst.msk [vmem:[%s2 + $0x6c] sm:$0xf] %vm3434, %v2979
  %3463 = vst.msk [vmem:[%s2 + $0x70] sm:$0xf] %vm3434, %v2980
  %3464 = vst.msk [vmem:[%s2 + $0x74] sm:$0xf] %vm3434, %v2981
  %3465 = vst.msk [vmem:[%s2 + $0x78] sm:$0xf] %vm3434, %v2982
  %3466 = vst.msk [vmem:[%s2 + $0x7c] sm:$0xf] %vm3434, %v2983
  %3467 = vst.msk [vmem:[%s2 + $0x80] sm:$0xf] %vm3434, %v2984
  %3468 = vst.msk [vmem:[%s2 + $0x84] sm:$0xf] %vm3434, %v2985
  %3469 = vst.msk [vmem:[%s2 + $0x88] sm:$0xf] %vm3434, %v2986
  %3470 = vst.msk [vmem:[%s2 + $0x8c] sm:$0xf] %vm3434, %v2987
  %3471 = vst.msk [vmem:[%s2 + $0x90] sm:$0xf] %vm3434, %v2988
  %3472 = vst.msk [vmem:[%s2 + $0x94] sm:$0xf] %vm3434, %v2989
  %3473 = vst.msk [vmem:[%s2 + $0x98] sm:$0xf] %vm3434, %v2990
  %3474 = vst.msk [vmem:[%s2 + $0x9c] sm:$0xf] %vm3434, %v2991
  %3475 = vst.msk [vmem:[%s2 + $0xa0] sm:$0xf] %vm3434, %v2992
  %3476 = vst.msk [vmem:[%s2 + $0xa4] sm:$0xf] %vm3434, %v2993
  %3477 = vst.msk [vmem:[%s2 + $0xa8] sm:$0xf] %vm3434, %v2994
  %3478 = vst.msk [vmem:[%s2 + $0xac] sm:$0xf] %vm3434, %v2995
  %3479 = vst.msk [vmem:[%s2 + $0xb0] sm:$0xf] %vm3434, %v2996
  %3480 = vst.msk [vmem:[%s2 + $0xb4] sm:$0xf] %vm3434, %v2997
  %3481 = vst.msk [vmem:[%s2 + $0xb8] sm:$0xf] %vm3434, %v2998
  %3482 = vst.msk [vmem:[%s2 + $0xbc] sm:$0xf] %vm3434, %v2999
  %3483 = vst.msk [vmem:[%s2 + $0xc0] sm:$0xf] %vm3434, %v3000
  %3484 = vst.msk [vmem:[%s2 + $0xc4] sm:$0xf] %vm3434, %v3001
  %3485 = vst.msk [vmem:[%s2 + $0xc8] sm:$0xf] %vm3434, %v3002
  %3486 = vst.msk [vmem:[%s2 + $0xcc] sm:$0xf] %vm3434, %v3003
  %3487 = vst.msk [vmem:[%s2 + $0xd0] sm:$0xf] %vm3434, %v3004
  %3488 = vst.msk [vmem:[%s2 + $0xd4] sm:$0xf] %vm3434, %v3005
  %3489 = vst.msk [vmem:[%s2 + $0xd8] sm:$0xf] %vm3434, %v3006
  %3490 = vst.msk [vmem:[%s2 + $0xdc] sm:$0xf] %vm3434, %v3007
  %3491 = vst.msk [vmem:[%s2 + $0xe0] sm:$0xf] %vm3434, %v3008
  %3492 = vst.msk [vmem:[%s2 + $0xe4] sm:$0xf] %vm3434, %v3009
  %3493 = vst.msk [vmem:[%s2 + $0xe8] sm:$0xf] %vm3434, %v3010
  %3494 = vst.msk [vmem:[%s2 + $0xec] sm:$0xf] %vm3434, %v3011
  %3495 = vst.msk [vmem:[%s2 + $0xf0] sm:$0xf] %vm3434, %v3012
  %3496 = vst.msk [vmem:[%s2 + $0xf4] sm:$0xf] %vm3434, %v3013
  %3497 = vst.msk [vmem:[%s2 + $0xf8] sm:$0xf] %vm3434, %v3014
  %3498 = vst.msk [vmem:[%s2 + $0xfc] sm:$0xf] %vm3434, %v3015
  %3499 = vst.msk [vmem:[%s2 + $0x100] sm:$0xf] %vm3434, %v3016
  %3500 = vst.msk [vmem:[%s2 + $0x104] sm:$0xf] %vm3434, %v3017
  %3501 = vst.msk [vmem:[%s2 + $0x108] sm:$0xf] %vm3434, %v3018
  %3502 = vst.msk [vmem:[%s2 + $0x10c] sm:$0xf] %vm3434, %v3019
  %3503 = vst.msk [vmem:[%s2 + $0x110] sm:$0xf] %vm3434, %v3020
  %3504 = vst.msk [vmem:[%s2 + $0x114] sm:$0xf] %vm3434, %v3021
  %3505 = vst.msk [vmem:[%s2 + $0x118] sm:$0xf] %vm3434, %v3022
  %3506 = vst.msk [vmem:[%s2 + $0x11c] sm:$0xf] %vm3434, %v3023
  %3507 = vst.msk [vmem:[%s2 + $0x120] sm:$0xf] %vm3434, %v3024
  %3508 = vst.msk [vmem:[%s2 + $0x124] sm:$0xf] %vm3434, %v3025
  %3509 = vst.msk [vmem:[%s2 + $0x128] sm:$0xf] %vm3434, %v3026
  %3510 = vst.msk [vmem:[%s2 + $0x12c] sm:$0xf] %vm3434, %v3027
  %3511 = vst.msk [vmem:[%s2 + $0x130] sm:$0xf] %vm3434, %v3028
  %3512 = vst.msk [vmem:[%s2 + $0x134] sm:$0xf] %vm3434, %v3029
  %3513 = vst.msk [vmem:[%s2 + $0x138] sm:$0xf] %vm3434, %v3030
  %3514 = vst.msk [vmem:[%s2 + $0x13c] sm:$0xf] %vm3434, %v3031
  %3515 = vst.msk [vmem:[%s2 + $0x140] sm:$0xf] %vm3434, %v3032
  %3516 = vst.msk [vmem:[%s2 + $0x144] sm:$0xf] %vm3434, %v3033
  %3517 = vst.msk [vmem:[%s2 + $0x148] sm:$0xf] %vm3434, %v3034
  %3518 = vst.msk [vmem:[%s2 + $0x14c] sm:$0xf] %vm3434, %v3035
  %3519 = vst.msk [vmem:[%s2 + $0x150] sm:$0xf] %vm3434, %v3036
  %3520 = vst.msk [vmem:[%s2 + $0x154] sm:$0xf] %vm3434, %v3037
  %3521 = vst.msk [vmem:[%s2 + $0x158] sm:$0xf] %vm3434, %v3038
  %3522 = vst.msk [vmem:[%s2 + $0x15c] sm:$0xf] %vm3434, %v3039
  %3523 = vst.msk [vmem:[%s2 + $0x160] sm:$0xf] %vm3434, %v3040
  %3524 = vst.msk [vmem:[%s2 + $0x164] sm:$0xf] %vm3434, %v3041
  %3525 = vst.msk [vmem:[%s2 + $0x168] sm:$0xf] %vm3434, %v3042
  %3526 = vst.msk [vmem:[%s2 + $0x16c] sm:$0xf] %vm3434, %v3043
  %3527 = vst.msk [vmem:[%s2 + $0x170] sm:$0xf] %vm3434, %v3044
  %3528 = vst.msk [vmem:[%s2 + $0x174] sm:$0xf] %vm3434, %v3045
  %3529 = vst.msk [vmem:[%s2 + $0x178] sm:$0xf] %vm3434, %v3046
  %3530 = vst.msk [vmem:[%s2 + $0x17c] sm:$0xf] %vm3434, %v3047
  %3531 = vst.msk [vmem:[%s2 + $0x180] sm:$0xf] %vm3434, %v3048
  %3532 = vst.msk [vmem:[%s2 + $0x184] sm:$0xf] %vm3434, %v3049
  %3533 = vst.msk [vmem:[%s2 + $0x188] sm:$0xf] %vm3434, %v3050
  %3534 = vst.msk [vmem:[%s2 + $0x18c] sm:$0xf] %vm3434, %v3051
  %3535 = vst.msk [vmem:[%s2 + $0x190] sm:$0xf] %vm3434, %v3052
  %3536 = vst.msk [vmem:[%s2 + $0x194] sm:$0xf] %vm3434, %v3053
  %3537 = vst.msk [vmem:[%s2 + $0x198] sm:$0xf] %vm3434, %v3054
  %3538 = vst.msk [vmem:[%s2 + $0x19c] sm:$0xf] %vm3434, %v3055
  %3539 = vst.msk [vmem:[%s2 + $0x1a0] sm:$0xf] %vm3434, %v3056
  %3540 = vst.msk [vmem:[%s2 + $0x1a4] sm:$0xf] %vm3434, %v3057
  %3541 = vst.msk [vmem:[%s2 + $0x1a8] sm:$0xf] %vm3434, %v3058
  %3542 = vst.msk [vmem:[%s2 + $0x1ac] sm:$0xf] %vm3434, %v3059
  %3543 = vst.msk [vmem:[%s2 + $0x1b0] sm:$0xf] %vm3434, %v3060
  %3544 = vst.msk [vmem:[%s2 + $0x1b4] sm:$0xf] %vm3434, %v3061
  %3545 = vst.msk [vmem:[%s2 + $0x1b8] sm:$0xf] %vm3434, %v3062
  %3546 = vst.msk [vmem:[%s2 + $0x1bc] sm:$0xf] %vm3434, %v3063
  %3547 = vst.msk [vmem:[%s2 + $0x1c0] sm:$0xf] %vm3434, %v3064
  %3548 = vst.msk [vmem:[%s2 + $0x1c4] sm:$0xf] %vm3434, %v3065
  %3549 = vst.msk [vmem:[%s2 + $0x1c8] sm:$0xf] %vm3434, %v3066
  %3550 = vst.msk [vmem:[%s2 + $0x1cc] sm:$0xf] %vm3434, %v3067
  %3551 = vst.msk [vmem:[%s2 + $0x1d0] sm:$0xf] %vm3434, %v3068
  %3552 = vst.msk [vmem:[%s2 + $0x1d4] sm:$0xf] %vm3434, %v3069
  %3553 = vst.msk [vmem:[%s2 + $0x1d8] sm:$0xf] %vm3434, %v3070
  %3554 = vst.msk [vmem:[%s2 + $0x1dc] sm:$0xf] %vm3434, %v3071
  %3555 = vst.msk [vmem:[%s2 + $0x1e0] sm:$0xf] %vm3434, %v3072
  %3556 = vst.msk [vmem:[%s2 + $0x1e4] sm:$0xf] %vm3434, %v3073
  %3557 = vst.msk [vmem:[%s2 + $0x1e8] sm:$0xf] %vm3434, %v3074
  %3558 = vst.msk [vmem:[%s2 + $0x1ec] sm:$0xf] %vm3434, %v3075
  %3559 = vst.msk [vmem:[%s2 + $0x1f0] sm:$0xf] %vm3434, %v3076
  %3560 = vst.msk [vmem:[%s2 + $0x1f4] sm:$0xf] %vm3434, %v3077
  %3561 = vst.msk [vmem:[%s2 + $0x1f8] sm:$0xf] %vm3434, %v3078
  %3562 = vst.msk [vmem:[%s2 + $0x1fc] sm:$0xf] %vm3434, %v3079
  %3563 = vst.msk [vmem:[%s2 + $0x200] sm:$0xf] %vm3434, %v3080
  %3564 = vst.msk [vmem:[%s2 + $0x204] sm:$0xf] %vm3434, %v3081
  %3565 = vst.msk [vmem:[%s2 + $0x208] sm:$0xf] %vm3434, %v3082
  %3566 = vst.msk [vmem:[%s2 + $0x20c] sm:$0xf] %vm3434, %v3083
  %3567 = vst.msk [vmem:[%s2 + $0x210] sm:$0xf] %vm3434, %v3084
  %3568 = vst.msk [vmem:[%s2 + $0x214] sm:$0xf] %vm3434, %v3085
  %3569 = vst.msk [vmem:[%s2 + $0x218] sm:$0xf] %vm3434, %v3086
  %3570 = vst.msk [vmem:[%s2 + $0x21c] sm:$0xf] %vm3434, %v3087
  %3571 = vst.msk [vmem:[%s2 + $0x220] sm:$0xf] %vm3434, %v3088
  %3572 = vst.msk [vmem:[%s2 + $0x224] sm:$0xf] %vm3434, %v3089
  %3573 = vst.msk [vmem:[%s2 + $0x228] sm:$0xf] %vm3434, %v3090
  %3574 = vst.msk [vmem:[%s2 + $0x22c] sm:$0xf] %vm3434, %v3091
  %3575 = vst.msk [vmem:[%s2 + $0x230] sm:$0xf] %vm3434, %v3092
  %3576 = vst.msk [vmem:[%s2 + $0x234] sm:$0xf] %vm3434, %v3093
  %3577 = vst.msk [vmem:[%s2 + $0x238] sm:$0xf] %vm3434, %v3094
  %3578 = vst.msk [vmem:[%s2 + $0x23c] sm:$0xf] %vm3434, %v3095
  %3579 = vst.msk [vmem:[%s2 + $0x240] sm:$0xf] %vm3434, %v3096
  %3580 = vst.msk [vmem:[%s2 + $0x244] sm:$0xf] %vm3434, %v3097
  %3581 = vst.msk [vmem:[%s2 + $0x248] sm:$0xf] %vm3434, %v3098
  %3582 = vst.msk [vmem:[%s2 + $0x24c] sm:$0xf] %vm3434, %v3099
  %3583 = vst.msk [vmem:[%s2 + $0x250] sm:$0xf] %vm3434, %v3100
  %3584 = vst.msk [vmem:[%s2 + $0x254] sm:$0xf] %vm3434, %v3101
  %3585 = vst.msk [vmem:[%s2 + $0x258] sm:$0xf] %vm3434, %v3102
  %3586 = vst.msk [vmem:[%s2 + $0x25c] sm:$0xf] %vm3434, %v3103
  %3587 = vst.msk [vmem:[%s2 + $0x260] sm:$0xf] %vm3434, %v3104
  %3588 = vst.msk [vmem:[%s2 + $0x264] sm:$0xf] %vm3434, %v3105
  %3589 = vst.msk [vmem:[%s2 + $0x268] sm:$0xf] %vm3434, %v3106
  %3590 = vst.msk [vmem:[%s2 + $0x26c] sm:$0xf] %vm3434, %v3107
  %3591 = vst.msk [vmem:[%s2 + $0x270] sm:$0xf] %vm3434, %v3108
  %3592 = vst.msk [vmem:[%s2 + $0x274] sm:$0xf] %vm3434, %v3109
  %3593 = vst.msk [vmem:[%s2 + $0x278] sm:$0xf] %vm3434, %v3110
  %3594 = vst.msk [vmem:[%s2 + $0x27c] sm:$0xf] %vm3434, %v3111
  %3595 = vst.msk [vmem:[%s2 + $0x280] sm:$0xf] %vm3434, %v3112
  %3596 = vst.msk [vmem:[%s2 + $0x284] sm:$0xf] %vm3434, %v3113
  %3597 = vst.msk [vmem:[%s2 + $0x288] sm:$0xf] %vm3434, %v3114
  %3598 = vst.msk [vmem:[%s2 + $0x28c] sm:$0xf] %vm3434, %v3115
  %3599 = vst.msk [vmem:[%s2 + $0x290] sm:$0xf] %vm3434, %v3116
  %3600 = vst.msk [vmem:[%s2 + $0x294] sm:$0xf] %vm3434, %v3117
  %3601 = vst.msk [vmem:[%s2 + $0x298] sm:$0xf] %vm3434, %v3118
  %3602 = vst.msk [vmem:[%s2 + $0x29c] sm:$0xf] %vm3434, %v3119
  %3603 = vst.msk [vmem:[%s2 + $0x2a0] sm:$0xf] %vm3434, %v3120
  %3604 = vst.msk [vmem:[%s2 + $0x2a4] sm:$0xf] %vm3434, %v3121
  %3605 = vst.msk [vmem:[%s2 + $0x2a8] sm:$0xf] %vm3434, %v3122
  %3606 = vst.msk [vmem:[%s2 + $0x2ac] sm:$0xf] %vm3434, %v3123
  %3607 = vst.msk [vmem:[%s2 + $0x2b0] sm:$0xf] %vm3434, %v3124
  %3608 = vst.msk [vmem:[%s2 + $0x2b4] sm:$0xf] %vm3434, %v3125
  %3609 = vst.msk [vmem:[%s2 + $0x2b8] sm:$0xf] %vm3434, %v3126
  %3610 = vst.msk [vmem:[%s2 + $0x2bc] sm:$0xf] %vm3434, %v3127
  %3611 = vst.msk [vmem:[%s2 + $0x2c0] sm:$0xf] %vm3434, %v3128
  %3612 = vst.msk [vmem:[%s2 + $0x2c4] sm:$0xf] %vm3434, %v3129
  %3613 = vst.msk [vmem:[%s2 + $0x2c8] sm:$0xf] %vm3434, %v3130
  %3614 = vst.msk [vmem:[%s2 + $0x2cc] sm:$0xf] %vm3434, %v3131
  %3615 = vst.msk [vmem:[%s2 + $0x2d0] sm:$0xf] %vm3434, %v3132
  %3616 = vst.msk [vmem:[%s2 + $0x2d4] sm:$0xf] %vm3434, %v3133
  %3617 = vst.msk [vmem:[%s2 + $0x2d8] sm:$0xf] %vm3434, %v3134
  %3618 = vst.msk [vmem:[%s2 + $0x2dc] sm:$0xf] %vm3434, %v3135
  %3619 = vst.msk [vmem:[%s2 + $0x2e0] sm:$0xf] %vm3434, %v3136
  %3620 = vst.msk [vmem:[%s2 + $0x2e4] sm:$0xf] %vm3434, %v3137
  %3621 = vst.msk [vmem:[%s2 + $0x2e8] sm:$0xf] %vm3434, %v3138
  %3622 = vst.msk [vmem:[%s2 + $0x2ec] sm:$0xf] %vm3434, %v3139
  %3623 = vst.msk [vmem:[%s2 + $0x2f0] sm:$0xf] %vm3434, %v3140
  %3624 = vst.msk [vmem:[%s2 + $0x2f4] sm:$0xf] %vm3434, %v3141
  %3625 = vst.msk [vmem:[%s2 + $0x2f8] sm:$0xf] %vm3434, %v3142
  %3626 = vst.msk [vmem:[%s2 + $0x2fc] sm:$0xf] %vm3434, %v3143
  %3627 = vst.msk [vmem:[%s2 + $0x300] sm:$0xf] %vm3434, %v3144
  %3628 = vst.msk [vmem:[%s2 + $0x304] sm:$0xf] %vm3434, %v3145
  %3629 = vst.msk [vmem:[%s2 + $0x308] sm:$0xf] %vm3434, %v3146
  %3630 = vst.msk [vmem:[%s2 + $0x30c] sm:$0xf] %vm3434, %v3147
  %3631 = vst.msk [vmem:[%s2 + $0x310] sm:$0xf] %vm3434, %v3148
  %3632 = vst.msk [vmem:[%s2 + $0x314] sm:$0xf] %vm3434, %v3149
  %3633 = vst.msk [vmem:[%s2 + $0x318] sm:$0xf] %vm3434, %v3150
  %3634 = vst.msk [vmem:[%s2 + $0x31c] sm:$0xf] %vm3434, %v3151
  %3635 = vst.msk [vmem:[%s2 + $0x320] sm:$0xf] %vm3434, %v3152
  %3636 = vst.msk [vmem:[%s2 + $0x324] sm:$0xf] %vm3434, %v3153
  %3637 = vst.msk [vmem:[%s2 + $0x328] sm:$0xf] %vm3434, %v3154
  %3638 = vst.msk [vmem:[%s2 + $0x32c] sm:$0xf] %vm3434, %v3155
  %3639 = vst.msk [vmem:[%s2 + $0x330] sm:$0xf] %vm3434, %v3156
  %3640 = vst.msk [vmem:[%s2 + $0x334] sm:$0xf] %vm3434, %v3157
  %3641 = vst.msk [vmem:[%s2 + $0x338] sm:$0xf] %vm3434, %v3158
  %3642 = vst.msk [vmem:[%s2 + $0x33c] sm:$0xf] %vm3434, %v3159
  %3643 = vst.msk [vmem:[%s2 + $0x340] sm:$0xf] %vm3434, %v3160
  %3644 = vst.msk [vmem:[%s2 + $0x344] sm:$0xf] %vm3434, %v3161
  %3645 = vst.msk [vmem:[%s2 + $0x348] sm:$0xf] %vm3434, %v3162
  %3646 = vst.msk [vmem:[%s2 + $0x34c] sm:$0xf] %vm3434, %v3163
  %3647 = vst.msk [vmem:[%s2 + $0x350] sm:$0xf] %vm3434, %v3164
  %3648 = vst.msk [vmem:[%s2 + $0x354] sm:$0xf] %vm3434, %v3165
  %3649 = vst.msk [vmem:[%s2 + $0x358] sm:$0xf] %vm3434, %v3166
  %3650 = vst.msk [vmem:[%s2 + $0x35c] sm:$0xf] %vm3434, %v3167
  %3651 = vst.msk [vmem:[%s2 + $0x360] sm:$0xf] %vm3434, %v3168
  %3652 = vst.msk [vmem:[%s2 + $0x364] sm:$0xf] %vm3434, %v3169
  %3653 = vst.msk [vmem:[%s2 + $0x368] sm:$0xf] %vm3434, %v3170
  %3654 = vst.msk [vmem:[%s2 + $0x36c] sm:$0xf] %vm3434, %v3171
  %3655 = vst.msk [vmem:[%s2 + $0x370] sm:$0xf] %vm3434, %v3172
  %3656 = vst.msk [vmem:[%s2 + $0x374] sm:$0xf] %vm3434, %v3173
  %3657 = vst.msk [vmem:[%s2 + $0x378] sm:$0xf] %vm3434, %v3174
  %3658 = vst.msk [vmem:[%s2 + $0x37c] sm:$0xf] %vm3434, %v3175
  %3659 = vst.msk [vmem:[%s2 + $0x380] sm:$0xf] %vm3434, %v3176
  %3660 = vst.msk [vmem:[%s2 + $0x384] sm:$0xf] %vm3434, %v3177
  %3661 = vst.msk [vmem:[%s2 + $0x388] sm:$0xf] %vm3434, %v3178
  %3662 = vst.msk [vmem:[%s2 + $0x38c] sm:$0xf] %vm3434, %v3179
  %3663 = vst.msk [vmem:[%s2 + $0x390] sm:$0xf] %vm3434, %v3180
  %3664 = vst.msk [vmem:[%s2 + $0x394] sm:$0xf] %vm3434, %v3181
  %3665 = vst.msk [vmem:[%s2 + $0x398] sm:$0xf] %vm3434, %v3182
  %3666 = vst.msk [vmem:[%s2 + $0x39c] sm:$0xf] %vm3434, %v3183
  %3667 = vst.msk [vmem:[%s2 + $0x3a0] sm:$0xf] %vm3434, %v3184
  %3668 = vst.msk [vmem:[%s2 + $0x3a4] sm:$0xf] %vm3434, %v3185
  %3669 = vst.msk [vmem:[%s2 + $0x3a8] sm:$0xf] %vm3434, %v3186
  %3670 = vst.msk [vmem:[%s2 + $0x3ac] sm:$0xf] %vm3434, %v3187
  %3671 = vst.msk [vmem:[%s2 + $0x3b0] sm:$0xf] %vm3434, %v3188
  %3672 = vst.msk [vmem:[%s2 + $0x3b4] sm:$0xf] %vm3434, %v3189
  %3673 = vst.msk [vmem:[%s2 + $0x3b8] sm:$0xf] %vm3434, %v3190
  %3674 = vst.msk [vmem:[%s2 + $0x3bc] sm:$0xf] %vm3434, %v3191
  %vm3675 = vcmask 253952
  %3676 = vst.msk [vmem:[%s2 + $0x3c0] sm:$0x1] %vm3675, %v3192
  // Predicated region
  $region10: #{conv_module_forward.4} parent=0 // pred_check
    _
  $region11: #{conv_module_forward.4} parent=0 // pred_check_branch
    %3678 = sbr.rel (0) target = $region13
  $region12: #{conv_module_forward.4} parent=0 // pred_region
    _
  $region13: #{conv_module_forward.4} parent=0 // pred_fallthru
    _
  // Predicated region
  $region14: #{conv_module_forward.4} parent=0 // pred_check
    _
  $region15: #{conv_module_forward.4} parent=0 // pred_check_branch
    %3680 = sbr.rel (0) target = $region17
  $region16: #{conv_module_forward.4} parent=0 // pred_region
    _
  $region17: #{conv_module_forward.4} parent=0 // pred_fallthru
    _

// kernel: conv_module_forward.5
$region0: #{conv_module_forward.5}
  #allocation0 [shape = 'u32[]', space=smem, size = 0x4, offset = 0x4, fixed_abs, tag = 'smem constant byte address 0x4 - core index']
  #allocation1 [shape = 'u32[144,128]{1,0:T(1,128)}', space=vmem, size = 0x12000, scoped, tag = 'internal scratch']
  %s0 = inlined_call_operand.vmem [shape: bf16[392,512], index: 0, kind: input, shape index: {}]
  %s1 = inlined_call_operand.vmem [shape: bf16[512,64], index: 1, kind: input, shape index: {}]
  %s2 = inlined_call_operand.vmem [shape: f32[1,64], index: 2, kind: input, shape index: {}]
  %s3 = inlined_call_operand.vmem [shape: bf16[392,64], index: 3, kind: output, shape index: {}]
  %s4 = sld [smem:[#allocation0]]
  $region22: #{conv_module_forward.5} parent=0
    _
  %s6 = ssub.s32 1, %s4
  %s7 = scalar_select 0, %s6, %s4
  // Predicated region
  $region2: #{conv_module_forward.5} parent=0 // pred_check
    _
  $region3: #{conv_module_forward.5} parent=0 // pred_check_branch
    %9 = sbr.rel (0) target = $region5
  $region4: #{conv_module_forward.5} parent=0 // pred_region
    _
  $region5: #{conv_module_forward.5} parent=0 // pred_fallthru
    _
  // Predicated region
  $region6: #{conv_module_forward.5} parent=0 // pred_check
    _
  $region7: #{conv_module_forward.5} parent=0 // pred_check_branch
    %11 = sbr.rel (0) target = $region9
  $region8: #{conv_module_forward.5} parent=0 // pred_region
    _
  $region9: #{conv_module_forward.5} parent=0 // pred_fallthru
    _
  // Predicated region
  $region10: #{conv_module_forward.5} parent=0 // pred_check
    _
  $region11: #{conv_module_forward.5} parent=0 // pred_check_branch
    %13 = sbr.rel (0) target = $region13
  $region12: #{conv_module_forward.5} parent=0 // pred_region
    _
  $region13: #{conv_module_forward.5} parent=0 // pred_fallthru
    _
  %v15 = vld [vmem:[%s0] sm:$0xff]
  %v16 = vld [vmem:[%s0 + $0x8] sm:$0xff]
  %v17 = vld [vmem:[%s0 + $0x10] sm:$0xff]
  %v18 = vld [vmem:[%s0 + $0x18] sm:$0xff]
  %v19 = vld [vmem:[%s0 + $0x20] sm:$0xff]
  %v20 = vld [vmem:[%s0 + $0x28] sm:$0xff]
  %v21 = vld [vmem:[%s0 + $0x30] sm:$0xff]
  %v22 = vld [vmem:[%s0 + $0x38] sm:$0xff]
  %v23 = vld [vmem:[%s0 + $0x40] sm:$0xff]
  %v24 = vld [vmem:[%s0 + $0x48] sm:$0xff]
  %v25 = vld [vmem:[%s0 + $0x50] sm:$0xff]
  %v26 = vld [vmem:[%s0 + $0x58] sm:$0xff]
  %v27 = vld [vmem:[%s0 + $0x60] sm:$0xff]
  %v28 = vld [vmem:[%s0 + $0x68] sm:$0xff]
  %v29 = vld [vmem:[%s0 + $0x70] sm:$0xff]
  %v30 = vld [vmem:[%s0 + $0x78] sm:$0xff]
  %v31 = vld [vmem:[%s0 + $0x80] sm:$0xff]
  %v32 = vld [vmem:[%s0 + $0x88] sm:$0xff]
  %v33 = vld [vmem:[%s0 + $0x90] sm:$0xff]
  %v34 = vld [vmem:[%s0 + $0x98] sm:$0xff]
  %v35 = vld [vmem:[%s0 + $0xa0] sm:$0xff]
  %v36 = vld [vmem:[%s0 + $0xa8] sm:$0xff]
  %v37 = vld [vmem:[%s0 + $0xb0] sm:$0xff]
  %v38 = vld [vmem:[%s0 + $0xb8] sm:$0xff]
  %v39 = vld [vmem:[%s0 + $0xc0] sm:$0xff]
  %v40 = vld [vmem:[%s0 + $0xc8] sm:$0xff]
  %v41 = vld [vmem:[%s0 + $0xd0] sm:$0xff]
  %v42 = vld [vmem:[%s0 + $0xd8] sm:$0xff]
  %v43 = vld [vmem:[%s0 + $0xe0] sm:$0xff]
  %v44 = vld [vmem:[%s0 + $0xe8] sm:$0xff]
  %v45 = vld [vmem:[%s0 + $0xf0] sm:$0xff]
  %v46 = vld [vmem:[%s0 + $0xf8] sm:$0xff]
  %v47 = vld [vmem:[%s0 + $0x100] sm:$0xff]
  %v48 = vld [vmem:[%s0 + $0x108] sm:$0xff]
  %v49 = vld [vmem:[%s0 + $0x110] sm:$0xff]
  %v50 = vld [vmem:[%s0 + $0x118] sm:$0xff]
  %v51 = vld [vmem:[%s0 + $0x120] sm:$0xff]
  %v52 = vld [vmem:[%s0 + $0x128] sm:$0xff]
  %v53 = vld [vmem:[%s0 + $0x130] sm:$0xff]
  %v54 = vld [vmem:[%s0 + $0x138] sm:$0xff]
  %v55 = vld [vmem:[%s0 + $0x140] sm:$0xff]
  %v56 = vld [vmem:[%s0 + $0x148] sm:$0xff]
  %v57 = vld [vmem:[%s0 + $0x150] sm:$0xff]
  %v58 = vld [vmem:[%s0 + $0x158] sm:$0xff]
  %v59 = vld [vmem:[%s0 + $0x160] sm:$0xff]
  %v60 = vld [vmem:[%s0 + $0x168] sm:$0xff]
  %v61 = vld [vmem:[%s0 + $0x170] sm:$0xff]
  %v62 = vld [vmem:[%s0 + $0x178] sm:$0xff]
  %v63 = vld [vmem:[%s0 + $0x180] sm:$0xff]
  %v64 = vld [vmem:[%s0 + $0x188] sm:$0xff]
  %v65 = vld [vmem:[%s0 + $0x190] sm:$0xff]
  %v66 = vld [vmem:[%s0 + $0x198] sm:$0xff]
  %v67 = vld [vmem:[%s0 + $0x1a0] sm:$0xff]
  %v68 = vld [vmem:[%s0 + $0x1a8] sm:$0xff]
  %v69 = vld [vmem:[%s0 + $0x1b0] sm:$0xff]
  %v70 = vld [vmem:[%s0 + $0x1b8] sm:$0xff]
  %v71 = vld [vmem:[%s0 + $0x1c0] sm:$0xff]
  %v72 = vld [vmem:[%s0 + $0x1c8] sm:$0xff]
  %v73 = vld [vmem:[%s0 + $0x1d0] sm:$0xff]
  %v74 = vld [vmem:[%s0 + $0x1d8] sm:$0xff]
  %v75 = vld [vmem:[%s0 + $0x1e0] sm:$0xff]
  %v76 = vld [vmem:[%s0 + $0x1e8] sm:$0xff]
  %v77 = vld [vmem:[%s0 + $0x1f0] sm:$0xff]
  %v78 = vld [vmem:[%s0 + $0x1f8] sm:$0xff]
  %v79 = vld [vmem:[%s0 + $0x200] sm:$0xff]
  %v80 = vld [vmem:[%s0 + $0x208] sm:$0xff]
  %v81 = vld [vmem:[%s0 + $0x210] sm:$0xff]
  %v82 = vld [vmem:[%s0 + $0x218] sm:$0xff]
  %v83 = vld [vmem:[%s0 + $0x220] sm:$0xff]
  %v84 = vld [vmem:[%s0 + $0x228] sm:$0xff]
  %v85 = vld [vmem:[%s0 + $0x230] sm:$0xff]
  %v86 = vld [vmem:[%s0 + $0x238] sm:$0xff]
  %v87 = vld [vmem:[%s0 + $0x240] sm:$0xff]
  %v88 = vld [vmem:[%s0 + $0x248] sm:$0xff]
  %v89 = vld [vmem:[%s0 + $0x250] sm:$0xff]
  %v90 = vld [vmem:[%s0 + $0x258] sm:$0xff]
  %v91 = vld [vmem:[%s0 + $0x260] sm:$0xff]
  %v92 = vld [vmem:[%s0 + $0x268] sm:$0xff]
  %v93 = vld [vmem:[%s0 + $0x270] sm:$0xff]
  %v94 = vld [vmem:[%s0 + $0x278] sm:$0xff]
  %v95 = vld [vmem:[%s0 + $0x280] sm:$0xff]
  %v96 = vld [vmem:[%s0 + $0x288] sm:$0xff]
  %v97 = vld [vmem:[%s0 + $0x290] sm:$0xff]
  %v98 = vld [vmem:[%s0 + $0x298] sm:$0xff]
  %v99 = vld [vmem:[%s0 + $0x2a0] sm:$0xff]
  %v100 = vld [vmem:[%s0 + $0x2a8] sm:$0xff]
  %v101 = vld [vmem:[%s0 + $0x2b0] sm:$0xff]
  %v102 = vld [vmem:[%s0 + $0x2b8] sm:$0xff]
  %v103 = vld [vmem:[%s0 + $0x2c0] sm:$0xff]
  %v104 = vld [vmem:[%s0 + $0x2c8] sm:$0xff]
  %v105 = vld [vmem:[%s0 + $0x2d0] sm:$0xff]
  %v106 = vld [vmem:[%s0 + $0x2d8] sm:$0xff]
  %v107 = vld [vmem:[%s0 + $0x2e0] sm:$0xff]
  %v108 = vld [vmem:[%s0 + $0x2e8] sm:$0xff]
  %v109 = vld [vmem:[%s0 + $0x2f0] sm:$0xff]
  %v110 = vld [vmem:[%s0 + $0x2f8] sm:$0xff]
  %v111 = vld [vmem:[%s0 + $0x300] sm:$0xff]
  %v112 = vld [vmem:[%s0 + $0x308] sm:$0xff]
  %v113 = vld [vmem:[%s1] sm:$0xf]
  %v114 = vld [vmem:[%s1 + $0x4] sm:$0xf]
  %v115 = vld [vmem:[%s1 + $0x8] sm:$0xf]
  %v116 = vld [vmem:[%s1 + $0xc] sm:$0xf]
  %v117 = vld [vmem:[%s1 + $0x10] sm:$0xf]
  %v118 = vld [vmem:[%s1 + $0x14] sm:$0xf]
  %v119 = vld [vmem:[%s1 + $0x18] sm:$0xf]
  %v120 = vld [vmem:[%s1 + $0x1c] sm:$0xf]
  %v121 = vld [vmem:[%s1 + $0x20] sm:$0xf]
  %v122 = vld [vmem:[%s1 + $0x24] sm:$0xf]
  %v123 = vld [vmem:[%s1 + $0x28] sm:$0xf]
  %v124 = vld [vmem:[%s1 + $0x2c] sm:$0xf]
  %v125 = vld [vmem:[%s1 + $0x30] sm:$0xf]
  %v126 = vld [vmem:[%s1 + $0x34] sm:$0xf]
  %v127 = vld [vmem:[%s1 + $0x38] sm:$0xf]
  %v128 = vld [vmem:[%s1 + $0x3c] sm:$0xf]
  %v129 = vld [vmem:[%s1 + $0x40] sm:$0xf]
  %v130 = vld [vmem:[%s1 + $0x44] sm:$0xf]
  %v131 = vld [vmem:[%s1 + $0x48] sm:$0xf]
  %v132 = vld [vmem:[%s1 + $0x4c] sm:$0xf]
  %v133 = vld [vmem:[%s1 + $0x50] sm:$0xf]
  %v134 = vld [vmem:[%s1 + $0x54] sm:$0xf]
  %v135 = vld [vmem:[%s1 + $0x58] sm:$0xf]
  %v136 = vld [vmem:[%s1 + $0x5c] sm:$0xf]
  %v137 = vld [vmem:[%s1 + $0x60] sm:$0xf]
  %v138 = vld [vmem:[%s1 + $0x64] sm:$0xf]
  %v139 = vld [vmem:[%s1 + $0x68] sm:$0xf]
  %v140 = vld [vmem:[%s1 + $0x6c] sm:$0xf]
  %v141 = vld [vmem:[%s1 + $0x70] sm:$0xf]
  %v142 = vld [vmem:[%s1 + $0x74] sm:$0xf]
  %v143 = vld [vmem:[%s1 + $0x78] sm:$0xf]
  %v144 = vld [vmem:[%s1 + $0x7c] sm:$0xf]
  %v145 = vld [vmem:[%s1 + $0x80] sm:$0xf]
  %v146 = vld [vmem:[%s1 + $0x84] sm:$0xf]
  %v147 = vld [vmem:[%s1 + $0x88] sm:$0xf]
  %v148 = vld [vmem:[%s1 + $0x8c] sm:$0xf]
  %v149 = vld [vmem:[%s1 + $0x90] sm:$0xf]
  %v150 = vld [vmem:[%s1 + $0x94] sm:$0xf]
  %v151 = vld [vmem:[%s1 + $0x98] sm:$0xf]
  %v152 = vld [vmem:[%s1 + $0x9c] sm:$0xf]
  %v153 = vld [vmem:[%s1 + $0xa0] sm:$0xf]
  %v154 = vld [vmem:[%s1 + $0xa4] sm:$0xf]
  %v155 = vld [vmem:[%s1 + $0xa8] sm:$0xf]
  %v156 = vld [vmem:[%s1 + $0xac] sm:$0xf]
  %v157 = vld [vmem:[%s1 + $0xb0] sm:$0xf]
  %v158 = vld [vmem:[%s1 + $0xb4] sm:$0xf]
  %v159 = vld [vmem:[%s1 + $0xb8] sm:$0xf]
  %v160 = vld [vmem:[%s1 + $0xbc] sm:$0xf]
  %v161 = vld [vmem:[%s1 + $0xc0] sm:$0xf]
  %v162 = vld [vmem:[%s1 + $0xc4] sm:$0xf]
  %v163 = vld [vmem:[%s1 + $0xc8] sm:$0xf]
  %v164 = vld [vmem:[%s1 + $0xcc] sm:$0xf]
  %v165 = vld [vmem:[%s1 + $0xd0] sm:$0xf]
  %v166 = vld [vmem:[%s1 + $0xd4] sm:$0xf]
  %v167 = vld [vmem:[%s1 + $0xd8] sm:$0xf]
  %v168 = vld [vmem:[%s1 + $0xdc] sm:$0xf]
  %v169 = vld [vmem:[%s1 + $0xe0] sm:$0xf]
  %v170 = vld [vmem:[%s1 + $0xe4] sm:$0xf]
  %v171 = vld [vmem:[%s1 + $0xe8] sm:$0xf]
  %v172 = vld [vmem:[%s1 + $0xec] sm:$0xf]
  %v173 = vld [vmem:[%s1 + $0xf0] sm:$0xf]
  %v174 = vld [vmem:[%s1 + $0xf4] sm:$0xf]
  %v175 = vld [vmem:[%s1 + $0xf8] sm:$0xf]
  %v176 = vld [vmem:[%s1 + $0xfc] sm:$0xf]
  %v177 = vld [vmem:[%s2] sm:$0x1]
  %v179 = vlaneseq
  %v180 = vshrl.u32 %v179, 7
  %v181 = vsub.s32 0, %v180
  %v182 = vrot.slane %v177, %v181
  %v282 = vunpack.c.l.b16 %v15
  %v283 = vunpack.c.h.b16 %v15
  %v284 = vunpack.c.l.b16 %v16
  %v285 = vunpack.c.h.b16 %v16
  %v286 = vunpack.c.l.b16 %v17
  %v287 = vunpack.c.h.b16 %v17
  %v288 = vunpack.c.l.b16 %v18
  %v289 = vunpack.c.h.b16 %v18
  %v290 = vunpack.c.l.b16 %v19
  %v291 = vunpack.c.h.b16 %v19
  %v292 = vunpack.c.l.b16 %v20
  %v293 = vunpack.c.h.b16 %v20
  %v294 = vunpack.c.l.b16 %v21
  %v295 = vunpack.c.h.b16 %v21
  %v296 = vunpack.c.l.b16 %v22
  %v297 = vunpack.c.h.b16 %v22
  %v298 = vunpack.c.l.b16 %v23
  %v299 = vunpack.c.h.b16 %v23
  %v300 = vunpack.c.l.b16 %v24
  %v301 = vunpack.c.h.b16 %v24
  %v302 = vunpack.c.l.b16 %v25
  %v303 = vunpack.c.h.b16 %v25
  %v304 = vunpack.c.l.b16 %v26
  %v305 = vunpack.c.h.b16 %v26
  %v306 = vunpack.c.l.b16 %v27
  %v307 = vunpack.c.h.b16 %v27
  %v308 = vunpack.c.l.b16 %v28
  %v309 = vunpack.c.h.b16 %v28
  %v310 = vunpack.c.l.b16 %v29
  %v311 = vunpack.c.h.b16 %v29
  %v312 = vunpack.c.l.b16 %v30
  %v313 = vunpack.c.h.b16 %v30
  %v314 = vunpack.c.l.b16 %v31
  %v315 = vunpack.c.h.b16 %v31
  %v316 = vunpack.c.l.b16 %v32
  %v317 = vunpack.c.h.b16 %v32
  %v318 = vunpack.c.l.b16 %v33
  %v319 = vunpack.c.h.b16 %v33
  %v320 = vunpack.c.l.b16 %v34
  %v321 = vunpack.c.h.b16 %v34
  %v322 = vunpack.c.l.b16 %v35
  %v323 = vunpack.c.h.b16 %v35
  %v324 = vunpack.c.l.b16 %v36
  %v325 = vunpack.c.h.b16 %v36
  %v326 = vunpack.c.l.b16 %v37
  %v327 = vunpack.c.h.b16 %v37
  %v328 = vunpack.c.l.b16 %v38
  %v329 = vunpack.c.h.b16 %v38
  %v330 = vunpack.c.l.b16 %v39
  %v331 = vunpack.c.h.b16 %v39
  %v332 = vunpack.c.l.b16 %v40
  %v333 = vunpack.c.h.b16 %v40
  %v334 = vunpack.c.l.b16 %v41
  %v335 = vunpack.c.h.b16 %v41
  %v336 = vunpack.c.l.b16 %v42
  %v337 = vunpack.c.h.b16 %v42
  %v338 = vunpack.c.l.b16 %v43
  %v339 = vunpack.c.h.b16 %v43
  %v340 = vunpack.c.l.b16 %v44
  %v341 = vunpack.c.h.b16 %v44
  %v342 = vunpack.c.l.b16 %v45
  %v343 = vunpack.c.h.b16 %v45
  %v344 = vunpack.c.l.b16 %v46
  %v345 = vunpack.c.h.b16 %v46
  %v346 = vunpack.c.l.b16 %v47
  %v347 = vunpack.c.h.b16 %v47
  %v348 = vunpack.c.l.b16 %v48
  %v349 = vunpack.c.h.b16 %v48
  %v350 = vunpack.c.l.b16 %v49
  %v351 = vunpack.c.h.b16 %v49
  %v352 = vunpack.c.l.b16 %v50
  %v353 = vunpack.c.h.b16 %v50
  %v354 = vunpack.c.l.b16 %v51
  %v355 = vunpack.c.h.b16 %v51
  %v356 = vunpack.c.l.b16 %v52
  %v357 = vunpack.c.h.b16 %v52
  %v358 = vunpack.c.l.b16 %v53
  %v359 = vunpack.c.h.b16 %v53
  %v360 = vunpack.c.l.b16 %v54
  %v361 = vunpack.c.h.b16 %v54
  %v362 = vunpack.c.l.b16 %v55
  %v363 = vunpack.c.h.b16 %v55
  %v364 = vunpack.c.l.b16 %v56
  %v365 = vunpack.c.h.b16 %v56
  %v366 = vunpack.c.l.b16 %v57
  %v367 = vunpack.c.h.b16 %v57
  %v368 = vunpack.c.l.b16 %v58
  %v369 = vunpack.c.h.b16 %v58
  %v370 = vunpack.c.l.b16 %v59
  %v371 = vunpack.c.h.b16 %v59
  %v372 = vunpack.c.l.b16 %v60
  %v373 = vunpack.c.h.b16 %v60
  %v374 = vunpack.c.l.b16 %v61
  %v375 = vunpack.c.h.b16 %v61
  %v376 = vunpack.c.l.b16 %v62
  %v377 = vunpack.c.h.b16 %v62
  %v378 = vunpack.c.l.b16 %v63
  %v379 = vunpack.c.h.b16 %v63
  %v380 = vunpack.c.l.b16 %v64
  %v381 = vunpack.c.h.b16 %v64
  %v382 = vunpack.c.l.b16 %v65
  %v383 = vunpack.c.h.b16 %v65
  %v384 = vunpack.c.l.b16 %v66
  %v385 = vunpack.c.h.b16 %v66
  %v386 = vunpack.c.l.b16 %v67
  %v387 = vunpack.c.h.b16 %v67
  %v388 = vunpack.c.l.b16 %v68
  %v389 = vunpack.c.h.b16 %v68
  %v390 = vunpack.c.l.b16 %v69
  %v391 = vunpack.c.h.b16 %v69
  %v392 = vunpack.c.l.b16 %v70
  %v393 = vunpack.c.h.b16 %v70
  %v394 = vunpack.c.l.b16 %v71
  %v395 = vunpack.c.h.b16 %v71
  %v396 = vunpack.c.l.b16 %v72
  %v397 = vunpack.c.h.b16 %v72
  %v398 = vunpack.c.l.b16 %v73
  %v399 = vunpack.c.h.b16 %v73
  %v400 = vunpack.c.l.b16 %v74
  %v401 = vunpack.c.h.b16 %v74
  %v402 = vunpack.c.l.b16 %v75
  %v403 = vunpack.c.h.b16 %v75
  %v404 = vunpack.c.l.b16 %v76
  %v405 = vunpack.c.h.b16 %v76
  %v406 = vunpack.c.l.b16 %v77
  %v407 = vunpack.c.h.b16 %v77
  %v408 = vunpack.c.l.b16 %v78
  %v409 = vunpack.c.h.b16 %v78
  %v410 = vunpack.c.l.b16 %v79
  %v411 = vunpack.c.h.b16 %v79
  %v412 = vunpack.c.l.b16 %v80
  %v413 = vunpack.c.h.b16 %v80
  %v414 = vunpack.c.l.b16 %v81
  %v415 = vunpack.c.h.b16 %v81
  %v416 = vunpack.c.l.b16 %v82
  %v417 = vunpack.c.h.b16 %v82
  %v418 = vunpack.c.l.b16 %v83
  %v419 = vunpack.c.h.b16 %v83
  %v420 = vunpack.c.l.b16 %v84
  %v421 = vunpack.c.h.b16 %v84
  %v422 = vunpack.c.l.b16 %v85
  %v423 = vunpack.c.h.b16 %v85
  %v424 = vunpack.c.l.b16 %v86
  %v425 = vunpack.c.h.b16 %v86
  %v426 = vunpack.c.l.b16 %v87
  %v427 = vunpack.c.h.b16 %v87
  %v428 = vunpack.c.l.b16 %v88
  %v429 = vunpack.c.h.b16 %v88
  %v430 = vunpack.c.l.b16 %v89
  %v431 = vunpack.c.h.b16 %v89
  %v432 = vunpack.c.l.b16 %v90
  %v433 = vunpack.c.h.b16 %v90
  %v434 = vunpack.c.l.b16 %v91
  %v435 = vunpack.c.h.b16 %v91
  %v436 = vunpack.c.l.b16 %v92
  %v437 = vunpack.c.h.b16 %v92
  %v438 = vunpack.c.l.b16 %v93
  %v439 = vunpack.c.h.b16 %v93
  %v440 = vunpack.c.l.b16 %v94
  %v441 = vunpack.c.h.b16 %v94
  %v442 = vunpack.c.l.b16 %v95
  %v443 = vunpack.c.h.b16 %v95
  %v444 = vunpack.c.l.b16 %v96
  %v445 = vunpack.c.h.b16 %v96
  %v446 = vunpack.c.l.b16 %v97
  %v447 = vunpack.c.h.b16 %v97
  %v448 = vunpack.c.l.b16 %v98
  %v449 = vunpack.c.h.b16 %v98
  %v450 = vunpack.c.l.b16 %v99
  %v451 = vunpack.c.h.b16 %v99
  %v452 = vunpack.c.l.b16 %v100
  %v453 = vunpack.c.h.b16 %v100
  %v454 = vunpack.c.l.b16 %v101
  %v455 = vunpack.c.h.b16 %v101
  %v456 = vunpack.c.l.b16 %v102
  %v457 = vunpack.c.h.b16 %v102
  %v458 = vunpack.c.l.b16 %v103
  %v459 = vunpack.c.h.b16 %v103
  %v460 = vunpack.c.l.b16 %v104
  %v461 = vunpack.c.h.b16 %v104
  %v462 = vunpack.c.l.b16 %v105
  %v463 = vunpack.c.h.b16 %v105
  %v464 = vunpack.c.l.b16 %v106
  %v465 = vunpack.c.h.b16 %v106
  %v466 = vunpack.c.l.b16 %v107
  %v467 = vunpack.c.h.b16 %v107
  %v468 = vunpack.c.l.b16 %v108
  %v469 = vunpack.c.h.b16 %v108
  %v470 = vunpack.c.l.b16 %v109
  %v471 = vunpack.c.h.b16 %v109
  %v472 = vunpack.c.l.b16 %v110
  %v473 = vunpack.c.h.b16 %v110
  %v474 = vunpack.c.l.b16 %v111
  %v475 = vunpack.c.h.b16 %v111
  %v476 = vunpack.c.l.b16 %v112
  %v477 = vunpack.c.h.b16 %v112
  %v478 = vpack.c.b16 %v286, %v282
  %v479 = vpack.c.b16 %v287, %v283
  %v480 = vpack.c.b16 %v288, %v284
  %v481 = vpack.c.b16 %v289, %v285
  %v482 = vpack.c.b16 %v294, %v290
  %v483 = vpack.c.b16 %v295, %v291
  %v484 = vpack.c.b16 %v296, %v292
  %v485 = vpack.c.b16 %v297, %v293
  %v486 = vpack.c.b16 %v302, %v298
  %v487 = vpack.c.b16 %v303, %v299
  %v488 = vpack.c.b16 %v304, %v300
  %v489 = vpack.c.b16 %v305, %v301
  %v490 = vpack.c.b16 %v310, %v306
  %v491 = vpack.c.b16 %v311, %v307
  %v492 = vpack.c.b16 %v312, %v308
  %v493 = vpack.c.b16 %v313, %v309
  %v494 = vpack.c.b16 %v318, %v314
  %v495 = vpack.c.b16 %v319, %v315
  %v496 = vpack.c.b16 %v320, %v316
  %v497 = vpack.c.b16 %v321, %v317
  %v498 = vpack.c.b16 %v326, %v322
  %v499 = vpack.c.b16 %v327, %v323
  %v500 = vpack.c.b16 %v328, %v324
  %v501 = vpack.c.b16 %v329, %v325
  %v502 = vpack.c.b16 %v334, %v330
  %v503 = vpack.c.b16 %v335, %v331
  %v504 = vpack.c.b16 %v336, %v332
  %v505 = vpack.c.b16 %v337, %v333
  %v506 = vpack.c.b16 %v342, %v338
  %v507 = vpack.c.b16 %v343, %v339
  %v508 = vpack.c.b16 %v344, %v340
  %v509 = vpack.c.b16 %v345, %v341
  %v510 = vpack.c.b16 %v350, %v346
  %v511 = vpack.c.b16 %v351, %v347
  %v512 = vpack.c.b16 %v352, %v348
  %v513 = vpack.c.b16 %v353, %v349
  %v514 = vpack.c.b16 %v358, %v354
  %v515 = vpack.c.b16 %v359, %v355
  %v516 = vpack.c.b16 %v360, %v356
  %v517 = vpack.c.b16 %v361, %v357
  %v518 = vpack.c.b16 %v366, %v362
  %v519 = vpack.c.b16 %v367, %v363
  %v520 = vpack.c.b16 %v368, %v364
  %v521 = vpack.c.b16 %v369, %v365
  %v522 = vpack.c.b16 %v374, %v370
  %v523 = vpack.c.b16 %v375, %v371
  %v524 = vpack.c.b16 %v376, %v372
  %v525 = vpack.c.b16 %v377, %v373
  %v526 = vpack.c.b16 %v382, %v378
  %v527 = vpack.c.b16 %v383, %v379
  %v528 = vpack.c.b16 %v384, %v380
  %v529 = vpack.c.b16 %v385, %v381
  %v530 = vpack.c.b16 %v390, %v386
  %v531 = vpack.c.b16 %v391, %v387
  %v532 = vpack.c.b16 %v392, %v388
  %v533 = vpack.c.b16 %v393, %v389
  %v534 = vpack.c.b16 %v398, %v394
  %v535 = vpack.c.b16 %v399, %v395
  %v536 = vpack.c.b16 %v400, %v396
  %v537 = vpack.c.b16 %v401, %v397
  %v538 = vpack.c.b16 %v406, %v402
  %v539 = vpack.c.b16 %v407, %v403
  %v540 = vpack.c.b16 %v408, %v404
  %v541 = vpack.c.b16 %v409, %v405
  %v542 = vpack.c.b16 %v414, %v410
  %v543 = vpack.c.b16 %v415, %v411
  %v544 = vpack.c.b16 %v416, %v412
  %v545 = vpack.c.b16 %v417, %v413
  %v546 = vpack.c.b16 %v422, %v418
  %v547 = vpack.c.b16 %v423, %v419
  %v548 = vpack.c.b16 %v424, %v420
  %v549 = vpack.c.b16 %v425, %v421
  %v550 = vpack.c.b16 %v430, %v426
  %v551 = vpack.c.b16 %v431, %v427
  %v552 = vpack.c.b16 %v432, %v428
  %v553 = vpack.c.b16 %v433, %v429
  %v554 = vpack.c.b16 %v438, %v434
  %v555 = vpack.c.b16 %v439, %v435
  %v556 = vpack.c.b16 %v440, %v436
  %v557 = vpack.c.b16 %v441, %v437
  %v558 = vpack.c.b16 %v446, %v442
  %v559 = vpack.c.b16 %v447, %v443
  %v560 = vpack.c.b16 %v448, %v444
  %v561 = vpack.c.b16 %v449, %v445
  %v562 = vpack.c.b16 %v454, %v450
  %v563 = vpack.c.b16 %v455, %v451
  %v564 = vpack.c.b16 %v456, %v452
  %v565 = vpack.c.b16 %v457, %v453
  %v566 = vpack.c.b16 %v462, %v458
  %v567 = vpack.c.b16 %v463, %v459
  %v568 = vpack.c.b16 %v464, %v460
  %v569 = vpack.c.b16 %v465, %v461
  %v570 = vpack.c.b16 %v470, %v466
  %v571 = vpack.c.b16 %v471, %v467
  %v572 = vpack.c.b16 %v472, %v468
  %v573 = vpack.c.b16 %v473, %v469
  %v574 = vpack.c.b16 %v474, %v474
  %v575 = vpack.c.b16 %v475, %v475
  %v576 = vpack.c.b16 %v476, %v476
  %v577 = vpack.c.b16 %v477, %v477
  %v742 = vunpack.c.l.b16 %v113
  %v743 = vunpack.c.l.b16 %v114
  %v744 = vunpack.c.l.b16 %v115
  %v745 = vunpack.c.l.b16 %v116
  %v746 = vunpack.c.l.b16 %v117
  %v747 = vunpack.c.l.b16 %v118
  %v748 = vunpack.c.l.b16 %v119
  %v749 = vunpack.c.l.b16 %v120
  %v750 = vunpack.c.l.b16 %v121
  %v751 = vunpack.c.l.b16 %v122
  %v752 = vunpack.c.l.b16 %v123
  %v753 = vunpack.c.l.b16 %v124
  %v754 = vunpack.c.l.b16 %v125
  %v755 = vunpack.c.l.b16 %v126
  %v756 = vunpack.c.l.b16 %v127
  %v757 = vunpack.c.l.b16 %v128
  %v758 = vunpack.c.l.b16 %v129
  %v759 = vunpack.c.l.b16 %v130
  %v760 = vunpack.c.l.b16 %v131
  %v761 = vunpack.c.l.b16 %v132
  %v762 = vunpack.c.l.b16 %v133
  %v763 = vunpack.c.l.b16 %v134
  %v764 = vunpack.c.l.b16 %v135
  %v765 = vunpack.c.l.b16 %v136
  %v766 = vunpack.c.l.b16 %v137
  %v767 = vunpack.c.l.b16 %v138
  %v768 = vunpack.c.l.b16 %v139
  %v769 = vunpack.c.l.b16 %v140
  %v770 = vunpack.c.l.b16 %v141
  %v771 = vunpack.c.l.b16 %v142
  %v772 = vunpack.c.l.b16 %v143
  %v773 = vunpack.c.l.b16 %v144
  %v774 = vunpack.c.l.b16 %v145
  %v775 = vunpack.c.l.b16 %v146
  %v776 = vunpack.c.l.b16 %v147
  %v777 = vunpack.c.l.b16 %v148
  %v778 = vunpack.c.l.b16 %v149
  %v779 = vunpack.c.l.b16 %v150
  %v780 = vunpack.c.l.b16 %v151
  %v781 = vunpack.c.l.b16 %v152
  %v782 = vunpack.c.l.b16 %v153
  %v783 = vunpack.c.l.b16 %v154
  %v784 = vunpack.c.l.b16 %v155
  %v785 = vunpack.c.l.b16 %v156
  %v786 = vunpack.c.l.b16 %v157
  %v787 = vunpack.c.l.b16 %v158
  %v788 = vunpack.c.l.b16 %v159
  %v789 = vunpack.c.l.b16 %v160
  %v790 = vunpack.c.l.b16 %v161
  %v791 = vunpack.c.l.b16 %v162
  %v792 = vunpack.c.l.b16 %v163
  %v793 = vunpack.c.l.b16 %v164
  %v794 = vunpack.c.l.b16 %v165
  %v795 = vunpack.c.l.b16 %v166
  %v796 = vunpack.c.l.b16 %v167
  %v797 = vunpack.c.l.b16 %v168
  %v798 = vunpack.c.l.b16 %v169
  %v799 = vunpack.c.l.b16 %v170
  %v800 = vunpack.c.l.b16 %v171
  %v801 = vunpack.c.l.b16 %v172
  %v802 = vunpack.c.l.b16 %v173
  %v803 = vunpack.c.l.b16 %v174
  %v804 = vunpack.c.l.b16 %v175
  %v805 = vunpack.c.l.b16 %v176
  %v806 = vpack.c.b16 %v743, %v742
  %v807 = vpack.c.b16 %v745, %v744
  %v808 = vpack.c.b16 %v747, %v746
  %v809 = vpack.c.b16 %v749, %v748
  %v810 = vpack.c.b16 %v751, %v750
  %v811 = vpack.c.b16 %v753, %v752
  %v812 = vpack.c.b16 %v755, %v754
  %v813 = vpack.c.b16 %v757, %v756
  %v814 = vpack.c.b16 %v759, %v758
  %v815 = vpack.c.b16 %v761, %v760
  %v816 = vpack.c.b16 %v763, %v762
  %v817 = vpack.c.b16 %v765, %v764
  %v818 = vpack.c.b16 %v767, %v766
  %v819 = vpack.c.b16 %v769, %v768
  %v820 = vpack.c.b16 %v771, %v770
  %v821 = vpack.c.b16 %v773, %v772
  %v822 = vpack.c.b16 %v775, %v774
  %v823 = vpack.c.b16 %v777, %v776
  %v824 = vpack.c.b16 %v779, %v778
  %v825 = vpack.c.b16 %v781, %v780
  %v826 = vpack.c.b16 %v783, %v782
  %v827 = vpack.c.b16 %v785, %v784
  %v828 = vpack.c.b16 %v787, %v786
  %v829 = vpack.c.b16 %v789, %v788
  %v830 = vpack.c.b16 %v791, %v790
  %v831 = vpack.c.b16 %v793, %v792
  %v832 = vpack.c.b16 %v795, %v794
  %v833 = vpack.c.b16 %v797, %v796
  %v834 = vpack.c.b16 %v799, %v798
  %v835 = vpack.c.b16 %v801, %v800
  %v836 = vpack.c.b16 %v803, %v802
  %v837 = vpack.c.b16 %v805, %v804
  %870 = vmatprep.subr.bf16.mxu0 0
  %871 = vmatpush1.bf16.msra.mxu0 %v806
  %872 = vmatprep.subr.bf16.mxu0 0
  %873 = vmatpush1.bf16.msra.mxu0 %v807
  %874 = vmatprep.subr.bf16.mxu0 0
  %875 = vmatpush1.bf16.msra.mxu0 %v808
  %876 = vmatprep.subr.bf16.mxu0 0
  %877 = vmatpush1.bf16.msra.mxu0 %v809
  %878 = vmatprep.subr.bf16.mxu0 0
  %879 = vmatpush1.bf16.msra.mxu0 %v810
  %880 = vmatprep.subr.bf16.mxu0 0
  %881 = vmatpush1.bf16.msra.mxu0 %v811
  %882 = vmatprep.subr.bf16.mxu0 0
  %883 = vmatpush1.bf16.msra.mxu0 %v812
  %884 = vmatprep.subr.bf16.mxu0 0
  %885 = vmatpush1.bf16.msra.mxu0 %v813
  %886 = vmatprep.subr.bf16.mxu0 0
  %887 = vmatpush1.bf16.msra.mxu0 %v814
  %888 = vmatprep.subr.bf16.mxu0 0
  %889 = vmatpush1.bf16.msra.mxu0 %v815
  %890 = vmatprep.subr.bf16.mxu0 0
  %891 = vmatpush1.bf16.msra.mxu0 %v816
  %892 = vmatprep.subr.bf16.mxu0 0
  %893 = vmatpush1.bf16.msra.mxu0 %v817
  %894 = vmatprep.subr.bf16.mxu0 0
  %895 = vmatpush1.bf16.msra.mxu0 %v818
  %896 = vmatprep.subr.bf16.mxu0 0
  %897 = vmatpush1.bf16.msra.mxu0 %v819
  %898 = vmatprep.subr.bf16.mxu0 0
  %899 = vmatpush1.bf16.msra.mxu0 %v820
  %900 = vmatprep.subr.bf16.mxu0 0
  %901 = vmatpush1.bf16.msra.mxu0 %v821
  %902 = vmatprep.mubr.bf16.mxu0 %v479
  %903 = vmatmul.mubr.bf16.gmra.mrb[0].mxu0 %v478
  %v904 = vpop.f32.mrb[0].mxu0
  %v905 = vadd.f32 %v182, %v904
  %v906 = vpop.f32.mrb[0].mxu0
  %v907 = vpop.f32.mrb[0].mxu0
  %v908 = vadd.f32 %v182, %v907
  %v909 = vpop.f32.mrb[0].mxu0
  %910 = vmatprep.mubr.bf16.mxu0 %v483
  %911 = vmatmul.mubr.bf16.gmra.mrb[0].mxu0 %v482
  %v912 = vpop.f32.mrb[0].mxu0
  %v913 = vadd.f32 %v182, %v912
  %v914 = vpop.f32.mrb[0].mxu0
  %v915 = vpop.f32.mrb[0].mxu0
  %v916 = vadd.f32 %v182, %v915
  %v917 = vpop.f32.mrb[0].mxu0
  %918 = vmatprep.mubr.bf16.mxu0 %v487
  %919 = vmatmul.mubr.bf16.gmra.mrb[0].mxu0 %v486
  %v920 = vpop.f32.mrb[0].mxu0
  %v921 = vadd.f32 %v182, %v920
  %v922 = vpop.f32.mrb[0].mxu0
  %v923 = vpop.f32.mrb[0].mxu0
  %v924 = vadd.f32 %v182, %v923
  %v925 = vpop.f32.mrb[0].mxu0
  %926 = vmatprep.mubr.bf16.mxu0 %v491
  %927 = vmatmul.mubr.bf16.gmra.mrb[0].mxu0 %v490
  %v928 = vpop.f32.mrb[0].mxu0
  %v929 = vadd.f32 %v182, %v928
  %v930 = vpop.f32.mrb[0].mxu0
  %v931 = vpop.f32.mrb[0].mxu0
  %v932 = vadd.f32 %v182, %v931
  %v933 = vpop.f32.mrb[0].mxu0
  %934 = vmatprep.mubr.bf16.mxu0 %v495
  %935 = vmatmul.mubr.bf16.gmra.mrb[0].mxu0 %v494
  %v936 = vpop.f32.mrb[0].mxu0
  %v937 = vadd.f32 %v182, %v936
  %v938 = vpop.f32.mrb[0].mxu0
  %v939 = vpop.f32.mrb[0].mxu0
  %v940 = vadd.f32 %v182, %v939
  %v941 = vpop.f32.mrb[0].mxu0
  %942 = vmatprep.mubr.bf16.mxu0 %v499
  %943 = vmatmul.mubr.bf16.gmra.mrb[0].mxu0 %v498
  %v944 = vpop.f32.mrb[0].mxu0
  %v945 = vadd.f32 %v182, %v944
  %v946 = vpop.f32.mrb[0].mxu0
  %v947 = vpop.f32.mrb[0].mxu0
  %v948 = vadd.f32 %v182, %v947
  %v949 = vpop.f32.mrb[0].mxu0
  %950 = vmatprep.mubr.bf16.mxu0 %v503
  %951 = vmatmul.mubr.bf16.gmra.mrb[0].mxu0 %v502
  %v952 = vpop.f32.mrb[0].mxu0
  %v953 = vadd.f32 %v182, %v952
  %v954 = vpop.f32.mrb[0].mxu0
  %v955 = vpop.f32.mrb[0].mxu0
  %v956 = vadd.f32 %v182, %v955
  %v957 = vpop.f32.mrb[0].mxu0
  %958 = vmatprep.mubr.bf16.mxu0 %v507
  %959 = vmatmul.mubr.bf16.gmra.mrb[0].mxu0 %v506
  %v960 = vpop.f32.mrb[0].mxu0
  %v961 = vadd.f32 %v182, %v960
  %v962 = vpop.f32.mrb[0].mxu0
  %v963 = vpop.f32.mrb[0].mxu0
  %v964 = vadd.f32 %v182, %v963
  %v965 = vpop.f32.mrb[0].mxu0
  %966 = vmatprep.mubr.bf16.mxu0 %v511
  %967 = vmatmul.mubr.bf16.gmra.mrb[0].mxu0 %v510
  %v968 = vpop.f32.mrb[0].mxu0
  %v969 = vadd.f32 %v182, %v968
  %v970 = vpop.f32.mrb[0].mxu0
  %v971 = vpop.f32.mrb[0].mxu0
  %v972 = vadd.f32 %v182, %v971
  %v973 = vpop.f32.mrb[0].mxu0
  %974 = vmatprep.mubr.bf16.mxu0 %v515
  %975 = vmatmul.mubr.bf16.gmra.mrb[0].mxu0 %v514
  %v976 = vpop.f32.mrb[0].mxu0
  %v977 = vadd.f32 %v182, %v976
  %v978 = vpop.f32.mrb[0].mxu0
  %v979 = vpop.f32.mrb[0].mxu0
  %v980 = vadd.f32 %v182, %v979
  %v981 = vpop.f32.mrb[0].mxu0
  %982 = vmatprep.mubr.bf16.mxu0 %v519
  %983 = vmatmul.mubr.bf16.gmra.mrb[0].mxu0 %v518
  %v984 = vpop.f32.mrb[0].mxu0
  %v985 = vadd.f32 %v182, %v984
  %v986 = vpop.f32.mrb[0].mxu0
  %v987 = vpop.f32.mrb[0].mxu0
  %v988 = vadd.f32 %v182, %v987
  %v989 = vpop.f32.mrb[0].mxu0
  %990 = vmatprep.mubr.bf16.mxu0 %v523
  %991 = vmatmul.mubr.bf16.gmra.mrb[0].mxu0 %v522
  %v992 = vpop.f32.mrb[0].mxu0
  %v993 = vadd.f32 %v182, %v992
  %v994 = vpop.f32.mrb[0].mxu0
  %v995 = vpop.f32.mrb[0].mxu0
  %v996 = vadd.f32 %v182, %v995
  %v997 = vpop.f32.mrb[0].mxu0
  %998 = vmatprep.mubr.bf16.mxu0 %v527
  %999 = vmatmul.mubr.bf16.gmra.mrb[0].mxu0 %v526
  %v1000 = vpop.f32.mrb[0].mxu0
  %v1001 = vadd.f32 %v182, %v1000
  %v1002 = vpop.f32.mrb[0].mxu0
  %v1003 = vpop.f32.mrb[0].mxu0
  %v1004 = vadd.f32 %v182, %v1003
  %v1005 = vpop.f32.mrb[0].mxu0
  %1006 = vmatprep.mubr.bf16.mxu0 %v531
  %1007 = vmatmul.mubr.bf16.gmra.mrb[0].mxu0 %v530
  %v1008 = vpop.f32.mrb[0].mxu0
  %v1009 = vadd.f32 %v182, %v1008
  %v1010 = vpop.f32.mrb[0].mxu0
  %v1011 = vpop.f32.mrb[0].mxu0
  %v1012 = vadd.f32 %v182, %v1011
  %v1013 = vpop.f32.mrb[0].mxu0
  %1014 = vmatprep.mubr.bf16.mxu0 %v535
  %1015 = vmatmul.mubr.bf16.gmra.mrb[0].mxu0 %v534
  %v1016 = vpop.f32.mrb[0].mxu0
  %v1017 = vadd.f32 %v182, %v1016
  %v1018 = vpop.f32.mrb[0].mxu0
  %v1019 = vpop.f32.mrb[0].mxu0
  %v1020 = vadd.f32 %v182, %v1019
  %v1021 = vpop.f32.mrb[0].mxu0
  %1022 = vmatprep.mubr.bf16.mxu0 %v539
  %1023 = vmatmul.mubr.bf16.gmra.mrb[0].mxu0 %v538
  %v1024 = vpop.f32.mrb[0].mxu0
  %v1025 = vadd.f32 %v182, %v1024
  %v1026 = vpop.f32.mrb[0].mxu0
  %v1027 = vpop.f32.mrb[0].mxu0
  %v1028 = vadd.f32 %v182, %v1027
  %v1029 = vpop.f32.mrb[0].mxu0
  %1030 = vmatprep.mubr.bf16.mxu0 %v543
  %1031 = vmatmul.mubr.bf16.gmra.mrb[0].mxu0 %v542
  %v1032 = vpop.f32.mrb[0].mxu0
  %v1033 = vadd.f32 %v182, %v1032
  %v1034 = vpop.f32.mrb[0].mxu0
  %v1035 = vpop.f32.mrb[0].mxu0
  %v1036 = vadd.f32 %v182, %v1035
  %v1037 = vpop.f32.mrb[0].mxu0
  %1038 = vmatprep.mubr.bf16.mxu0 %v547
  %1039 = vmatmul.mubr.bf16.gmra.mrb[0].mxu0 %v546
  %v1040 = vpop.f32.mrb[0].mxu0
  %v1041 = vadd.f32 %v182, %v1040
  %v1042 = vpop.f32.mrb[0].mxu0
  %v1043 = vpop.f32.mrb[0].mxu0
  %v1044 = vadd.f32 %v182, %v1043
  %v1045 = vpop.f32.mrb[0].mxu0
  %1046 = vmatprep.mubr.bf16.mxu0 %v551
  %1047 = vmatmul.mubr.bf16.gmra.mrb[0].mxu0 %v550
  %v1048 = vpop.f32.mrb[0].mxu0
  %v1049 = vadd.f32 %v182, %v1048
  %v1050 = vpop.f32.mrb[0].mxu0
  %v1051 = vpop.f32.mrb[0].mxu0
  %v1052 = vadd.f32 %v182, %v1051
  %v1053 = vpop.f32.mrb[0].mxu0
  %1054 = vmatprep.mubr.bf16.mxu0 %v555
  %1055 = vmatmul.mubr.bf16.gmra.mrb[0].mxu0 %v554
  %v1056 = vpop.f32.mrb[0].mxu0
  %v1057 = vadd.f32 %v182, %v1056
  %v1058 = vpop.f32.mrb[0].mxu0
  %v1059 = vpop.f32.mrb[0].mxu0
  %v1060 = vadd.f32 %v182, %v1059
  %v1061 = vpop.f32.mrb[0].mxu0
  %1062 = vmatprep.mubr.bf16.mxu0 %v559
  %1063 = vmatmul.mubr.bf16.gmra.mrb[0].mxu0 %v558
  %v1064 = vpop.f32.mrb[0].mxu0
  %v1065 = vadd.f32 %v182, %v1064
  %v1066 = vpop.f32.mrb[0].mxu0
  %v1067 = vpop.f32.mrb[0].mxu0
  %v1068 = vadd.f32 %v182, %v1067
  %v1069 = vpop.f32.mrb[0].mxu0
  %1070 = vmatprep.mubr.bf16.mxu0 %v563
  %1071 = vmatmul.mubr.bf16.gmra.mrb[0].mxu0 %v562
  %v1072 = vpop.f32.mrb[0].mxu0
  %v1073 = vadd.f32 %v182, %v1072
  %v1074 = vpop.f32.mrb[0].mxu0
  %v1075 = vpop.f32.mrb[0].mxu0
  %v1076 = vadd.f32 %v182, %v1075
  %v1077 = vpop.f32.mrb[0].mxu0
  %1078 = vmatprep.mubr.bf16.mxu0 %v567
  %1079 = vmatmul.mubr.bf16.gmra.mrb[0].mxu0 %v566
  %v1080 = vpop.f32.mrb[0].mxu0
  %v1081 = vadd.f32 %v182, %v1080
  %v1082 = vpop.f32.mrb[0].mxu0
  %v1083 = vpop.f32.mrb[0].mxu0
  %v1084 = vadd.f32 %v182, %v1083
  %v1085 = vpop.f32.mrb[0].mxu0
  %1086 = vmatprep.mubr.bf16.mxu0 %v571
  %1087 = vmatmul.mubr.bf16.gmra.mrb[0].mxu0 %v570
  %v1088 = vpop.f32.mrb[0].mxu0
  %v1089 = vadd.f32 %v182, %v1088
  %v1090 = vpop.f32.mrb[0].mxu0
  %v1091 = vpop.f32.mrb[0].mxu0
  %v1092 = vadd.f32 %v182, %v1091
  %v1093 = vpop.f32.mrb[0].mxu0
  %1094 = vmatprep.mubr.bf16.mxu0 %v575
  %1095 = vmatmul.mubr.bf16.gmra.mrb[0].mxu0 %v574
  %v1096 = vpop.f32.mrb[0].mxu0
  %v1097 = vadd.f32 %v182, %v1096
  %v1098 = vpop.f32.mrb[0].mxu0
  %v1099 = vpop.f32.mrb[0].mxu0
  %v1100 = vpop.f32.mrb[0].mxu0
  %1101 = vdwg.mxu0
  %1102 = vmatprep.subr.bf16.mxu0 0
  %1103 = vmatpush1.bf16.msra.mxu0 %v822
  %1104 = vmatprep.subr.bf16.mxu0 0
  %1105 = vmatpush1.bf16.msra.mxu0 %v823
  %1106 = vmatprep.subr.bf16.mxu0 0
  %1107 = vmatpush1.bf16.msra.mxu0 %v824
  %1108 = vmatprep.subr.bf16.mxu0 0
  %1109 = vmatpush1.bf16.msra.mxu0 %v825
  %1110 = vmatprep.subr.bf16.mxu0 0
  %1111 = vmatpush1.bf16.msra.mxu0 %v826
  %1112 = vmatprep.subr.bf16.mxu0 0
  %1113 = vmatpush1.bf16.msra.mxu0 %v827
  %1114 = vmatprep.subr.bf16.mxu0 0
  %1115 = vmatpush1.bf16.msra.mxu0 %v828
  %1116 = vmatprep.subr.bf16.mxu0 0
  %1117 = vmatpush1.bf16.msra.mxu0 %v829
  %1118 = vmatprep.subr.bf16.mxu0 0
  %1119 = vmatpush1.bf16.msra.mxu0 %v830
  %1120 = vmatprep.subr.bf16.mxu0 0
  %1121 = vmatpush1.bf16.msra.mxu0 %v831
  %1122 = vmatprep.subr.bf16.mxu0 0
  %1123 = vmatpush1.bf16.msra.mxu0 %v832
  %1124 = vmatprep.subr.bf16.mxu0 0
  %1125 = vmatpush1.bf16.msra.mxu0 %v833
  %1126 = vmatprep.subr.bf16.mxu0 0
  %1127 = vmatpush1.bf16.msra.mxu0 %v834
  %1128 = vmatprep.subr.bf16.mxu0 0
  %1129 = vmatpush1.bf16.msra.mxu0 %v835
  %1130 = vmatprep.subr.bf16.mxu0 0
  %1131 = vmatpush1.bf16.msra.mxu0 %v836
  %1132 = vmatprep.subr.bf16.mxu0 0
  %1133 = vmatpush1.bf16.msra.mxu0 %v837
  %1134 = vmatprep.mubr.bf16.mxu0 %v481
  %1135 = vmatmul.mubr.bf16.gmra.mrb[0].mxu0 %v480
  %v1136 = vpop.f32.mrb[0].mxu0
  %v1137 = vadd.f32 %v905, %v1136
  %v1138 = vpop.f32.mrb[0].mxu0
  %v1139 = vpop.f32.mrb[0].mxu0
  %v1140 = vadd.f32 %v908, %v1139
  %v1141 = vpop.f32.mrb[0].mxu0
  %1142 = vmatprep.mubr.bf16.mxu0 %v485
  %1143 = vmatmul.mubr.bf16.gmra.mrb[0].mxu0 %v484
  %v1144 = vpop.f32.mrb[0].mxu0
  %v1145 = vadd.f32 %v913, %v1144
  %v1146 = vpop.f32.mrb[0].mxu0
  %v1147 = vpop.f32.mrb[0].mxu0
  %v1148 = vadd.f32 %v916, %v1147
  %v1149 = vpop.f32.mrb[0].mxu0
  %1150 = vmatprep.mubr.bf16.mxu0 %v489
  %1151 = vmatmul.mubr.bf16.gmra.mrb[0].mxu0 %v488
  %v1152 = vpop.f32.mrb[0].mxu0
  %v1153 = vadd.f32 %v921, %v1152
  %v1154 = vpop.f32.mrb[0].mxu0
  %v1155 = vpop.f32.mrb[0].mxu0
  %v1156 = vadd.f32 %v924, %v1155
  %v1157 = vpop.f32.mrb[0].mxu0
  %1158 = vmatprep.mubr.bf16.mxu0 %v493
  %1159 = vmatmul.mubr.bf16.gmra.mrb[0].mxu0 %v492
  %v1160 = vpop.f32.mrb[0].mxu0
  %v1161 = vadd.f32 %v929, %v1160
  %v1162 = vpop.f32.mrb[0].mxu0
  %v1163 = vpop.f32.mrb[0].mxu0
  %v1164 = vadd.f32 %v932, %v1163
  %v1165 = vpop.f32.mrb[0].mxu0
  %1166 = vmatprep.mubr.bf16.mxu0 %v497
  %1167 = vmatmul.mubr.bf16.gmra.mrb[0].mxu0 %v496
  %v1168 = vpop.f32.mrb[0].mxu0
  %v1169 = vadd.f32 %v937, %v1168
  %v1170 = vpop.f32.mrb[0].mxu0
  %v1171 = vpop.f32.mrb[0].mxu0
  %v1172 = vadd.f32 %v940, %v1171
  %v1173 = vpop.f32.mrb[0].mxu0
  %1174 = vmatprep.mubr.bf16.mxu0 %v501
  %1175 = vmatmul.mubr.bf16.gmra.mrb[0].mxu0 %v500
  %v1176 = vpop.f32.mrb[0].mxu0
  %v1177 = vadd.f32 %v945, %v1176
  %v1178 = vpop.f32.mrb[0].mxu0
  %v1179 = vpop.f32.mrb[0].mxu0
  %v1180 = vadd.f32 %v948, %v1179
  %v1181 = vpop.f32.mrb[0].mxu0
  %1182 = vmatprep.mubr.bf16.mxu0 %v505
  %1183 = vmatmul.mubr.bf16.gmra.mrb[0].mxu0 %v504
  %v1184 = vpop.f32.mrb[0].mxu0
  %v1185 = vadd.f32 %v953, %v1184
  %v1186 = vpop.f32.mrb[0].mxu0
  %v1187 = vpop.f32.mrb[0].mxu0
  %v1188 = vadd.f32 %v956, %v1187
  %v1189 = vpop.f32.mrb[0].mxu0
  %1190 = vmatprep.mubr.bf16.mxu0 %v509
  %1191 = vmatmul.mubr.bf16.gmra.mrb[0].mxu0 %v508
  %v1192 = vpop.f32.mrb[0].mxu0
  %v1193 = vadd.f32 %v961, %v1192
  %v1194 = vpop.f32.mrb[0].mxu0
  %v1195 = vpop.f32.mrb[0].mxu0
  %v1196 = vadd.f32 %v964, %v1195
  %v1197 = vpop.f32.mrb[0].mxu0
  %1198 = vmatprep.mubr.bf16.mxu0 %v513
  %1199 = vmatmul.mubr.bf16.gmra.mrb[0].mxu0 %v512
  %v1200 = vpop.f32.mrb[0].mxu0
  %v1201 = vadd.f32 %v969, %v1200
  %v1202 = vpop.f32.mrb[0].mxu0
  %v1203 = vpop.f32.mrb[0].mxu0
  %v1204 = vadd.f32 %v972, %v1203
  %v1205 = vpop.f32.mrb[0].mxu0
  %1206 = vmatprep.mubr.bf16.mxu0 %v517
  %1207 = vmatmul.mubr.bf16.gmra.mrb[0].mxu0 %v516
  %v1208 = vpop.f32.mrb[0].mxu0
  %v1209 = vadd.f32 %v977, %v1208
  %v1210 = vpop.f32.mrb[0].mxu0
  %v1211 = vpop.f32.mrb[0].mxu0
  %v1212 = vadd.f32 %v980, %v1211
  %v1213 = vpop.f32.mrb[0].mxu0
  %1214 = vmatprep.mubr.bf16.mxu0 %v521
  %1215 = vmatmul.mubr.bf16.gmra.mrb[0].mxu0 %v520
  %v1216 = vpop.f32.mrb[0].mxu0
  %v1217 = vadd.f32 %v985, %v1216
  %v1218 = vpop.f32.mrb[0].mxu0
  %v1219 = vpop.f32.mrb[0].mxu0
  %v1220 = vadd.f32 %v988, %v1219
  %v1221 = vpop.f32.mrb[0].mxu0
  %1222 = vmatprep.mubr.bf16.mxu0 %v525
  %1223 = vmatmul.mubr.bf16.gmra.mrb[0].mxu0 %v524
  %v1224 = vpop.f32.mrb[0].mxu0
  %v1225 = vadd.f32 %v993, %v1224
  %v1226 = vpop.f32.mrb[0].mxu0
  %v1227 = vpop.f32.mrb[0].mxu0
  %v1228 = vadd.f32 %v996, %v1227
  %v1229 = vpop.f32.mrb[0].mxu0
  %1230 = vmatprep.mubr.bf16.mxu0 %v529
  %1231 = vmatmul.mubr.bf16.gmra.mrb[0].mxu0 %v528
  %v1232 = vpop.f32.mrb[0].mxu0
  %v1233 = vadd.f32 %v1001, %v1232
  %v1234 = vpop.f32.mrb[0].mxu0
  %v1235 = vpop.f32.mrb[0].mxu0
  %v1236 = vadd.f32 %v1004, %v1235
  %v1237 = vpop.f32.mrb[0].mxu0
  %1238 = vmatprep.mubr.bf16.mxu0 %v533
  %1239 = vmatmul.mubr.bf16.gmra.mrb[0].mxu0 %v532
  %v1240 = vpop.f32.mrb[0].mxu0
  %v1241 = vadd.f32 %v1009, %v1240
  %v1242 = vpop.f32.mrb[0].mxu0
  %v1243 = vpop.f32.mrb[0].mxu0
  %v1244 = vadd.f32 %v1012, %v1243
  %v1245 = vpop.f32.mrb[0].mxu0
  %1246 = vmatprep.mubr.bf16.mxu0 %v537
  %1247 = vmatmul.mubr.bf16.gmra.mrb[0].mxu0 %v536
  %v1248 = vpop.f32.mrb[0].mxu0
  %v1249 = vadd.f32 %v1017, %v1248
  %v1250 = vpop.f32.mrb[0].mxu0
  %v1251 = vpop.f32.mrb[0].mxu0
  %v1252 = vadd.f32 %v1020, %v1251
  %v1253 = vpop.f32.mrb[0].mxu0
  %1254 = vmatprep.mubr.bf16.mxu0 %v541
  %1255 = vmatmul.mubr.bf16.gmra.mrb[0].mxu0 %v540
  %v1256 = vpop.f32.mrb[0].mxu0
  %v1257 = vadd.f32 %v1025, %v1256
  %v1258 = vpop.f32.mrb[0].mxu0
  %v1259 = vpop.f32.mrb[0].mxu0
  %v1260 = vadd.f32 %v1028, %v1259
  %v1261 = vpop.f32.mrb[0].mxu0
  %1262 = vmatprep.mubr.bf16.mxu0 %v545
  %1263 = vmatmul.mubr.bf16.gmra.mrb[0].mxu0 %v544
  %v1264 = vpop.f32.mrb[0].mxu0
  %v1265 = vadd.f32 %v1033, %v1264
  %v1266 = vpop.f32.mrb[0].mxu0
  %v1267 = vpop.f32.mrb[0].mxu0
  %v1268 = vadd.f32 %v1036, %v1267
  %v1269 = vpop.f32.mrb[0].mxu0
  %1270 = vmatprep.mubr.bf16.mxu0 %v549
  %1271 = vmatmul.mubr.bf16.gmra.mrb[0].mxu0 %v548
  %v1272 = vpop.f32.mrb[0].mxu0
  %v1273 = vadd.f32 %v1041, %v1272
  %v1274 = vpop.f32.mrb[0].mxu0
  %v1275 = vpop.f32.mrb[0].mxu0
  %v1276 = vadd.f32 %v1044, %v1275
  %v1277 = vpop.f32.mrb[0].mxu0
  %1278 = vmatprep.mubr.bf16.mxu0 %v553
  %1279 = vmatmul.mubr.bf16.gmra.mrb[0].mxu0 %v552
  %v1280 = vpop.f32.mrb[0].mxu0
  %v1281 = vadd.f32 %v1049, %v1280
  %v1282 = vpop.f32.mrb[0].mxu0
  %v1283 = vpop.f32.mrb[0].mxu0
  %v1284 = vadd.f32 %v1052, %v1283
  %v1285 = vpop.f32.mrb[0].mxu0
  %1286 = vmatprep.mubr.bf16.mxu0 %v557
  %1287 = vmatmul.mubr.bf16.gmra.mrb[0].mxu0 %v556
  %v1288 = vpop.f32.mrb[0].mxu0
  %v1289 = vadd.f32 %v1057, %v1288
  %v1290 = vpop.f32.mrb[0].mxu0
  %v1291 = vpop.f32.mrb[0].mxu0
  %v1292 = vadd.f32 %v1060, %v1291
  %v1293 = vpop.f32.mrb[0].mxu0
  %1294 = vmatprep.mubr.bf16.mxu0 %v561
  %1295 = vmatmul.mubr.bf16.gmra.mrb[0].mxu0 %v560
  %v1296 = vpop.f32.mrb[0].mxu0
  %v1297 = vadd.f32 %v1065, %v1296
  %v1298 = vpop.f32.mrb[0].mxu0
  %v1299 = vpop.f32.mrb[0].mxu0
  %v1300 = vadd.f32 %v1068, %v1299
  %v1301 = vpop.f32.mrb[0].mxu0
  %1302 = vmatprep.mubr.bf16.mxu0 %v565
  %1303 = vmatmul.mubr.bf16.gmra.mrb[0].mxu0 %v564
  %v1304 = vpop.f32.mrb[0].mxu0
  %v1305 = vadd.f32 %v1073, %v1304
  %v1306 = vpop.f32.mrb[0].mxu0
  %v1307 = vpop.f32.mrb[0].mxu0
  %v1308 = vadd.f32 %v1076, %v1307
  %v1309 = vpop.f32.mrb[0].mxu0
  %1310 = vmatprep.mubr.bf16.mxu0 %v569
  %1311 = vmatmul.mubr.bf16.gmra.mrb[0].mxu0 %v568
  %v1312 = vpop.f32.mrb[0].mxu0
  %v1313 = vadd.f32 %v1081, %v1312
  %v1314 = vpop.f32.mrb[0].mxu0
  %v1315 = vpop.f32.mrb[0].mxu0
  %v1316 = vadd.f32 %v1084, %v1315
  %v1317 = vpop.f32.mrb[0].mxu0
  %1318 = vmatprep.mubr.bf16.mxu0 %v573
  %1319 = vmatmul.mubr.bf16.gmra.mrb[0].mxu0 %v572
  %v1320 = vpop.f32.mrb[0].mxu0
  %v1321 = vadd.f32 %v1089, %v1320
  %v1322 = vpop.f32.mrb[0].mxu0
  %v1323 = vpop.f32.mrb[0].mxu0
  %v1324 = vadd.f32 %v1092, %v1323
  %v1325 = vpop.f32.mrb[0].mxu0
  %1326 = vmatprep.mubr.bf16.mxu0 %v577
  %1327 = vmatmul.mubr.bf16.gmra.mrb[0].mxu0 %v576
  %v1328 = vpop.f32.mrb[0].mxu0
  %v1329 = vadd.f32 %v1097, %v1328
  %v1330 = vpop.f32.mrb[0].mxu0
  %v1331 = vpop.f32.mrb[0].mxu0
  %v1332 = vpop.f32.mrb[0].mxu0
  %1333 = vdwg.mxu0
  %v1334 = vmax.f32 %v1137, 0.0
  %v1335 = vmax.f32 %v1140, 0.0
  %v1336 = vmax.f32 %v1145, 0.0
  %v1337 = vmax.f32 %v1148, 0.0
  %v1338 = vmax.f32 %v1153, 0.0
  %v1339 = vmax.f32 %v1156, 0.0
  %v1340 = vmax.f32 %v1161, 0.0
  %v1341 = vmax.f32 %v1164, 0.0
  %v1342 = vmax.f32 %v1169, 0.0
  %v1343 = vmax.f32 %v1172, 0.0
  %v1344 = vmax.f32 %v1177, 0.0
  %v1345 = vmax.f32 %v1180, 0.0
  %v1346 = vmax.f32 %v1185, 0.0
  %v1347 = vmax.f32 %v1188, 0.0
  %v1348 = vmax.f32 %v1193, 0.0
  %v1349 = vmax.f32 %v1196, 0.0
  %v1350 = vmax.f32 %v1201, 0.0
  %v1351 = vmax.f32 %v1204, 0.0
  %v1352 = vmax.f32 %v1209, 0.0
  %v1353 = vmax.f32 %v1212, 0.0
  %v1354 = vmax.f32 %v1217, 0.0
  %v1355 = vmax.f32 %v1220, 0.0
  %v1356 = vmax.f32 %v1225, 0.0
  %v1357 = vmax.f32 %v1228, 0.0
  %v1358 = vmax.f32 %v1233, 0.0
  %v1359 = vmax.f32 %v1236, 0.0
  %v1360 = vmax.f32 %v1241, 0.0
  %v1361 = vmax.f32 %v1244, 0.0
  %v1362 = vmax.f32 %v1249, 0.0
  %v1363 = vmax.f32 %v1252, 0.0
  %v1364 = vmax.f32 %v1257, 0.0
  %v1365 = vmax.f32 %v1260, 0.0
  %v1366 = vmax.f32 %v1265, 0.0
  %v1367 = vmax.f32 %v1268, 0.0
  %v1368 = vmax.f32 %v1273, 0.0
  %v1369 = vmax.f32 %v1276, 0.0
  %v1370 = vmax.f32 %v1281, 0.0
  %v1371 = vmax.f32 %v1284, 0.0
  %v1372 = vmax.f32 %v1289, 0.0
  %v1373 = vmax.f32 %v1292, 0.0
  %v1374 = vmax.f32 %v1297, 0.0
  %v1375 = vmax.f32 %v1300, 0.0
  %v1376 = vmax.f32 %v1305, 0.0
  %v1377 = vmax.f32 %v1308, 0.0
  %v1378 = vmax.f32 %v1313, 0.0
  %v1379 = vmax.f32 %v1316, 0.0
  %v1380 = vmax.f32 %v1321, 0.0
  %v1381 = vmax.f32 %v1324, 0.0
  %v1382 = vmax.f32 %v1329, 0.0
  %v1383 = vpack.c.bf16 %v1335, %v1334
  %v1384 = vpack.c.bf16 %v1337, %v1336
  %v1385 = vpack.c.bf16 %v1339, %v1338
  %v1386 = vpack.c.bf16 %v1341, %v1340
  %v1387 = vpack.c.bf16 %v1343, %v1342
  %v1388 = vpack.c.bf16 %v1345, %v1344
  %v1389 = vpack.c.bf16 %v1347, %v1346
  %v1390 = vpack.c.bf16 %v1349, %v1348
  %v1391 = vpack.c.bf16 %v1351, %v1350
  %v1392 = vpack.c.bf16 %v1353, %v1352
  %v1393 = vpack.c.bf16 %v1355, %v1354
  %v1394 = vpack.c.bf16 %v1357, %v1356
  %v1395 = vpack.c.bf16 %v1359, %v1358
  %v1396 = vpack.c.bf16 %v1361, %v1360
  %v1397 = vpack.c.bf16 %v1363, %v1362
  %v1398 = vpack.c.bf16 %v1365, %v1364
  %v1399 = vpack.c.bf16 %v1367, %v1366
  %v1400 = vpack.c.bf16 %v1369, %v1368
  %v1401 = vpack.c.bf16 %v1371, %v1370
  %v1402 = vpack.c.bf16 %v1373, %v1372
  %v1403 = vpack.c.bf16 %v1375, %v1374
  %v1404 = vpack.c.bf16 %v1377, %v1376
  %v1405 = vpack.c.bf16 %v1379, %v1378
  %v1406 = vpack.c.bf16 %v1381, %v1380
  %v1407 = vpack.c.bf16 %v1382, %v1382
  %v1433 = vunpack.c.l.b16 %v1383
  %v1434 = vunpack.c.h.b16 %v1383
  %v1435 = vunpack.c.l.b16 %v1384
  %v1436 = vunpack.c.h.b16 %v1384
  %v1437 = vunpack.c.l.b16 %v1385
  %v1438 = vunpack.c.h.b16 %v1385
  %v1439 = vunpack.c.l.b16 %v1386
  %v1440 = vunpack.c.h.b16 %v1386
  %v1441 = vunpack.c.l.b16 %v1387
  %v1442 = vunpack.c.h.b16 %v1387
  %v1443 = vunpack.c.l.b16 %v1388
  %v1444 = vunpack.c.h.b16 %v1388
  %v1445 = vunpack.c.l.b16 %v1389
  %v1446 = vunpack.c.h.b16 %v1389
  %v1447 = vunpack.c.l.b16 %v1390
  %v1448 = vunpack.c.h.b16 %v1390
  %v1449 = vunpack.c.l.b16 %v1391
  %v1450 = vunpack.c.h.b16 %v1391
  %v1451 = vunpack.c.l.b16 %v1392
  %v1452 = vunpack.c.h.b16 %v1392
  %v1453 = vunpack.c.l.b16 %v1393
  %v1454 = vunpack.c.h.b16 %v1393
  %v1455 = vunpack.c.l.b16 %v1394
  %v1456 = vunpack.c.h.b16 %v1394
  %v1457 = vunpack.c.l.b16 %v1395
  %v1458 = vunpack.c.h.b16 %v1395
  %v1459 = vunpack.c.l.b16 %v1396
  %v1460 = vunpack.c.h.b16 %v1396
  %v1461 = vunpack.c.l.b16 %v1397
  %v1462 = vunpack.c.h.b16 %v1397
  %v1463 = vunpack.c.l.b16 %v1398
  %v1464 = vunpack.c.h.b16 %v1398
  %v1465 = vunpack.c.l.b16 %v1399
  %v1466 = vunpack.c.h.b16 %v1399
  %v1467 = vunpack.c.l.b16 %v1400
  %v1468 = vunpack.c.h.b16 %v1400
  %v1469 = vunpack.c.l.b16 %v1401
  %v1470 = vunpack.c.h.b16 %v1401
  %v1471 = vunpack.c.l.b16 %v1402
  %v1472 = vunpack.c.h.b16 %v1402
  %v1473 = vunpack.c.l.b16 %v1403
  %v1474 = vunpack.c.h.b16 %v1403
  %v1475 = vunpack.c.l.b16 %v1404
  %v1476 = vunpack.c.h.b16 %v1404
  %v1477 = vunpack.c.l.b16 %v1405
  %v1478 = vunpack.c.h.b16 %v1405
  %v1479 = vunpack.c.l.b16 %v1406
  %v1480 = vunpack.c.h.b16 %v1406
  %v1481 = vunpack.c.l.b16 %v1407
  %v1482 = vpack.c.b16 %v1433, %v1433
  %v1483 = vpack.c.b16 %v1434, %v1434
  %v1484 = vpack.c.b16 %v1435, %v1435
  %v1485 = vpack.c.b16 %v1436, %v1436
  %v1486 = vpack.c.b16 %v1437, %v1437
  %v1487 = vpack.c.b16 %v1438, %v1438
  %v1488 = vpack.c.b16 %v1439, %v1439
  %v1489 = vpack.c.b16 %v1440, %v1440
  %v1490 = vpack.c.b16 %v1441, %v1441
  %v1491 = vpack.c.b16 %v1442, %v1442
  %v1492 = vpack.c.b16 %v1443, %v1443
  %v1493 = vpack.c.b16 %v1444, %v1444
  %v1494 = vpack.c.b16 %v1445, %v1445
  %v1495 = vpack.c.b16 %v1446, %v1446
  %v1496 = vpack.c.b16 %v1447, %v1447
  %v1497 = vpack.c.b16 %v1448, %v1448
  %v1498 = vpack.c.b16 %v1449, %v1449
  %v1499 = vpack.c.b16 %v1450, %v1450
  %v1500 = vpack.c.b16 %v1451, %v1451
  %v1501 = vpack.c.b16 %v1452, %v1452
  %v1502 = vpack.c.b16 %v1453, %v1453
  %v1503 = vpack.c.b16 %v1454, %v1454
  %v1504 = vpack.c.b16 %v1455, %v1455
  %v1505 = vpack.c.b16 %v1456, %v1456
  %v1506 = vpack.c.b16 %v1457, %v1457
  %v1507 = vpack.c.b16 %v1458, %v1458
  %v1508 = vpack.c.b16 %v1459, %v1459
  %v1509 = vpack.c.b16 %v1460, %v1460
  %v1510 = vpack.c.b16 %v1461, %v1461
  %v1511 = vpack.c.b16 %v1462, %v1462
  %v1512 = vpack.c.b16 %v1463, %v1463
  %v1513 = vpack.c.b16 %v1464, %v1464
  %v1514 = vpack.c.b16 %v1465, %v1465
  %v1515 = vpack.c.b16 %v1466, %v1466
  %v1516 = vpack.c.b16 %v1467, %v1467
  %v1517 = vpack.c.b16 %v1468, %v1468
  %v1518 = vpack.c.b16 %v1469, %v1469
  %v1519 = vpack.c.b16 %v1470, %v1470
  %v1520 = vpack.c.b16 %v1471, %v1471
  %v1521 = vpack.c.b16 %v1472, %v1472
  %v1522 = vpack.c.b16 %v1473, %v1473
  %v1523 = vpack.c.b16 %v1474, %v1474
  %v1524 = vpack.c.b16 %v1475, %v1475
  %v1525 = vpack.c.b16 %v1476, %v1476
  %v1526 = vpack.c.b16 %v1477, %v1477
  %v1527 = vpack.c.b16 %v1478, %v1478
  %v1528 = vpack.c.b16 %v1479, %v1479
  %v1529 = vpack.c.b16 %v1480, %v1480
  %v1530 = vpack.c.b16 %v1481, %v1481
  %vm1580 = vcmask 519168
  %1581 = vst.msk [vmem:[%s3] sm:$0xf] %vm1580, %v1482
  %1582 = vst.msk [vmem:[%s3 + $0x4] sm:$0xf] %vm1580, %v1483
  %1583 = vst.msk [vmem:[%s3 + $0x8] sm:$0xf] %vm1580, %v1484
  %1584 = vst.msk [vmem:[%s3 + $0xc] sm:$0xf] %vm1580, %v1485
  %1585 = vst.msk [vmem:[%s3 + $0x10] sm:$0xf] %vm1580, %v1486
  %1586 = vst.msk [vmem:[%s3 + $0x14] sm:$0xf] %vm1580, %v1487
  %1587 = vst.msk [vmem:[%s3 + $0x18] sm:$0xf] %vm1580, %v1488
  %1588 = vst.msk [vmem:[%s3 + $0x1c] sm:$0xf] %vm1580, %v1489
  %1589 = vst.msk [vmem:[%s3 + $0x20] sm:$0xf] %vm1580, %v1490
  %1590 = vst.msk [vmem:[%s3 + $0x24] sm:$0xf] %vm1580, %v1491
  %1591 = vst.msk [vmem:[%s3 + $0x28] sm:$0xf] %vm1580, %v1492
  %1592 = vst.msk [vmem:[%s3 + $0x2c] sm:$0xf] %vm1580, %v1493
  %1593 = vst.msk [vmem:[%s3 + $0x30] sm:$0xf] %vm1580, %v1494
  %1594 = vst.msk [vmem:[%s3 + $0x34] sm:$0xf] %vm1580, %v1495
  %1595 = vst.msk [vmem:[%s3 + $0x38] sm:$0xf] %vm1580, %v1496
  %1596 = vst.msk [vmem:[%s3 + $0x3c] sm:$0xf] %vm1580, %v1497
  %1597 = vst.msk [vmem:[%s3 + $0x40] sm:$0xf] %vm1580, %v1498
  %1598 = vst.msk [vmem:[%s3 + $0x44] sm:$0xf] %vm1580, %v1499
  %1599 = vst.msk [vmem:[%s3 + $0x48] sm:$0xf] %vm1580, %v1500
  %1600 = vst.msk [vmem:[%s3 + $0x4c] sm:$0xf] %vm1580, %v1501
  %1601 = vst.msk [vmem:[%s3 + $0x50] sm:$0xf] %vm1580, %v1502
  %1602 = vst.msk [vmem:[%s3 + $0x54] sm:$0xf] %vm1580, %v1503
  %1603 = vst.msk [vmem:[%s3 + $0x58] sm:$0xf] %vm1580, %v1504
  %1604 = vst.msk [vmem:[%s3 + $0x5c] sm:$0xf] %vm1580, %v1505
  %1605 = vst.msk [vmem:[%s3 + $0x60] sm:$0xf] %vm1580, %v1506
  %1606 = vst.msk [vmem:[%s3 + $0x64] sm:$0xf] %vm1580, %v1507
  %1607 = vst.msk [vmem:[%s3 + $0x68] sm:$0xf] %vm1580, %v1508
  %1608 = vst.msk [vmem:[%s3 + $0x6c] sm:$0xf] %vm1580, %v1509
  %1609 = vst.msk [vmem:[%s3 + $0x70] sm:$0xf] %vm1580, %v1510
  %1610 = vst.msk [vmem:[%s3 + $0x74] sm:$0xf] %vm1580, %v1511
  %1611 = vst.msk [vmem:[%s3 + $0x78] sm:$0xf] %vm1580, %v1512
  %1612 = vst.msk [vmem:[%s3 + $0x7c] sm:$0xf] %vm1580, %v1513
  %1613 = vst.msk [vmem:[%s3 + $0x80] sm:$0xf] %vm1580, %v1514
  %1614 = vst.msk [vmem:[%s3 + $0x84] sm:$0xf] %vm1580, %v1515
  %1615 = vst.msk [vmem:[%s3 + $0x88] sm:$0xf] %vm1580, %v1516
  %1616 = vst.msk [vmem:[%s3 + $0x8c] sm:$0xf] %vm1580, %v1517
  %1617 = vst.msk [vmem:[%s3 + $0x90] sm:$0xf] %vm1580, %v1518
  %1618 = vst.msk [vmem:[%s3 + $0x94] sm:$0xf] %vm1580, %v1519
  %1619 = vst.msk [vmem:[%s3 + $0x98] sm:$0xf] %vm1580, %v1520
  %1620 = vst.msk [vmem:[%s3 + $0x9c] sm:$0xf] %vm1580, %v1521
  %1621 = vst.msk [vmem:[%s3 + $0xa0] sm:$0xf] %vm1580, %v1522
  %1622 = vst.msk [vmem:[%s3 + $0xa4] sm:$0xf] %vm1580, %v1523
  %1623 = vst.msk [vmem:[%s3 + $0xa8] sm:$0xf] %vm1580, %v1524
  %1624 = vst.msk [vmem:[%s3 + $0xac] sm:$0xf] %vm1580, %v1525
  %1625 = vst.msk [vmem:[%s3 + $0xb0] sm:$0xf] %vm1580, %v1526
  %1626 = vst.msk [vmem:[%s3 + $0xb4] sm:$0xf] %vm1580, %v1527
  %1627 = vst.msk [vmem:[%s3 + $0xb8] sm:$0xf] %vm1580, %v1528
  %1628 = vst.msk [vmem:[%s3 + $0xbc] sm:$0xf] %vm1580, %v1529
  %1629 = vst.msk [vmem:[%s3 + $0xc0] sm:$0xf] %vm1580, %v1530
  // Predicated region
  $region14: #{conv_module_forward.5} parent=0 // pred_check
    _
  $region15: #{conv_module_forward.5} parent=0 // pred_check_branch
    %1631 = sbr.rel (0) target = $region17
  $region16: #{conv_module_forward.5} parent=0 // pred_region
    _
  $region17: #{conv_module_forward.5} parent=0 // pred_fallthru
    _
  // Predicated region
  $region18: #{conv_module_forward.5} parent=0 // pred_check
    _
  $region19: #{conv_module_forward.5} parent=0 // pred_check_branch
    %1633 = sbr.rel (0) target = $region21
  $region20: #{conv_module_forward.5} parent=0 // pred_region
    _
  $region21: #{conv_module_forward.5} parent=0 // pred_fallthru
    _

// kernel: conv_module_forward.6
$region0: #{conv_module_forward.6}
  #allocation0 [shape = 'u32[]', space=smem, size = 0x4, offset = 0x4, fixed_abs, tag = 'smem constant byte address 0x4 - core index']
  #allocation1 [shape = 'u32[144,128]{1,0:T(1,128)}', space=vmem, size = 0x12000, scoped, tag = 'internal scratch']
  %s0 = inlined_call_operand.vmem [shape: bf16[72,1024], index: 0, kind: input, shape index: {}]
  %s1 = inlined_call_operand.vmem [shape: bf16[1024,128], index: 1, kind: input, shape index: {}]
  %s2 = inlined_call_operand.vmem [shape: f32[1,128], index: 2, kind: input, shape index: {}]
  %s3 = inlined_call_operand.vmem [shape: bf16[72,128], index: 3, kind: output, shape index: {}]
  %s4 = sld [smem:[#allocation0]]
  $region22: #{conv_module_forward.6} parent=0
    _
  %s6 = ssub.s32 1, %s4
  %s7 = scalar_select 0, %s6, %s4
  // Predicated region
  $region2: #{conv_module_forward.6} parent=0 // pred_check
    _
  $region3: #{conv_module_forward.6} parent=0 // pred_check_branch
    %9 = sbr.rel (0) target = $region5
  $region4: #{conv_module_forward.6} parent=0 // pred_region
    _
  $region5: #{conv_module_forward.6} parent=0 // pred_fallthru
    _
  // Predicated region
  $region6: #{conv_module_forward.6} parent=0 // pred_check
    _
  $region7: #{conv_module_forward.6} parent=0 // pred_check_branch
    %11 = sbr.rel (0) target = $region9
  $region8: #{conv_module_forward.6} parent=0 // pred_region
    _
  $region9: #{conv_module_forward.6} parent=0 // pred_fallthru
    _
  // Predicated region
  $region10: #{conv_module_forward.6} parent=0 // pred_check
    _
  $region11: #{conv_module_forward.6} parent=0 // pred_check_branch
    %13 = sbr.rel (0) target = $region13
  $region12: #{conv_module_forward.6} parent=0 // pred_region
    _
  $region13: #{conv_module_forward.6} parent=0 // pred_fallthru
    _
  %v15 = vld [vmem:[%s0] sm:$0xff]
  %v16 = vld [vmem:[%s0 + $0x8] sm:$0xff]
  %v17 = vld [vmem:[%s0 + $0x10] sm:$0xff]
  %v18 = vld [vmem:[%s0 + $0x18] sm:$0xff]
  %v19 = vld [vmem:[%s0 + $0x20] sm:$0xff]
  %v20 = vld [vmem:[%s0 + $0x28] sm:$0xff]
  %v21 = vld [vmem:[%s0 + $0x30] sm:$0xff]
  %v22 = vld [vmem:[%s0 + $0x38] sm:$0xff]
  %v23 = vld [vmem:[%s0 + $0x40] sm:$0xff]
  %v24 = vld [vmem:[%s0 + $0x48] sm:$0xff]
  %v25 = vld [vmem:[%s0 + $0x50] sm:$0xff]
  %v26 = vld [vmem:[%s0 + $0x58] sm:$0xff]
  %v27 = vld [vmem:[%s0 + $0x60] sm:$0xff]
  %v28 = vld [vmem:[%s0 + $0x68] sm:$0xff]
  %v29 = vld [vmem:[%s0 + $0x70] sm:$0xff]
  %v30 = vld [vmem:[%s0 + $0x78] sm:$0xff]
  %v31 = vld [vmem:[%s0 + $0x80] sm:$0xff]
  %v32 = vld [vmem:[%s0 + $0x88] sm:$0xff]
  %v33 = vld [vmem:[%s0 + $0x90] sm:$0xff]
  %v34 = vld [vmem:[%s0 + $0x98] sm:$0xff]
  %v35 = vld [vmem:[%s0 + $0xa0] sm:$0xff]
  %v36 = vld [vmem:[%s0 + $0xa8] sm:$0xff]
  %v37 = vld [vmem:[%s0 + $0xb0] sm:$0xff]
  %v38 = vld [vmem:[%s0 + $0xb8] sm:$0xff]
  %v39 = vld [vmem:[%s0 + $0xc0] sm:$0xff]
  %v40 = vld [vmem:[%s0 + $0xc8] sm:$0xff]
  %v41 = vld [vmem:[%s0 + $0xd0] sm:$0xff]
  %v42 = vld [vmem:[%s0 + $0xd8] sm:$0xff]
  %v43 = vld [vmem:[%s0 + $0xe0] sm:$0xff]
  %v44 = vld [vmem:[%s0 + $0xe8] sm:$0xff]
  %v45 = vld [vmem:[%s0 + $0xf0] sm:$0xff]
  %v46 = vld [vmem:[%s0 + $0xf8] sm:$0xff]
  %v47 = vld [vmem:[%s0 + $0x100] sm:$0xff]
  %v48 = vld [vmem:[%s0 + $0x108] sm:$0xff]
  %v49 = vld [vmem:[%s0 + $0x110] sm:$0xff]
  %v50 = vld [vmem:[%s0 + $0x118] sm:$0xff]
  %v51 = vld [vmem:[%s1] sm:$0xf]
  %v52 = vld [vmem:[%s1 + $0x4] sm:$0xf]
  %v53 = vld [vmem:[%s1 + $0x8] sm:$0xf]
  %v54 = vld [vmem:[%s1 + $0xc] sm:$0xf]
  %v55 = vld [vmem:[%s1 + $0x10] sm:$0xf]
  %v56 = vld [vmem:[%s1 + $0x14] sm:$0xf]
  %v57 = vld [vmem:[%s1 + $0x18] sm:$0xf]
  %v58 = vld [vmem:[%s1 + $0x1c] sm:$0xf]
  %v59 = vld [vmem:[%s1 + $0x20] sm:$0xf]
  %v60 = vld [vmem:[%s1 + $0x24] sm:$0xf]
  %v61 = vld [vmem:[%s1 + $0x28] sm:$0xf]
  %v62 = vld [vmem:[%s1 + $0x2c] sm:$0xf]
  %v63 = vld [vmem:[%s1 + $0x30] sm:$0xf]
  %v64 = vld [vmem:[%s1 + $0x34] sm:$0xf]
  %v65 = vld [vmem:[%s1 + $0x38] sm:$0xf]
  %v66 = vld [vmem:[%s1 + $0x3c] sm:$0xf]
  %v67 = vld [vmem:[%s1 + $0x40] sm:$0xf]
  %v68 = vld [vmem:[%s1 + $0x44] sm:$0xf]
  %v69 = vld [vmem:[%s1 + $0x48] sm:$0xf]
  %v70 = vld [vmem:[%s1 + $0x4c] sm:$0xf]
  %v71 = vld [vmem:[%s1 + $0x50] sm:$0xf]
  %v72 = vld [vmem:[%s1 + $0x54] sm:$0xf]
  %v73 = vld [vmem:[%s1 + $0x58] sm:$0xf]
  %v74 = vld [vmem:[%s1 + $0x5c] sm:$0xf]
  %v75 = vld [vmem:[%s1 + $0x60] sm:$0xf]
  %v76 = vld [vmem:[%s1 + $0x64] sm:$0xf]
  %v77 = vld [vmem:[%s1 + $0x68] sm:$0xf]
  %v78 = vld [vmem:[%s1 + $0x6c] sm:$0xf]
  %v79 = vld [vmem:[%s1 + $0x70] sm:$0xf]
  %v80 = vld [vmem:[%s1 + $0x74] sm:$0xf]
  %v81 = vld [vmem:[%s1 + $0x78] sm:$0xf]
  %v82 = vld [vmem:[%s1 + $0x7c] sm:$0xf]
  %v83 = vld [vmem:[%s1 + $0x80] sm:$0xf]
  %v84 = vld [vmem:[%s1 + $0x84] sm:$0xf]
  %v85 = vld [vmem:[%s1 + $0x88] sm:$0xf]
  %v86 = vld [vmem:[%s1 + $0x8c] sm:$0xf]
  %v87 = vld [vmem:[%s1 + $0x90] sm:$0xf]
  %v88 = vld [vmem:[%s1 + $0x94] sm:$0xf]
  %v89 = vld [vmem:[%s1 + $0x98] sm:$0xf]
  %v90 = vld [vmem:[%s1 + $0x9c] sm:$0xf]
  %v91 = vld [vmem:[%s1 + $0xa0] sm:$0xf]
  %v92 = vld [vmem:[%s1 + $0xa4] sm:$0xf]
  %v93 = vld [vmem:[%s1 + $0xa8] sm:$0xf]
  %v94 = vld [vmem:[%s1 + $0xac] sm:$0xf]
  %v95 = vld [vmem:[%s1 + $0xb0] sm:$0xf]
  %v96 = vld [vmem:[%s1 + $0xb4] sm:$0xf]
  %v97 = vld [vmem:[%s1 + $0xb8] sm:$0xf]
  %v98 = vld [vmem:[%s1 + $0xbc] sm:$0xf]
  %v99 = vld [vmem:[%s1 + $0xc0] sm:$0xf]
  %v100 = vld [vmem:[%s1 + $0xc4] sm:$0xf]
  %v101 = vld [vmem:[%s1 + $0xc8] sm:$0xf]
  %v102 = vld [vmem:[%s1 + $0xcc] sm:$0xf]
  %v103 = vld [vmem:[%s1 + $0xd0] sm:$0xf]
  %v104 = vld [vmem:[%s1 + $0xd4] sm:$0xf]
  %v105 = vld [vmem:[%s1 + $0xd8] sm:$0xf]
  %v106 = vld [vmem:[%s1 + $0xdc] sm:$0xf]
  %v107 = vld [vmem:[%s1 + $0xe0] sm:$0xf]
  %v108 = vld [vmem:[%s1 + $0xe4] sm:$0xf]
  %v109 = vld [vmem:[%s1 + $0xe8] sm:$0xf]
  %v110 = vld [vmem:[%s1 + $0xec] sm:$0xf]
  %v111 = vld [vmem:[%s1 + $0xf0] sm:$0xf]
  %v112 = vld [vmem:[%s1 + $0xf4] sm:$0xf]
  %v113 = vld [vmem:[%s1 + $0xf8] sm:$0xf]
  %v114 = vld [vmem:[%s1 + $0xfc] sm:$0xf]
  %v115 = vld [vmem:[%s1 + $0x100] sm:$0xf]
  %v116 = vld [vmem:[%s1 + $0x104] sm:$0xf]
  %v117 = vld [vmem:[%s1 + $0x108] sm:$0xf]
  %v118 = vld [vmem:[%s1 + $0x10c] sm:$0xf]
  %v119 = vld [vmem:[%s1 + $0x110] sm:$0xf]
  %v120 = vld [vmem:[%s1 + $0x114] sm:$0xf]
  %v121 = vld [vmem:[%s1 + $0x118] sm:$0xf]
  %v122 = vld [vmem:[%s1 + $0x11c] sm:$0xf]
  %v123 = vld [vmem:[%s1 + $0x120] sm:$0xf]
  %v124 = vld [vmem:[%s1 + $0x124] sm:$0xf]
  %v125 = vld [vmem:[%s1 + $0x128] sm:$0xf]
  %v126 = vld [vmem:[%s1 + $0x12c] sm:$0xf]
  %v127 = vld [vmem:[%s1 + $0x130] sm:$0xf]
  %v128 = vld [vmem:[%s1 + $0x134] sm:$0xf]
  %v129 = vld [vmem:[%s1 + $0x138] sm:$0xf]
  %v130 = vld [vmem:[%s1 + $0x13c] sm:$0xf]
  %v131 = vld [vmem:[%s1 + $0x140] sm:$0xf]
  %v132 = vld [vmem:[%s1 + $0x144] sm:$0xf]
  %v133 = vld [vmem:[%s1 + $0x148] sm:$0xf]
  %v134 = vld [vmem:[%s1 + $0x14c] sm:$0xf]
  %v135 = vld [vmem:[%s1 + $0x150] sm:$0xf]
  %v136 = vld [vmem:[%s1 + $0x154] sm:$0xf]
  %v137 = vld [vmem:[%s1 + $0x158] sm:$0xf]
  %v138 = vld [vmem:[%s1 + $0x15c] sm:$0xf]
  %v139 = vld [vmem:[%s1 + $0x160] sm:$0xf]
  %v140 = vld [vmem:[%s1 + $0x164] sm:$0xf]
  %v141 = vld [vmem:[%s1 + $0x168] sm:$0xf]
  %v142 = vld [vmem:[%s1 + $0x16c] sm:$0xf]
  %v143 = vld [vmem:[%s1 + $0x170] sm:$0xf]
  %v144 = vld [vmem:[%s1 + $0x174] sm:$0xf]
  %v145 = vld [vmem:[%s1 + $0x178] sm:$0xf]
  %v146 = vld [vmem:[%s1 + $0x17c] sm:$0xf]
  %v147 = vld [vmem:[%s1 + $0x180] sm:$0xf]
  %v148 = vld [vmem:[%s1 + $0x184] sm:$0xf]
  %v149 = vld [vmem:[%s1 + $0x188] sm:$0xf]
  %v150 = vld [vmem:[%s1 + $0x18c] sm:$0xf]
  %v151 = vld [vmem:[%s1 + $0x190] sm:$0xf]
  %v152 = vld [vmem:[%s1 + $0x194] sm:$0xf]
  %v153 = vld [vmem:[%s1 + $0x198] sm:$0xf]
  %v154 = vld [vmem:[%s1 + $0x19c] sm:$0xf]
  %v155 = vld [vmem:[%s1 + $0x1a0] sm:$0xf]
  %v156 = vld [vmem:[%s1 + $0x1a4] sm:$0xf]
  %v157 = vld [vmem:[%s1 + $0x1a8] sm:$0xf]
  %v158 = vld [vmem:[%s1 + $0x1ac] sm:$0xf]
  %v159 = vld [vmem:[%s1 + $0x1b0] sm:$0xf]
  %v160 = vld [vmem:[%s1 + $0x1b4] sm:$0xf]
  %v161 = vld [vmem:[%s1 + $0x1b8] sm:$0xf]
  %v162 = vld [vmem:[%s1 + $0x1bc] sm:$0xf]
  %v163 = vld [vmem:[%s1 + $0x1c0] sm:$0xf]
  %v164 = vld [vmem:[%s1 + $0x1c4] sm:$0xf]
  %v165 = vld [vmem:[%s1 + $0x1c8] sm:$0xf]
  %v166 = vld [vmem:[%s1 + $0x1cc] sm:$0xf]
  %v167 = vld [vmem:[%s1 + $0x1d0] sm:$0xf]
  %v168 = vld [vmem:[%s1 + $0x1d4] sm:$0xf]
  %v169 = vld [vmem:[%s1 + $0x1d8] sm:$0xf]
  %v170 = vld [vmem:[%s1 + $0x1dc] sm:$0xf]
  %v171 = vld [vmem:[%s1 + $0x1e0] sm:$0xf]
  %v172 = vld [vmem:[%s1 + $0x1e4] sm:$0xf]
  %v173 = vld [vmem:[%s1 + $0x1e8] sm:$0xf]
  %v174 = vld [vmem:[%s1 + $0x1ec] sm:$0xf]
  %v175 = vld [vmem:[%s1 + $0x1f0] sm:$0xf]
  %v176 = vld [vmem:[%s1 + $0x1f4] sm:$0xf]
  %v177 = vld [vmem:[%s1 + $0x1f8] sm:$0xf]
  %v178 = vld [vmem:[%s1 + $0x1fc] sm:$0xf]
  %v179 = vld [vmem:[%s2] sm:$0x1]
  %v181 = vlaneseq
  %v182 = vshrl.u32 %v181, 7
  %v183 = vsub.s32 0, %v182
  %v184 = vrot.slane %v179, %v183
  %v222 = vunpack.c.l.b16 %v15
  %v223 = vunpack.c.h.b16 %v15
  %v224 = vunpack.c.l.b16 %v16
  %v225 = vunpack.c.h.b16 %v16
  %v226 = vunpack.c.l.b16 %v17
  %v227 = vunpack.c.h.b16 %v17
  %v228 = vunpack.c.l.b16 %v18
  %v229 = vunpack.c.h.b16 %v18
  %v230 = vunpack.c.l.b16 %v19
  %v231 = vunpack.c.h.b16 %v19
  %v232 = vunpack.c.l.b16 %v20
  %v233 = vunpack.c.h.b16 %v20
  %v234 = vunpack.c.l.b16 %v21
  %v235 = vunpack.c.h.b16 %v21
  %v236 = vunpack.c.l.b16 %v22
  %v237 = vunpack.c.h.b16 %v22
  %v238 = vunpack.c.l.b16 %v23
  %v239 = vunpack.c.h.b16 %v23
  %v240 = vunpack.c.l.b16 %v24
  %v241 = vunpack.c.h.b16 %v24
  %v242 = vunpack.c.l.b16 %v25
  %v243 = vunpack.c.h.b16 %v25
  %v244 = vunpack.c.l.b16 %v26
  %v245 = vunpack.c.h.b16 %v26
  %v246 = vunpack.c.l.b16 %v27
  %v247 = vunpack.c.h.b16 %v27
  %v248 = vunpack.c.l.b16 %v28
  %v249 = vunpack.c.h.b16 %v28
  %v250 = vunpack.c.l.b16 %v29
  %v251 = vunpack.c.h.b16 %v29
  %v252 = vunpack.c.l.b16 %v30
  %v253 = vunpack.c.h.b16 %v30
  %v254 = vunpack.c.l.b16 %v31
  %v255 = vunpack.c.h.b16 %v31
  %v256 = vunpack.c.l.b16 %v32
  %v257 = vunpack.c.h.b16 %v32
  %v258 = vunpack.c.l.b16 %v33
  %v259 = vunpack.c.h.b16 %v33
  %v260 = vunpack.c.l.b16 %v34
  %v261 = vunpack.c.h.b16 %v34
  %v262 = vunpack.c.l.b16 %v35
  %v263 = vunpack.c.h.b16 %v35
  %v264 = vunpack.c.l.b16 %v36
  %v265 = vunpack.c.h.b16 %v36
  %v266 = vunpack.c.l.b16 %v37
  %v267 = vunpack.c.h.b16 %v37
  %v268 = vunpack.c.l.b16 %v38
  %v269 = vunpack.c.h.b16 %v38
  %v270 = vunpack.c.l.b16 %v39
  %v271 = vunpack.c.h.b16 %v39
  %v272 = vunpack.c.l.b16 %v40
  %v273 = vunpack.c.h.b16 %v40
  %v274 = vunpack.c.l.b16 %v41
  %v275 = vunpack.c.h.b16 %v41
  %v276 = vunpack.c.l.b16 %v42
  %v277 = vunpack.c.h.b16 %v42
  %v278 = vunpack.c.l.b16 %v43
  %v279 = vunpack.c.h.b16 %v43
  %v280 = vunpack.c.l.b16 %v44
  %v281 = vunpack.c.h.b16 %v44
  %v282 = vunpack.c.l.b16 %v45
  %v283 = vunpack.c.h.b16 %v45
  %v284 = vunpack.c.l.b16 %v46
  %v285 = vunpack.c.h.b16 %v46
  %v286 = vunpack.c.l.b16 %v47
  %v287 = vunpack.c.h.b16 %v47
  %v288 = vunpack.c.l.b16 %v48
  %v289 = vunpack.c.h.b16 %v48
  %v290 = vunpack.c.l.b16 %v49
  %v291 = vunpack.c.h.b16 %v49
  %v292 = vunpack.c.l.b16 %v50
  %v293 = vunpack.c.h.b16 %v50
  %v294 = vpack.c.b16 %v230, %v222
  %v295 = vpack.c.b16 %v231, %v223
  %v296 = vpack.c.b16 %v232, %v224
  %v297 = vpack.c.b16 %v233, %v225
  %v298 = vpack.c.b16 %v234, %v226
  %v299 = vpack.c.b16 %v235, %v227
  %v300 = vpack.c.b16 %v236, %v228
  %v301 = vpack.c.b16 %v237, %v229
  %v302 = vpack.c.b16 %v246, %v238
  %v303 = vpack.c.b16 %v247, %v239
  %v304 = vpack.c.b16 %v248, %v240
  %v305 = vpack.c.b16 %v249, %v241
  %v306 = vpack.c.b16 %v250, %v242
  %v307 = vpack.c.b16 %v251, %v243
  %v308 = vpack.c.b16 %v252, %v244
  %v309 = vpack.c.b16 %v253, %v245
  %v310 = vpack.c.b16 %v262, %v254
  %v311 = vpack.c.b16 %v263, %v255
  %v312 = vpack.c.b16 %v264, %v256
  %v313 = vpack.c.b16 %v265, %v257
  %v314 = vpack.c.b16 %v266, %v258
  %v315 = vpack.c.b16 %v267, %v259
  %v316 = vpack.c.b16 %v268, %v260
  %v317 = vpack.c.b16 %v269, %v261
  %v318 = vpack.c.b16 %v278, %v270
  %v319 = vpack.c.b16 %v279, %v271
  %v320 = vpack.c.b16 %v280, %v272
  %v321 = vpack.c.b16 %v281, %v273
  %v322 = vpack.c.b16 %v282, %v274
  %v323 = vpack.c.b16 %v283, %v275
  %v324 = vpack.c.b16 %v284, %v276
  %v325 = vpack.c.b16 %v285, %v277
  %v326 = vpack.c.b16 %v286, %v286
  %v327 = vpack.c.b16 %v287, %v287
  %v328 = vpack.c.b16 %v288, %v288
  %v329 = vpack.c.b16 %v289, %v289
  %v330 = vpack.c.b16 %v290, %v290
  %v331 = vpack.c.b16 %v291, %v291
  %v332 = vpack.c.b16 %v292, %v292
  %v333 = vpack.c.b16 %v293, %v293
  %v502 = vunpack.c.l.b16 %v51
  %v503 = vunpack.c.l.b16 %v52
  %v504 = vunpack.c.l.b16 %v53
  %v505 = vunpack.c.l.b16 %v54
  %v506 = vunpack.c.l.b16 %v55
  %v507 = vunpack.c.l.b16 %v56
  %v508 = vunpack.c.l.b16 %v57
  %v509 = vunpack.c.l.b16 %v58
  %v510 = vunpack.c.l.b16 %v59
  %v511 = vunpack.c.l.b16 %v60
  %v512 = vunpack.c.l.b16 %v61
  %v513 = vunpack.c.l.b16 %v62
  %v514 = vunpack.c.l.b16 %v63
  %v515 = vunpack.c.l.b16 %v64
  %v516 = vunpack.c.l.b16 %v65
  %v517 = vunpack.c.l.b16 %v66
  %v518 = vunpack.c.l.b16 %v67
  %v519 = vunpack.c.l.b16 %v68
  %v520 = vunpack.c.l.b16 %v69
  %v521 = vunpack.c.l.b16 %v70
  %v522 = vunpack.c.l.b16 %v71
  %v523 = vunpack.c.l.b16 %v72
  %v524 = vunpack.c.l.b16 %v73
  %v525 = vunpack.c.l.b16 %v74
  %v526 = vunpack.c.l.b16 %v75
  %v527 = vunpack.c.l.b16 %v76
  %v528 = vunpack.c.l.b16 %v77
  %v529 = vunpack.c.l.b16 %v78
  %v530 = vunpack.c.l.b16 %v79
  %v531 = vunpack.c.l.b16 %v80
  %v532 = vunpack.c.l.b16 %v81
  %v533 = vunpack.c.l.b16 %v82
  %v534 = vunpack.c.l.b16 %v83
  %v535 = vunpack.c.l.b16 %v84
  %v536 = vunpack.c.l.b16 %v85
  %v537 = vunpack.c.l.b16 %v86
  %v538 = vunpack.c.l.b16 %v87
  %v539 = vunpack.c.l.b16 %v88
  %v540 = vunpack.c.l.b16 %v89
  %v541 = vunpack.c.l.b16 %v90
  %v542 = vunpack.c.l.b16 %v91
  %v543 = vunpack.c.l.b16 %v92
  %v544 = vunpack.c.l.b16 %v93
  %v545 = vunpack.c.l.b16 %v94
  %v546 = vunpack.c.l.b16 %v95
  %v547 = vunpack.c.l.b16 %v96
  %v548 = vunpack.c.l.b16 %v97
  %v549 = vunpack.c.l.b16 %v98
  %v550 = vunpack.c.l.b16 %v99
  %v551 = vunpack.c.l.b16 %v100
  %v552 = vunpack.c.l.b16 %v101
  %v553 = vunpack.c.l.b16 %v102
  %v554 = vunpack.c.l.b16 %v103
  %v555 = vunpack.c.l.b16 %v104
  %v556 = vunpack.c.l.b16 %v105
  %v557 = vunpack.c.l.b16 %v106
  %v558 = vunpack.c.l.b16 %v107
  %v559 = vunpack.c.l.b16 %v108
  %v560 = vunpack.c.l.b16 %v109
  %v561 = vunpack.c.l.b16 %v110
  %v562 = vunpack.c.l.b16 %v111
  %v563 = vunpack.c.l.b16 %v112
  %v564 = vunpack.c.l.b16 %v113
  %v565 = vunpack.c.l.b16 %v114
  %v566 = vunpack.c.l.b16 %v115
  %v567 = vunpack.c.l.b16 %v116
  %v568 = vunpack.c.l.b16 %v117
  %v569 = vunpack.c.l.b16 %v118
  %v570 = vunpack.c.l.b16 %v119
  %v571 = vunpack.c.l.b16 %v120
  %v572 = vunpack.c.l.b16 %v121
  %v573 = vunpack.c.l.b16 %v122
  %v574 = vunpack.c.l.b16 %v123
  %v575 = vunpack.c.l.b16 %v124
  %v576 = vunpack.c.l.b16 %v125
  %v577 = vunpack.c.l.b16 %v126
  %v578 = vunpack.c.l.b16 %v127
  %v579 = vunpack.c.l.b16 %v128
  %v580 = vunpack.c.l.b16 %v129
  %v581 = vunpack.c.l.b16 %v130
  %v582 = vunpack.c.l.b16 %v131
  %v583 = vunpack.c.l.b16 %v132
  %v584 = vunpack.c.l.b16 %v133
  %v585 = vunpack.c.l.b16 %v134
  %v586 = vunpack.c.l.b16 %v135
  %v587 = vunpack.c.l.b16 %v136
  %v588 = vunpack.c.l.b16 %v137
  %v589 = vunpack.c.l.b16 %v138
  %v590 = vunpack.c.l.b16 %v139
  %v591 = vunpack.c.l.b16 %v140
  %v592 = vunpack.c.l.b16 %v141
  %v593 = vunpack.c.l.b16 %v142
  %v594 = vunpack.c.l.b16 %v143
  %v595 = vunpack.c.l.b16 %v144
  %v596 = vunpack.c.l.b16 %v145
  %v597 = vunpack.c.l.b16 %v146
  %v598 = vunpack.c.l.b16 %v147
  %v599 = vunpack.c.l.b16 %v148
  %v600 = vunpack.c.l.b16 %v149
  %v601 = vunpack.c.l.b16 %v150
  %v602 = vunpack.c.l.b16 %v151
  %v603 = vunpack.c.l.b16 %v152
  %v604 = vunpack.c.l.b16 %v153
  %v605 = vunpack.c.l.b16 %v154
  %v606 = vunpack.c.l.b16 %v155
  %v607 = vunpack.c.l.b16 %v156
  %v608 = vunpack.c.l.b16 %v157
  %v609 = vunpack.c.l.b16 %v158
  %v610 = vunpack.c.l.b16 %v159
  %v611 = vunpack.c.l.b16 %v160
  %v612 = vunpack.c.l.b16 %v161
  %v613 = vunpack.c.l.b16 %v162
  %v614 = vunpack.c.l.b16 %v163
  %v615 = vunpack.c.l.b16 %v164
  %v616 = vunpack.c.l.b16 %v165
  %v617 = vunpack.c.l.b16 %v166
  %v618 = vunpack.c.l.b16 %v167
  %v619 = vunpack.c.l.b16 %v168
  %v620 = vunpack.c.l.b16 %v169
  %v621 = vunpack.c.l.b16 %v170
  %v622 = vunpack.c.l.b16 %v171
  %v623 = vunpack.c.l.b16 %v172
  %v624 = vunpack.c.l.b16 %v173
  %v625 = vunpack.c.l.b16 %v174
  %v626 = vunpack.c.l.b16 %v175
  %v627 = vunpack.c.l.b16 %v176
  %v628 = vunpack.c.l.b16 %v177
  %v629 = vunpack.c.l.b16 %v178
  %v630 = vpack.c.b16 %v503, %v502
  %v631 = vpack.c.b16 %v505, %v504
  %v632 = vpack.c.b16 %v507, %v506
  %v633 = vpack.c.b16 %v509, %v508
  %v634 = vpack.c.b16 %v511, %v510
  %v635 = vpack.c.b16 %v513, %v512
  %v636 = vpack.c.b16 %v515, %v514
  %v637 = vpack.c.b16 %v517, %v516
  %v638 = vpack.c.b16 %v519, %v518
  %v639 = vpack.c.b16 %v521, %v520
  %v640 = vpack.c.b16 %v523, %v522
  %v641 = vpack.c.b16 %v525, %v524
  %v642 = vpack.c.b16 %v527, %v526
  %v643 = vpack.c.b16 %v529, %v528
  %v644 = vpack.c.b16 %v531, %v530
  %v645 = vpack.c.b16 %v533, %v532
  %v646 = vpack.c.b16 %v535, %v534
  %v647 = vpack.c.b16 %v537, %v536
  %v648 = vpack.c.b16 %v539, %v538
  %v649 = vpack.c.b16 %v541, %v540
  %v650 = vpack.c.b16 %v543, %v542
  %v651 = vpack.c.b16 %v545, %v544
  %v652 = vpack.c.b16 %v547, %v546
  %v653 = vpack.c.b16 %v549, %v548
  %v654 = vpack.c.b16 %v551, %v550
  %v655 = vpack.c.b16 %v553, %v552
  %v656 = vpack.c.b16 %v555, %v554
  %v657 = vpack.c.b16 %v557, %v556
  %v658 = vpack.c.b16 %v559, %v558
  %v659 = vpack.c.b16 %v561, %v560
  %v660 = vpack.c.b16 %v563, %v562
  %v661 = vpack.c.b16 %v565, %v564
  %v662 = vpack.c.b16 %v567, %v566
  %v663 = vpack.c.b16 %v569, %v568
  %v664 = vpack.c.b16 %v571, %v570
  %v665 = vpack.c.b16 %v573, %v572
  %v666 = vpack.c.b16 %v575, %v574
  %v667 = vpack.c.b16 %v577, %v576
  %v668 = vpack.c.b16 %v579, %v578
  %v669 = vpack.c.b16 %v581, %v580
  %v670 = vpack.c.b16 %v583, %v582
  %v671 = vpack.c.b16 %v585, %v584
  %v672 = vpack.c.b16 %v587, %v586
  %v673 = vpack.c.b16 %v589, %v588
  %v674 = vpack.c.b16 %v591, %v590
  %v675 = vpack.c.b16 %v593, %v592
  %v676 = vpack.c.b16 %v595, %v594
  %v677 = vpack.c.b16 %v597, %v596
  %v678 = vpack.c.b16 %v599, %v598
  %v679 = vpack.c.b16 %v601, %v600
  %v680 = vpack.c.b16 %v603, %v602
  %v681 = vpack.c.b16 %v605, %v604
  %v682 = vpack.c.b16 %v607, %v606
  %v683 = vpack.c.b16 %v609, %v608
  %v684 = vpack.c.b16 %v611, %v610
  %v685 = vpack.c.b16 %v613, %v612
  %v686 = vpack.c.b16 %v615, %v614
  %v687 = vpack.c.b16 %v617, %v616
  %v688 = vpack.c.b16 %v619, %v618
  %v689 = vpack.c.b16 %v621, %v620
  %v690 = vpack.c.b16 %v623, %v622
  %v691 = vpack.c.b16 %v625, %v624
  %v692 = vpack.c.b16 %v627, %v626
  %v693 = vpack.c.b16 %v629, %v628
  %758 = vmatprep.subr.bf16.mxu0 0
  %759 = vmatpush1.bf16.msra.mxu0 %v630
  %760 = vmatprep.subr.bf16.mxu0 0
  %761 = vmatpush1.bf16.msra.mxu0 %v631
  %762 = vmatprep.subr.bf16.mxu0 0
  %763 = vmatpush1.bf16.msra.mxu0 %v632
  %764 = vmatprep.subr.bf16.mxu0 0
  %765 = vmatpush1.bf16.msra.mxu0 %v633
  %766 = vmatprep.subr.bf16.mxu0 0
  %767 = vmatpush1.bf16.msra.mxu0 %v634
  %768 = vmatprep.subr.bf16.mxu0 0
  %769 = vmatpush1.bf16.msra.mxu0 %v635
  %770 = vmatprep.subr.bf16.mxu0 0
  %771 = vmatpush1.bf16.msra.mxu0 %v636
  %772 = vmatprep.subr.bf16.mxu0 0
  %773 = vmatpush1.bf16.msra.mxu0 %v637
  %774 = vmatprep.subr.bf16.mxu0 0
  %775 = vmatpush1.bf16.msra.mxu0 %v638
  %776 = vmatprep.subr.bf16.mxu0 0
  %777 = vmatpush1.bf16.msra.mxu0 %v639
  %778 = vmatprep.subr.bf16.mxu0 0
  %779 = vmatpush1.bf16.msra.mxu0 %v640
  %780 = vmatprep.subr.bf16.mxu0 0
  %781 = vmatpush1.bf16.msra.mxu0 %v641
  %782 = vmatprep.subr.bf16.mxu0 0
  %783 = vmatpush1.bf16.msra.mxu0 %v642
  %784 = vmatprep.subr.bf16.mxu0 0
  %785 = vmatpush1.bf16.msra.mxu0 %v643
  %786 = vmatprep.subr.bf16.mxu0 0
  %787 = vmatpush1.bf16.msra.mxu0 %v644
  %788 = vmatprep.subr.bf16.mxu0 0
  %789 = vmatpush1.bf16.msra.mxu0 %v645
  %790 = vmatprep.mubr.bf16.mxu0 %v295
  %791 = vmatmul.mubr.bf16.gmra.mrb[0].mxu0 %v294
  %v792 = vpop.f32.mrb[0].mxu0
  %v793 = vadd.f32 %v184, %v792
  %v794 = vpop.f32.mrb[0].mxu0
  %v795 = vpop.f32.mrb[0].mxu0
  %v796 = vadd.f32 %v184, %v795
  %v797 = vpop.f32.mrb[0].mxu0
  %798 = vmatprep.mubr.bf16.mxu0 %v303
  %799 = vmatmul.mubr.bf16.gmra.mrb[0].mxu0 %v302
  %v800 = vpop.f32.mrb[0].mxu0
  %v801 = vadd.f32 %v184, %v800
  %v802 = vpop.f32.mrb[0].mxu0
  %v803 = vpop.f32.mrb[0].mxu0
  %v804 = vadd.f32 %v184, %v803
  %v805 = vpop.f32.mrb[0].mxu0
  %806 = vmatprep.mubr.bf16.mxu0 %v311
  %807 = vmatmul.mubr.bf16.gmra.mrb[0].mxu0 %v310
  %v808 = vpop.f32.mrb[0].mxu0
  %v809 = vadd.f32 %v184, %v808
  %v810 = vpop.f32.mrb[0].mxu0
  %v811 = vpop.f32.mrb[0].mxu0
  %v812 = vadd.f32 %v184, %v811
  %v813 = vpop.f32.mrb[0].mxu0
  %814 = vmatprep.mubr.bf16.mxu0 %v319
  %815 = vmatmul.mubr.bf16.gmra.mrb[0].mxu0 %v318
  %v816 = vpop.f32.mrb[0].mxu0
  %v817 = vadd.f32 %v184, %v816
  %v818 = vpop.f32.mrb[0].mxu0
  %v819 = vpop.f32.mrb[0].mxu0
  %v820 = vadd.f32 %v184, %v819
  %v821 = vpop.f32.mrb[0].mxu0
  %822 = vmatprep.mubr.bf16.mxu0 %v327
  %823 = vmatmul.mubr.bf16.gmra.mrb[0].mxu0 %v326
  %v824 = vpop.f32.mrb[0].mxu0
  %v825 = vadd.f32 %v184, %v824
  %v826 = vpop.f32.mrb[0].mxu0
  %v827 = vpop.f32.mrb[0].mxu0
  %v828 = vpop.f32.mrb[0].mxu0
  %829 = vdwg.mxu0
  %830 = vmatprep.subr.bf16.mxu0 0
  %831 = vmatpush1.bf16.msra.mxu0 %v646
  %832 = vmatprep.subr.bf16.mxu0 0
  %833 = vmatpush1.bf16.msra.mxu0 %v647
  %834 = vmatprep.subr.bf16.mxu0 0
  %835 = vmatpush1.bf16.msra.mxu0 %v648
  %836 = vmatprep.subr.bf16.mxu0 0
  %837 = vmatpush1.bf16.msra.mxu0 %v649
  %838 = vmatprep.subr.bf16.mxu0 0
  %839 = vmatpush1.bf16.msra.mxu0 %v650
  %840 = vmatprep.subr.bf16.mxu0 0
  %841 = vmatpush1.bf16.msra.mxu0 %v651
  %842 = vmatprep.subr.bf16.mxu0 0
  %843 = vmatpush1.bf16.msra.mxu0 %v652
  %844 = vmatprep.subr.bf16.mxu0 0
  %845 = vmatpush1.bf16.msra.mxu0 %v653
  %846 = vmatprep.subr.bf16.mxu0 0
  %847 = vmatpush1.bf16.msra.mxu0 %v654
  %848 = vmatprep.subr.bf16.mxu0 0
  %849 = vmatpush1.bf16.msra.mxu0 %v655
  %850 = vmatprep.subr.bf16.mxu0 0
  %851 = vmatpush1.bf16.msra.mxu0 %v656
  %852 = vmatprep.subr.bf16.mxu0 0
  %853 = vmatpush1.bf16.msra.mxu0 %v657
  %854 = vmatprep.subr.bf16.mxu0 0
  %855 = vmatpush1.bf16.msra.mxu0 %v658
  %856 = vmatprep.subr.bf16.mxu0 0
  %857 = vmatpush1.bf16.msra.mxu0 %v659
  %858 = vmatprep.subr.bf16.mxu0 0
  %859 = vmatpush1.bf16.msra.mxu0 %v660
  %860 = vmatprep.subr.bf16.mxu0 0
  %861 = vmatpush1.bf16.msra.mxu0 %v661
  %862 = vmatprep.mubr.bf16.mxu0 %v297
  %863 = vmatmul.mubr.bf16.gmra.mrb[0].mxu0 %v296
  %v864 = vpop.f32.mrb[0].mxu0
  %v865 = vadd.f32 %v793, %v864
  %v866 = vpop.f32.mrb[0].mxu0
  %v867 = vpop.f32.mrb[0].mxu0
  %v868 = vadd.f32 %v796, %v867
  %v869 = vpop.f32.mrb[0].mxu0
  %870 = vmatprep.mubr.bf16.mxu0 %v305
  %871 = vmatmul.mubr.bf16.gmra.mrb[0].mxu0 %v304
  %v872 = vpop.f32.mrb[0].mxu0
  %v873 = vadd.f32 %v801, %v872
  %v874 = vpop.f32.mrb[0].mxu0
  %v875 = vpop.f32.mrb[0].mxu0
  %v876 = vadd.f32 %v804, %v875
  %v877 = vpop.f32.mrb[0].mxu0
  %878 = vmatprep.mubr.bf16.mxu0 %v313
  %879 = vmatmul.mubr.bf16.gmra.mrb[0].mxu0 %v312
  %v880 = vpop.f32.mrb[0].mxu0
  %v881 = vadd.f32 %v809, %v880
  %v882 = vpop.f32.mrb[0].mxu0
  %v883 = vpop.f32.mrb[0].mxu0
  %v884 = vadd.f32 %v812, %v883
  %v885 = vpop.f32.mrb[0].mxu0
  %886 = vmatprep.mubr.bf16.mxu0 %v321
  %887 = vmatmul.mubr.bf16.gmra.mrb[0].mxu0 %v320
  %v888 = vpop.f32.mrb[0].mxu0
  %v889 = vadd.f32 %v817, %v888
  %v890 = vpop.f32.mrb[0].mxu0
  %v891 = vpop.f32.mrb[0].mxu0
  %v892 = vadd.f32 %v820, %v891
  %v893 = vpop.f32.mrb[0].mxu0
  %894 = vmatprep.mubr.bf16.mxu0 %v329
  %895 = vmatmul.mubr.bf16.gmra.mrb[0].mxu0 %v328
  %v896 = vpop.f32.mrb[0].mxu0
  %v897 = vadd.f32 %v825, %v896
  %v898 = vpop.f32.mrb[0].mxu0
  %v899 = vpop.f32.mrb[0].mxu0
  %v900 = vpop.f32.mrb[0].mxu0
  %901 = vdwg.mxu0
  %902 = vmatprep.subr.bf16.mxu0 0
  %903 = vmatpush1.bf16.msra.mxu0 %v662
  %904 = vmatprep.subr.bf16.mxu0 0
  %905 = vmatpush1.bf16.msra.mxu0 %v663
  %906 = vmatprep.subr.bf16.mxu0 0
  %907 = vmatpush1.bf16.msra.mxu0 %v664
  %908 = vmatprep.subr.bf16.mxu0 0
  %909 = vmatpush1.bf16.msra.mxu0 %v665
  %910 = vmatprep.subr.bf16.mxu0 0
  %911 = vmatpush1.bf16.msra.mxu0 %v666
  %912 = vmatprep.subr.bf16.mxu0 0
  %913 = vmatpush1.bf16.msra.mxu0 %v667
  %914 = vmatprep.subr.bf16.mxu0 0
  %915 = vmatpush1.bf16.msra.mxu0 %v668
  %916 = vmatprep.subr.bf16.mxu0 0
  %917 = vmatpush1.bf16.msra.mxu0 %v669
  %918 = vmatprep.subr.bf16.mxu0 0
  %919 = vmatpush1.bf16.msra.mxu0 %v670
  %920 = vmatprep.subr.bf16.mxu0 0
  %921 = vmatpush1.bf16.msra.mxu0 %v671
  %922 = vmatprep.subr.bf16.mxu0 0
  %923 = vmatpush1.bf16.msra.mxu0 %v672
  %924 = vmatprep.subr.bf16.mxu0 0
  %925 = vmatpush1.bf16.msra.mxu0 %v673
  %926 = vmatprep.subr.bf16.mxu0 0
  %927 = vmatpush1.bf16.msra.mxu0 %v674
  %928 = vmatprep.subr.bf16.mxu0 0
  %929 = vmatpush1.bf16.msra.mxu0 %v675
  %930 = vmatprep.subr.bf16.mxu0 0
  %931 = vmatpush1.bf16.msra.mxu0 %v676
  %932 = vmatprep.subr.bf16.mxu0 0
  %933 = vmatpush1.bf16.msra.mxu0 %v677
  %934 = vmatprep.mubr.bf16.mxu0 %v299
  %935 = vmatmul.mubr.bf16.gmra.mrb[0].mxu0 %v298
  %v936 = vpop.f32.mrb[0].mxu0
  %v937 = vadd.f32 %v865, %v936
  %v938 = vpop.f32.mrb[0].mxu0
  %v939 = vpop.f32.mrb[0].mxu0
  %v940 = vadd.f32 %v868, %v939
  %v941 = vpop.f32.mrb[0].mxu0
  %942 = vmatprep.mubr.bf16.mxu0 %v307
  %943 = vmatmul.mubr.bf16.gmra.mrb[0].mxu0 %v306
  %v944 = vpop.f32.mrb[0].mxu0
  %v945 = vadd.f32 %v873, %v944
  %v946 = vpop.f32.mrb[0].mxu0
  %v947 = vpop.f32.mrb[0].mxu0
  %v948 = vadd.f32 %v876, %v947
  %v949 = vpop.f32.mrb[0].mxu0
  %950 = vmatprep.mubr.bf16.mxu0 %v315
  %951 = vmatmul.mubr.bf16.gmra.mrb[0].mxu0 %v314
  %v952 = vpop.f32.mrb[0].mxu0
  %v953 = vadd.f32 %v881, %v952
  %v954 = vpop.f32.mrb[0].mxu0
  %v955 = vpop.f32.mrb[0].mxu0
  %v956 = vadd.f32 %v884, %v955
  %v957 = vpop.f32.mrb[0].mxu0
  %958 = vmatprep.mubr.bf16.mxu0 %v323
  %959 = vmatmul.mubr.bf16.gmra.mrb[0].mxu0 %v322
  %v960 = vpop.f32.mrb[0].mxu0
  %v961 = vadd.f32 %v889, %v960
  %v962 = vpop.f32.mrb[0].mxu0
  %v963 = vpop.f32.mrb[0].mxu0
  %v964 = vadd.f32 %v892, %v963
  %v965 = vpop.f32.mrb[0].mxu0
  %966 = vmatprep.mubr.bf16.mxu0 %v331
  %967 = vmatmul.mubr.bf16.gmra.mrb[0].mxu0 %v330
  %v968 = vpop.f32.mrb[0].mxu0
  %v969 = vadd.f32 %v897, %v968
  %v970 = vpop.f32.mrb[0].mxu0
  %v971 = vpop.f32.mrb[0].mxu0
  %v972 = vpop.f32.mrb[0].mxu0
  %973 = vdwg.mxu0
  %974 = vmatprep.subr.bf16.mxu0 0
  %975 = vmatpush1.bf16.msra.mxu0 %v678
  %976 = vmatprep.subr.bf16.mxu0 0
  %977 = vmatpush1.bf16.msra.mxu0 %v679
  %978 = vmatprep.subr.bf16.mxu0 0
  %979 = vmatpush1.bf16.msra.mxu0 %v680
  %980 = vmatprep.subr.bf16.mxu0 0
  %981 = vmatpush1.bf16.msra.mxu0 %v681
  %982 = vmatprep.subr.bf16.mxu0 0
  %983 = vmatpush1.bf16.msra.mxu0 %v682
  %984 = vmatprep.subr.bf16.mxu0 0
  %985 = vmatpush1.bf16.msra.mxu0 %v683
  %986 = vmatprep.subr.bf16.mxu0 0
  %987 = vmatpush1.bf16.msra.mxu0 %v684
  %988 = vmatprep.subr.bf16.mxu0 0
  %989 = vmatpush1.bf16.msra.mxu0 %v685
  %990 = vmatprep.subr.bf16.mxu0 0
  %991 = vmatpush1.bf16.msra.mxu0 %v686
  %992 = vmatprep.subr.bf16.mxu0 0
  %993 = vmatpush1.bf16.msra.mxu0 %v687
  %994 = vmatprep.subr.bf16.mxu0 0
  %995 = vmatpush1.bf16.msra.mxu0 %v688
  %996 = vmatprep.subr.bf16.mxu0 0
  %997 = vmatpush1.bf16.msra.mxu0 %v689
  %998 = vmatprep.subr.bf16.mxu0 0
  %999 = vmatpush1.bf16.msra.mxu0 %v690
  %1000 = vmatprep.subr.bf16.mxu0 0
  %1001 = vmatpush1.bf16.msra.mxu0 %v691
  %1002 = vmatprep.subr.bf16.mxu0 0
  %1003 = vmatpush1.bf16.msra.mxu0 %v692
  %1004 = vmatprep.subr.bf16.mxu0 0
  %1005 = vmatpush1.bf16.msra.mxu0 %v693
  %1006 = vmatprep.mubr.bf16.mxu0 %v301
  %1007 = vmatmul.mubr.bf16.gmra.mrb[0].mxu0 %v300
  %v1008 = vpop.f32.mrb[0].mxu0
  %v1009 = vadd.f32 %v937, %v1008
  %v1010 = vpop.f32.mrb[0].mxu0
  %v1011 = vpop.f32.mrb[0].mxu0
  %v1012 = vadd.f32 %v940, %v1011
  %v1013 = vpop.f32.mrb[0].mxu0
  %1014 = vmatprep.mubr.bf16.mxu0 %v309
  %1015 = vmatmul.mubr.bf16.gmra.mrb[0].mxu0 %v308
  %v1016 = vpop.f32.mrb[0].mxu0
  %v1017 = vadd.f32 %v945, %v1016
  %v1018 = vpop.f32.mrb[0].mxu0
  %v1019 = vpop.f32.mrb[0].mxu0
  %v1020 = vadd.f32 %v948, %v1019
  %v1021 = vpop.f32.mrb[0].mxu0
  %1022 = vmatprep.mubr.bf16.mxu0 %v317
  %1023 = vmatmul.mubr.bf16.gmra.mrb[0].mxu0 %v316
  %v1024 = vpop.f32.mrb[0].mxu0
  %v1025 = vadd.f32 %v953, %v1024
  %v1026 = vpop.f32.mrb[0].mxu0
  %v1027 = vpop.f32.mrb[0].mxu0
  %v1028 = vadd.f32 %v956, %v1027
  %v1029 = vpop.f32.mrb[0].mxu0
  %1030 = vmatprep.mubr.bf16.mxu0 %v325
  %1031 = vmatmul.mubr.bf16.gmra.mrb[0].mxu0 %v324
  %v1032 = vpop.f32.mrb[0].mxu0
  %v1033 = vadd.f32 %v961, %v1032
  %v1034 = vpop.f32.mrb[0].mxu0
  %v1035 = vpop.f32.mrb[0].mxu0
  %v1036 = vadd.f32 %v964, %v1035
  %v1037 = vpop.f32.mrb[0].mxu0
  %1038 = vmatprep.mubr.bf16.mxu0 %v333
  %1039 = vmatmul.mubr.bf16.gmra.mrb[0].mxu0 %v332
  %v1040 = vpop.f32.mrb[0].mxu0
  %v1041 = vadd.f32 %v969, %v1040
  %v1042 = vpop.f32.mrb[0].mxu0
  %v1043 = vpop.f32.mrb[0].mxu0
  %v1044 = vpop.f32.mrb[0].mxu0
  %1045 = vdwg.mxu0
  %v1046 = vmax.f32 %v1009, 0.0
  %v1047 = vmax.f32 %v1012, 0.0
  %v1048 = vmax.f32 %v1017, 0.0
  %v1049 = vmax.f32 %v1020, 0.0
  %v1050 = vmax.f32 %v1025, 0.0
  %v1051 = vmax.f32 %v1028, 0.0
  %v1052 = vmax.f32 %v1033, 0.0
  %v1053 = vmax.f32 %v1036, 0.0
  %v1054 = vmax.f32 %v1041, 0.0
  %v1055 = vpack.c.bf16 %v1047, %v1046
  %v1056 = vpack.c.bf16 %v1049, %v1048
  %v1057 = vpack.c.bf16 %v1051, %v1050
  %v1058 = vpack.c.bf16 %v1053, %v1052
  %v1059 = vpack.c.bf16 %v1054, %v1054
  %v1065 = vunpack.c.l.b16 %v1055
  %v1066 = vunpack.c.h.b16 %v1055
  %v1067 = vunpack.c.l.b16 %v1056
  %v1068 = vunpack.c.h.b16 %v1056
  %v1069 = vunpack.c.l.b16 %v1057
  %v1070 = vunpack.c.h.b16 %v1057
  %v1071 = vunpack.c.l.b16 %v1058
  %v1072 = vunpack.c.h.b16 %v1058
  %v1073 = vunpack.c.l.b16 %v1059
  %v1074 = vpack.c.b16 %v1065, %v1065
  %v1075 = vpack.c.b16 %v1066, %v1066
  %v1076 = vpack.c.b16 %v1067, %v1067
  %v1077 = vpack.c.b16 %v1068, %v1068
  %v1078 = vpack.c.b16 %v1069, %v1069
  %v1079 = vpack.c.b16 %v1070, %v1070
  %v1080 = vpack.c.b16 %v1071, %v1071
  %v1081 = vpack.c.b16 %v1072, %v1072
  %v1082 = vpack.c.b16 %v1073, %v1073
  %1092 = vst [vmem:[%s3] sm:$0xf] %v1074
  %1093 = vst [vmem:[%s3 + $0x4] sm:$0xf] %v1075
  %1094 = vst [vmem:[%s3 + $0x8] sm:$0xf] %v1076
  %1095 = vst [vmem:[%s3 + $0xc] sm:$0xf] %v1077
  %1096 = vst [vmem:[%s3 + $0x10] sm:$0xf] %v1078
  %1097 = vst [vmem:[%s3 + $0x14] sm:$0xf] %v1079
  %1098 = vst [vmem:[%s3 + $0x18] sm:$0xf] %v1080
  %1099 = vst [vmem:[%s3 + $0x1c] sm:$0xf] %v1081
  %1100 = vst [vmem:[%s3 + $0x20] sm:$0xf] %v1082
  // Predicated region
  $region14: #{conv_module_forward.6} parent=0 // pred_check
    _
  $region15: #{conv_module_forward.6} parent=0 // pred_check_branch
    %1102 = sbr.rel (0) target = $region17
  $region16: #{conv_module_forward.6} parent=0 // pred_region
    _
  $region17: #{conv_module_forward.6} parent=0 // pred_fallthru
    _
  // Predicated region
  $region18: #{conv_module_forward.6} parent=0 // pred_check
    _
  $region19: #{conv_module_forward.6} parent=0 // pred_check_branch
    %1104 = sbr.rel (0) target = $region21
  $region20: #{conv_module_forward.6} parent=0 // pred_region
    _
  $region21: #{conv_module_forward.6} parent=0 // pred_fallthru
    _

// kernel: conv_module_forward.7
$region0: #{conv_module_forward.7}
  #allocation0 [shape = 'u32[]', space=smem, size = 0x4, offset = 0x4, fixed_abs, tag = 'smem constant byte address 0x4 - core index']
  #allocation1 [shape = 'u32[144,128]{1,0:T(1,128)}', space=vmem, size = 0x12000, scoped, tag = 'internal scratch']
  %s0 = inlined_call_operand.vmem [shape: bf16[8,2048], index: 0, kind: input, shape index: {}]
  %s1 = inlined_call_operand.vmem [shape: bf16[2048,256], index: 1, kind: input, shape index: {}]
  %s2 = inlined_call_operand.vmem [shape: f32[1,256], index: 2, kind: input, shape index: {}]
  %s3 = inlined_call_operand.vmem [shape: f32[8,256], index: 3, kind: output, shape index: {}]
  %s4 = sld [smem:[#allocation0]]
  $region22: #{conv_module_forward.7} parent=0
    _
  %s6 = ssub.s32 1, %s4
  %s7 = scalar_select 0, %s6, %s4
  // Predicated region
  $region2: #{conv_module_forward.7} parent=0 // pred_check
    _
  $region3: #{conv_module_forward.7} parent=0 // pred_check_branch
    %9 = sbr.rel (0) target = $region5
  $region4: #{conv_module_forward.7} parent=0 // pred_region
    _
  $region5: #{conv_module_forward.7} parent=0 // pred_fallthru
    _
  // Predicated region
  $region6: #{conv_module_forward.7} parent=0 // pred_check
    _
  $region7: #{conv_module_forward.7} parent=0 // pred_check_branch
    %11 = sbr.rel (0) target = $region9
  $region8: #{conv_module_forward.7} parent=0 // pred_region
    _
  $region9: #{conv_module_forward.7} parent=0 // pred_fallthru
    _
  // Predicated region
  $region10: #{conv_module_forward.7} parent=0 // pred_check
    _
  $region11: #{conv_module_forward.7} parent=0 // pred_check_branch
    %13 = sbr.rel (0) target = $region13
  $region12: #{conv_module_forward.7} parent=0 // pred_region
    _
  $region13: #{conv_module_forward.7} parent=0 // pred_fallthru
    _
  %v14 = vld [vmem:[%s0] sm:$0xff]
  %v15 = vld [vmem:[%s0 + $0x8] sm:$0xff]
  %v16 = vld [vmem:[%s0 + $0x10] sm:$0xff]
  %v17 = vld [vmem:[%s0 + $0x18] sm:$0xff]
  %v18 = vld [vmem:[%s0 + $0x20] sm:$0xff]
  %v19 = vld [vmem:[%s0 + $0x28] sm:$0xff]
  %v20 = vld [vmem:[%s0 + $0x30] sm:$0xff]
  %v21 = vld [vmem:[%s0 + $0x38] sm:$0xff]
  %v22 = vld [vmem:[%s1] sm:$0xff]
  %v23 = vld [vmem:[%s1 + $0x8] sm:$0xff]
  %v24 = vld [vmem:[%s1 + $0x10] sm:$0xff]
  %v25 = vld [vmem:[%s1 + $0x18] sm:$0xff]
  %v26 = vld [vmem:[%s1 + $0x20] sm:$0xff]
  %v27 = vld [vmem:[%s1 + $0x28] sm:$0xff]
  %v28 = vld [vmem:[%s1 + $0x30] sm:$0xff]
  %v29 = vld [vmem:[%s1 + $0x38] sm:$0xff]
  %v30 = vld [vmem:[%s1 + $0x40] sm:$0xff]
  %v31 = vld [vmem:[%s1 + $0x48] sm:$0xff]
  %v32 = vld [vmem:[%s1 + $0x50] sm:$0xff]
  %v33 = vld [vmem:[%s1 + $0x58] sm:$0xff]
  %v34 = vld [vmem:[%s1 + $0x60] sm:$0xff]
  %v35 = vld [vmem:[%s1 + $0x68] sm:$0xff]
  %v36 = vld [vmem:[%s1 + $0x70] sm:$0xff]
  %v37 = vld [vmem:[%s1 + $0x78] sm:$0xff]
  %v38 = vld [vmem:[%s1 + $0x80] sm:$0xff]
  %v39 = vld [vmem:[%s1 + $0x88] sm:$0xff]
  %v40 = vld [vmem:[%s1 + $0x90] sm:$0xff]
  %v41 = vld [vmem:[%s1 + $0x98] sm:$0xff]
  %v42 = vld [vmem:[%s1 + $0xa0] sm:$0xff]
  %v43 = vld [vmem:[%s1 + $0xa8] sm:$0xff]
  %v44 = vld [vmem:[%s1 + $0xb0] sm:$0xff]
  %v45 = vld [vmem:[%s1 + $0xb8] sm:$0xff]
  %v46 = vld [vmem:[%s1 + $0xc0] sm:$0xff]
  %v47 = vld [vmem:[%s1 + $0xc8] sm:$0xff]
  %v48 = vld [vmem:[%s1 + $0xd0] sm:$0xff]
  %v49 = vld [vmem:[%s1 + $0xd8] sm:$0xff]
  %v50 = vld [vmem:[%s1 + $0xe0] sm:$0xff]
  %v51 = vld [vmem:[%s1 + $0xe8] sm:$0xff]
  %v52 = vld [vmem:[%s1 + $0xf0] sm:$0xff]
  %v53 = vld [vmem:[%s1 + $0xf8] sm:$0xff]
  %v54 = vld [vmem:[%s1 + $0x100] sm:$0xff]
  %v55 = vld [vmem:[%s1 + $0x108] sm:$0xff]
  %v56 = vld [vmem:[%s1 + $0x110] sm:$0xff]
  %v57 = vld [vmem:[%s1 + $0x118] sm:$0xff]
  %v58 = vld [vmem:[%s1 + $0x120] sm:$0xff]
  %v59 = vld [vmem:[%s1 + $0x128] sm:$0xff]
  %v60 = vld [vmem:[%s1 + $0x130] sm:$0xff]
  %v61 = vld [vmem:[%s1 + $0x138] sm:$0xff]
  %v62 = vld [vmem:[%s1 + $0x140] sm:$0xff]
  %v63 = vld [vmem:[%s1 + $0x148] sm:$0xff]
  %v64 = vld [vmem:[%s1 + $0x150] sm:$0xff]
  %v65 = vld [vmem:[%s1 + $0x158] sm:$0xff]
  %v66 = vld [vmem:[%s1 + $0x160] sm:$0xff]
  %v67 = vld [vmem:[%s1 + $0x168] sm:$0xff]
  %v68 = vld [vmem:[%s1 + $0x170] sm:$0xff]
  %v69 = vld [vmem:[%s1 + $0x178] sm:$0xff]
  %v70 = vld [vmem:[%s1 + $0x180] sm:$0xff]
  %v71 = vld [vmem:[%s1 + $0x188] sm:$0xff]
  %v72 = vld [vmem:[%s1 + $0x190] sm:$0xff]
  %v73 = vld [vmem:[%s1 + $0x198] sm:$0xff]
  %v74 = vld [vmem:[%s1 + $0x1a0] sm:$0xff]
  %v75 = vld [vmem:[%s1 + $0x1a8] sm:$0xff]
  %v76 = vld [vmem:[%s1 + $0x1b0] sm:$0xff]
  %v77 = vld [vmem:[%s1 + $0x1b8] sm:$0xff]
  %v78 = vld [vmem:[%s1 + $0x1c0] sm:$0xff]
  %v79 = vld [vmem:[%s1 + $0x1c8] sm:$0xff]
  %v80 = vld [vmem:[%s1 + $0x1d0] sm:$0xff]
  %v81 = vld [vmem:[%s1 + $0x1d8] sm:$0xff]
  %v82 = vld [vmem:[%s1 + $0x1e0] sm:$0xff]
  %v83 = vld [vmem:[%s1 + $0x1e8] sm:$0xff]
  %v84 = vld [vmem:[%s1 + $0x1f0] sm:$0xff]
  %v85 = vld [vmem:[%s1 + $0x1f8] sm:$0xff]
  %v86 = vld [vmem:[%s1 + $0x200] sm:$0xff]
  %v87 = vld [vmem:[%s1 + $0x208] sm:$0xff]
  %v88 = vld [vmem:[%s1 + $0x210] sm:$0xff]
  %v89 = vld [vmem:[%s1 + $0x218] sm:$0xff]
  %v90 = vld [vmem:[%s1 + $0x220] sm:$0xff]
  %v91 = vld [vmem:[%s1 + $0x228] sm:$0xff]
  %v92 = vld [vmem:[%s1 + $0x230] sm:$0xff]
  %v93 = vld [vmem:[%s1 + $0x238] sm:$0xff]
  %v94 = vld [vmem:[%s1 + $0x240] sm:$0xff]
  %v95 = vld [vmem:[%s1 + $0x248] sm:$0xff]
  %v96 = vld [vmem:[%s1 + $0x250] sm:$0xff]
  %v97 = vld [vmem:[%s1 + $0x258] sm:$0xff]
  %v98 = vld [vmem:[%s1 + $0x260] sm:$0xff]
  %v99 = vld [vmem:[%s1 + $0x268] sm:$0xff]
  %v100 = vld [vmem:[%s1 + $0x270] sm:$0xff]
  %v101 = vld [vmem:[%s1 + $0x278] sm:$0xff]
  %v102 = vld [vmem:[%s1 + $0x280] sm:$0xff]
  %v103 = vld [vmem:[%s1 + $0x288] sm:$0xff]
  %v104 = vld [vmem:[%s1 + $0x290] sm:$0xff]
  %v105 = vld [vmem:[%s1 + $0x298] sm:$0xff]
  %v106 = vld [vmem:[%s1 + $0x2a0] sm:$0xff]
  %v107 = vld [vmem:[%s1 + $0x2a8] sm:$0xff]
  %v108 = vld [vmem:[%s1 + $0x2b0] sm:$0xff]
  %v109 = vld [vmem:[%s1 + $0x2b8] sm:$0xff]
  %v110 = vld [vmem:[%s1 + $0x2c0] sm:$0xff]
  %v111 = vld [vmem:[%s1 + $0x2c8] sm:$0xff]
  %v112 = vld [vmem:[%s1 + $0x2d0] sm:$0xff]
  %v113 = vld [vmem:[%s1 + $0x2d8] sm:$0xff]
  %v114 = vld [vmem:[%s1 + $0x2e0] sm:$0xff]
  %v115 = vld [vmem:[%s1 + $0x2e8] sm:$0xff]
  %v116 = vld [vmem:[%s1 + $0x2f0] sm:$0xff]
  %v117 = vld [vmem:[%s1 + $0x2f8] sm:$0xff]
  %v118 = vld [vmem:[%s1 + $0x300] sm:$0xff]
  %v119 = vld [vmem:[%s1 + $0x308] sm:$0xff]
  %v120 = vld [vmem:[%s1 + $0x310] sm:$0xff]
  %v121 = vld [vmem:[%s1 + $0x318] sm:$0xff]
  %v122 = vld [vmem:[%s1 + $0x320] sm:$0xff]
  %v123 = vld [vmem:[%s1 + $0x328] sm:$0xff]
  %v124 = vld [vmem:[%s1 + $0x330] sm:$0xff]
  %v125 = vld [vmem:[%s1 + $0x338] sm:$0xff]
  %v126 = vld [vmem:[%s1 + $0x340] sm:$0xff]
  %v127 = vld [vmem:[%s1 + $0x348] sm:$0xff]
  %v128 = vld [vmem:[%s1 + $0x350] sm:$0xff]
  %v129 = vld [vmem:[%s1 + $0x358] sm:$0xff]
  %v130 = vld [vmem:[%s1 + $0x360] sm:$0xff]
  %v131 = vld [vmem:[%s1 + $0x368] sm:$0xff]
  %v132 = vld [vmem:[%s1 + $0x370] sm:$0xff]
  %v133 = vld [vmem:[%s1 + $0x378] sm:$0xff]
  %v134 = vld [vmem:[%s1 + $0x380] sm:$0xff]
  %v135 = vld [vmem:[%s1 + $0x388] sm:$0xff]
  %v136 = vld [vmem:[%s1 + $0x390] sm:$0xff]
  %v137 = vld [vmem:[%s1 + $0x398] sm:$0xff]
  %v138 = vld [vmem:[%s1 + $0x3a0] sm:$0xff]
  %v139 = vld [vmem:[%s1 + $0x3a8] sm:$0xff]
  %v140 = vld [vmem:[%s1 + $0x3b0] sm:$0xff]
  %v141 = vld [vmem:[%s1 + $0x3b8] sm:$0xff]
  %v142 = vld [vmem:[%s1 + $0x3c0] sm:$0xff]
  %v143 = vld [vmem:[%s1 + $0x3c8] sm:$0xff]
  %v144 = vld [vmem:[%s1 + $0x3d0] sm:$0xff]
  %v145 = vld [vmem:[%s1 + $0x3d8] sm:$0xff]
  %v146 = vld [vmem:[%s1 + $0x3e0] sm:$0xff]
  %v147 = vld [vmem:[%s1 + $0x3e8] sm:$0xff]
  %v148 = vld [vmem:[%s1 + $0x3f0] sm:$0xff]
  %v149 = vld [vmem:[%s1 + $0x3f8] sm:$0xff]
  %v150 = vld [vmem:[%s1 + $0x400] sm:$0xff]
  %v151 = vld [vmem:[%s1 + $0x408] sm:$0xff]
  %v152 = vld [vmem:[%s1 + $0x410] sm:$0xff]
  %v153 = vld [vmem:[%s1 + $0x418] sm:$0xff]
  %v154 = vld [vmem:[%s1 + $0x420] sm:$0xff]
  %v155 = vld [vmem:[%s1 + $0x428] sm:$0xff]
  %v156 = vld [vmem:[%s1 + $0x430] sm:$0xff]
  %v157 = vld [vmem:[%s1 + $0x438] sm:$0xff]
  %v158 = vld [vmem:[%s1 + $0x440] sm:$0xff]
  %v159 = vld [vmem:[%s1 + $0x448] sm:$0xff]
  %v160 = vld [vmem:[%s1 + $0x450] sm:$0xff]
  %v161 = vld [vmem:[%s1 + $0x458] sm:$0xff]
  %v162 = vld [vmem:[%s1 + $0x460] sm:$0xff]
  %v163 = vld [vmem:[%s1 + $0x468] sm:$0xff]
  %v164 = vld [vmem:[%s1 + $0x470] sm:$0xff]
  %v165 = vld [vmem:[%s1 + $0x478] sm:$0xff]
  %v166 = vld [vmem:[%s1 + $0x480] sm:$0xff]
  %v167 = vld [vmem:[%s1 + $0x488] sm:$0xff]
  %v168 = vld [vmem:[%s1 + $0x490] sm:$0xff]
  %v169 = vld [vmem:[%s1 + $0x498] sm:$0xff]
  %v170 = vld [vmem:[%s1 + $0x4a0] sm:$0xff]
  %v171 = vld [vmem:[%s1 + $0x4a8] sm:$0xff]
  %v172 = vld [vmem:[%s1 + $0x4b0] sm:$0xff]
  %v173 = vld [vmem:[%s1 + $0x4b8] sm:$0xff]
  %v174 = vld [vmem:[%s1 + $0x4c0] sm:$0xff]
  %v175 = vld [vmem:[%s1 + $0x4c8] sm:$0xff]
  %v176 = vld [vmem:[%s1 + $0x4d0] sm:$0xff]
  %v177 = vld [vmem:[%s1 + $0x4d8] sm:$0xff]
  %v178 = vld [vmem:[%s1 + $0x4e0] sm:$0xff]
  %v179 = vld [vmem:[%s1 + $0x4e8] sm:$0xff]
  %v180 = vld [vmem:[%s1 + $0x4f0] sm:$0xff]
  %v181 = vld [vmem:[%s1 + $0x4f8] sm:$0xff]
  %v182 = vld [vmem:[%s1 + $0x500] sm:$0xff]
  %v183 = vld [vmem:[%s1 + $0x508] sm:$0xff]
  %v184 = vld [vmem:[%s1 + $0x510] sm:$0xff]
  %v185 = vld [vmem:[%s1 + $0x518] sm:$0xff]
  %v186 = vld [vmem:[%s1 + $0x520] sm:$0xff]
  %v187 = vld [vmem:[%s1 + $0x528] sm:$0xff]
  %v188 = vld [vmem:[%s1 + $0x530] sm:$0xff]
  %v189 = vld [vmem:[%s1 + $0x538] sm:$0xff]
  %v190 = vld [vmem:[%s1 + $0x540] sm:$0xff]
  %v191 = vld [vmem:[%s1 + $0x548] sm:$0xff]
  %v192 = vld [vmem:[%s1 + $0x550] sm:$0xff]
  %v193 = vld [vmem:[%s1 + $0x558] sm:$0xff]
  %v194 = vld [vmem:[%s1 + $0x560] sm:$0xff]
  %v195 = vld [vmem:[%s1 + $0x568] sm:$0xff]
  %v196 = vld [vmem:[%s1 + $0x570] sm:$0xff]
  %v197 = vld [vmem:[%s1 + $0x578] sm:$0xff]
  %v198 = vld [vmem:[%s1 + $0x580] sm:$0xff]
  %v199 = vld [vmem:[%s1 + $0x588] sm:$0xff]
  %v200 = vld [vmem:[%s1 + $0x590] sm:$0xff]
  %v201 = vld [vmem:[%s1 + $0x598] sm:$0xff]
  %v202 = vld [vmem:[%s1 + $0x5a0] sm:$0xff]
  %v203 = vld [vmem:[%s1 + $0x5a8] sm:$0xff]
  %v204 = vld [vmem:[%s1 + $0x5b0] sm:$0xff]
  %v205 = vld [vmem:[%s1 + $0x5b8] sm:$0xff]
  %v206 = vld [vmem:[%s1 + $0x5c0] sm:$0xff]
  %v207 = vld [vmem:[%s1 + $0x5c8] sm:$0xff]
  %v208 = vld [vmem:[%s1 + $0x5d0] sm:$0xff]
  %v209 = vld [vmem:[%s1 + $0x5d8] sm:$0xff]
  %v210 = vld [vmem:[%s1 + $0x5e0] sm:$0xff]
  %v211 = vld [vmem:[%s1 + $0x5e8] sm:$0xff]
  %v212 = vld [vmem:[%s1 + $0x5f0] sm:$0xff]
  %v213 = vld [vmem:[%s1 + $0x5f8] sm:$0xff]
  %v214 = vld [vmem:[%s1 + $0x600] sm:$0xff]
  %v215 = vld [vmem:[%s1 + $0x608] sm:$0xff]
  %v216 = vld [vmem:[%s1 + $0x610] sm:$0xff]
  %v217 = vld [vmem:[%s1 + $0x618] sm:$0xff]
  %v218 = vld [vmem:[%s1 + $0x620] sm:$0xff]
  %v219 = vld [vmem:[%s1 + $0x628] sm:$0xff]
  %v220 = vld [vmem:[%s1 + $0x630] sm:$0xff]
  %v221 = vld [vmem:[%s1 + $0x638] sm:$0xff]
  %v222 = vld [vmem:[%s1 + $0x640] sm:$0xff]
  %v223 = vld [vmem:[%s1 + $0x648] sm:$0xff]
  %v224 = vld [vmem:[%s1 + $0x650] sm:$0xff]
  %v225 = vld [vmem:[%s1 + $0x658] sm:$0xff]
  %v226 = vld [vmem:[%s1 + $0x660] sm:$0xff]
  %v227 = vld [vmem:[%s1 + $0x668] sm:$0xff]
  %v228 = vld [vmem:[%s1 + $0x670] sm:$0xff]
  %v229 = vld [vmem:[%s1 + $0x678] sm:$0xff]
  %v230 = vld [vmem:[%s1 + $0x680] sm:$0xff]
  %v231 = vld [vmem:[%s1 + $0x688] sm:$0xff]
  %v232 = vld [vmem:[%s1 + $0x690] sm:$0xff]
  %v233 = vld [vmem:[%s1 + $0x698] sm:$0xff]
  %v234 = vld [vmem:[%s1 + $0x6a0] sm:$0xff]
  %v235 = vld [vmem:[%s1 + $0x6a8] sm:$0xff]
  %v236 = vld [vmem:[%s1 + $0x6b0] sm:$0xff]
  %v237 = vld [vmem:[%s1 + $0x6b8] sm:$0xff]
  %v238 = vld [vmem:[%s1 + $0x6c0] sm:$0xff]
  %v239 = vld [vmem:[%s1 + $0x6c8] sm:$0xff]
  %v240 = vld [vmem:[%s1 + $0x6d0] sm:$0xff]
  %v241 = vld [vmem:[%s1 + $0x6d8] sm:$0xff]
  %v242 = vld [vmem:[%s1 + $0x6e0] sm:$0xff]
  %v243 = vld [vmem:[%s1 + $0x6e8] sm:$0xff]
  %v244 = vld [vmem:[%s1 + $0x6f0] sm:$0xff]
  %v245 = vld [vmem:[%s1 + $0x6f8] sm:$0xff]
  %v246 = vld [vmem:[%s1 + $0x700] sm:$0xff]
  %v247 = vld [vmem:[%s1 + $0x708] sm:$0xff]
  %v248 = vld [vmem:[%s1 + $0x710] sm:$0xff]
  %v249 = vld [vmem:[%s1 + $0x718] sm:$0xff]
  %v250 = vld [vmem:[%s1 + $0x720] sm:$0xff]
  %v251 = vld [vmem:[%s1 + $0x728] sm:$0xff]
  %v252 = vld [vmem:[%s1 + $0x730] sm:$0xff]
  %v253 = vld [vmem:[%s1 + $0x738] sm:$0xff]
  %v254 = vld [vmem:[%s1 + $0x740] sm:$0xff]
  %v255 = vld [vmem:[%s1 + $0x748] sm:$0xff]
  %v256 = vld [vmem:[%s1 + $0x750] sm:$0xff]
  %v257 = vld [vmem:[%s1 + $0x758] sm:$0xff]
  %v258 = vld [vmem:[%s1 + $0x760] sm:$0xff]
  %v259 = vld [vmem:[%s1 + $0x768] sm:$0xff]
  %v260 = vld [vmem:[%s1 + $0x770] sm:$0xff]
  %v261 = vld [vmem:[%s1 + $0x778] sm:$0xff]
  %v262 = vld [vmem:[%s1 + $0x780] sm:$0xff]
  %v263 = vld [vmem:[%s1 + $0x788] sm:$0xff]
  %v264 = vld [vmem:[%s1 + $0x790] sm:$0xff]
  %v265 = vld [vmem:[%s1 + $0x798] sm:$0xff]
  %v266 = vld [vmem:[%s1 + $0x7a0] sm:$0xff]
  %v267 = vld [vmem:[%s1 + $0x7a8] sm:$0xff]
  %v268 = vld [vmem:[%s1 + $0x7b0] sm:$0xff]
  %v269 = vld [vmem:[%s1 + $0x7b8] sm:$0xff]
  %v270 = vld [vmem:[%s1 + $0x7c0] sm:$0xff]
  %v271 = vld [vmem:[%s1 + $0x7c8] sm:$0xff]
  %v272 = vld [vmem:[%s1 + $0x7d0] sm:$0xff]
  %v273 = vld [vmem:[%s1 + $0x7d8] sm:$0xff]
  %v274 = vld [vmem:[%s1 + $0x7e0] sm:$0xff]
  %v275 = vld [vmem:[%s1 + $0x7e8] sm:$0xff]
  %v276 = vld [vmem:[%s1 + $0x7f0] sm:$0xff]
  %v277 = vld [vmem:[%s1 + $0x7f8] sm:$0xff]
  %v278 = vld [vmem:[%s2] sm:$0x3]
  %v280 = vlaneseq
  %v281 = vshrl.u32 %v280, 7
  %v282 = vsub.s32 0, %v281
  %v283 = vrot.slane %v278, %v282
  %v284 = vlaneseq
  %v285 = vshrl.u32 %v284, 7
  %v286 = vsub.s32 1, %v285
  %v287 = vrot.slane %v278, %v286
  %v298 = vunpack.c.l.b16 %v14
  %v299 = vunpack.c.h.b16 %v14
  %v300 = vunpack.c.l.b16 %v15
  %v301 = vunpack.c.h.b16 %v15
  %v302 = vunpack.c.l.b16 %v16
  %v303 = vunpack.c.h.b16 %v16
  %v304 = vunpack.c.l.b16 %v17
  %v305 = vunpack.c.h.b16 %v17
  %v306 = vunpack.c.l.b16 %v18
  %v307 = vunpack.c.h.b16 %v18
  %v308 = vunpack.c.l.b16 %v19
  %v309 = vunpack.c.h.b16 %v19
  %v310 = vunpack.c.l.b16 %v20
  %v311 = vunpack.c.h.b16 %v20
  %v312 = vunpack.c.l.b16 %v21
  %v313 = vunpack.c.h.b16 %v21
  %v314 = vpack.c.b16 %v298, %v298
  %v315 = vpack.c.b16 %v299, %v299
  %v316 = vpack.c.b16 %v300, %v300
  %v317 = vpack.c.b16 %v301, %v301
  %v318 = vpack.c.b16 %v302, %v302
  %v319 = vpack.c.b16 %v303, %v303
  %v320 = vpack.c.b16 %v304, %v304
  %v321 = vpack.c.b16 %v305, %v305
  %v322 = vpack.c.b16 %v306, %v306
  %v323 = vpack.c.b16 %v307, %v307
  %v324 = vpack.c.b16 %v308, %v308
  %v325 = vpack.c.b16 %v309, %v309
  %v326 = vpack.c.b16 %v310, %v310
  %v327 = vpack.c.b16 %v311, %v311
  %v328 = vpack.c.b16 %v312, %v312
  %v329 = vpack.c.b16 %v313, %v313
  %v602 = vunpack.c.l.b16 %v22
  %v603 = vunpack.c.h.b16 %v22
  %v604 = vunpack.c.l.b16 %v23
  %v605 = vunpack.c.h.b16 %v23
  %v606 = vunpack.c.l.b16 %v24
  %v607 = vunpack.c.h.b16 %v24
  %v608 = vunpack.c.l.b16 %v25
  %v609 = vunpack.c.h.b16 %v25
  %v610 = vunpack.c.l.b16 %v26
  %v611 = vunpack.c.h.b16 %v26
  %v612 = vunpack.c.l.b16 %v27
  %v613 = vunpack.c.h.b16 %v27
  %v614 = vunpack.c.l.b16 %v28
  %v615 = vunpack.c.h.b16 %v28
  %v616 = vunpack.c.l.b16 %v29
  %v617 = vunpack.c.h.b16 %v29
  %v618 = vunpack.c.l.b16 %v30
  %v619 = vunpack.c.h.b16 %v30
  %v620 = vunpack.c.l.b16 %v31
  %v621 = vunpack.c.h.b16 %v31
  %v622 = vunpack.c.l.b16 %v32
  %v623 = vunpack.c.h.b16 %v32
  %v624 = vunpack.c.l.b16 %v33
  %v625 = vunpack.c.h.b16 %v33
  %v626 = vunpack.c.l.b16 %v34
  %v627 = vunpack.c.h.b16 %v34
  %v628 = vunpack.c.l.b16 %v35
  %v629 = vunpack.c.h.b16 %v35
  %v630 = vunpack.c.l.b16 %v36
  %v631 = vunpack.c.h.b16 %v36
  %v632 = vunpack.c.l.b16 %v37
  %v633 = vunpack.c.h.b16 %v37
  %v634 = vunpack.c.l.b16 %v38
  %v635 = vunpack.c.h.b16 %v38
  %v636 = vunpack.c.l.b16 %v39
  %v637 = vunpack.c.h.b16 %v39
  %v638 = vunpack.c.l.b16 %v40
  %v639 = vunpack.c.h.b16 %v40
  %v640 = vunpack.c.l.b16 %v41
  %v641 = vunpack.c.h.b16 %v41
  %v642 = vunpack.c.l.b16 %v42
  %v643 = vunpack.c.h.b16 %v42
  %v644 = vunpack.c.l.b16 %v43
  %v645 = vunpack.c.h.b16 %v43
  %v646 = vunpack.c.l.b16 %v44
  %v647 = vunpack.c.h.b16 %v44
  %v648 = vunpack.c.l.b16 %v45
  %v649 = vunpack.c.h.b16 %v45
  %v650 = vunpack.c.l.b16 %v46
  %v651 = vunpack.c.h.b16 %v46
  %v652 = vunpack.c.l.b16 %v47
  %v653 = vunpack.c.h.b16 %v47
  %v654 = vunpack.c.l.b16 %v48
  %v655 = vunpack.c.h.b16 %v48
  %v656 = vunpack.c.l.b16 %v49
  %v657 = vunpack.c.h.b16 %v49
  %v658 = vunpack.c.l.b16 %v50
  %v659 = vunpack.c.h.b16 %v50
  %v660 = vunpack.c.l.b16 %v51
  %v661 = vunpack.c.h.b16 %v51
  %v662 = vunpack.c.l.b16 %v52
  %v663 = vunpack.c.h.b16 %v52
  %v664 = vunpack.c.l.b16 %v53
  %v665 = vunpack.c.h.b16 %v53
  %v666 = vunpack.c.l.b16 %v54
  %v667 = vunpack.c.h.b16 %v54
  %v668 = vunpack.c.l.b16 %v55
  %v669 = vunpack.c.h.b16 %v55
  %v670 = vunpack.c.l.b16 %v56
  %v671 = vunpack.c.h.b16 %v56
  %v672 = vunpack.c.l.b16 %v57
  %v673 = vunpack.c.h.b16 %v57
  %v674 = vunpack.c.l.b16 %v58
  %v675 = vunpack.c.h.b16 %v58
  %v676 = vunpack.c.l.b16 %v59
  %v677 = vunpack.c.h.b16 %v59
  %v678 = vunpack.c.l.b16 %v60
  %v679 = vunpack.c.h.b16 %v60
  %v680 = vunpack.c.l.b16 %v61
  %v681 = vunpack.c.h.b16 %v61
  %v682 = vunpack.c.l.b16 %v62
  %v683 = vunpack.c.h.b16 %v62
  %v684 = vunpack.c.l.b16 %v63
  %v685 = vunpack.c.h.b16 %v63
  %v686 = vunpack.c.l.b16 %v64
  %v687 = vunpack.c.h.b16 %v64
  %v688 = vunpack.c.l.b16 %v65
  %v689 = vunpack.c.h.b16 %v65
  %v690 = vunpack.c.l.b16 %v66
  %v691 = vunpack.c.h.b16 %v66
  %v692 = vunpack.c.l.b16 %v67
  %v693 = vunpack.c.h.b16 %v67
  %v694 = vunpack.c.l.b16 %v68
  %v695 = vunpack.c.h.b16 %v68
  %v696 = vunpack.c.l.b16 %v69
  %v697 = vunpack.c.h.b16 %v69
  %v698 = vunpack.c.l.b16 %v70
  %v699 = vunpack.c.h.b16 %v70
  %v700 = vunpack.c.l.b16 %v71
  %v701 = vunpack.c.h.b16 %v71
  %v702 = vunpack.c.l.b16 %v72
  %v703 = vunpack.c.h.b16 %v72
  %v704 = vunpack.c.l.b16 %v73
  %v705 = vunpack.c.h.b16 %v73
  %v706 = vunpack.c.l.b16 %v74
  %v707 = vunpack.c.h.b16 %v74
  %v708 = vunpack.c.l.b16 %v75
  %v709 = vunpack.c.h.b16 %v75
  %v710 = vunpack.c.l.b16 %v76
  %v711 = vunpack.c.h.b16 %v76
  %v712 = vunpack.c.l.b16 %v77
  %v713 = vunpack.c.h.b16 %v77
  %v714 = vunpack.c.l.b16 %v78
  %v715 = vunpack.c.h.b16 %v78
  %v716 = vunpack.c.l.b16 %v79
  %v717 = vunpack.c.h.b16 %v79
  %v718 = vunpack.c.l.b16 %v80
  %v719 = vunpack.c.h.b16 %v80
  %v720 = vunpack.c.l.b16 %v81
  %v721 = vunpack.c.h.b16 %v81
  %v722 = vunpack.c.l.b16 %v82
  %v723 = vunpack.c.h.b16 %v82
  %v724 = vunpack.c.l.b16 %v83
  %v725 = vunpack.c.h.b16 %v83
  %v726 = vunpack.c.l.b16 %v84
  %v727 = vunpack.c.h.b16 %v84
  %v728 = vunpack.c.l.b16 %v85
  %v729 = vunpack.c.h.b16 %v85
  %v730 = vunpack.c.l.b16 %v86
  %v731 = vunpack.c.h.b16 %v86
  %v732 = vunpack.c.l.b16 %v87
  %v733 = vunpack.c.h.b16 %v87
  %v734 = vunpack.c.l.b16 %v88
  %v735 = vunpack.c.h.b16 %v88
  %v736 = vunpack.c.l.b16 %v89
  %v737 = vunpack.c.h.b16 %v89
  %v738 = vunpack.c.l.b16 %v90
  %v739 = vunpack.c.h.b16 %v90
  %v740 = vunpack.c.l.b16 %v91
  %v741 = vunpack.c.h.b16 %v91
  %v742 = vunpack.c.l.b16 %v92
  %v743 = vunpack.c.h.b16 %v92
  %v744 = vunpack.c.l.b16 %v93
  %v745 = vunpack.c.h.b16 %v93
  %v746 = vunpack.c.l.b16 %v94
  %v747 = vunpack.c.h.b16 %v94
  %v748 = vunpack.c.l.b16 %v95
  %v749 = vunpack.c.h.b16 %v95
  %v750 = vunpack.c.l.b16 %v96
  %v751 = vunpack.c.h.b16 %v96
  %v752 = vunpack.c.l.b16 %v97
  %v753 = vunpack.c.h.b16 %v97
  %v754 = vunpack.c.l.b16 %v98
  %v755 = vunpack.c.h.b16 %v98
  %v756 = vunpack.c.l.b16 %v99
  %v757 = vunpack.c.h.b16 %v99
  %v758 = vunpack.c.l.b16 %v100
  %v759 = vunpack.c.h.b16 %v100
  %v760 = vunpack.c.l.b16 %v101
  %v761 = vunpack.c.h.b16 %v101
  %v762 = vunpack.c.l.b16 %v102
  %v763 = vunpack.c.h.b16 %v102
  %v764 = vunpack.c.l.b16 %v103
  %v765 = vunpack.c.h.b16 %v103
  %v766 = vunpack.c.l.b16 %v104
  %v767 = vunpack.c.h.b16 %v104
  %v768 = vunpack.c.l.b16 %v105
  %v769 = vunpack.c.h.b16 %v105
  %v770 = vunpack.c.l.b16 %v106
  %v771 = vunpack.c.h.b16 %v106
  %v772 = vunpack.c.l.b16 %v107
  %v773 = vunpack.c.h.b16 %v107
  %v774 = vunpack.c.l.b16 %v108
  %v775 = vunpack.c.h.b16 %v108
  %v776 = vunpack.c.l.b16 %v109
  %v777 = vunpack.c.h.b16 %v109
  %v778 = vunpack.c.l.b16 %v110
  %v779 = vunpack.c.h.b16 %v110
  %v780 = vunpack.c.l.b16 %v111
  %v781 = vunpack.c.h.b16 %v111
  %v782 = vunpack.c.l.b16 %v112
  %v783 = vunpack.c.h.b16 %v112
  %v784 = vunpack.c.l.b16 %v113
  %v785 = vunpack.c.h.b16 %v113
  %v786 = vunpack.c.l.b16 %v114
  %v787 = vunpack.c.h.b16 %v114
  %v788 = vunpack.c.l.b16 %v115
  %v789 = vunpack.c.h.b16 %v115
  %v790 = vunpack.c.l.b16 %v116
  %v791 = vunpack.c.h.b16 %v116
  %v792 = vunpack.c.l.b16 %v117
  %v793 = vunpack.c.h.b16 %v117
  %v794 = vunpack.c.l.b16 %v118
  %v795 = vunpack.c.h.b16 %v118
  %v796 = vunpack.c.l.b16 %v119
  %v797 = vunpack.c.h.b16 %v119
  %v798 = vunpack.c.l.b16 %v120
  %v799 = vunpack.c.h.b16 %v120
  %v800 = vunpack.c.l.b16 %v121
  %v801 = vunpack.c.h.b16 %v121
  %v802 = vunpack.c.l.b16 %v122
  %v803 = vunpack.c.h.b16 %v122
  %v804 = vunpack.c.l.b16 %v123
  %v805 = vunpack.c.h.b16 %v123
  %v806 = vunpack.c.l.b16 %v124
  %v807 = vunpack.c.h.b16 %v124
  %v808 = vunpack.c.l.b16 %v125
  %v809 = vunpack.c.h.b16 %v125
  %v810 = vunpack.c.l.b16 %v126
  %v811 = vunpack.c.h.b16 %v126
  %v812 = vunpack.c.l.b16 %v127
  %v813 = vunpack.c.h.b16 %v127
  %v814 = vunpack.c.l.b16 %v128
  %v815 = vunpack.c.h.b16 %v128
  %v816 = vunpack.c.l.b16 %v129
  %v817 = vunpack.c.h.b16 %v129
  %v818 = vunpack.c.l.b16 %v130
  %v819 = vunpack.c.h.b16 %v130
  %v820 = vunpack.c.l.b16 %v131
  %v821 = vunpack.c.h.b16 %v131
  %v822 = vunpack.c.l.b16 %v132
  %v823 = vunpack.c.h.b16 %v132
  %v824 = vunpack.c.l.b16 %v133
  %v825 = vunpack.c.h.b16 %v133
  %v826 = vunpack.c.l.b16 %v134
  %v827 = vunpack.c.h.b16 %v134
  %v828 = vunpack.c.l.b16 %v135
  %v829 = vunpack.c.h.b16 %v135
  %v830 = vunpack.c.l.b16 %v136
  %v831 = vunpack.c.h.b16 %v136
  %v832 = vunpack.c.l.b16 %v137
  %v833 = vunpack.c.h.b16 %v137
  %v834 = vunpack.c.l.b16 %v138
  %v835 = vunpack.c.h.b16 %v138
  %v836 = vunpack.c.l.b16 %v139
  %v837 = vunpack.c.h.b16 %v139
  %v838 = vunpack.c.l.b16 %v140
  %v839 = vunpack.c.h.b16 %v140
  %v840 = vunpack.c.l.b16 %v141
  %v841 = vunpack.c.h.b16 %v141
  %v842 = vunpack.c.l.b16 %v142
  %v843 = vunpack.c.h.b16 %v142
  %v844 = vunpack.c.l.b16 %v143
  %v845 = vunpack.c.h.b16 %v143
  %v846 = vunpack.c.l.b16 %v144
  %v847 = vunpack.c.h.b16 %v144
  %v848 = vunpack.c.l.b16 %v145
  %v849 = vunpack.c.h.b16 %v145
  %v850 = vunpack.c.l.b16 %v146
  %v851 = vunpack.c.h.b16 %v146
  %v852 = vunpack.c.l.b16 %v147
  %v853 = vunpack.c.h.b16 %v147
  %v854 = vunpack.c.l.b16 %v148
  %v855 = vunpack.c.h.b16 %v148
  %v856 = vunpack.c.l.b16 %v149
  %v857 = vunpack.c.h.b16 %v149
  %v858 = vunpack.c.l.b16 %v150
  %v859 = vunpack.c.h.b16 %v150
  %v860 = vunpack.c.l.b16 %v151
  %v861 = vunpack.c.h.b16 %v151
  %v862 = vunpack.c.l.b16 %v152
  %v863 = vunpack.c.h.b16 %v152
  %v864 = vunpack.c.l.b16 %v153
  %v865 = vunpack.c.h.b16 %v153
  %v866 = vunpack.c.l.b16 %v154
  %v867 = vunpack.c.h.b16 %v154
  %v868 = vunpack.c.l.b16 %v155
  %v869 = vunpack.c.h.b16 %v155
  %v870 = vunpack.c.l.b16 %v156
  %v871 = vunpack.c.h.b16 %v156
  %v872 = vunpack.c.l.b16 %v157
  %v873 = vunpack.c.h.b16 %v157
  %v874 = vunpack.c.l.b16 %v158
  %v875 = vunpack.c.h.b16 %v158
  %v876 = vunpack.c.l.b16 %v159
  %v877 = vunpack.c.h.b16 %v159
  %v878 = vunpack.c.l.b16 %v160
  %v879 = vunpack.c.h.b16 %v160
  %v880 = vunpack.c.l.b16 %v161
  %v881 = vunpack.c.h.b16 %v161
  %v882 = vunpack.c.l.b16 %v162
  %v883 = vunpack.c.h.b16 %v162
  %v884 = vunpack.c.l.b16 %v163
  %v885 = vunpack.c.h.b16 %v163
  %v886 = vunpack.c.l.b16 %v164
  %v887 = vunpack.c.h.b16 %v164
  %v888 = vunpack.c.l.b16 %v165
  %v889 = vunpack.c.h.b16 %v165
  %v890 = vunpack.c.l.b16 %v166
  %v891 = vunpack.c.h.b16 %v166
  %v892 = vunpack.c.l.b16 %v167
  %v893 = vunpack.c.h.b16 %v167
  %v894 = vunpack.c.l.b16 %v168
  %v895 = vunpack.c.h.b16 %v168
  %v896 = vunpack.c.l.b16 %v169
  %v897 = vunpack.c.h.b16 %v169
  %v898 = vunpack.c.l.b16 %v170
  %v899 = vunpack.c.h.b16 %v170
  %v900 = vunpack.c.l.b16 %v171
  %v901 = vunpack.c.h.b16 %v171
  %v902 = vunpack.c.l.b16 %v172
  %v903 = vunpack.c.h.b16 %v172
  %v904 = vunpack.c.l.b16 %v173
  %v905 = vunpack.c.h.b16 %v173
  %v906 = vunpack.c.l.b16 %v174
  %v907 = vunpack.c.h.b16 %v174
  %v908 = vunpack.c.l.b16 %v175
  %v909 = vunpack.c.h.b16 %v175
  %v910 = vunpack.c.l.b16 %v176
  %v911 = vunpack.c.h.b16 %v176
  %v912 = vunpack.c.l.b16 %v177
  %v913 = vunpack.c.h.b16 %v177
  %v914 = vunpack.c.l.b16 %v178
  %v915 = vunpack.c.h.b16 %v178
  %v916 = vunpack.c.l.b16 %v179
  %v917 = vunpack.c.h.b16 %v179
  %v918 = vunpack.c.l.b16 %v180
  %v919 = vunpack.c.h.b16 %v180
  %v920 = vunpack.c.l.b16 %v181
  %v921 = vunpack.c.h.b16 %v181
  %v922 = vunpack.c.l.b16 %v182
  %v923 = vunpack.c.h.b16 %v182
  %v924 = vunpack.c.l.b16 %v183
  %v925 = vunpack.c.h.b16 %v183
  %v926 = vunpack.c.l.b16 %v184
  %v927 = vunpack.c.h.b16 %v184
  %v928 = vunpack.c.l.b16 %v185
  %v929 = vunpack.c.h.b16 %v185
  %v930 = vunpack.c.l.b16 %v186
  %v931 = vunpack.c.h.b16 %v186
  %v932 = vunpack.c.l.b16 %v187
  %v933 = vunpack.c.h.b16 %v187
  %v934 = vunpack.c.l.b16 %v188
  %v935 = vunpack.c.h.b16 %v188
  %v936 = vunpack.c.l.b16 %v189
  %v937 = vunpack.c.h.b16 %v189
  %v938 = vunpack.c.l.b16 %v190
  %v939 = vunpack.c.h.b16 %v190
  %v940 = vunpack.c.l.b16 %v191
  %v941 = vunpack.c.h.b16 %v191
  %v942 = vunpack.c.l.b16 %v192
  %v943 = vunpack.c.h.b16 %v192
  %v944 = vunpack.c.l.b16 %v193
  %v945 = vunpack.c.h.b16 %v193
  %v946 = vunpack.c.l.b16 %v194
  %v947 = vunpack.c.h.b16 %v194
  %v948 = vunpack.c.l.b16 %v195
  %v949 = vunpack.c.h.b16 %v195
  %v950 = vunpack.c.l.b16 %v196
  %v951 = vunpack.c.h.b16 %v196
  %v952 = vunpack.c.l.b16 %v197
  %v953 = vunpack.c.h.b16 %v197
  %v954 = vunpack.c.l.b16 %v198
  %v955 = vunpack.c.h.b16 %v198
  %v956 = vunpack.c.l.b16 %v199
  %v957 = vunpack.c.h.b16 %v199
  %v958 = vunpack.c.l.b16 %v200
  %v959 = vunpack.c.h.b16 %v200
  %v960 = vunpack.c.l.b16 %v201
  %v961 = vunpack.c.h.b16 %v201
  %v962 = vunpack.c.l.b16 %v202
  %v963 = vunpack.c.h.b16 %v202
  %v964 = vunpack.c.l.b16 %v203
  %v965 = vunpack.c.h.b16 %v203
  %v966 = vunpack.c.l.b16 %v204
  %v967 = vunpack.c.h.b16 %v204
  %v968 = vunpack.c.l.b16 %v205
  %v969 = vunpack.c.h.b16 %v205
  %v970 = vunpack.c.l.b16 %v206
  %v971 = vunpack.c.h.b16 %v206
  %v972 = vunpack.c.l.b16 %v207
  %v973 = vunpack.c.h.b16 %v207
  %v974 = vunpack.c.l.b16 %v208
  %v975 = vunpack.c.h.b16 %v208
  %v976 = vunpack.c.l.b16 %v209
  %v977 = vunpack.c.h.b16 %v209
  %v978 = vunpack.c.l.b16 %v210
  %v979 = vunpack.c.h.b16 %v210
  %v980 = vunpack.c.l.b16 %v211
  %v981 = vunpack.c.h.b16 %v211
  %v982 = vunpack.c.l.b16 %v212
  %v983 = vunpack.c.h.b16 %v212
  %v984 = vunpack.c.l.b16 %v213
  %v985 = vunpack.c.h.b16 %v213
  %v986 = vunpack.c.l.b16 %v214
  %v987 = vunpack.c.h.b16 %v214
  %v988 = vunpack.c.l.b16 %v215
  %v989 = vunpack.c.h.b16 %v215
  %v990 = vunpack.c.l.b16 %v216
  %v991 = vunpack.c.h.b16 %v216
  %v992 = vunpack.c.l.b16 %v217
  %v993 = vunpack.c.h.b16 %v217
  %v994 = vunpack.c.l.b16 %v218
  %v995 = vunpack.c.h.b16 %v218
  %v996 = vunpack.c.l.b16 %v219
  %v997 = vunpack.c.h.b16 %v219
  %v998 = vunpack.c.l.b16 %v220
  %v999 = vunpack.c.h.b16 %v220
  %v1000 = vunpack.c.l.b16 %v221
  %v1001 = vunpack.c.h.b16 %v221
  %v1002 = vunpack.c.l.b16 %v222
  %v1003 = vunpack.c.h.b16 %v222
  %v1004 = vunpack.c.l.b16 %v223
  %v1005 = vunpack.c.h.b16 %v223
  %v1006 = vunpack.c.l.b16 %v224
  %v1007 = vunpack.c.h.b16 %v224
  %v1008 = vunpack.c.l.b16 %v225
  %v1009 = vunpack.c.h.b16 %v225
  %v1010 = vunpack.c.l.b16 %v226
  %v1011 = vunpack.c.h.b16 %v226
  %v1012 = vunpack.c.l.b16 %v227
  %v1013 = vunpack.c.h.b16 %v227
  %v1014 = vunpack.c.l.b16 %v228
  %v1015 = vunpack.c.h.b16 %v228
  %v1016 = vunpack.c.l.b16 %v229
  %v1017 = vunpack.c.h.b16 %v229
  %v1018 = vunpack.c.l.b16 %v230
  %v1019 = vunpack.c.h.b16 %v230
  %v1020 = vunpack.c.l.b16 %v231
  %v1021 = vunpack.c.h.b16 %v231
  %v1022 = vunpack.c.l.b16 %v232
  %v1023 = vunpack.c.h.b16 %v232
  %v1024 = vunpack.c.l.b16 %v233
  %v1025 = vunpack.c.h.b16 %v233
  %v1026 = vunpack.c.l.b16 %v234
  %v1027 = vunpack.c.h.b16 %v234
  %v1028 = vunpack.c.l.b16 %v235
  %v1029 = vunpack.c.h.b16 %v235
  %v1030 = vunpack.c.l.b16 %v236
  %v1031 = vunpack.c.h.b16 %v236
  %v1032 = vunpack.c.l.b16 %v237
  %v1033 = vunpack.c.h.b16 %v237
  %v1034 = vunpack.c.l.b16 %v238
  %v1035 = vunpack.c.h.b16 %v238
  %v1036 = vunpack.c.l.b16 %v239
  %v1037 = vunpack.c.h.b16 %v239
  %v1038 = vunpack.c.l.b16 %v240
  %v1039 = vunpack.c.h.b16 %v240
  %v1040 = vunpack.c.l.b16 %v241
  %v1041 = vunpack.c.h.b16 %v241
  %v1042 = vunpack.c.l.b16 %v242
  %v1043 = vunpack.c.h.b16 %v242
  %v1044 = vunpack.c.l.b16 %v243
  %v1045 = vunpack.c.h.b16 %v243
  %v1046 = vunpack.c.l.b16 %v244
  %v1047 = vunpack.c.h.b16 %v244
  %v1048 = vunpack.c.l.b16 %v245
  %v1049 = vunpack.c.h.b16 %v245
  %v1050 = vunpack.c.l.b16 %v246
  %v1051 = vunpack.c.h.b16 %v246
  %v1052 = vunpack.c.l.b16 %v247
  %v1053 = vunpack.c.h.b16 %v247
  %v1054 = vunpack.c.l.b16 %v248
  %v1055 = vunpack.c.h.b16 %v248
  %v1056 = vunpack.c.l.b16 %v249
  %v1057 = vunpack.c.h.b16 %v249
  %v1058 = vunpack.c.l.b16 %v250
  %v1059 = vunpack.c.h.b16 %v250
  %v1060 = vunpack.c.l.b16 %v251
  %v1061 = vunpack.c.h.b16 %v251
  %v1062 = vunpack.c.l.b16 %v252
  %v1063 = vunpack.c.h.b16 %v252
  %v1064 = vunpack.c.l.b16 %v253
  %v1065 = vunpack.c.h.b16 %v253
  %v1066 = vunpack.c.l.b16 %v254
  %v1067 = vunpack.c.h.b16 %v254
  %v1068 = vunpack.c.l.b16 %v255
  %v1069 = vunpack.c.h.b16 %v255
  %v1070 = vunpack.c.l.b16 %v256
  %v1071 = vunpack.c.h.b16 %v256
  %v1072 = vunpack.c.l.b16 %v257
  %v1073 = vunpack.c.h.b16 %v257
  %v1074 = vunpack.c.l.b16 %v258
  %v1075 = vunpack.c.h.b16 %v258
  %v1076 = vunpack.c.l.b16 %v259
  %v1077 = vunpack.c.h.b16 %v259
  %v1078 = vunpack.c.l.b16 %v260
  %v1079 = vunpack.c.h.b16 %v260
  %v1080 = vunpack.c.l.b16 %v261
  %v1081 = vunpack.c.h.b16 %v261
  %v1082 = vunpack.c.l.b16 %v262
  %v1083 = vunpack.c.h.b16 %v262
  %v1084 = vunpack.c.l.b16 %v263
  %v1085 = vunpack.c.h.b16 %v263
  %v1086 = vunpack.c.l.b16 %v264
  %v1087 = vunpack.c.h.b16 %v264
  %v1088 = vunpack.c.l.b16 %v265
  %v1089 = vunpack.c.h.b16 %v265
  %v1090 = vunpack.c.l.b16 %v266
  %v1091 = vunpack.c.h.b16 %v266
  %v1092 = vunpack.c.l.b16 %v267
  %v1093 = vunpack.c.h.b16 %v267
  %v1094 = vunpack.c.l.b16 %v268
  %v1095 = vunpack.c.h.b16 %v268
  %v1096 = vunpack.c.l.b16 %v269
  %v1097 = vunpack.c.h.b16 %v269
  %v1098 = vunpack.c.l.b16 %v270
  %v1099 = vunpack.c.h.b16 %v270
  %v1100 = vunpack.c.l.b16 %v271
  %v1101 = vunpack.c.h.b16 %v271
  %v1102 = vunpack.c.l.b16 %v272
  %v1103 = vunpack.c.h.b16 %v272
  %v1104 = vunpack.c.l.b16 %v273
  %v1105 = vunpack.c.h.b16 %v273
  %v1106 = vunpack.c.l.b16 %v274
  %v1107 = vunpack.c.h.b16 %v274
  %v1108 = vunpack.c.l.b16 %v275
  %v1109 = vunpack.c.h.b16 %v275
  %v1110 = vunpack.c.l.b16 %v276
  %v1111 = vunpack.c.h.b16 %v276
  %v1112 = vunpack.c.l.b16 %v277
  %v1113 = vunpack.c.h.b16 %v277
  %v1114 = vpack.c.b16 %v604, %v602
  %v1115 = vpack.c.b16 %v605, %v603
  %v1116 = vpack.c.b16 %v608, %v606
  %v1117 = vpack.c.b16 %v609, %v607
  %v1118 = vpack.c.b16 %v612, %v610
  %v1119 = vpack.c.b16 %v613, %v611
  %v1120 = vpack.c.b16 %v616, %v614
  %v1121 = vpack.c.b16 %v617, %v615
  %v1122 = vpack.c.b16 %v620, %v618
  %v1123 = vpack.c.b16 %v621, %v619
  %v1124 = vpack.c.b16 %v624, %v622
  %v1125 = vpack.c.b16 %v625, %v623
  %v1126 = vpack.c.b16 %v628, %v626
  %v1127 = vpack.c.b16 %v629, %v627
  %v1128 = vpack.c.b16 %v632, %v630
  %v1129 = vpack.c.b16 %v633, %v631
  %v1130 = vpack.c.b16 %v636, %v634
  %v1131 = vpack.c.b16 %v637, %v635
  %v1132 = vpack.c.b16 %v640, %v638
  %v1133 = vpack.c.b16 %v641, %v639
  %v1134 = vpack.c.b16 %v644, %v642
  %v1135 = vpack.c.b16 %v645, %v643
  %v1136 = vpack.c.b16 %v648, %v646
  %v1137 = vpack.c.b16 %v649, %v647
  %v1138 = vpack.c.b16 %v652, %v650
  %v1139 = vpack.c.b16 %v653, %v651
  %v1140 = vpack.c.b16 %v656, %v654
  %v1141 = vpack.c.b16 %v657, %v655
  %v1142 = vpack.c.b16 %v660, %v658
  %v1143 = vpack.c.b16 %v661, %v659
  %v1144 = vpack.c.b16 %v664, %v662
  %v1145 = vpack.c.b16 %v665, %v663
  %v1146 = vpack.c.b16 %v668, %v666
  %v1147 = vpack.c.b16 %v669, %v667
  %v1148 = vpack.c.b16 %v672, %v670
  %v1149 = vpack.c.b16 %v673, %v671
  %v1150 = vpack.c.b16 %v676, %v674
  %v1151 = vpack.c.b16 %v677, %v675
  %v1152 = vpack.c.b16 %v680, %v678
  %v1153 = vpack.c.b16 %v681, %v679
  %v1154 = vpack.c.b16 %v684, %v682
  %v1155 = vpack.c.b16 %v685, %v683
  %v1156 = vpack.c.b16 %v688, %v686
  %v1157 = vpack.c.b16 %v689, %v687
  %v1158 = vpack.c.b16 %v692, %v690
  %v1159 = vpack.c.b16 %v693, %v691
  %v1160 = vpack.c.b16 %v696, %v694
  %v1161 = vpack.c.b16 %v697, %v695
  %v1162 = vpack.c.b16 %v700, %v698
  %v1163 = vpack.c.b16 %v701, %v699
  %v1164 = vpack.c.b16 %v704, %v702
  %v1165 = vpack.c.b16 %v705, %v703
  %v1166 = vpack.c.b16 %v708, %v706
  %v1167 = vpack.c.b16 %v709, %v707
  %v1168 = vpack.c.b16 %v712, %v710
  %v1169 = vpack.c.b16 %v713, %v711
  %v1170 = vpack.c.b16 %v716, %v714
  %v1171 = vpack.c.b16 %v717, %v715
  %v1172 = vpack.c.b16 %v720, %v718
  %v1173 = vpack.c.b16 %v721, %v719
  %v1174 = vpack.c.b16 %v724, %v722
  %v1175 = vpack.c.b16 %v725, %v723
  %v1176 = vpack.c.b16 %v728, %v726
  %v1177 = vpack.c.b16 %v729, %v727
  %v1178 = vpack.c.b16 %v732, %v730
  %v1179 = vpack.c.b16 %v733, %v731
  %v1180 = vpack.c.b16 %v736, %v734
  %v1181 = vpack.c.b16 %v737, %v735
  %v1182 = vpack.c.b16 %v740, %v738
  %v1183 = vpack.c.b16 %v741, %v739
  %v1184 = vpack.c.b16 %v744, %v742
  %v1185 = vpack.c.b16 %v745, %v743
  %v1186 = vpack.c.b16 %v748, %v746
  %v1187 = vpack.c.b16 %v749, %v747
  %v1188 = vpack.c.b16 %v752, %v750
  %v1189 = vpack.c.b16 %v753, %v751
  %v1190 = vpack.c.b16 %v756, %v754
  %v1191 = vpack.c.b16 %v757, %v755
  %v1192 = vpack.c.b16 %v760, %v758
  %v1193 = vpack.c.b16 %v761, %v759
  %v1194 = vpack.c.b16 %v764, %v762
  %v1195 = vpack.c.b16 %v765, %v763
  %v1196 = vpack.c.b16 %v768, %v766
  %v1197 = vpack.c.b16 %v769, %v767
  %v1198 = vpack.c.b16 %v772, %v770
  %v1199 = vpack.c.b16 %v773, %v771
  %v1200 = vpack.c.b16 %v776, %v774
  %v1201 = vpack.c.b16 %v777, %v775
  %v1202 = vpack.c.b16 %v780, %v778
  %v1203 = vpack.c.b16 %v781, %v779
  %v1204 = vpack.c.b16 %v784, %v782
  %v1205 = vpack.c.b16 %v785, %v783
  %v1206 = vpack.c.b16 %v788, %v786
  %v1207 = vpack.c.b16 %v789, %v787
  %v1208 = vpack.c.b16 %v792, %v790
  %v1209 = vpack.c.b16 %v793, %v791
  %v1210 = vpack.c.b16 %v796, %v794
  %v1211 = vpack.c.b16 %v797, %v795
  %v1212 = vpack.c.b16 %v800, %v798
  %v1213 = vpack.c.b16 %v801, %v799
  %v1214 = vpack.c.b16 %v804, %v802
  %v1215 = vpack.c.b16 %v805, %v803
  %v1216 = vpack.c.b16 %v808, %v806
  %v1217 = vpack.c.b16 %v809, %v807
  %v1218 = vpack.c.b16 %v812, %v810
  %v1219 = vpack.c.b16 %v813, %v811
  %v1220 = vpack.c.b16 %v816, %v814
  %v1221 = vpack.c.b16 %v817, %v815
  %v1222 = vpack.c.b16 %v820, %v818
  %v1223 = vpack.c.b16 %v821, %v819
  %v1224 = vpack.c.b16 %v824, %v822
  %v1225 = vpack.c.b16 %v825, %v823
  %v1226 = vpack.c.b16 %v828, %v826
  %v1227 = vpack.c.b16 %v829, %v827
  %v1228 = vpack.c.b16 %v832, %v830
  %v1229 = vpack.c.b16 %v833, %v831
  %v1230 = vpack.c.b16 %v836, %v834
  %v1231 = vpack.c.b16 %v837, %v835
  %v1232 = vpack.c.b16 %v840, %v838
  %v1233 = vpack.c.b16 %v841, %v839
  %v1234 = vpack.c.b16 %v844, %v842
  %v1235 = vpack.c.b16 %v845, %v843
  %v1236 = vpack.c.b16 %v848, %v846
  %v1237 = vpack.c.b16 %v849, %v847
  %v1238 = vpack.c.b16 %v852, %v850
  %v1239 = vpack.c.b16 %v853, %v851
  %v1240 = vpack.c.b16 %v856, %v854
  %v1241 = vpack.c.b16 %v857, %v855
  %v1242 = vpack.c.b16 %v860, %v858
  %v1243 = vpack.c.b16 %v861, %v859
  %v1244 = vpack.c.b16 %v864, %v862
  %v1245 = vpack.c.b16 %v865, %v863
  %v1246 = vpack.c.b16 %v868, %v866
  %v1247 = vpack.c.b16 %v869, %v867
  %v1248 = vpack.c.b16 %v872, %v870
  %v1249 = vpack.c.b16 %v873, %v871
  %v1250 = vpack.c.b16 %v876, %v874
  %v1251 = vpack.c.b16 %v877, %v875
  %v1252 = vpack.c.b16 %v880, %v878
  %v1253 = vpack.c.b16 %v881, %v879
  %v1254 = vpack.c.b16 %v884, %v882
  %v1255 = vpack.c.b16 %v885, %v883
  %v1256 = vpack.c.b16 %v888, %v886
  %v1257 = vpack.c.b16 %v889, %v887
  %v1258 = vpack.c.b16 %v892, %v890
  %v1259 = vpack.c.b16 %v893, %v891
  %v1260 = vpack.c.b16 %v896, %v894
  %v1261 = vpack.c.b16 %v897, %v895
  %v1262 = vpack.c.b16 %v900, %v898
  %v1263 = vpack.c.b16 %v901, %v899
  %v1264 = vpack.c.b16 %v904, %v902
  %v1265 = vpack.c.b16 %v905, %v903
  %v1266 = vpack.c.b16 %v908, %v906
  %v1267 = vpack.c.b16 %v909, %v907
  %v1268 = vpack.c.b16 %v912, %v910
  %v1269 = vpack.c.b16 %v913, %v911
  %v1270 = vpack.c.b16 %v916, %v914
  %v1271 = vpack.c.b16 %v917, %v915
  %v1272 = vpack.c.b16 %v920, %v918
  %v1273 = vpack.c.b16 %v921, %v919
  %v1274 = vpack.c.b16 %v924, %v922
  %v1275 = vpack.c.b16 %v925, %v923
  %v1276 = vpack.c.b16 %v928, %v926
  %v1277 = vpack.c.b16 %v929, %v927
  %v1278 = vpack.c.b16 %v932, %v930
  %v1279 = vpack.c.b16 %v933, %v931
  %v1280 = vpack.c.b16 %v936, %v934
  %v1281 = vpack.c.b16 %v937, %v935
  %v1282 = vpack.c.b16 %v940, %v938
  %v1283 = vpack.c.b16 %v941, %v939
  %v1284 = vpack.c.b16 %v944, %v942
  %v1285 = vpack.c.b16 %v945, %v943
  %v1286 = vpack.c.b16 %v948, %v946
  %v1287 = vpack.c.b16 %v949, %v947
  %v1288 = vpack.c.b16 %v952, %v950
  %v1289 = vpack.c.b16 %v953, %v951
  %v1290 = vpack.c.b16 %v956, %v954
  %v1291 = vpack.c.b16 %v957, %v955
  %v1292 = vpack.c.b16 %v960, %v958
  %v1293 = vpack.c.b16 %v961, %v959
  %v1294 = vpack.c.b16 %v964, %v962
  %v1295 = vpack.c.b16 %v965, %v963
  %v1296 = vpack.c.b16 %v968, %v966
  %v1297 = vpack.c.b16 %v969, %v967
  %v1298 = vpack.c.b16 %v972, %v970
  %v1299 = vpack.c.b16 %v973, %v971
  %v1300 = vpack.c.b16 %v976, %v974
  %v1301 = vpack.c.b16 %v977, %v975
  %v1302 = vpack.c.b16 %v980, %v978
  %v1303 = vpack.c.b16 %v981, %v979
  %v1304 = vpack.c.b16 %v984, %v982
  %v1305 = vpack.c.b16 %v985, %v983
  %v1306 = vpack.c.b16 %v988, %v986
  %v1307 = vpack.c.b16 %v989, %v987
  %v1308 = vpack.c.b16 %v992, %v990
  %v1309 = vpack.c.b16 %v993, %v991
  %v1310 = vpack.c.b16 %v996, %v994
  %v1311 = vpack.c.b16 %v997, %v995
  %v1312 = vpack.c.b16 %v1000, %v998
  %v1313 = vpack.c.b16 %v1001, %v999
  %v1314 = vpack.c.b16 %v1004, %v1002
  %v1315 = vpack.c.b16 %v1005, %v1003
  %v1316 = vpack.c.b16 %v1008, %v1006
  %v1317 = vpack.c.b16 %v1009, %v1007
  %v1318 = vpack.c.b16 %v1012, %v1010
  %v1319 = vpack.c.b16 %v1013, %v1011
  %v1320 = vpack.c.b16 %v1016, %v1014
  %v1321 = vpack.c.b16 %v1017, %v1015
  %v1322 = vpack.c.b16 %v1020, %v1018
  %v1323 = vpack.c.b16 %v1021, %v1019
  %v1324 = vpack.c.b16 %v1024, %v1022
  %v1325 = vpack.c.b16 %v1025, %v1023
  %v1326 = vpack.c.b16 %v1028, %v1026
  %v1327 = vpack.c.b16 %v1029, %v1027
  %v1328 = vpack.c.b16 %v1032, %v1030
  %v1329 = vpack.c.b16 %v1033, %v1031
  %v1330 = vpack.c.b16 %v1036, %v1034
  %v1331 = vpack.c.b16 %v1037, %v1035
  %v1332 = vpack.c.b16 %v1040, %v1038
  %v1333 = vpack.c.b16 %v1041, %v1039
  %v1334 = vpack.c.b16 %v1044, %v1042
  %v1335 = vpack.c.b16 %v1045, %v1043
  %v1336 = vpack.c.b16 %v1048, %v1046
  %v1337 = vpack.c.b16 %v1049, %v1047
  %v1338 = vpack.c.b16 %v1052, %v1050
  %v1339 = vpack.c.b16 %v1053, %v1051
  %v1340 = vpack.c.b16 %v1056, %v1054
  %v1341 = vpack.c.b16 %v1057, %v1055
  %v1342 = vpack.c.b16 %v1060, %v1058
  %v1343 = vpack.c.b16 %v1061, %v1059
  %v1344 = vpack.c.b16 %v1064, %v1062
  %v1345 = vpack.c.b16 %v1065, %v1063
  %v1346 = vpack.c.b16 %v1068, %v1066
  %v1347 = vpack.c.b16 %v1069, %v1067
  %v1348 = vpack.c.b16 %v1072, %v1070
  %v1349 = vpack.c.b16 %v1073, %v1071
  %v1350 = vpack.c.b16 %v1076, %v1074
  %v1351 = vpack.c.b16 %v1077, %v1075
  %v1352 = vpack.c.b16 %v1080, %v1078
  %v1353 = vpack.c.b16 %v1081, %v1079
  %v1354 = vpack.c.b16 %v1084, %v1082
  %v1355 = vpack.c.b16 %v1085, %v1083
  %v1356 = vpack.c.b16 %v1088, %v1086
  %v1357 = vpack.c.b16 %v1089, %v1087
  %v1358 = vpack.c.b16 %v1092, %v1090
  %v1359 = vpack.c.b16 %v1093, %v1091
  %v1360 = vpack.c.b16 %v1096, %v1094
  %v1361 = vpack.c.b16 %v1097, %v1095
  %v1362 = vpack.c.b16 %v1100, %v1098
  %v1363 = vpack.c.b16 %v1101, %v1099
  %v1364 = vpack.c.b16 %v1104, %v1102
  %v1365 = vpack.c.b16 %v1105, %v1103
  %v1366 = vpack.c.b16 %v1108, %v1106
  %v1367 = vpack.c.b16 %v1109, %v1107
  %v1368 = vpack.c.b16 %v1112, %v1110
  %v1369 = vpack.c.b16 %v1113, %v1111
  %1626 = vmatprep.subr.bf16.mxu0 %v1115
  %1627 = vmatpush1.bf16.msra.mxu0 %v1114
  %1628 = vmatprep.subr.bf16.mxu0 %v1117
  %1629 = vmatpush1.bf16.msra.mxu0 %v1116
  %1630 = vmatprep.subr.bf16.mxu0 %v1119
  %1631 = vmatpush1.bf16.msra.mxu0 %v1118
  %1632 = vmatprep.subr.bf16.mxu0 %v1121
  %1633 = vmatpush1.bf16.msra.mxu0 %v1120
  %1634 = vmatprep.subr.bf16.mxu0 %v1123
  %1635 = vmatpush1.bf16.msra.mxu0 %v1122
  %1636 = vmatprep.subr.bf16.mxu0 %v1125
  %1637 = vmatpush1.bf16.msra.mxu0 %v1124
  %1638 = vmatprep.subr.bf16.mxu0 %v1127
  %1639 = vmatpush1.bf16.msra.mxu0 %v1126
  %1640 = vmatprep.subr.bf16.mxu0 %v1129
  %1641 = vmatpush1.bf16.msra.mxu0 %v1128
  %1642 = vmatprep.subr.bf16.mxu0 %v1131
  %1643 = vmatpush1.bf16.msra.mxu0 %v1130
  %1644 = vmatprep.subr.bf16.mxu0 %v1133
  %1645 = vmatpush1.bf16.msra.mxu0 %v1132
  %1646 = vmatprep.subr.bf16.mxu0 %v1135
  %1647 = vmatpush1.bf16.msra.mxu0 %v1134
  %1648 = vmatprep.subr.bf16.mxu0 %v1137
  %1649 = vmatpush1.bf16.msra.mxu0 %v1136
  %1650 = vmatprep.subr.bf16.mxu0 %v1139
  %1651 = vmatpush1.bf16.msra.mxu0 %v1138
  %1652 = vmatprep.subr.bf16.mxu0 %v1141
  %1653 = vmatpush1.bf16.msra.mxu0 %v1140
  %1654 = vmatprep.subr.bf16.mxu0 %v1143
  %1655 = vmatpush1.bf16.msra.mxu0 %v1142
  %1656 = vmatprep.subr.bf16.mxu0 %v1145
  %1657 = vmatpush1.bf16.msra.mxu0 %v1144
  %1658 = vmatprep.mubr.bf16.mxu0 %v315
  %1659 = vmatmul.mubr.bf16.gmra.mrb[0].mxu0 %v314
  %v1660 = vpop.f32.mrb[0].mxu0
  %v1661 = vadd.f32 %v283, %v1660
  %v1662 = vpop.f32.mrb[0].mxu0
  %v1663 = vadd.f32 %v287, %v1662
  %v1664 = vpop.f32.mrb[0].mxu0
  %v1665 = vpop.f32.mrb[0].mxu0
  %1666 = vdwg.mxu0
  %1667 = vmatprep.subr.bf16.mxu0 %v1147
  %1668 = vmatpush1.bf16.msra.mxu0 %v1146
  %1669 = vmatprep.subr.bf16.mxu0 %v1149
  %1670 = vmatpush1.bf16.msra.mxu0 %v1148
  %1671 = vmatprep.subr.bf16.mxu0 %v1151
  %1672 = vmatpush1.bf16.msra.mxu0 %v1150
  %1673 = vmatprep.subr.bf16.mxu0 %v1153
  %1674 = vmatpush1.bf16.msra.mxu0 %v1152
  %1675 = vmatprep.subr.bf16.mxu0 %v1155
  %1676 = vmatpush1.bf16.msra.mxu0 %v1154
  %1677 = vmatprep.subr.bf16.mxu0 %v1157
  %1678 = vmatpush1.bf16.msra.mxu0 %v1156
  %1679 = vmatprep.subr.bf16.mxu0 %v1159
  %1680 = vmatpush1.bf16.msra.mxu0 %v1158
  %1681 = vmatprep.subr.bf16.mxu0 %v1161
  %1682 = vmatpush1.bf16.msra.mxu0 %v1160
  %1683 = vmatprep.subr.bf16.mxu0 %v1163
  %1684 = vmatpush1.bf16.msra.mxu0 %v1162
  %1685 = vmatprep.subr.bf16.mxu0 %v1165
  %1686 = vmatpush1.bf16.msra.mxu0 %v1164
  %1687 = vmatprep.subr.bf16.mxu0 %v1167
  %1688 = vmatpush1.bf16.msra.mxu0 %v1166
  %1689 = vmatprep.subr.bf16.mxu0 %v1169
  %1690 = vmatpush1.bf16.msra.mxu0 %v1168
  %1691 = vmatprep.subr.bf16.mxu0 %v1171
  %1692 = vmatpush1.bf16.msra.mxu0 %v1170
  %1693 = vmatprep.subr.bf16.mxu0 %v1173
  %1694 = vmatpush1.bf16.msra.mxu0 %v1172
  %1695 = vmatprep.subr.bf16.mxu0 %v1175
  %1696 = vmatpush1.bf16.msra.mxu0 %v1174
  %1697 = vmatprep.subr.bf16.mxu0 %v1177
  %1698 = vmatpush1.bf16.msra.mxu0 %v1176
  %1699 = vmatprep.mubr.bf16.mxu0 %v317
  %1700 = vmatmul.mubr.bf16.gmra.mrb[0].mxu0 %v316
  %v1701 = vpop.f32.mrb[0].mxu0
  %v1702 = vadd.f32 %v1661, %v1701
  %v1703 = vpop.f32.mrb[0].mxu0
  %v1704 = vadd.f32 %v1663, %v1703
  %v1705 = vpop.f32.mrb[0].mxu0
  %v1706 = vpop.f32.mrb[0].mxu0
  %1707 = vdwg.mxu0
  %1708 = vmatprep.subr.bf16.mxu0 %v1179
  %1709 = vmatpush1.bf16.msra.mxu0 %v1178
  %1710 = vmatprep.subr.bf16.mxu0 %v1181
  %1711 = vmatpush1.bf16.msra.mxu0 %v1180
  %1712 = vmatprep.subr.bf16.mxu0 %v1183
  %1713 = vmatpush1.bf16.msra.mxu0 %v1182
  %1714 = vmatprep.subr.bf16.mxu0 %v1185
  %1715 = vmatpush1.bf16.msra.mxu0 %v1184
  %1716 = vmatprep.subr.bf16.mxu0 %v1187
  %1717 = vmatpush1.bf16.msra.mxu0 %v1186
  %1718 = vmatprep.subr.bf16.mxu0 %v1189
  %1719 = vmatpush1.bf16.msra.mxu0 %v1188
  %1720 = vmatprep.subr.bf16.mxu0 %v1191
  %1721 = vmatpush1.bf16.msra.mxu0 %v1190
  %1722 = vmatprep.subr.bf16.mxu0 %v1193
  %1723 = vmatpush1.bf16.msra.mxu0 %v1192
  %1724 = vmatprep.subr.bf16.mxu0 %v1195
  %1725 = vmatpush1.bf16.msra.mxu0 %v1194
  %1726 = vmatprep.subr.bf16.mxu0 %v1197
  %1727 = vmatpush1.bf16.msra.mxu0 %v1196
  %1728 = vmatprep.subr.bf16.mxu0 %v1199
  %1729 = vmatpush1.bf16.msra.mxu0 %v1198
  %1730 = vmatprep.subr.bf16.mxu0 %v1201
  %1731 = vmatpush1.bf16.msra.mxu0 %v1200
  %1732 = vmatprep.subr.bf16.mxu0 %v1203
  %1733 = vmatpush1.bf16.msra.mxu0 %v1202
  %1734 = vmatprep.subr.bf16.mxu0 %v1205
  %1735 = vmatpush1.bf16.msra.mxu0 %v1204
  %1736 = vmatprep.subr.bf16.mxu0 %v1207
  %1737 = vmatpush1.bf16.msra.mxu0 %v1206
  %1738 = vmatprep.subr.bf16.mxu0 %v1209
  %1739 = vmatpush1.bf16.msra.mxu0 %v1208
  %1740 = vmatprep.mubr.bf16.mxu0 %v319
  %1741 = vmatmul.mubr.bf16.gmra.mrb[0].mxu0 %v318
  %v1742 = vpop.f32.mrb[0].mxu0
  %v1743 = vadd.f32 %v1702, %v1742
  %v1744 = vpop.f32.mrb[0].mxu0
  %v1745 = vadd.f32 %v1704, %v1744
  %v1746 = vpop.f32.mrb[0].mxu0
  %v1747 = vpop.f32.mrb[0].mxu0
  %1748 = vdwg.mxu0
  %1749 = vmatprep.subr.bf16.mxu0 %v1211
  %1750 = vmatpush1.bf16.msra.mxu0 %v1210
  %1751 = vmatprep.subr.bf16.mxu0 %v1213
  %1752 = vmatpush1.bf16.msra.mxu0 %v1212
  %1753 = vmatprep.subr.bf16.mxu0 %v1215
  %1754 = vmatpush1.bf16.msra.mxu0 %v1214
  %1755 = vmatprep.subr.bf16.mxu0 %v1217
  %1756 = vmatpush1.bf16.msra.mxu0 %v1216
  %1757 = vmatprep.subr.bf16.mxu0 %v1219
  %1758 = vmatpush1.bf16.msra.mxu0 %v1218
  %1759 = vmatprep.subr.bf16.mxu0 %v1221
  %1760 = vmatpush1.bf16.msra.mxu0 %v1220
  %1761 = vmatprep.subr.bf16.mxu0 %v1223
  %1762 = vmatpush1.bf16.msra.mxu0 %v1222
  %1763 = vmatprep.subr.bf16.mxu0 %v1225
  %1764 = vmatpush1.bf16.msra.mxu0 %v1224
  %1765 = vmatprep.subr.bf16.mxu0 %v1227
  %1766 = vmatpush1.bf16.msra.mxu0 %v1226
  %1767 = vmatprep.subr.bf16.mxu0 %v1229
  %1768 = vmatpush1.bf16.msra.mxu0 %v1228
  %1769 = vmatprep.subr.bf16.mxu0 %v1231
  %1770 = vmatpush1.bf16.msra.mxu0 %v1230
  %1771 = vmatprep.subr.bf16.mxu0 %v1233
  %1772 = vmatpush1.bf16.msra.mxu0 %v1232
  %1773 = vmatprep.subr.bf16.mxu0 %v1235
  %1774 = vmatpush1.bf16.msra.mxu0 %v1234
  %1775 = vmatprep.subr.bf16.mxu0 %v1237
  %1776 = vmatpush1.bf16.msra.mxu0 %v1236
  %1777 = vmatprep.subr.bf16.mxu0 %v1239
  %1778 = vmatpush1.bf16.msra.mxu0 %v1238
  %1779 = vmatprep.subr.bf16.mxu0 %v1241
  %1780 = vmatpush1.bf16.msra.mxu0 %v1240
  %1781 = vmatprep.mubr.bf16.mxu0 %v321
  %1782 = vmatmul.mubr.bf16.gmra.mrb[0].mxu0 %v320
  %v1783 = vpop.f32.mrb[0].mxu0
  %v1784 = vadd.f32 %v1743, %v1783
  %v1785 = vpop.f32.mrb[0].mxu0
  %v1786 = vadd.f32 %v1745, %v1785
  %v1787 = vpop.f32.mrb[0].mxu0
  %v1788 = vpop.f32.mrb[0].mxu0
  %1789 = vdwg.mxu0
  %1790 = vmatprep.subr.bf16.mxu0 %v1243
  %1791 = vmatpush1.bf16.msra.mxu0 %v1242
  %1792 = vmatprep.subr.bf16.mxu0 %v1245
  %1793 = vmatpush1.bf16.msra.mxu0 %v1244
  %1794 = vmatprep.subr.bf16.mxu0 %v1247
  %1795 = vmatpush1.bf16.msra.mxu0 %v1246
  %1796 = vmatprep.subr.bf16.mxu0 %v1249
  %1797 = vmatpush1.bf16.msra.mxu0 %v1248
  %1798 = vmatprep.subr.bf16.mxu0 %v1251
  %1799 = vmatpush1.bf16.msra.mxu0 %v1250
  %1800 = vmatprep.subr.bf16.mxu0 %v1253
  %1801 = vmatpush1.bf16.msra.mxu0 %v1252
  %1802 = vmatprep.subr.bf16.mxu0 %v1255
  %1803 = vmatpush1.bf16.msra.mxu0 %v1254
  %1804 = vmatprep.subr.bf16.mxu0 %v1257
  %1805 = vmatpush1.bf16.msra.mxu0 %v1256
  %1806 = vmatprep.subr.bf16.mxu0 %v1259
  %1807 = vmatpush1.bf16.msra.mxu0 %v1258
  %1808 = vmatprep.subr.bf16.mxu0 %v1261
  %1809 = vmatpush1.bf16.msra.mxu0 %v1260
  %1810 = vmatprep.subr.bf16.mxu0 %v1263
  %1811 = vmatpush1.bf16.msra.mxu0 %v1262
  %1812 = vmatprep.subr.bf16.mxu0 %v1265
  %1813 = vmatpush1.bf16.msra.mxu0 %v1264
  %1814 = vmatprep.subr.bf16.mxu0 %v1267
  %1815 = vmatpush1.bf16.msra.mxu0 %v1266
  %1816 = vmatprep.subr.bf16.mxu0 %v1269
  %1817 = vmatpush1.bf16.msra.mxu0 %v1268
  %1818 = vmatprep.subr.bf16.mxu0 %v1271
  %1819 = vmatpush1.bf16.msra.mxu0 %v1270
  %1820 = vmatprep.subr.bf16.mxu0 %v1273
  %1821 = vmatpush1.bf16.msra.mxu0 %v1272
  %1822 = vmatprep.mubr.bf16.mxu0 %v323
  %1823 = vmatmul.mubr.bf16.gmra.mrb[0].mxu0 %v322
  %v1824 = vpop.f32.mrb[0].mxu0
  %v1825 = vadd.f32 %v1784, %v1824
  %v1826 = vpop.f32.mrb[0].mxu0
  %v1827 = vadd.f32 %v1786, %v1826
  %v1828 = vpop.f32.mrb[0].mxu0
  %v1829 = vpop.f32.mrb[0].mxu0
  %1830 = vdwg.mxu0
  %1831 = vmatprep.subr.bf16.mxu0 %v1275
  %1832 = vmatpush1.bf16.msra.mxu0 %v1274
  %1833 = vmatprep.subr.bf16.mxu0 %v1277
  %1834 = vmatpush1.bf16.msra.mxu0 %v1276
  %1835 = vmatprep.subr.bf16.mxu0 %v1279
  %1836 = vmatpush1.bf16.msra.mxu0 %v1278
  %1837 = vmatprep.subr.bf16.mxu0 %v1281
  %1838 = vmatpush1.bf16.msra.mxu0 %v1280
  %1839 = vmatprep.subr.bf16.mxu0 %v1283
  %1840 = vmatpush1.bf16.msra.mxu0 %v1282
  %1841 = vmatprep.subr.bf16.mxu0 %v1285
  %1842 = vmatpush1.bf16.msra.mxu0 %v1284
  %1843 = vmatprep.subr.bf16.mxu0 %v1287
  %1844 = vmatpush1.bf16.msra.mxu0 %v1286
  %1845 = vmatprep.subr.bf16.mxu0 %v1289
  %1846 = vmatpush1.bf16.msra.mxu0 %v1288
  %1847 = vmatprep.subr.bf16.mxu0 %v1291
  %1848 = vmatpush1.bf16.msra.mxu0 %v1290
  %1849 = vmatprep.subr.bf16.mxu0 %v1293
  %1850 = vmatpush1.bf16.msra.mxu0 %v1292
  %1851 = vmatprep.subr.bf16.mxu0 %v1295
  %1852 = vmatpush1.bf16.msra.mxu0 %v1294
  %1853 = vmatprep.subr.bf16.mxu0 %v1297
  %1854 = vmatpush1.bf16.msra.mxu0 %v1296
  %1855 = vmatprep.subr.bf16.mxu0 %v1299
  %1856 = vmatpush1.bf16.msra.mxu0 %v1298
  %1857 = vmatprep.subr.bf16.mxu0 %v1301
  %1858 = vmatpush1.bf16.msra.mxu0 %v1300
  %1859 = vmatprep.subr.bf16.mxu0 %v1303
  %1860 = vmatpush1.bf16.msra.mxu0 %v1302
  %1861 = vmatprep.subr.bf16.mxu0 %v1305
  %1862 = vmatpush1.bf16.msra.mxu0 %v1304
  %1863 = vmatprep.mubr.bf16.mxu0 %v325
  %1864 = vmatmul.mubr.bf16.gmra.mrb[0].mxu0 %v324
  %v1865 = vpop.f32.mrb[0].mxu0
  %v1866 = vadd.f32 %v1825, %v1865
  %v1867 = vpop.f32.mrb[0].mxu0
  %v1868 = vadd.f32 %v1827, %v1867
  %v1869 = vpop.f32.mrb[0].mxu0
  %v1870 = vpop.f32.mrb[0].mxu0
  %1871 = vdwg.mxu0
  %1872 = vmatprep.subr.bf16.mxu0 %v1307
  %1873 = vmatpush1.bf16.msra.mxu0 %v1306
  %1874 = vmatprep.subr.bf16.mxu0 %v1309
  %1875 = vmatpush1.bf16.msra.mxu0 %v1308
  %1876 = vmatprep.subr.bf16.mxu0 %v1311
  %1877 = vmatpush1.bf16.msra.mxu0 %v1310
  %1878 = vmatprep.subr.bf16.mxu0 %v1313
  %1879 = vmatpush1.bf16.msra.mxu0 %v1312
  %1880 = vmatprep.subr.bf16.mxu0 %v1315
  %1881 = vmatpush1.bf16.msra.mxu0 %v1314
  %1882 = vmatprep.subr.bf16.mxu0 %v1317
  %1883 = vmatpush1.bf16.msra.mxu0 %v1316
  %1884 = vmatprep.subr.bf16.mxu0 %v1319
  %1885 = vmatpush1.bf16.msra.mxu0 %v1318
  %1886 = vmatprep.subr.bf16.mxu0 %v1321
  %1887 = vmatpush1.bf16.msra.mxu0 %v1320
  %1888 = vmatprep.subr.bf16.mxu0 %v1323
  %1889 = vmatpush1.bf16.msra.mxu0 %v1322
  %1890 = vmatprep.subr.bf16.mxu0 %v1325
  %1891 = vmatpush1.bf16.msra.mxu0 %v1324
  %1892 = vmatprep.subr.bf16.mxu0 %v1327
  %1893 = vmatpush1.bf16.msra.mxu0 %v1326
  %1894 = vmatprep.subr.bf16.mxu0 %v1329
  %1895 = vmatpush1.bf16.msra.mxu0 %v1328
  %1896 = vmatprep.subr.bf16.mxu0 %v1331
  %1897 = vmatpush1.bf16.msra.mxu0 %v1330
  %1898 = vmatprep.subr.bf16.mxu0 %v1333
  %1899 = vmatpush1.bf16.msra.mxu0 %v1332
  %1900 = vmatprep.subr.bf16.mxu0 %v1335
  %1901 = vmatpush1.bf16.msra.mxu0 %v1334
  %1902 = vmatprep.subr.bf16.mxu0 %v1337
  %1903 = vmatpush1.bf16.msra.mxu0 %v1336
  %1904 = vmatprep.mubr.bf16.mxu0 %v327
  %1905 = vmatmul.mubr.bf16.gmra.mrb[0].mxu0 %v326
  %v1906 = vpop.f32.mrb[0].mxu0
  %v1907 = vadd.f32 %v1866, %v1906
  %v1908 = vpop.f32.mrb[0].mxu0
  %v1909 = vadd.f32 %v1868, %v1908
  %v1910 = vpop.f32.mrb[0].mxu0
  %v1911 = vpop.f32.mrb[0].mxu0
  %1912 = vdwg.mxu0
  %1913 = vmatprep.subr.bf16.mxu0 %v1339
  %1914 = vmatpush1.bf16.msra.mxu0 %v1338
  %1915 = vmatprep.subr.bf16.mxu0 %v1341
  %1916 = vmatpush1.bf16.msra.mxu0 %v1340
  %1917 = vmatprep.subr.bf16.mxu0 %v1343
  %1918 = vmatpush1.bf16.msra.mxu0 %v1342
  %1919 = vmatprep.subr.bf16.mxu0 %v1345
  %1920 = vmatpush1.bf16.msra.mxu0 %v1344
  %1921 = vmatprep.subr.bf16.mxu0 %v1347
  %1922 = vmatpush1.bf16.msra.mxu0 %v1346
  %1923 = vmatprep.subr.bf16.mxu0 %v1349
  %1924 = vmatpush1.bf16.msra.mxu0 %v1348
  %1925 = vmatprep.subr.bf16.mxu0 %v1351
  %1926 = vmatpush1.bf16.msra.mxu0 %v1350
  %1927 = vmatprep.subr.bf16.mxu0 %v1353
  %1928 = vmatpush1.bf16.msra.mxu0 %v1352
  %1929 = vmatprep.subr.bf16.mxu0 %v1355
  %1930 = vmatpush1.bf16.msra.mxu0 %v1354
  %1931 = vmatprep.subr.bf16.mxu0 %v1357
  %1932 = vmatpush1.bf16.msra.mxu0 %v1356
  %1933 = vmatprep.subr.bf16.mxu0 %v1359
  %1934 = vmatpush1.bf16.msra.mxu0 %v1358
  %1935 = vmatprep.subr.bf16.mxu0 %v1361
  %1936 = vmatpush1.bf16.msra.mxu0 %v1360
  %1937 = vmatprep.subr.bf16.mxu0 %v1363
  %1938 = vmatpush1.bf16.msra.mxu0 %v1362
  %1939 = vmatprep.subr.bf16.mxu0 %v1365
  %1940 = vmatpush1.bf16.msra.mxu0 %v1364
  %1941 = vmatprep.subr.bf16.mxu0 %v1367
  %1942 = vmatpush1.bf16.msra.mxu0 %v1366
  %1943 = vmatprep.subr.bf16.mxu0 %v1369
  %1944 = vmatpush1.bf16.msra.mxu0 %v1368
  %1945 = vmatprep.mubr.bf16.mxu0 %v329
  %1946 = vmatmul.mubr.bf16.gmra.mrb[0].mxu0 %v328
  %v1947 = vpop.f32.mrb[0].mxu0
  %v1948 = vadd.f32 %v1907, %v1947
  %v1949 = vpop.f32.mrb[0].mxu0
  %v1950 = vadd.f32 %v1909, %v1949
  %v1951 = vpop.f32.mrb[0].mxu0
  %v1952 = vpop.f32.mrb[0].mxu0
  %1953 = vdwg.mxu0
  %v1954 = vmax.f32 %v1948, 0.0
  %v1955 = vmax.f32 %v1950, 0.0
  %1956 = vst [vmem:[%s3] sm:$0xff] %v1954
  %1957 = vst [vmem:[%s3 + $0x8] sm:$0xff] %v1955
  // Predicated region
  $region14: #{conv_module_forward.7} parent=0 // pred_check
    _
  $region15: #{conv_module_forward.7} parent=0 // pred_check_branch
    %1959 = sbr.rel (0) target = $region17
  $region16: #{conv_module_forward.7} parent=0 // pred_region
    _
  $region17: #{conv_module_forward.7} parent=0 // pred_fallthru
    _
  // Predicated region
  $region18: #{conv_module_forward.7} parent=0 // pred_check
    _
  $region19: #{conv_module_forward.7} parent=0 // pred_check_branch
    %1961 = sbr.rel (0) target = $region21
  $region20: #{conv_module_forward.7} parent=0 // pred_region
    _
  $region21: #{conv_module_forward.7} parent=0 // pred_fallthru
    _

</llo_original>
